<compile_context>
chip_gen: v7x
topology: tpu7x:2x2x1
jax: 0.10.0
libtpu: 0.0.40
codegen_flags: <defaults>
</compile_context>

<pallas_src>
import functools

import jax
import jax.numpy as jnp
import numpy as np
from jax.experimental import pallas as pl
from jax.experimental.pallas import tpu as pltpu

# Module config: ConvTranspose2d(57, 32, 4, stride=2, padding=1, output_padding=1)
CIN = 57
COUT = 32
KH = KW = 4
STRIDE = 2
PADDING = 1
OUTPUT_PADDING = 1

CIN_PAD = 128            # per-tap contraction slab padded to full lane width
NTAPS = 9                # 3x3 (dh, dw) tap offsets of the stride-2 phase decomposition
KWIDE = NTAPS * CIN_PAD  # 1152: wide contraction depth -> single MXU matmul per step
OC = 4 * COUT            # 2x2 output phases * Cout = 128 -> lane-dense output
TARGET_M = 1024          # target rows per grid step (VMEM/vreg sweet spot)


def _round_up(x, m):
    return (x + m - 1) // m * m


def prepare_params(w_torch, bias):
    """One-time weight/bias preprocessing (outside the jitted hot path).

    Builds W_wide[(dh*3+dw)*128 + ci, (ph,pw,cout)] such that

      out[2a+ph, 2b+pw, cout] =
          sum_{dh,dw,ci} xpad[a+dh, b+dw, ci] * W_wide[(dh*3+dw)*128+ci, (ph,pw,cout)]

    with xpad = x zero-padded by one pixel at top/left.  This is exactly
    ConvTranspose2d(k=4, s=2, p=1, op=1) decomposed into its 4 output phases.
    """
    w = np.asarray(w_torch, np.float32)            # (Cin, Cout, KH, KW) torch layout
    cin, cout, kh_, kw_ = w.shape
    assert kh_ == 4 and kw_ == 4 and cin == CIN and cout == COUT
    # spatially flipped, channels moved last: wf[kh, kw, ci, co] = w[ci, co, 3-kh, 3-kw]
    wf = np.transpose(w[:, :, ::-1, ::-1], (2, 3, 0, 1))
    wp = np.zeros((3, 3, CIN_PAD, 2, 2, cout), np.float32)
    for dh in range(3):
        for ph in range(2):
            if dh - ph not in (0, 1):
                continue
            kh = 2 * dh - ph
            for dw in range(3):
                for pw in range(2):
                    if dw - pw not in (0, 1):
                        continue
                    kw = 2 * dw - pw
                    wp[dh, dw, :cin, ph, pw, :] = wf[kh, kw]
    w_wide = wp.reshape(KWIDE, OC)                                   # wide-K RHS
    bias_p = np.tile(np.asarray(bias, np.float32), 4).reshape(1, OC)  # phase-replicated
    return jnp.asarray(w_wide, jnp.bfloat16), jnp.asarray(bias_p, jnp.float32)


def _make_kernel(TH, BP):
    M = TH * BP

    def kernel(x_ref, w_ref, b_ref, o_ref, lhs_ref):
        # x_ref  : (1, Hp, Wp, CIN_PAD)  padded image for this batch element (bf16)
        # w_ref  : (KWIDE, OC)           wide-K phase-combined weights (bf16)
        # b_ref  : (1, OC)               phase-replicated bias (f32)
        # o_ref  : (1, M, OC)            lane-dense output slab for this row block (bf16)
        # lhs_ref: (M, KWIDE)            VMEM scratch: packed wide-K LHS (bf16)
        row0 = pl.multiple_of(pl.program_id(1) * TH, TH)

        # Pack the 9 (dh, dw) tap windows along the contraction dim.  Each store
        # targets a full 128-lane slab (aligned, unmasked); the dw-offset shift is
        # absorbed into this single copy per tap.
        t = 0
        for dh in range(3):
            for dw in range(3):
                win = x_ref[0, pl.ds(row0 + dh, TH), pl.ds(dw, BP), :]
                lhs_ref[:, t * CIN_PAD:(t + 1) * CIN_PAD] = win.reshape(M, CIN_PAD)
                t += 1

        # One wide-contraction MXU matmul; accumulation stays inside the MXU.
        acc = jnp.dot(lhs_ref[...], w_ref[...], preferred_element_type=jnp.float32)
        v = acc + b_ref[...]
        # SiLU with the divide pushed to the EUP slot.
        silu = v * pl.reciprocal(1.0 + jnp.exp(-v), approx=True)
        o_ref[0] = silu.astype(o_ref.dtype)

    return kernel


@functools.partial(jax.jit, static_argnames=("tile_rows",))
def conv_transpose_silu(x_nchw, w_wide, bias_phase, tile_rows=None):
    """x_nchw: (N, Cin, H, W) f32.  Returns (N, Cout, 2H+1, 2W+1) f32."""
    N, cin, H, W = x_nchw.shape
    assert cin == CIN
    Hout = (H - 1) * STRIDE - 2 * PADDING + KH + OUTPUT_PADDING   # = 2H + 1
    Wout = (W - 1) * STRIDE - 2 * PADDING + KW + OUTPUT_PADDING   # = 2W + 1
    A = H + 1                       # phase rows   (oh = 2a + ph)
    B = W + 1                       # phase cols   (ow = 2b + pw)
    BP = _round_up(B, 16)           # bf16 sublane tile -> tile-aligned in-kernel fold

    if tile_rows is not None:
        TH = tile_rows
    else:
        TH = max(8, min(64, TARGET_M // BP))        # M = TH*BP near the sweet spot
        TH = min(TH, _round_up(A, 8))               # don't blow up tiny images
        if A > 8:
            TH = min(TH, _round_up((A + 1) // 2, 8))  # >= 2 row blocks (megacore)
    A_pad = _round_up(A, TH)
    n_row_blocks = A_pad // TH
    M = TH * BP
    Hp, Wp = A_pad + 2, BP + 2

    # NCHW -> NHWC, 1 halo row/col top/left, pad bottom/right to the padded phase
    # grid, channels -> CIN_PAD, cast bf16 for the MXU (one pass over the input).
    x = jnp.transpose(x_nchw, (0, 2, 3, 1))
    x = jnp.pad(x, ((0, 0),
                    (1, Hp - 1 - H),
                    (1, Wp - 1 - W),
                    (0, CIN_PAD - cin))).astype(jnp.bfloat16)

    # Size the scoped VMEM limit from the actual block footprint (+ margin).
    vmem_need = (2 * Hp * Wp * CIN_PAD * 2    # input image block (double-buffered)
                 + M * KWIDE * 2              # wide-K LHS scratch
                 + 2 * M * OC * 2             # output slab (double-buffered)
                 + 2 * KWIDE * OC * 2         # weights
                 + 2 * OC * 4 + 4096)         # bias + slack
    vmem_limit = int(min(max(vmem_need + (8 << 20), 32 << 20), 56 << 20))

    kernel = _make_kernel(TH, BP)
    out_raw = pl.pallas_call(
        kernel,
        out_shape=jax.ShapeDtypeStruct((N, A_pad * BP, OC), jnp.bfloat16),
        grid=(N, n_row_blocks),
        in_specs=[
            pl.BlockSpec((1, Hp, Wp, CIN_PAD), lambda n, ab: (n, 0, 0, 0)),
            pl.BlockSpec((KWIDE, OC), lambda n, ab: (0, 0)),
            pl.BlockSpec((1, OC), lambda n, ab: (0, 0)),
        ],
        out_specs=pl.BlockSpec((1, M, OC), lambda n, ab: (n, ab, 0)),
        scratch_shapes=[pltpu.VMEM((M, KWIDE), jnp.bfloat16)],
        compiler_params=pltpu.CompilerParams(
            dimension_semantics=("parallel", "parallel"),
            vmem_limit_bytes=vmem_limit),
    )(x, w_wide, bias_phase)

    # Single fused XLA epilogue pass (bf16 until the very last cast):
    # interleave the 2x2 phases, crop to (Hout, Wout), back to NCHW f32.
    out = out_raw.reshape(N, A_pad, BP, 2, 2, COUT)
    out = jnp.transpose(out, (0, 1, 3, 2, 4, 5)).reshape(N, 2 * A_pad, 2 * BP, COUT)
    out = out[:, :Hout, :Wout, :]
    return jnp.transpose(out, (0, 3, 1, 2)).astype(jnp.float32)


def _numpy_reference(x, w, b, stride=2, padding=1, output_padding=1):
    """Brute-force ConvTranspose2d + SiLU reference (NCHW, torch weight layout)."""
    N, Cin, H, W = x.shape
    _, Cout, kh_, kw_ = w.shape
    Hout = (H - 1) * stride - 2 * padding + kh_ + output_padding
    Wout = (W - 1) * stride - 2 * padding + kw_ + output_padding
    out = np.zeros((N, Cout, Hout, Wout), np.float32)
    for ih in range(H):
        for iw in range(W):
            for kh in range(kh_):
                for kw in range(kw_):
                    oh = ih * stride - padding + kh
                    ow = iw * stride - padding + kw
                    if 0 <= oh < Hout and 0 <= ow < Wout:
                        out[:, :, oh, ow] += x[:, :, ih, iw] @ w[:, :, kh, kw]
    out += b[None, :, None, None]
    return out * (1.0 / (1.0 + np.exp(-out)))


if __name__ == "__main__":
    # Small shapes consistent with the module: Cin=57, Cout=32, k=4, s=2, p=1, op=1.
    N, H, W = 2, 16, 16

    key = jax.random.PRNGKey(0)
    kx, kw, kb = jax.random.split(key, 3)
    x = jax.random.normal(kx, (N, CIN, H, W), jnp.float32)
    # torch ConvTranspose2d weight layout: (in_channels, out_channels, KH, KW)
    weight = jax.random.normal(kw, (CIN, COUT, KH, KW), jnp.float32) * 0.05
    bias = jax.random.normal(kb, (COUT,), jnp.float32) * 0.1

    w_wide, bias_phase = prepare_params(weight, bias)      # one-time preprocessing
    out = conv_transpose_silu(x, w_wide, bias_phase)
    out = jax.block_until_ready(out)

    ref = _numpy_reference(np.asarray(x), np.asarray(weight), np.asarray(bias))
    # bf16 MXU inputs with f32 accumulation (+ approx reciprocal) -> loose tolerance.
    np.testing.assert_allclose(np.asarray(out), ref, rtol=5e-2, atol=5e-2)

    print("KERNEL_OK")
</pallas_src>

<mosaic_0001>
module attributes {stable_mosaic.version = 11 : i64} {
  func.func @kernel(%arg0: i32, %arg1: i32, %arg2: memref<1x34x34x128xbf16, #tpu.memory_space<vmem>>, %arg3: memref<1152x128xbf16, #tpu.memory_space<vmem>>, %arg4: memref<1x128xf32, #tpu.memory_space<vmem>>, %arg5: memref<1x512x128xbf16, #tpu.memory_space<vmem>>, %arg6: memref<512x1152xbf16, #tpu.memory_space<vmem>>) attributes {dimension_semantics = [#tpu.dimension_semantics<parallel>, #tpu.dimension_semantics<parallel>], iteration_bounds = array<i64: 2, 2>, scalar_prefetch = 0 : i64, scratch_operands = 1 : i64, tpu.core_type = #tpu.core_type<tc>, window_params = [{transform_indices = @transform_0, window_bounds = array<i64: 1, 34, 34, 128>}, {pipeline_mode = #tpu.pipeline_mode<synchronous>, transform_indices = @transform_1, window_bounds = array<i64: 1152, 128>}, {pipeline_mode = #tpu.pipeline_mode<synchronous>, transform_indices = @transform_2, window_bounds = array<i64: 1, 128>}, {transform_indices = @transform_3, window_bounds = array<i64: 1, 512, 128>}]} {
    %c16_i32 = arith.constant 16 : i32
    %0 = arith.muli %arg1, %c16_i32 : i32
    %1 = tpu.assume_multiple %0, 16 : i32
    %c0_i32 = arith.constant 0 : i32
    %2 = arith.addi %1, %c0_i32 : i32
    %c0 = arith.constant 0 : index
    %3 = arith.index_cast %2 : i32 to index
    %c0_0 = arith.constant 0 : index
    %c0_1 = arith.constant 0 : index
    %4 = vector.load %arg2[%c0, %3, %c0_0, %c0_1] : memref<1x34x34x128xbf16, #tpu.memory_space<vmem>>, vector<1x16x32x128xbf16>
    %5 = vector.shape_cast %4 : vector<1x16x32x128xbf16> to vector<16x32x128xbf16>
    %6 = vector.shape_cast %5 : vector<16x32x128xbf16> to vector<512x128xbf16>
    %c0_2 = arith.constant 0 : index
    %c0_3 = arith.constant 0 : index
    %7 = vector.load %arg6[%c0_2, %c0_3] : memref<512x1152xbf16, #tpu.memory_space<vmem>>, vector<512x128xbf16>
    tpu.vector_store %arg6[%c0_2, %c0_3], %6 {strides = array<i32>} : memref<512x1152xbf16, #tpu.memory_space<vmem>>, vector<512x128xbf16>,
    %c0_i32_4 = arith.constant 0 : i32
    %8 = arith.addi %1, %c0_i32_4 : i32
    %c0_5 = arith.constant 0 : index
    %9 = arith.index_cast %8 : i32 to index
    %c1 = arith.constant 1 : index
    %c0_6 = arith.constant 0 : index
    %10 = vector.load %arg2[%c0_5, %9, %c1, %c0_6] : memref<1x34x34x128xbf16, #tpu.memory_space<vmem>>, vector<1x16x32x128xbf16>
    %11 = vector.shape_cast %10 : vector<1x16x32x128xbf16> to vector<16x32x128xbf16>
    %12 = vector.shape_cast %11 : vector<16x32x128xbf16> to vector<512x128xbf16>
    %c0_7 = arith.constant 0 : index
    %c128 = arith.constant 128 : index
    %13 = vector.load %arg6[%c0_7, %c128] : memref<512x1152xbf16, #tpu.memory_space<vmem>>, vector<512x128xbf16>
    tpu.vector_store %arg6[%c0_7, %c128], %12 {strides = array<i32>} : memref<512x1152xbf16, #tpu.memory_space<vmem>>, vector<512x128xbf16>,
    %c0_i32_8 = arith.constant 0 : i32
    %14 = arith.addi %1, %c0_i32_8 : i32
    %c0_9 = arith.constant 0 : index
    %15 = arith.index_cast %14 : i32 to index
    %c2 = arith.constant 2 : index
    %c0_10 = arith.constant 0 : index
    %16 = vector.load %arg2[%c0_9, %15, %c2, %c0_10] : memref<1x34x34x128xbf16, #tpu.memory_space<vmem>>, vector<1x16x32x128xbf16>
    %17 = vector.shape_cast %16 : vector<1x16x32x128xbf16> to vector<16x32x128xbf16>
    %18 = vector.shape_cast %17 : vector<16x32x128xbf16> to vector<512x128xbf16>
    %c0_11 = arith.constant 0 : index
    %c256 = arith.constant 256 : index
    %19 = vector.load %arg6[%c0_11, %c256] : memref<512x1152xbf16, #tpu.memory_space<vmem>>, vector<512x128xbf16>
    tpu.vector_store %arg6[%c0_11, %c256], %18 {strides = array<i32>} : memref<512x1152xbf16, #tpu.memory_space<vmem>>, vector<512x128xbf16>,
    %c1_i32 = arith.constant 1 : i32
    %20 = arith.addi %1, %c1_i32 : i32
    %c0_12 = arith.constant 0 : index
    %21 = arith.index_cast %20 : i32 to index
    %c0_13 = arith.constant 0 : index
    %c0_14 = arith.constant 0 : index
    %22 = vector.load %arg2[%c0_12, %21, %c0_13, %c0_14] : memref<1x34x34x128xbf16, #tpu.memory_space<vmem>>, vector<1x16x32x128xbf16>
    %23 = vector.shape_cast %22 : vector<1x16x32x128xbf16> to vector<16x32x128xbf16>
    %24 = vector.shape_cast %23 : vector<16x32x128xbf16> to vector<512x128xbf16>
    %c0_15 = arith.constant 0 : index
    %c384 = arith.constant 384 : index
    %25 = vector.load %arg6[%c0_15, %c384] : memref<512x1152xbf16, #tpu.memory_space<vmem>>, vector<512x128xbf16>
    tpu.vector_store %arg6[%c0_15, %c384], %24 {strides = array<i32>} : memref<512x1152xbf16, #tpu.memory_space<vmem>>, vector<512x128xbf16>,
    %c1_i32_16 = arith.constant 1 : i32
    %26 = arith.addi %1, %c1_i32_16 : i32
    %c0_17 = arith.constant 0 : index
    %27 = arith.index_cast %26 : i32 to index
    %c1_18 = arith.constant 1 : index
    %c0_19 = arith.constant 0 : index
    %28 = vector.load %arg2[%c0_17, %27, %c1_18, %c0_19] : memref<1x34x34x128xbf16, #tpu.memory_space<vmem>>, vector<1x16x32x128xbf16>
    %29 = vector.shape_cast %28 : vector<1x16x32x128xbf16> to vector<16x32x128xbf16>
    %30 = vector.shape_cast %29 : vector<16x32x128xbf16> to vector<512x128xbf16>
    %c0_20 = arith.constant 0 : index
    %c512 = arith.constant 512 : index
    %31 = vector.load %arg6[%c0_20, %c512] : memref<512x1152xbf16, #tpu.memory_space<vmem>>, vector<512x128xbf16>
    tpu.vector_store %arg6[%c0_20, %c512], %30 {strides = array<i32>} : memref<512x1152xbf16, #tpu.memory_space<vmem>>, vector<512x128xbf16>,
    %c1_i32_21 = arith.constant 1 : i32
    %32 = arith.addi %1, %c1_i32_21 : i32
    %c0_22 = arith.constant 0 : index
    %33 = arith.index_cast %32 : i32 to index
    %c2_23 = arith.constant 2 : index
    %c0_24 = arith.constant 0 : index
    %34 = vector.load %arg2[%c0_22, %33, %c2_23, %c0_24] : memref<1x34x34x128xbf16, #tpu.memory_space<vmem>>, vector<1x16x32x128xbf16>
    %35 = vector.shape_cast %34 : vector<1x16x32x128xbf16> to vector<16x32x128xbf16>
    %36 = vector.shape_cast %35 : vector<16x32x128xbf16> to vector<512x128xbf16>
    %c0_25 = arith.constant 0 : index
    %c640 = arith.constant 640 : index
    %37 = vector.load %arg6[%c0_25, %c640] : memref<512x1152xbf16, #tpu.memory_space<vmem>>, vector<512x128xbf16>
    tpu.vector_store %arg6[%c0_25, %c640], %36 {strides = array<i32>} : memref<512x1152xbf16, #tpu.memory_space<vmem>>, vector<512x128xbf16>,
    %c2_i32 = arith.constant 2 : i32
    %38 = arith.addi %1, %c2_i32 : i32
    %c0_26 = arith.constant 0 : index
    %39 = arith.index_cast %38 : i32 to index
    %c0_27 = arith.constant 0 : index
    %c0_28 = arith.constant 0 : index
    %40 = vector.load %arg2[%c0_26, %39, %c0_27, %c0_28] : memref<1x34x34x128xbf16, #tpu.memory_space<vmem>>, vector<1x16x32x128xbf16>
    %41 = vector.shape_cast %40 : vector<1x16x32x128xbf16> to vector<16x32x128xbf16>
    %42 = vector.shape_cast %41 : vector<16x32x128xbf16> to vector<512x128xbf16>
    %c0_29 = arith.constant 0 : index
    %c768 = arith.constant 768 : index
    %43 = vector.load %arg6[%c0_29, %c768] : memref<512x1152xbf16, #tpu.memory_space<vmem>>, vector<512x128xbf16>
    tpu.vector_store %arg6[%c0_29, %c768], %42 {strides = array<i32>} : memref<512x1152xbf16, #tpu.memory_space<vmem>>, vector<512x128xbf16>,
    %c2_i32_30 = arith.constant 2 : i32
    %44 = arith.addi %1, %c2_i32_30 : i32
    %c0_31 = arith.constant 0 : index
    %45 = arith.index_cast %44 : i32 to index
    %c1_32 = arith.constant 1 : index
    %c0_33 = arith.constant 0 : index
    %46 = vector.load %arg2[%c0_31, %45, %c1_32, %c0_33] : memref<1x34x34x128xbf16, #tpu.memory_space<vmem>>, vector<1x16x32x128xbf16>
    %47 = vector.shape_cast %46 : vector<1x16x32x128xbf16> to vector<16x32x128xbf16>
    %48 = vector.shape_cast %47 : vector<16x32x128xbf16> to vector<512x128xbf16>
    %c0_34 = arith.constant 0 : index
    %c896 = arith.constant 896 : index
    %49 = vector.load %arg6[%c0_34, %c896] : memref<512x1152xbf16, #tpu.memory_space<vmem>>, vector<512x128xbf16>
    tpu.vector_store %arg6[%c0_34, %c896], %48 {strides = array<i32>} : memref<512x1152xbf16, #tpu.memory_space<vmem>>, vector<512x128xbf16>,
    %c2_i32_35 = arith.constant 2 : i32
    %50 = arith.addi %1, %c2_i32_35 : i32
    %c0_36 = arith.constant 0 : index
    %51 = arith.index_cast %50 : i32 to index
    %c2_37 = arith.constant 2 : index
    %c0_38 = arith.constant 0 : index
    %52 = vector.load %arg2[%c0_36, %51, %c2_37, %c0_38] : memref<1x34x34x128xbf16, #tpu.memory_space<vmem>>, vector<1x16x32x128xbf16>
    %53 = vector.shape_cast %52 : vector<1x16x32x128xbf16> to vector<16x32x128xbf16>
    %54 = vector.shape_cast %53 : vector<16x32x128xbf16> to vector<512x128xbf16>
    %c0_39 = arith.constant 0 : index
    %c1024 = arith.constant 1024 : index
    %55 = vector.load %arg6[%c0_39, %c1024] : memref<512x1152xbf16, #tpu.memory_space<vmem>>, vector<512x128xbf16>
    tpu.vector_store %arg6[%c0_39, %c1024], %54 {strides = array<i32>} : memref<512x1152xbf16, #tpu.memory_space<vmem>>, vector<512x128xbf16>,
    %c0_40 = arith.constant 0 : index
    %c0_41 = arith.constant 0 : index
    %56 = vector.load %arg6[%c0_40, %c0_41] : memref<512x1152xbf16, #tpu.memory_space<vmem>>, vector<512x1152xbf16>
    %c0_42 = arith.constant 0 : index
    %c0_43 = arith.constant 0 : index
    %57 = vector.load %arg3[%c0_42, %c0_43] : memref<1152x128xbf16, #tpu.memory_space<vmem>>, vector<1152x128xbf16>
    %cst = arith.constant dense<0.000000e+00> : vector<512x128xf32>
    %58 = tpu.matmul %56, %57, %cst {dimension_numbers = #tpu.dot_dimension_numbers<[1], [0], [0], [1], [0, 0, 1, 1], [], []>} : vector<512x1152xbf16>, vector<1152x128xbf16>, vector<512x128xf32> -> vector<512x128xf32>
    %c0_44 = arith.constant 0 : index
    %c0_45 = arith.constant 0 : index
    %59 = vector.load %arg4[%c0_44, %c0_45] : memref<1x128xf32, #tpu.memory_space<vmem>>, vector<1x128xf32>
    %60 = vector.broadcast %59 : vector<1x128xf32> to vector<512x128xf32>
    %61 = arith.addf %58, %60 : vector<512x128xf32>
    %cst_46 = arith.constant 0.000000e+00 : f32
    %62 = vector.broadcast %cst_46 : f32 to vector<512x128xf32>
    %63 = arith.subf %62, %61 : vector<512x128xf32>
    %64 = math.exp %63 : vector<512x128xf32>
    %cst_47 = arith.constant 1.000000e+00 : f32
    %65 = vector.broadcast %cst_47 : f32 to vector<512x128xf32>
    %66 = arith.addf %65, %64 : vector<512x128xf32>
    %67 = tpu.reciprocal %66 {approx = true} : vector<512x128xf32> -> vector<512x128xf32>
    %68 = arith.mulf %61, %67 : vector<512x128xf32>
    %69 = arith.truncf %68 : vector<512x128xf32> to vector<512x128xbf16>
    %c0_48 = arith.constant 0 : index
    %c0_49 = arith.constant 0 : index
    %c0_50 = arith.constant 0 : index
    %70 = vector.load %arg5[%c0_48, %c0_49, %c0_50] : memref<1x512x128xbf16, #tpu.memory_space<vmem>>, vector<1x512x128xbf16>
    %71 = vector.shape_cast %70 : vector<1x512x128xbf16> to vector<512x128xbf16>
    %72 = vector.shape_cast %69 : vector<512x128xbf16> to vector<1x512x128xbf16>
    tpu.vector_store %arg5[%c0_48, %c0_49, %c0_50], %72 {strides = array<i32>} : memref<1x512x128xbf16, #tpu.memory_space<vmem>>, vector<1x512x128xbf16>,
    return
  }
  func.func @transform_0(%arg0: i32, %arg1: i32) -> (i32, i32, i32, i32) {
    %c0_i32 = arith.constant 0 : i32
    %c0_i32_0 = arith.constant 0 : i32
    %c0_i32_1 = arith.constant 0 : i32
    %c0_i32_2 = arith.constant 0 : i32
    return %arg0, %c0_i32, %c0_i32_0, %c0_i32_1 : i32, i32, i32, i32
  }
  func.func @transform_1(%arg0: i32, %arg1: i32) -> (i32, i32) {
    %c0_i32 = arith.constant 0 : i32
    %c0_i32_0 = arith.constant 0 : i32
    %c0_i32_1 = arith.constant 0 : i32
    return %c0_i32, %c0_i32_0 : i32, i32
  }
  func.func @transform_2(%arg0: i32, %arg1: i32) -> (i32, i32) {
    %c0_i32 = arith.constant 0 : i32
    %c0_i32_0 = arith.constant 0 : i32
    %c0_i32_1 = arith.constant 0 : i32
    return %c0_i32, %c0_i32_0 : i32, i32
  }
  func.func @transform_3(%arg0: i32, %arg1: i32) -> (i32, i32, i32) {
    %c0_i32 = arith.constant 0 : i32
    %c0_i32_0 = arith.constant 0 : i32
    return %arg0, %arg1, %c0_i32 : i32, i32, i32
  }
}

</mosaic_0001>

<llo_original>
// kernel: conv_transpose_silu.1
$region0: #{conv_transpose_silu.1}
  #allocation0 [shape = 'u32[]', space=smem, size = 0x4, offset = 0x4, fixed_abs, tag = 'smem constant byte address 0x4 - core index']
  #allocation1 [shape = 'u32[144,128]{1,0:T(1,128)}', space=vmem, size = 0x12000, scoped, tag = 'internal scratch']
  #allocation2 [shape = 'bf16[512,1152]{1,0:T(16,128)(2,1)}', space=vmem, size = 0x120000, scoped, tag = 'scratch operand']
  %s0 = inlined_call_operand.vmem [shape: bf16[2,34,34,128], index: 0, kind: input, shape index: {}]
  %s1 = inlined_call_operand.hbm [shape: bf16[1152,128], index: 1, kind: input, shape index: {}]
  %s2 = inlined_call_operand.hbm [shape: f32[1,128], index: 2, kind: input, shape index: {}]
  %s3 = inlined_call_operand.vmem [shape: bf16[2,1024,128], index: 3, kind: output, shape index: {}]
  %s4 = sld [smem:[#allocation0]]
  $region53: #{conv_transpose_silu.1} parent=0
    _
  %s6 = ssub.s32 1, %s4
  %s7 = scalar_select 0, %s6, %s4
  $region1: #{conv_transpose_silu.1} parent=0
    #allocation3 [shape = 'u8[294912]{0}', space=vmem, size = 0x48000, scoped, tag = 'input window, operand 1, single buffered']
    #allocation4 [shape = 's32[2]{0}', space=sflag, size = 0x8, scoped, tag = 'scoped memory for conv_transpose_silu.1']
    #allocation5 [shape = 'u8[512]{0}', space=vmem, size = 0x400, scoped, tag = 'input window, operand 2, single buffered']
    #allocation6 [shape = 's32[1]{0}', space=sflag, size = 0x4, scoped, tag = 'scoped memory for conv_transpose_silu.1']
    %8 = vsyncpa [#allocation4], 0
    %9 = vsyncpa [#allocation6], 0
    loop: start=0, step=1, limit=6
    $region2: #{conv_transpose_silu.1} parent=1 // loop_pre_header
      _
    $region3: #{conv_transpose_silu.1} parent=1 // loop_header
      %s11 = sphi 0, %s15
      %p12 = scmp.ge.s32.totalorder %s11, 6
      %s18 = sphi 0, %s30
      %s19 = sphi 0, %s26
      %s20 = sphi 0, %s18
      %s21 = sphi 0, %s19
      %s22 = sphi 0, %s20
      %s23 = sphi 0, %s21
      %s33 = sphi 0, %s35
      %s36 = sphi 0, %s33
      %s37 = sphi 0, %s36
      %s53 = sphi 0, %s37
      %s57 = sphi 0, %s57
      %s59 = sphi 0, %s57
      %s60 = sphi 0, %s59
      %s74 = sphi 0, %s60
      %s78 = sphi 0, %s78
      %s80 = sphi 0, %s78
      %s81 = sphi 0, %s80
      %s95 = sphi 0, %s81
      %s103 = sphi 0, %s105
      %s106 = sphi 0, %s103
      %s107 = sphi 0, %s106
      %s123 = sphi 0, %s107
    $region4: #{conv_transpose_silu.1} parent=1 // loop_header_branch
      %14 = sbr.rel (%p12) target = $region8
    $region5: #{conv_transpose_silu.1} parent=1 // loop_body
      %s16 = ssub.s32 %s11, 1
      %s17 = ssub.s32 %s11, 2
      %s24 = sadd.s32 1, %s19
      %p25 = scmp.ge.s32.totalorder %s24, 2
      %s26 = scalar_select %p25, 0, %s24
      %s27 = sadd.s32 1, %s18
      %s28 = scalar_select %p25, %s27, %s18
      %p29 = scmp.ge.s32.totalorder %s28, 2
      %s30 = scalar_select %p29, 0, %s28
      %s31 = ssub.s32 %s18, %s30
      %p32 = scmp.eq.s32.totalorder %s31, 0
      %s34 = sadd.s32 %s33, 1
      %s35 = scalar_select %p32, %s33, %s34
      %p38 = pneg %p32
      %p39 = scmp.eq.s32.totalorder %s11, 3
      %p40 = por %p38, %p39
      %p41 = scmp.ne.s32.totalorder %s33, %s36
      %p42 = scmp.eq.s32.totalorder %s11, 0
      %p43 = por %p41, %p42
      %p44 = scmp.ne.s32.totalorder %s33, %s36
      %p45 = scmp.eq.s32.totalorder %s16, 3
      %p46 = por %p44, %p45
      %p47 = scmp.ne.s32.totalorder %s36, %s37
      %p48 = scmp.eq.s32.totalorder %s16, 0
      %p49 = por %p47, %p48
      %p50 = scmp.ne.s32.totalorder %s36, %s37
      %p51 = scmp.eq.s32.totalorder %s17, 3
      %p52 = por %p50, %p51
      %p54 = scmp.ne.s32.totalorder %s37, %s53
      %p55 = scmp.eq.s32.totalorder %s17, 0
      %p56 = por %p54, %p55
      %s58 = sadd.s32 %s57, 1
      %p61 = scmp.eq.s32.totalorder %s11, 3
      %p62 = scmp.ne.s32.totalorder %s57, %s59
      %p63 = scmp.eq.s32.totalorder %s11, 0
      %p64 = por %p62, %p63
      %p65 = scmp.ne.s32.totalorder %s57, %s59
      %p66 = scmp.eq.s32.totalorder %s16, 3
      %p67 = por %p65, %p66
      %p68 = scmp.ne.s32.totalorder %s59, %s60
      %p69 = scmp.eq.s32.totalorder %s16, 0
      %p70 = por %p68, %p69
      %p71 = scmp.ne.s32.totalorder %s59, %s60
      %p72 = scmp.eq.s32.totalorder %s17, 3
      %p73 = por %p71, %p72
      %p75 = scmp.ne.s32.totalorder %s60, %s74
      %p76 = scmp.eq.s32.totalorder %s17, 0
      %p77 = por %p75, %p76
      %s79 = sadd.s32 %s78, 1
      %p82 = scmp.eq.s32.totalorder %s11, 3
      %p83 = scmp.ne.s32.totalorder %s78, %s80
      %p84 = scmp.eq.s32.totalorder %s11, 0
      %p85 = por %p83, %p84
      %p86 = scmp.ne.s32.totalorder %s78, %s80
      %p87 = scmp.eq.s32.totalorder %s16, 3
      %p88 = por %p86, %p87
      %p89 = scmp.ne.s32.totalorder %s80, %s81
      %p90 = scmp.eq.s32.totalorder %s16, 0
      %p91 = por %p89, %p90
      %p92 = scmp.ne.s32.totalorder %s80, %s81
      %p93 = scmp.eq.s32.totalorder %s17, 3
      %p94 = por %p92, %p93
      %p96 = scmp.ne.s32.totalorder %s81, %s95
      %p97 = scmp.eq.s32.totalorder %s17, 0
      %p98 = por %p96, %p97
      %s99 = ssub.s32 %s18, %s30
      %s100 = ssub.s32 %s19, %s26
      %s101 = sor.u32 %s99, %s100
      %p102 = scmp.eq.s32.totalorder %s101, 0
      %s104 = sadd.s32 %s103, 1
      %s105 = scalar_select %p102, %s103, %s104
      %p108 = pneg %p102
      %p109 = scmp.eq.s32.totalorder %s11, 3
      %p110 = por %p108, %p109
      %p111 = scmp.ne.s32.totalorder %s103, %s106
      %p112 = scmp.eq.s32.totalorder %s11, 0
      %p113 = por %p111, %p112
      %p114 = scmp.ne.s32.totalorder %s103, %s106
      %p115 = scmp.eq.s32.totalorder %s16, 3
      %p116 = por %p114, %p115
      %p117 = scmp.ne.s32.totalorder %s106, %s107
      %p118 = scmp.eq.s32.totalorder %s16, 0
      %p119 = por %p117, %p118
      %p120 = scmp.ne.s32.totalorder %s106, %s107
      %p121 = scmp.eq.s32.totalorder %s17, 3
      %p122 = por %p120, %p121
      %p124 = scmp.ne.s32.totalorder %s107, %s123
      %p125 = scmp.eq.s32.totalorder %s17, 0
      %p126 = por %p124, %p125
      %p127 = scmp.le.s32.totalorder 1, %s11
      %p128 = scmp.lt.s32.totalorder %s11, 5
      %p129 = pnand %p127, %p128
      %p130 = pneg %p129
      // Predicated region
      $region9: #{conv_transpose_silu.1} parent=5 // pred_check
        _
      $region10: #{conv_transpose_silu.1} parent=5 // pred_check_branch
        %132 = sbr.rel (%p129) target = $region12
      $region11: #{conv_transpose_silu.1} parent=5 // pred_region
        %s133 = ssub.s32 %s11, 1
        // Predicated region
        $region13: #{conv_transpose_silu.1} parent=11 // pred_check
          %p134 = pneg %p70
        $region14: #{conv_transpose_silu.1} parent=11 // pred_check_branch
          %136 = sbr.rel (%p134) target = $region16
        $region15: #{conv_transpose_silu.1} parent=11 // pred_region
          %s138 = ssub.s32 9216, 9216
          %139 = vsyncadd [#allocation4], %s138
          %s140 = sshll.u32 [#allocation3], 4
          %s141 = int_to_ptr.vmem [resolvable:$true] %s140
          %146 = dma.hbm_to_vmem [thread:$0]  %s1, 9216, %s141, [#allocation4], 64, 64, 4
        $region16: #{conv_transpose_silu.1} parent=11 // pred_fallthru
          _
        // Predicated region
        $region17: #{conv_transpose_silu.1} parent=11 // pred_check
          %p147 = pneg %p91
        $region18: #{conv_transpose_silu.1} parent=11 // pred_check_branch
          %149 = sbr.rel (%p147) target = $region20
        $region19: #{conv_transpose_silu.1} parent=11 // pred_region
          %s151 = ssub.s32 16, 16
          %152 = vsyncadd [#allocation6], %s151
          %s154 = sshll.u32 [#allocation5], 4
          %s155 = int_to_ptr.vmem [resolvable:$true] %s154
          %157 = dma.hbm_to_vmem [thread:$0]  %s2, 16, %s155, [#allocation6]
        $region20: #{conv_transpose_silu.1} parent=11 // pred_fallthru
          _
      $region12: #{conv_transpose_silu.1} parent=5 // pred_fallthru
        _
      %p158 = scmp.lt.s32.totalorder %s11, 4
      // Predicated region
      $region21: #{conv_transpose_silu.1} parent=5 // pred_check
        %p159 = pneg %p158
      $region22: #{conv_transpose_silu.1} parent=5 // pred_check_branch
        %161 = sbr.rel (%p159) target = $region24
      $region23: #{conv_transpose_silu.1} parent=5 // pred_region
        // Predicated region
        $region25: #{conv_transpose_silu.1} parent=23 // pred_check
          %p162 = pneg %p43
        $region26: #{conv_transpose_silu.1} parent=23 // pred_check_branch
          %164 = sbr.rel (%p162) target = $region28
        $region27: #{conv_transpose_silu.1} parent=23 // pred_region
          %p165 = scmp.lt.s32.totalorder %s18, 1
          %s166 = scalar_select %p165, %s18, 1
          %s167 = smul.addr %s166, 170
          %s168 = smul.addr %s167, 4
          %s169 = scalar_lea.vmem %s0, %s168
        $region28: #{conv_transpose_silu.1} parent=23 // pred_fallthru
          _
      $region24: #{conv_transpose_silu.1} parent=5 // pred_fallthru
        _
      %p170 = scmp.le.s32.totalorder 1, %s11
      %p171 = scmp.lt.s32.totalorder %s11, 5
      %p172 = pnand %p170, %p171
      %p173 = pneg %p172
      // Predicated region
      $region29: #{conv_transpose_silu.1} parent=5 // pred_check
        _
      $region30: #{conv_transpose_silu.1} parent=5 // pred_check_branch
        %175 = sbr.rel (%p172) target = $region32
      $region31: #{conv_transpose_silu.1} parent=5 // pred_region
        %s176 = ssub.s32 %s11, 1
        // Predicated region
        $region33: #{conv_transpose_silu.1} parent=31 // pred_check
          %p177 = pneg %p70
        $region34: #{conv_transpose_silu.1} parent=31 // pred_check_branch
          %179 = sbr.rel (%p177) target = $region36
        $region35: #{conv_transpose_silu.1} parent=31 // pred_region
          %180 = dma.done [#allocation4], 9216
        $region36: #{conv_transpose_silu.1} parent=31 // pred_fallthru
          _
        // Predicated region
        $region37: #{conv_transpose_silu.1} parent=31 // pred_check
          %p181 = pneg %p91
        $region38: #{conv_transpose_silu.1} parent=31 // pred_check_branch
          %183 = sbr.rel (%p181) target = $region40
        $region39: #{conv_transpose_silu.1} parent=31 // pred_region
          %184 = dma.done [#allocation6], 16
        $region40: #{conv_transpose_silu.1} parent=31 // pred_fallthru
          _
        %p185 = scmp.lt.s32.totalorder %s20, 1
        %s186 = scalar_select %p185, %s20, 1
        %s187 = smul.addr %s186, 170
        %s188 = smul.addr %s187, 4
        %s189 = scalar_lea.vmem %s0, %s188
        %p190 = pneg %p49
        %p191 = pneg %p46
        %p192 = pneg %p70
        %p193 = pneg %p67
        %p194 = pneg %p91
        %p195 = pneg %p88
        %p196 = pneg %p119
        %p197 = pneg %p116
        %s198 = smul.u32 64, %s21
        %p199 = scmp.lt.s32.totalorder %s20, 1
        %s200 = scalar_select %p199, %s20, 1
        %p201 = scmp.lt.s32.totalorder %s198, 127
        %s202 = scalar_select %p201, %s198, 127
        %s203 = smul.addr %s200, 128
        %s204 = sadd.s32 %s202, %s203
        %s205 = smul.addr %s204, 4
        %s206 = scalar_lea.vmem %s3, %s205
        %p207 = scmp.lt.s32.totalorder %s20, 1
        %s208 = scalar_select %p207, %s20, 1
        %s209 = smul.addr %s208, 170
        %s210 = smul.addr %s209, 4
        %s211 = scalar_lea.vmem %s0, %s210
        %s212 = smul.u32 64, %s21
        %p213 = scmp.lt.s32.totalorder %s20, 1
        %s214 = scalar_select %p213, %s20, 1
        %p215 = scmp.lt.s32.totalorder %s212, 127
        %s216 = scalar_select %p215, %s212, 127
        %s217 = smul.addr %s214, 128
        %s218 = sadd.s32 %s216, %s217
        %s219 = smul.addr %s218, 4
        %s220 = scalar_lea.vmem %s3, %s219
        %s221 = smul.u32 64, %s21
        %s223 = smul.u32 %s21, 16
        %s224 = smul.u32 %s223, 5
        %s225 = smul.addr %s224, 4
        %s226 = scalar_lea.vmem %s211, %s225
        %v227 = vld [vmem:[%s226] sm:$0xf]
        %v228 = vld [vmem:[%s226 + $0x4] sm:$0xf]
        %v229 = vld [vmem:[%s226 + $0x8] sm:$0xf]
        %v230 = vld [vmem:[%s226 + $0xc] sm:$0xf]
        %v231 = vld [vmem:[%s226 + $0x14] sm:$0xf]
        %v232 = vld [vmem:[%s226 + $0x18] sm:$0xf]
        %v233 = vld [vmem:[%s226 + $0x1c] sm:$0xf]
        %v234 = vld [vmem:[%s226 + $0x20] sm:$0xf]
        %v235 = vld [vmem:[%s226 + $0x28] sm:$0xf]
        %v236 = vld [vmem:[%s226 + $0x2c] sm:$0xf]
        %v237 = vld [vmem:[%s226 + $0x30] sm:$0xf]
        %v238 = vld [vmem:[%s226 + $0x34] sm:$0xf]
        %v239 = vld [vmem:[%s226 + $0x3c] sm:$0xf]
        %v240 = vld [vmem:[%s226 + $0x40] sm:$0xf]
        %v241 = vld [vmem:[%s226 + $0x44] sm:$0xf]
        %v242 = vld [vmem:[%s226 + $0x48] sm:$0xf]
        %v243 = vld [vmem:[%s226 + $0x50] sm:$0xf]
        %v244 = vld [vmem:[%s226 + $0x54] sm:$0xf]
        %v245 = vld [vmem:[%s226 + $0x58] sm:$0xf]
        %v246 = vld [vmem:[%s226 + $0x5c] sm:$0xf]
        %v247 = vld [vmem:[%s226 + $0x64] sm:$0xf]
        %v248 = vld [vmem:[%s226 + $0x68] sm:$0xf]
        %v249 = vld [vmem:[%s226 + $0x6c] sm:$0xf]
        %v250 = vld [vmem:[%s226 + $0x70] sm:$0xf]
        %v251 = vld [vmem:[%s226 + $0x78] sm:$0xf]
        %v252 = vld [vmem:[%s226 + $0x7c] sm:$0xf]
        %v253 = vld [vmem:[%s226 + $0x80] sm:$0xf]
        %v254 = vld [vmem:[%s226 + $0x84] sm:$0xf]
        %v255 = vld [vmem:[%s226 + $0x8c] sm:$0xf]
        %v256 = vld [vmem:[%s226 + $0x90] sm:$0xf]
        %v257 = vld [vmem:[%s226 + $0x94] sm:$0xf]
        %v258 = vld [vmem:[%s226 + $0x98] sm:$0xf]
        %v259 = vld [vmem:[%s226 + $0xa0] sm:$0xf]
        %v260 = vld [vmem:[%s226 + $0xa4] sm:$0xf]
        %v261 = vld [vmem:[%s226 + $0xa8] sm:$0xf]
        %v262 = vld [vmem:[%s226 + $0xac] sm:$0xf]
        %v263 = vld [vmem:[%s226 + $0xb4] sm:$0xf]
        %v264 = vld [vmem:[%s226 + $0xb8] sm:$0xf]
        %v265 = vld [vmem:[%s226 + $0xbc] sm:$0xf]
        %v266 = vld [vmem:[%s226 + $0xc0] sm:$0xf]
        %v267 = vld [vmem:[%s226 + $0xc8] sm:$0xf]
        %v268 = vld [vmem:[%s226 + $0xcc] sm:$0xf]
        %v269 = vld [vmem:[%s226 + $0xd0] sm:$0xf]
        %v270 = vld [vmem:[%s226 + $0xd4] sm:$0xf]
        %v271 = vld [vmem:[%s226 + $0xdc] sm:$0xf]
        %v272 = vld [vmem:[%s226 + $0xe0] sm:$0xf]
        %v273 = vld [vmem:[%s226 + $0xe4] sm:$0xf]
        %v274 = vld [vmem:[%s226 + $0xe8] sm:$0xf]
        %v275 = vld [vmem:[%s226 + $0xf0] sm:$0xf]
        %v276 = vld [vmem:[%s226 + $0xf4] sm:$0xf]
        %v277 = vld [vmem:[%s226 + $0xf8] sm:$0xf]
        %v278 = vld [vmem:[%s226 + $0xfc] sm:$0xf]
        %v279 = vld [vmem:[%s226 + $0x104] sm:$0xf]
        %v280 = vld [vmem:[%s226 + $0x108] sm:$0xf]
        %v281 = vld [vmem:[%s226 + $0x10c] sm:$0xf]
        %v282 = vld [vmem:[%s226 + $0x110] sm:$0xf]
        %v283 = vld [vmem:[%s226 + $0x118] sm:$0xf]
        %v284 = vld [vmem:[%s226 + $0x11c] sm:$0xf]
        %v285 = vld [vmem:[%s226 + $0x120] sm:$0xf]
        %v286 = vld [vmem:[%s226 + $0x124] sm:$0xf]
        %v287 = vld [vmem:[%s226 + $0x12c] sm:$0xf]
        %v288 = vld [vmem:[%s226 + $0x130] sm:$0xf]
        %v289 = vld [vmem:[%s226 + $0x134] sm:$0xf]
        %v290 = vld [vmem:[%s226 + $0x138] sm:$0xf]
        %v355 = vunpack.c.l.b16 %v227
        %v356 = vunpack.c.l.b16 %v228
        %v357 = vunpack.c.l.b16 %v229
        %v358 = vunpack.c.l.b16 %v230
        %v359 = vunpack.c.l.b16 %v231
        %v360 = vunpack.c.l.b16 %v232
        %v361 = vunpack.c.l.b16 %v233
        %v362 = vunpack.c.l.b16 %v234
        %v363 = vunpack.c.l.b16 %v235
        %v364 = vunpack.c.l.b16 %v236
        %v365 = vunpack.c.l.b16 %v237
        %v366 = vunpack.c.l.b16 %v238
        %v367 = vunpack.c.l.b16 %v239
        %v368 = vunpack.c.l.b16 %v240
        %v369 = vunpack.c.l.b16 %v241
        %v370 = vunpack.c.l.b16 %v242
        %v371 = vunpack.c.l.b16 %v243
        %v372 = vunpack.c.l.b16 %v244
        %v373 = vunpack.c.l.b16 %v245
        %v374 = vunpack.c.l.b16 %v246
        %v375 = vunpack.c.l.b16 %v247
        %v376 = vunpack.c.l.b16 %v248
        %v377 = vunpack.c.l.b16 %v249
        %v378 = vunpack.c.l.b16 %v250
        %v379 = vunpack.c.l.b16 %v251
        %v380 = vunpack.c.l.b16 %v252
        %v381 = vunpack.c.l.b16 %v253
        %v382 = vunpack.c.l.b16 %v254
        %v383 = vunpack.c.l.b16 %v255
        %v384 = vunpack.c.l.b16 %v256
        %v385 = vunpack.c.l.b16 %v257
        %v386 = vunpack.c.l.b16 %v258
        %v387 = vunpack.c.l.b16 %v259
        %v388 = vunpack.c.l.b16 %v260
        %v389 = vunpack.c.l.b16 %v261
        %v390 = vunpack.c.l.b16 %v262
        %v391 = vunpack.c.l.b16 %v263
        %v392 = vunpack.c.l.b16 %v264
        %v393 = vunpack.c.l.b16 %v265
        %v394 = vunpack.c.l.b16 %v266
        %v395 = vunpack.c.l.b16 %v267
        %v396 = vunpack.c.l.b16 %v268
        %v397 = vunpack.c.l.b16 %v269
        %v398 = vunpack.c.l.b16 %v270
        %v399 = vunpack.c.l.b16 %v271
        %v400 = vunpack.c.l.b16 %v272
        %v401 = vunpack.c.l.b16 %v273
        %v402 = vunpack.c.l.b16 %v274
        %v403 = vunpack.c.l.b16 %v275
        %v404 = vunpack.c.l.b16 %v276
        %v405 = vunpack.c.l.b16 %v277
        %v406 = vunpack.c.l.b16 %v278
        %v407 = vunpack.c.l.b16 %v279
        %v408 = vunpack.c.l.b16 %v280
        %v409 = vunpack.c.l.b16 %v281
        %v410 = vunpack.c.l.b16 %v282
        %v411 = vunpack.c.l.b16 %v283
        %v412 = vunpack.c.l.b16 %v284
        %v413 = vunpack.c.l.b16 %v285
        %v414 = vunpack.c.l.b16 %v286
        %v415 = vunpack.c.l.b16 %v287
        %v416 = vunpack.c.l.b16 %v288
        %v417 = vunpack.c.l.b16 %v289
        %v418 = vunpack.c.l.b16 %v290
        %v419 = vpack.c.b16 %v356, %v355
        %v420 = vpack.c.b16 %v358, %v357
        %v421 = vpack.c.b16 %v360, %v359
        %v422 = vpack.c.b16 %v362, %v361
        %v423 = vpack.c.b16 %v364, %v363
        %v424 = vpack.c.b16 %v366, %v365
        %v425 = vpack.c.b16 %v368, %v367
        %v426 = vpack.c.b16 %v370, %v369
        %v427 = vpack.c.b16 %v372, %v371
        %v428 = vpack.c.b16 %v374, %v373
        %v429 = vpack.c.b16 %v376, %v375
        %v430 = vpack.c.b16 %v378, %v377
        %v431 = vpack.c.b16 %v380, %v379
        %v432 = vpack.c.b16 %v382, %v381
        %v433 = vpack.c.b16 %v384, %v383
        %v434 = vpack.c.b16 %v386, %v385
        %v435 = vpack.c.b16 %v388, %v387
        %v436 = vpack.c.b16 %v390, %v389
        %v437 = vpack.c.b16 %v392, %v391
        %v438 = vpack.c.b16 %v394, %v393
        %v439 = vpack.c.b16 %v396, %v395
        %v440 = vpack.c.b16 %v398, %v397
        %v441 = vpack.c.b16 %v400, %v399
        %v442 = vpack.c.b16 %v402, %v401
        %v443 = vpack.c.b16 %v404, %v403
        %v444 = vpack.c.b16 %v406, %v405
        %v445 = vpack.c.b16 %v408, %v407
        %v446 = vpack.c.b16 %v410, %v409
        %v447 = vpack.c.b16 %v412, %v411
        %v448 = vpack.c.b16 %v414, %v413
        %v449 = vpack.c.b16 %v416, %v415
        %v450 = vpack.c.b16 %v418, %v417
        %483 = vst [vmem:[#allocation2] sm:$0xff] %v419
        %484 = vst [vmem:[#allocation2 + $0x48] sm:$0xff] %v420
        %485 = vst [vmem:[#allocation2 + $0x90] sm:$0xff] %v421
        %486 = vst [vmem:[#allocation2 + $0xd8] sm:$0xff] %v422
        %487 = vst [vmem:[#allocation2 + $0x120] sm:$0xff] %v423
        %488 = vst [vmem:[#allocation2 + $0x168] sm:$0xff] %v424
        %489 = vst [vmem:[#allocation2 + $0x1b0] sm:$0xff] %v425
        %490 = vst [vmem:[#allocation2 + $0x1f8] sm:$0xff] %v426
        %491 = vst [vmem:[#allocation2 + $0x240] sm:$0xff] %v427
        %492 = vst [vmem:[#allocation2 + $0x288] sm:$0xff] %v428
        %493 = vst [vmem:[#allocation2 + $0x2d0] sm:$0xff] %v429
        %494 = vst [vmem:[#allocation2 + $0x318] sm:$0xff] %v430
        %495 = vst [vmem:[#allocation2 + $0x360] sm:$0xff] %v431
        %496 = vst [vmem:[#allocation2 + $0x3a8] sm:$0xff] %v432
        %497 = vst [vmem:[#allocation2 + $0x3f0] sm:$0xff] %v433
        %498 = vst [vmem:[#allocation2 + $0x438] sm:$0xff] %v434
        %499 = vst [vmem:[#allocation2 + $0x480] sm:$0xff] %v435
        %500 = vst [vmem:[#allocation2 + $0x4c8] sm:$0xff] %v436
        %501 = vst [vmem:[#allocation2 + $0x510] sm:$0xff] %v437
        %502 = vst [vmem:[#allocation2 + $0x558] sm:$0xff] %v438
        %503 = vst [vmem:[#allocation2 + $0x5a0] sm:$0xff] %v439
        %504 = vst [vmem:[#allocation2 + $0x5e8] sm:$0xff] %v440
        %505 = vst [vmem:[#allocation2 + $0x630] sm:$0xff] %v441
        %506 = vst [vmem:[#allocation2 + $0x678] sm:$0xff] %v442
        %507 = vst [vmem:[#allocation2 + $0x6c0] sm:$0xff] %v443
        %508 = vst [vmem:[#allocation2 + $0x708] sm:$0xff] %v444
        %509 = vst [vmem:[#allocation2 + $0x750] sm:$0xff] %v445
        %510 = vst [vmem:[#allocation2 + $0x798] sm:$0xff] %v446
        %511 = vst [vmem:[#allocation2 + $0x7e0] sm:$0xff] %v447
        %512 = vst [vmem:[#allocation2 + $0x828] sm:$0xff] %v448
        %513 = vst [vmem:[#allocation2 + $0x870] sm:$0xff] %v449
        %514 = vst [vmem:[#allocation2 + $0x8b8] sm:$0xff] %v450
        %v515 = vld [vmem:[%s226] sm:$0xf]
        %v516 = vld [vmem:[%s226 + $0x4] sm:$0xf]
        %v517 = vld [vmem:[%s226 + $0x8] sm:$0xf]
        %v518 = vld [vmem:[%s226 + $0xc] sm:$0xf]
        %v519 = vld [vmem:[%s226 + $0x10] sm:$0x1]
        %v520 = vld [vmem:[%s226 + $0x14] sm:$0xf]
        %v521 = vld [vmem:[%s226 + $0x18] sm:$0xf]
        %v522 = vld [vmem:[%s226 + $0x1c] sm:$0xf]
        %v523 = vld [vmem:[%s226 + $0x20] sm:$0xf]
        %v524 = vld [vmem:[%s226 + $0x24] sm:$0x1]
        %v525 = vld [vmem:[%s226 + $0x28] sm:$0xf]
        %v526 = vld [vmem:[%s226 + $0x2c] sm:$0xf]
        %v527 = vld [vmem:[%s226 + $0x30] sm:$0xf]
        %v528 = vld [vmem:[%s226 + $0x34] sm:$0xf]
        %v529 = vld [vmem:[%s226 + $0x38] sm:$0x1]
        %v530 = vld [vmem:[%s226 + $0x3c] sm:$0xf]
        %v531 = vld [vmem:[%s226 + $0x40] sm:$0xf]
        %v532 = vld [vmem:[%s226 + $0x44] sm:$0xf]
        %v533 = vld [vmem:[%s226 + $0x48] sm:$0xf]
        %v534 = vld [vmem:[%s226 + $0x4c] sm:$0x1]
        %v535 = vld [vmem:[%s226 + $0x50] sm:$0xf]
        %v536 = vld [vmem:[%s226 + $0x54] sm:$0xf]
        %v537 = vld [vmem:[%s226 + $0x58] sm:$0xf]
        %v538 = vld [vmem:[%s226 + $0x5c] sm:$0xf]
        %v539 = vld [vmem:[%s226 + $0x60] sm:$0x1]
        %v540 = vld [vmem:[%s226 + $0x64] sm:$0xf]
        %v541 = vld [vmem:[%s226 + $0x68] sm:$0xf]
        %v542 = vld [vmem:[%s226 + $0x6c] sm:$0xf]
        %v543 = vld [vmem:[%s226 + $0x70] sm:$0xf]
        %v544 = vld [vmem:[%s226 + $0x74] sm:$0x1]
        %v545 = vld [vmem:[%s226 + $0x78] sm:$0xf]
        %v546 = vld [vmem:[%s226 + $0x7c] sm:$0xf]
        %v547 = vld [vmem:[%s226 + $0x80] sm:$0xf]
        %v548 = vld [vmem:[%s226 + $0x84] sm:$0xf]
        %v549 = vld [vmem:[%s226 + $0x88] sm:$0x1]
        %v550 = vld [vmem:[%s226 + $0x8c] sm:$0xf]
        %v551 = vld [vmem:[%s226 + $0x90] sm:$0xf]
        %v552 = vld [vmem:[%s226 + $0x94] sm:$0xf]
        %v553 = vld [vmem:[%s226 + $0x98] sm:$0xf]
        %v554 = vld [vmem:[%s226 + $0x9c] sm:$0x1]
        %v555 = vld [vmem:[%s226 + $0xa0] sm:$0xf]
        %v556 = vld [vmem:[%s226 + $0xa4] sm:$0xf]
        %v557 = vld [vmem:[%s226 + $0xa8] sm:$0xf]
        %v558 = vld [vmem:[%s226 + $0xac] sm:$0xf]
        %v559 = vld [vmem:[%s226 + $0xb0] sm:$0x1]
        %v560 = vld [vmem:[%s226 + $0xb4] sm:$0xf]
        %v561 = vld [vmem:[%s226 + $0xb8] sm:$0xf]
        %v562 = vld [vmem:[%s226 + $0xbc] sm:$0xf]
        %v563 = vld [vmem:[%s226 + $0xc0] sm:$0xf]
        %v564 = vld [vmem:[%s226 + $0xc4] sm:$0x1]
        %v565 = vld [vmem:[%s226 + $0xc8] sm:$0xf]
        %v566 = vld [vmem:[%s226 + $0xcc] sm:$0xf]
        %v567 = vld [vmem:[%s226 + $0xd0] sm:$0xf]
        %v568 = vld [vmem:[%s226 + $0xd4] sm:$0xf]
        %v569 = vld [vmem:[%s226 + $0xd8] sm:$0x1]
        %v570 = vld [vmem:[%s226 + $0xdc] sm:$0xf]
        %v571 = vld [vmem:[%s226 + $0xe0] sm:$0xf]
        %v572 = vld [vmem:[%s226 + $0xe4] sm:$0xf]
        %v573 = vld [vmem:[%s226 + $0xe8] sm:$0xf]
        %v574 = vld [vmem:[%s226 + $0xec] sm:$0x1]
        %v575 = vld [vmem:[%s226 + $0xf0] sm:$0xf]
        %v576 = vld [vmem:[%s226 + $0xf4] sm:$0xf]
        %v577 = vld [vmem:[%s226 + $0xf8] sm:$0xf]
        %v578 = vld [vmem:[%s226 + $0xfc] sm:$0xf]
        %v579 = vld [vmem:[%s226 + $0x100] sm:$0x1]
        %v580 = vld [vmem:[%s226 + $0x104] sm:$0xf]
        %v581 = vld [vmem:[%s226 + $0x108] sm:$0xf]
        %v582 = vld [vmem:[%s226 + $0x10c] sm:$0xf]
        %v583 = vld [vmem:[%s226 + $0x110] sm:$0xf]
        %v584 = vld [vmem:[%s226 + $0x114] sm:$0x1]
        %v585 = vld [vmem:[%s226 + $0x118] sm:$0xf]
        %v586 = vld [vmem:[%s226 + $0x11c] sm:$0xf]
        %v587 = vld [vmem:[%s226 + $0x120] sm:$0xf]
        %v588 = vld [vmem:[%s226 + $0x124] sm:$0xf]
        %v589 = vld [vmem:[%s226 + $0x128] sm:$0x1]
        %v590 = vld [vmem:[%s226 + $0x12c] sm:$0xf]
        %v591 = vld [vmem:[%s226 + $0x130] sm:$0xf]
        %v592 = vld [vmem:[%s226 + $0x134] sm:$0xf]
        %v593 = vld [vmem:[%s226 + $0x138] sm:$0xf]
        %v594 = vld [vmem:[%s226 + $0x13c] sm:$0x1]
        %vm595 = vsmask.f32 3328
        %vm596 = vsmask.f32 7440
        %vm597 = vmor %vm595, %vm596
        %v599 = vshrl.u32 %v515, 16
        %v601 = vrot.slane %v599, 4
        %v602 = vshll.u32 %v515, 16
        %v604 = vrot.slane %v602, 5
        %v605 = vor.u32 %v601, %v604
        %v606 = vrot.slane %v605, 4
        %v608 = vshll.u32 %v516, 16
        %v610 = vrot.slane %v608, 5
        %v611 = vsel %vm597, %v606, %v610
        %v612 = vshrl.u32 %v516, 16
        %v614 = vrot.slane %v612, 4
        %v615 = vor.u32 %v614, %v610
        %v616 = vrot.slane %v615, 4
        %v618 = vshll.u32 %v517, 16
        %v620 = vrot.slane %v618, 5
        %v621 = vsel %vm597, %v616, %v620
        %v622 = vshrl.u32 %v517, 16
        %v624 = vrot.slane %v622, 4
        %v625 = vor.u32 %v624, %v620
        %v626 = vrot.slane %v625, 4
        %v628 = vshll.u32 %v518, 16
        %v630 = vrot.slane %v628, 5
        %v631 = vsel %vm597, %v626, %v630
        %v632 = vshrl.u32 %v518, 16
        %v634 = vrot.slane %v632, 4
        %v635 = vor.u32 %v634, %v630
        %v636 = vrot.slane %v635, 4
        %v638 = vshll.u32 %v519, 16
        %v640 = vrot.slane %v638, 5
        %v641 = vsel %vm597, %v636, %v640
        %v643 = vshrl.u32 %v520, 16
        %v645 = vrot.slane %v643, 4
        %v646 = vshll.u32 %v520, 16
        %v648 = vrot.slane %v646, 5
        %v649 = vor.u32 %v645, %v648
        %v650 = vrot.slane %v649, 4
        %v652 = vshll.u32 %v521, 16
        %v654 = vrot.slane %v652, 5
        %v655 = vsel %vm597, %v650, %v654
        %v656 = vshrl.u32 %v521, 16
        %v658 = vrot.slane %v656, 4
        %v659 = vor.u32 %v658, %v654
        %v660 = vrot.slane %v659, 4
        %v662 = vshll.u32 %v522, 16
        %v664 = vrot.slane %v662, 5
        %v665 = vsel %vm597, %v660, %v664
        %v666 = vshrl.u32 %v522, 16
        %v668 = vrot.slane %v666, 4
        %v669 = vor.u32 %v668, %v664
        %v670 = vrot.slane %v669, 4
        %v672 = vshll.u32 %v523, 16
        %v674 = vrot.slane %v672, 5
        %v675 = vsel %vm597, %v670, %v674
        %v676 = vshrl.u32 %v523, 16
        %v678 = vrot.slane %v676, 4
        %v679 = vor.u32 %v678, %v674
        %v680 = vrot.slane %v679, 4
        %v682 = vshll.u32 %v524, 16
        %v684 = vrot.slane %v682, 5
        %v685 = vsel %vm597, %v680, %v684
        %v687 = vshrl.u32 %v525, 16
        %v689 = vrot.slane %v687, 4
        %v690 = vshll.u32 %v525, 16
        %v692 = vrot.slane %v690, 5
        %v693 = vor.u32 %v689, %v692
        %v694 = vrot.slane %v693, 4
        %v696 = vshll.u32 %v526, 16
        %v698 = vrot.slane %v696, 5
        %v699 = vsel %vm597, %v694, %v698
        %v700 = vshrl.u32 %v526, 16
        %v702 = vrot.slane %v700, 4
        %v703 = vor.u32 %v702, %v698
        %v704 = vrot.slane %v703, 4
        %v706 = vshll.u32 %v527, 16
        %v708 = vrot.slane %v706, 5
        %v709 = vsel %vm597, %v704, %v708
        %v710 = vshrl.u32 %v527, 16
        %v712 = vrot.slane %v710, 4
        %v713 = vor.u32 %v712, %v708
        %v714 = vrot.slane %v713, 4
        %v716 = vshll.u32 %v528, 16
        %v718 = vrot.slane %v716, 5
        %v719 = vsel %vm597, %v714, %v718
        %v720 = vshrl.u32 %v528, 16
        %v722 = vrot.slane %v720, 4
        %v723 = vor.u32 %v722, %v718
        %v724 = vrot.slane %v723, 4
        %v726 = vshll.u32 %v529, 16
        %v728 = vrot.slane %v726, 5
        %v729 = vsel %vm597, %v724, %v728
        %v731 = vshrl.u32 %v530, 16
        %v733 = vrot.slane %v731, 4
        %v734 = vshll.u32 %v530, 16
        %v736 = vrot.slane %v734, 5
        %v737 = vor.u32 %v733, %v736
        %v738 = vrot.slane %v737, 4
        %v740 = vshll.u32 %v531, 16
        %v742 = vrot.slane %v740, 5
        %v743 = vsel %vm597, %v738, %v742
        %v744 = vshrl.u32 %v531, 16
        %v746 = vrot.slane %v744, 4
        %v747 = vor.u32 %v746, %v742
        %v748 = vrot.slane %v747, 4
        %v750 = vshll.u32 %v532, 16
        %v752 = vrot.slane %v750, 5
        %v753 = vsel %vm597, %v748, %v752
        %v754 = vshrl.u32 %v532, 16
        %v756 = vrot.slane %v754, 4
        %v757 = vor.u32 %v756, %v752
        %v758 = vrot.slane %v757, 4
        %v760 = vshll.u32 %v533, 16
        %v762 = vrot.slane %v760, 5
        %v763 = vsel %vm597, %v758, %v762
        %v764 = vshrl.u32 %v533, 16
        %v766 = vrot.slane %v764, 4
        %v767 = vor.u32 %v766, %v762
        %v768 = vrot.slane %v767, 4
        %v770 = vshll.u32 %v534, 16
        %v772 = vrot.slane %v770, 5
        %v773 = vsel %vm597, %v768, %v772
        %v775 = vshrl.u32 %v535, 16
        %v777 = vrot.slane %v775, 4
        %v778 = vshll.u32 %v535, 16
        %v780 = vrot.slane %v778, 5
        %v781 = vor.u32 %v777, %v780
        %v782 = vrot.slane %v781, 4
        %v784 = vshll.u32 %v536, 16
        %v786 = vrot.slane %v784, 5
        %v787 = vsel %vm597, %v782, %v786
        %v788 = vshrl.u32 %v536, 16
        %v790 = vrot.slane %v788, 4
        %v791 = vor.u32 %v790, %v786
        %v792 = vrot.slane %v791, 4
        %v794 = vshll.u32 %v537, 16
        %v796 = vrot.slane %v794, 5
        %v797 = vsel %vm597, %v792, %v796
        %v798 = vshrl.u32 %v537, 16
        %v800 = vrot.slane %v798, 4
        %v801 = vor.u32 %v800, %v796
        %v802 = vrot.slane %v801, 4
        %v804 = vshll.u32 %v538, 16
        %v806 = vrot.slane %v804, 5
        %v807 = vsel %vm597, %v802, %v806
        %v808 = vshrl.u32 %v538, 16
        %v810 = vrot.slane %v808, 4
        %v811 = vor.u32 %v810, %v806
        %v812 = vrot.slane %v811, 4
        %v814 = vshll.u32 %v539, 16
        %v816 = vrot.slane %v814, 5
        %v817 = vsel %vm597, %v812, %v816
        %v819 = vshrl.u32 %v540, 16
        %v821 = vrot.slane %v819, 4
        %v822 = vshll.u32 %v540, 16
        %v824 = vrot.slane %v822, 5
        %v825 = vor.u32 %v821, %v824
        %v826 = vrot.slane %v825, 4
        %v828 = vshll.u32 %v541, 16
        %v830 = vrot.slane %v828, 5
        %v831 = vsel %vm597, %v826, %v830
        %v832 = vshrl.u32 %v541, 16
        %v834 = vrot.slane %v832, 4
        %v835 = vor.u32 %v834, %v830
        %v836 = vrot.slane %v835, 4
        %v838 = vshll.u32 %v542, 16
        %v840 = vrot.slane %v838, 5
        %v841 = vsel %vm597, %v836, %v840
        %v842 = vshrl.u32 %v542, 16
        %v844 = vrot.slane %v842, 4
        %v845 = vor.u32 %v844, %v840
        %v846 = vrot.slane %v845, 4
        %v848 = vshll.u32 %v543, 16
        %v850 = vrot.slane %v848, 5
        %v851 = vsel %vm597, %v846, %v850
        %v852 = vshrl.u32 %v543, 16
        %v854 = vrot.slane %v852, 4
        %v855 = vor.u32 %v854, %v850
        %v856 = vrot.slane %v855, 4
        %v858 = vshll.u32 %v544, 16
        %v860 = vrot.slane %v858, 5
        %v861 = vsel %vm597, %v856, %v860
        %v863 = vshrl.u32 %v545, 16
        %v865 = vrot.slane %v863, 4
        %v866 = vshll.u32 %v545, 16
        %v868 = vrot.slane %v866, 5
        %v869 = vor.u32 %v865, %v868
        %v870 = vrot.slane %v869, 4
        %v872 = vshll.u32 %v546, 16
        %v874 = vrot.slane %v872, 5
        %v875 = vsel %vm597, %v870, %v874
        %v876 = vshrl.u32 %v546, 16
        %v878 = vrot.slane %v876, 4
        %v879 = vor.u32 %v878, %v874
        %v880 = vrot.slane %v879, 4
        %v882 = vshll.u32 %v547, 16
        %v884 = vrot.slane %v882, 5
        %v885 = vsel %vm597, %v880, %v884
        %v886 = vshrl.u32 %v547, 16
        %v888 = vrot.slane %v886, 4
        %v889 = vor.u32 %v888, %v884
        %v890 = vrot.slane %v889, 4
        %v892 = vshll.u32 %v548, 16
        %v894 = vrot.slane %v892, 5
        %v895 = vsel %vm597, %v890, %v894
        %v896 = vshrl.u32 %v548, 16
        %v898 = vrot.slane %v896, 4
        %v899 = vor.u32 %v898, %v894
        %v900 = vrot.slane %v899, 4
        %v902 = vshll.u32 %v549, 16
        %v904 = vrot.slane %v902, 5
        %v905 = vsel %vm597, %v900, %v904
        %v907 = vshrl.u32 %v550, 16
        %v909 = vrot.slane %v907, 4
        %v910 = vshll.u32 %v550, 16
        %v912 = vrot.slane %v910, 5
        %v913 = vor.u32 %v909, %v912
        %v914 = vrot.slane %v913, 4
        %v916 = vshll.u32 %v551, 16
        %v918 = vrot.slane %v916, 5
        %v919 = vsel %vm597, %v914, %v918
        %v920 = vshrl.u32 %v551, 16
        %v922 = vrot.slane %v920, 4
        %v923 = vor.u32 %v922, %v918
        %v924 = vrot.slane %v923, 4
        %v926 = vshll.u32 %v552, 16
        %v928 = vrot.slane %v926, 5
        %v929 = vsel %vm597, %v924, %v928
        %v930 = vshrl.u32 %v552, 16
        %v932 = vrot.slane %v930, 4
        %v933 = vor.u32 %v932, %v928
        %v934 = vrot.slane %v933, 4
        %v936 = vshll.u32 %v553, 16
        %v938 = vrot.slane %v936, 5
        %v939 = vsel %vm597, %v934, %v938
        %v940 = vshrl.u32 %v553, 16
        %v942 = vrot.slane %v940, 4
        %v943 = vor.u32 %v942, %v938
        %v944 = vrot.slane %v943, 4
        %v946 = vshll.u32 %v554, 16
        %v948 = vrot.slane %v946, 5
        %v949 = vsel %vm597, %v944, %v948
        %v951 = vshrl.u32 %v555, 16
        %v953 = vrot.slane %v951, 4
        %v954 = vshll.u32 %v555, 16
        %v956 = vrot.slane %v954, 5
        %v957 = vor.u32 %v953, %v956
        %v958 = vrot.slane %v957, 4
        %v960 = vshll.u32 %v556, 16
        %v962 = vrot.slane %v960, 5
        %v963 = vsel %vm597, %v958, %v962
        %v964 = vshrl.u32 %v556, 16
        %v966 = vrot.slane %v964, 4
        %v967 = vor.u32 %v966, %v962
        %v968 = vrot.slane %v967, 4
        %v970 = vshll.u32 %v557, 16
        %v972 = vrot.slane %v970, 5
        %v973 = vsel %vm597, %v968, %v972
        %v974 = vshrl.u32 %v557, 16
        %v976 = vrot.slane %v974, 4
        %v977 = vor.u32 %v976, %v972
        %v978 = vrot.slane %v977, 4
        %v980 = vshll.u32 %v558, 16
        %v982 = vrot.slane %v980, 5
        %v983 = vsel %vm597, %v978, %v982
        %v984 = vshrl.u32 %v558, 16
        %v986 = vrot.slane %v984, 4
        %v987 = vor.u32 %v986, %v982
        %v988 = vrot.slane %v987, 4
        %v990 = vshll.u32 %v559, 16
        %v992 = vrot.slane %v990, 5
        %v993 = vsel %vm597, %v988, %v992
        %v995 = vshrl.u32 %v560, 16
        %v997 = vrot.slane %v995, 4
        %v998 = vshll.u32 %v560, 16
        %v1000 = vrot.slane %v998, 5
        %v1001 = vor.u32 %v997, %v1000
        %v1002 = vrot.slane %v1001, 4
        %v1004 = vshll.u32 %v561, 16
        %v1006 = vrot.slane %v1004, 5
        %v1007 = vsel %vm597, %v1002, %v1006
        %v1008 = vshrl.u32 %v561, 16
        %v1010 = vrot.slane %v1008, 4
        %v1011 = vor.u32 %v1010, %v1006
        %v1012 = vrot.slane %v1011, 4
        %v1014 = vshll.u32 %v562, 16
        %v1016 = vrot.slane %v1014, 5
        %v1017 = vsel %vm597, %v1012, %v1016
        %v1018 = vshrl.u32 %v562, 16
        %v1020 = vrot.slane %v1018, 4
        %v1021 = vor.u32 %v1020, %v1016
        %v1022 = vrot.slane %v1021, 4
        %v1024 = vshll.u32 %v563, 16
        %v1026 = vrot.slane %v1024, 5
        %v1027 = vsel %vm597, %v1022, %v1026
        %v1028 = vshrl.u32 %v563, 16
        %v1030 = vrot.slane %v1028, 4
        %v1031 = vor.u32 %v1030, %v1026
        %v1032 = vrot.slane %v1031, 4
        %v1034 = vshll.u32 %v564, 16
        %v1036 = vrot.slane %v1034, 5
        %v1037 = vsel %vm597, %v1032, %v1036
        %v1039 = vshrl.u32 %v565, 16
        %v1041 = vrot.slane %v1039, 4
        %v1042 = vshll.u32 %v565, 16
        %v1044 = vrot.slane %v1042, 5
        %v1045 = vor.u32 %v1041, %v1044
        %v1046 = vrot.slane %v1045, 4
        %v1048 = vshll.u32 %v566, 16
        %v1050 = vrot.slane %v1048, 5
        %v1051 = vsel %vm597, %v1046, %v1050
        %v1052 = vshrl.u32 %v566, 16
        %v1054 = vrot.slane %v1052, 4
        %v1055 = vor.u32 %v1054, %v1050
        %v1056 = vrot.slane %v1055, 4
        %v1058 = vshll.u32 %v567, 16
        %v1060 = vrot.slane %v1058, 5
        %v1061 = vsel %vm597, %v1056, %v1060
        %v1062 = vshrl.u32 %v567, 16
        %v1064 = vrot.slane %v1062, 4
        %v1065 = vor.u32 %v1064, %v1060
        %v1066 = vrot.slane %v1065, 4
        %v1068 = vshll.u32 %v568, 16
        %v1070 = vrot.slane %v1068, 5
        %v1071 = vsel %vm597, %v1066, %v1070
        %v1072 = vshrl.u32 %v568, 16
        %v1074 = vrot.slane %v1072, 4
        %v1075 = vor.u32 %v1074, %v1070
        %v1076 = vrot.slane %v1075, 4
        %v1078 = vshll.u32 %v569, 16
        %v1080 = vrot.slane %v1078, 5
        %v1081 = vsel %vm597, %v1076, %v1080
        %v1083 = vshrl.u32 %v570, 16
        %v1085 = vrot.slane %v1083, 4
        %v1086 = vshll.u32 %v570, 16
        %v1088 = vrot.slane %v1086, 5
        %v1089 = vor.u32 %v1085, %v1088
        %v1090 = vrot.slane %v1089, 4
        %v1092 = vshll.u32 %v571, 16
        %v1094 = vrot.slane %v1092, 5
        %v1095 = vsel %vm597, %v1090, %v1094
        %v1096 = vshrl.u32 %v571, 16
        %v1098 = vrot.slane %v1096, 4
        %v1099 = vor.u32 %v1098, %v1094
        %v1100 = vrot.slane %v1099, 4
        %v1102 = vshll.u32 %v572, 16
        %v1104 = vrot.slane %v1102, 5
        %v1105 = vsel %vm597, %v1100, %v1104
        %v1106 = vshrl.u32 %v572, 16
        %v1108 = vrot.slane %v1106, 4
        %v1109 = vor.u32 %v1108, %v1104
        %v1110 = vrot.slane %v1109, 4
        %v1112 = vshll.u32 %v573, 16
        %v1114 = vrot.slane %v1112, 5
        %v1115 = vsel %vm597, %v1110, %v1114
        %v1116 = vshrl.u32 %v573, 16
        %v1118 = vrot.slane %v1116, 4
        %v1119 = vor.u32 %v1118, %v1114
        %v1120 = vrot.slane %v1119, 4
        %v1122 = vshll.u32 %v574, 16
        %v1124 = vrot.slane %v1122, 5
        %v1125 = vsel %vm597, %v1120, %v1124
        %v1127 = vshrl.u32 %v575, 16
        %v1129 = vrot.slane %v1127, 4
        %v1130 = vshll.u32 %v575, 16
        %v1132 = vrot.slane %v1130, 5
        %v1133 = vor.u32 %v1129, %v1132
        %v1134 = vrot.slane %v1133, 4
        %v1136 = vshll.u32 %v576, 16
        %v1138 = vrot.slane %v1136, 5
        %v1139 = vsel %vm597, %v1134, %v1138
        %v1140 = vshrl.u32 %v576, 16
        %v1142 = vrot.slane %v1140, 4
        %v1143 = vor.u32 %v1142, %v1138
        %v1144 = vrot.slane %v1143, 4
        %v1146 = vshll.u32 %v577, 16
        %v1148 = vrot.slane %v1146, 5
        %v1149 = vsel %vm597, %v1144, %v1148
        %v1150 = vshrl.u32 %v577, 16
        %v1152 = vrot.slane %v1150, 4
        %v1153 = vor.u32 %v1152, %v1148
        %v1154 = vrot.slane %v1153, 4
        %v1156 = vshll.u32 %v578, 16
        %v1158 = vrot.slane %v1156, 5
        %v1159 = vsel %vm597, %v1154, %v1158
        %v1160 = vshrl.u32 %v578, 16
        %v1162 = vrot.slane %v1160, 4
        %v1163 = vor.u32 %v1162, %v1158
        %v1164 = vrot.slane %v1163, 4
        %v1166 = vshll.u32 %v579, 16
        %v1168 = vrot.slane %v1166, 5
        %v1169 = vsel %vm597, %v1164, %v1168
        %v1171 = vshrl.u32 %v580, 16
        %v1173 = vrot.slane %v1171, 4
        %v1174 = vshll.u32 %v580, 16
        %v1176 = vrot.slane %v1174, 5
        %v1177 = vor.u32 %v1173, %v1176
        %v1178 = vrot.slane %v1177, 4
        %v1180 = vshll.u32 %v581, 16
        %v1182 = vrot.slane %v1180, 5
        %v1183 = vsel %vm597, %v1178, %v1182
        %v1184 = vshrl.u32 %v581, 16
        %v1186 = vrot.slane %v1184, 4
        %v1187 = vor.u32 %v1186, %v1182
        %v1188 = vrot.slane %v1187, 4
        %v1190 = vshll.u32 %v582, 16
        %v1192 = vrot.slane %v1190, 5
        %v1193 = vsel %vm597, %v1188, %v1192
        %v1194 = vshrl.u32 %v582, 16
        %v1196 = vrot.slane %v1194, 4
        %v1197 = vor.u32 %v1196, %v1192
        %v1198 = vrot.slane %v1197, 4
        %v1200 = vshll.u32 %v583, 16
        %v1202 = vrot.slane %v1200, 5
        %v1203 = vsel %vm597, %v1198, %v1202
        %v1204 = vshrl.u32 %v583, 16
        %v1206 = vrot.slane %v1204, 4
        %v1207 = vor.u32 %v1206, %v1202
        %v1208 = vrot.slane %v1207, 4
        %v1210 = vshll.u32 %v584, 16
        %v1212 = vrot.slane %v1210, 5
        %v1213 = vsel %vm597, %v1208, %v1212
        %v1215 = vshrl.u32 %v585, 16
        %v1217 = vrot.slane %v1215, 4
        %v1218 = vshll.u32 %v585, 16
        %v1220 = vrot.slane %v1218, 5
        %v1221 = vor.u32 %v1217, %v1220
        %v1222 = vrot.slane %v1221, 4
        %v1224 = vshll.u32 %v586, 16
        %v1226 = vrot.slane %v1224, 5
        %v1227 = vsel %vm597, %v1222, %v1226
        %v1228 = vshrl.u32 %v586, 16
        %v1230 = vrot.slane %v1228, 4
        %v1231 = vor.u32 %v1230, %v1226
        %v1232 = vrot.slane %v1231, 4
        %v1234 = vshll.u32 %v587, 16
        %v1236 = vrot.slane %v1234, 5
        %v1237 = vsel %vm597, %v1232, %v1236
        %v1238 = vshrl.u32 %v587, 16
        %v1240 = vrot.slane %v1238, 4
        %v1241 = vor.u32 %v1240, %v1236
        %v1242 = vrot.slane %v1241, 4
        %v1244 = vshll.u32 %v588, 16
        %v1246 = vrot.slane %v1244, 5
        %v1247 = vsel %vm597, %v1242, %v1246
        %v1248 = vshrl.u32 %v588, 16
        %v1250 = vrot.slane %v1248, 4
        %v1251 = vor.u32 %v1250, %v1246
        %v1252 = vrot.slane %v1251, 4
        %v1254 = vshll.u32 %v589, 16
        %v1256 = vrot.slane %v1254, 5
        %v1257 = vsel %vm597, %v1252, %v1256
        %v1259 = vshrl.u32 %v590, 16
        %v1261 = vrot.slane %v1259, 4
        %v1262 = vshll.u32 %v590, 16
        %v1264 = vrot.slane %v1262, 5
        %v1265 = vor.u32 %v1261, %v1264
        %v1266 = vrot.slane %v1265, 4
        %v1268 = vshll.u32 %v591, 16
        %v1270 = vrot.slane %v1268, 5
        %v1271 = vsel %vm597, %v1266, %v1270
        %v1272 = vshrl.u32 %v591, 16
        %v1274 = vrot.slane %v1272, 4
        %v1275 = vor.u32 %v1274, %v1270
        %v1276 = vrot.slane %v1275, 4
        %v1278 = vshll.u32 %v592, 16
        %v1280 = vrot.slane %v1278, 5
        %v1281 = vsel %vm597, %v1276, %v1280
        %v1282 = vshrl.u32 %v592, 16
        %v1284 = vrot.slane %v1282, 4
        %v1285 = vor.u32 %v1284, %v1280
        %v1286 = vrot.slane %v1285, 4
        %v1288 = vshll.u32 %v593, 16
        %v1290 = vrot.slane %v1288, 5
        %v1291 = vsel %vm597, %v1286, %v1290
        %v1292 = vshrl.u32 %v593, 16
        %v1294 = vrot.slane %v1292, 4
        %v1295 = vor.u32 %v1294, %v1290
        %v1296 = vrot.slane %v1295, 4
        %v1298 = vshll.u32 %v594, 16
        %v1300 = vrot.slane %v1298, 5
        %v1301 = vsel %vm597, %v1296, %v1300
        %v1302 = vunpack.c.l.b16 %v611
        %v1303 = vunpack.c.l.b16 %v621
        %v1304 = vunpack.c.l.b16 %v631
        %v1305 = vunpack.c.l.b16 %v641
        %v1306 = vunpack.c.l.b16 %v655
        %v1307 = vunpack.c.l.b16 %v665
        %v1308 = vunpack.c.l.b16 %v675
        %v1309 = vunpack.c.l.b16 %v685
        %v1310 = vunpack.c.l.b16 %v699
        %v1311 = vunpack.c.l.b16 %v709
        %v1312 = vunpack.c.l.b16 %v719
        %v1313 = vunpack.c.l.b16 %v729
        %v1314 = vunpack.c.l.b16 %v743
        %v1315 = vunpack.c.l.b16 %v753
        %v1316 = vunpack.c.l.b16 %v763
        %v1317 = vunpack.c.l.b16 %v773
        %v1318 = vunpack.c.l.b16 %v787
        %v1319 = vunpack.c.l.b16 %v797
        %v1320 = vunpack.c.l.b16 %v807
        %v1321 = vunpack.c.l.b16 %v817
        %v1322 = vunpack.c.l.b16 %v831
        %v1323 = vunpack.c.l.b16 %v841
        %v1324 = vunpack.c.l.b16 %v851
        %v1325 = vunpack.c.l.b16 %v861
        %v1326 = vunpack.c.l.b16 %v875
        %v1327 = vunpack.c.l.b16 %v885
        %v1328 = vunpack.c.l.b16 %v895
        %v1329 = vunpack.c.l.b16 %v905
        %v1330 = vunpack.c.l.b16 %v919
        %v1331 = vunpack.c.l.b16 %v929
        %v1332 = vunpack.c.l.b16 %v939
        %v1333 = vunpack.c.l.b16 %v949
        %v1334 = vunpack.c.l.b16 %v963
        %v1335 = vunpack.c.l.b16 %v973
        %v1336 = vunpack.c.l.b16 %v983
        %v1337 = vunpack.c.l.b16 %v993
        %v1338 = vunpack.c.l.b16 %v1007
        %v1339 = vunpack.c.l.b16 %v1017
        %v1340 = vunpack.c.l.b16 %v1027
        %v1341 = vunpack.c.l.b16 %v1037
        %v1342 = vunpack.c.l.b16 %v1051
        %v1343 = vunpack.c.l.b16 %v1061
        %v1344 = vunpack.c.l.b16 %v1071
        %v1345 = vunpack.c.l.b16 %v1081
        %v1346 = vunpack.c.l.b16 %v1095
        %v1347 = vunpack.c.l.b16 %v1105
        %v1348 = vunpack.c.l.b16 %v1115
        %v1349 = vunpack.c.l.b16 %v1125
        %v1350 = vunpack.c.l.b16 %v1139
        %v1351 = vunpack.c.l.b16 %v1149
        %v1352 = vunpack.c.l.b16 %v1159
        %v1353 = vunpack.c.l.b16 %v1169
        %v1354 = vunpack.c.l.b16 %v1183
        %v1355 = vunpack.c.l.b16 %v1193
        %v1356 = vunpack.c.l.b16 %v1203
        %v1357 = vunpack.c.l.b16 %v1213
        %v1358 = vunpack.c.l.b16 %v1227
        %v1359 = vunpack.c.l.b16 %v1237
        %v1360 = vunpack.c.l.b16 %v1247
        %v1361 = vunpack.c.l.b16 %v1257
        %v1362 = vunpack.c.l.b16 %v1271
        %v1363 = vunpack.c.l.b16 %v1281
        %v1364 = vunpack.c.l.b16 %v1291
        %v1365 = vunpack.c.l.b16 %v1301
        %v1366 = vpack.c.b16 %v1303, %v1302
        %v1367 = vpack.c.b16 %v1305, %v1304
        %v1368 = vpack.c.b16 %v1307, %v1306
        %v1369 = vpack.c.b16 %v1309, %v1308
        %v1370 = vpack.c.b16 %v1311, %v1310
        %v1371 = vpack.c.b16 %v1313, %v1312
        %v1372 = vpack.c.b16 %v1315, %v1314
        %v1373 = vpack.c.b16 %v1317, %v1316
        %v1374 = vpack.c.b16 %v1319, %v1318
        %v1375 = vpack.c.b16 %v1321, %v1320
        %v1376 = vpack.c.b16 %v1323, %v1322
        %v1377 = vpack.c.b16 %v1325, %v1324
        %v1378 = vpack.c.b16 %v1327, %v1326
        %v1379 = vpack.c.b16 %v1329, %v1328
        %v1380 = vpack.c.b16 %v1331, %v1330
        %v1381 = vpack.c.b16 %v1333, %v1332
        %v1382 = vpack.c.b16 %v1335, %v1334
        %v1383 = vpack.c.b16 %v1337, %v1336
        %v1384 = vpack.c.b16 %v1339, %v1338
        %v1385 = vpack.c.b16 %v1341, %v1340
        %v1386 = vpack.c.b16 %v1343, %v1342
        %v1387 = vpack.c.b16 %v1345, %v1344
        %v1388 = vpack.c.b16 %v1347, %v1346
        %v1389 = vpack.c.b16 %v1349, %v1348
        %v1390 = vpack.c.b16 %v1351, %v1350
        %v1391 = vpack.c.b16 %v1353, %v1352
        %v1392 = vpack.c.b16 %v1355, %v1354
        %v1393 = vpack.c.b16 %v1357, %v1356
        %v1394 = vpack.c.b16 %v1359, %v1358
        %v1395 = vpack.c.b16 %v1361, %v1360
        %v1396 = vpack.c.b16 %v1363, %v1362
        %v1397 = vpack.c.b16 %v1365, %v1364
        %1430 = vst [vmem:[#allocation2 + $0x8] sm:$0xff] %v1366
        %1431 = vst [vmem:[#allocation2 + $0x50] sm:$0xff] %v1367
        %1432 = vst [vmem:[#allocation2 + $0x98] sm:$0xff] %v1368
        %1433 = vst [vmem:[#allocation2 + $0xe0] sm:$0xff] %v1369
        %1434 = vst [vmem:[#allocation2 + $0x128] sm:$0xff] %v1370
        %1435 = vst [vmem:[#allocation2 + $0x170] sm:$0xff] %v1371
        %1436 = vst [vmem:[#allocation2 + $0x1b8] sm:$0xff] %v1372
        %1437 = vst [vmem:[#allocation2 + $0x200] sm:$0xff] %v1373
        %1438 = vst [vmem:[#allocation2 + $0x248] sm:$0xff] %v1374
        %1439 = vst [vmem:[#allocation2 + $0x290] sm:$0xff] %v1375
        %1440 = vst [vmem:[#allocation2 + $0x2d8] sm:$0xff] %v1376
        %1441 = vst [vmem:[#allocation2 + $0x320] sm:$0xff] %v1377
        %1442 = vst [vmem:[#allocation2 + $0x368] sm:$0xff] %v1378
        %1443 = vst [vmem:[#allocation2 + $0x3b0] sm:$0xff] %v1379
        %1444 = vst [vmem:[#allocation2 + $0x3f8] sm:$0xff] %v1380
        %1445 = vst [vmem:[#allocation2 + $0x440] sm:$0xff] %v1381
        %1446 = vst [vmem:[#allocation2 + $0x488] sm:$0xff] %v1382
        %1447 = vst [vmem:[#allocation2 + $0x4d0] sm:$0xff] %v1383
        %1448 = vst [vmem:[#allocation2 + $0x518] sm:$0xff] %v1384
        %1449 = vst [vmem:[#allocation2 + $0x560] sm:$0xff] %v1385
        %1450 = vst [vmem:[#allocation2 + $0x5a8] sm:$0xff] %v1386
        %1451 = vst [vmem:[#allocation2 + $0x5f0] sm:$0xff] %v1387
        %1452 = vst [vmem:[#allocation2 + $0x638] sm:$0xff] %v1388
        %1453 = vst [vmem:[#allocation2 + $0x680] sm:$0xff] %v1389
        %1454 = vst [vmem:[#allocation2 + $0x6c8] sm:$0xff] %v1390
        %1455 = vst [vmem:[#allocation2 + $0x710] sm:$0xff] %v1391
        %1456 = vst [vmem:[#allocation2 + $0x758] sm:$0xff] %v1392
        %1457 = vst [vmem:[#allocation2 + $0x7a0] sm:$0xff] %v1393
        %1458 = vst [vmem:[#allocation2 + $0x7e8] sm:$0xff] %v1394
        %1459 = vst [vmem:[#allocation2 + $0x830] sm:$0xff] %v1395
        %1460 = vst [vmem:[#allocation2 + $0x878] sm:$0xff] %v1396
        %1461 = vst [vmem:[#allocation2 + $0x8c0] sm:$0xff] %v1397
        %v1462 = vld [vmem:[%s226] sm:$0xe]
        %v1463 = vld [vmem:[%s226 + $0x4] sm:$0xf]
        %v1464 = vld [vmem:[%s226 + $0x8] sm:$0xf]
        %v1465 = vld [vmem:[%s226 + $0xc] sm:$0xf]
        %v1466 = vld [vmem:[%s226 + $0x10] sm:$0x1]
        %v1467 = vld [vmem:[%s226 + $0x14] sm:$0xe]
        %v1468 = vld [vmem:[%s226 + $0x18] sm:$0xf]
        %v1469 = vld [vmem:[%s226 + $0x1c] sm:$0xf]
        %v1470 = vld [vmem:[%s226 + $0x20] sm:$0xf]
        %v1471 = vld [vmem:[%s226 + $0x24] sm:$0x1]
        %v1472 = vld [vmem:[%s226 + $0x28] sm:$0xe]
        %v1473 = vld [vmem:[%s226 + $0x2c] sm:$0xf]
        %v1474 = vld [vmem:[%s226 + $0x30] sm:$0xf]
        %v1475 = vld [vmem:[%s226 + $0x34] sm:$0xf]
        %v1476 = vld [vmem:[%s226 + $0x38] sm:$0x1]
        %v1477 = vld [vmem:[%s226 + $0x3c] sm:$0xe]
        %v1478 = vld [vmem:[%s226 + $0x40] sm:$0xf]
        %v1479 = vld [vmem:[%s226 + $0x44] sm:$0xf]
        %v1480 = vld [vmem:[%s226 + $0x48] sm:$0xf]
        %v1481 = vld [vmem:[%s226 + $0x4c] sm:$0x1]
        %v1482 = vld [vmem:[%s226 + $0x50] sm:$0xe]
        %v1483 = vld [vmem:[%s226 + $0x54] sm:$0xf]
        %v1484 = vld [vmem:[%s226 + $0x58] sm:$0xf]
        %v1485 = vld [vmem:[%s226 + $0x5c] sm:$0xf]
        %v1486 = vld [vmem:[%s226 + $0x60] sm:$0x1]
        %v1487 = vld [vmem:[%s226 + $0x64] sm:$0xe]
        %v1488 = vld [vmem:[%s226 + $0x68] sm:$0xf]
        %v1489 = vld [vmem:[%s226 + $0x6c] sm:$0xf]
        %v1490 = vld [vmem:[%s226 + $0x70] sm:$0xf]
        %v1491 = vld [vmem:[%s226 + $0x74] sm:$0x1]
        %v1492 = vld [vmem:[%s226 + $0x78] sm:$0xe]
        %v1493 = vld [vmem:[%s226 + $0x7c] sm:$0xf]
        %v1494 = vld [vmem:[%s226 + $0x80] sm:$0xf]
        %v1495 = vld [vmem:[%s226 + $0x84] sm:$0xf]
        %v1496 = vld [vmem:[%s226 + $0x88] sm:$0x1]
        %v1497 = vld [vmem:[%s226 + $0x8c] sm:$0xe]
        %v1498 = vld [vmem:[%s226 + $0x90] sm:$0xf]
        %v1499 = vld [vmem:[%s226 + $0x94] sm:$0xf]
        %v1500 = vld [vmem:[%s226 + $0x98] sm:$0xf]
        %v1501 = vld [vmem:[%s226 + $0x9c] sm:$0x1]
        %v1502 = vld [vmem:[%s226 + $0xa0] sm:$0xe]
        %v1503 = vld [vmem:[%s226 + $0xa4] sm:$0xf]
        %v1504 = vld [vmem:[%s226 + $0xa8] sm:$0xf]
        %v1505 = vld [vmem:[%s226 + $0xac] sm:$0xf]
        %v1506 = vld [vmem:[%s226 + $0xb0] sm:$0x1]
        %v1507 = vld [vmem:[%s226 + $0xb4] sm:$0xe]
        %v1508 = vld [vmem:[%s226 + $0xb8] sm:$0xf]
        %v1509 = vld [vmem:[%s226 + $0xbc] sm:$0xf]
        %v1510 = vld [vmem:[%s226 + $0xc0] sm:$0xf]
        %v1511 = vld [vmem:[%s226 + $0xc4] sm:$0x1]
        %v1512 = vld [vmem:[%s226 + $0xc8] sm:$0xe]
        %v1513 = vld [vmem:[%s226 + $0xcc] sm:$0xf]
        %v1514 = vld [vmem:[%s226 + $0xd0] sm:$0xf]
        %v1515 = vld [vmem:[%s226 + $0xd4] sm:$0xf]
        %v1516 = vld [vmem:[%s226 + $0xd8] sm:$0x1]
        %v1517 = vld [vmem:[%s226 + $0xdc] sm:$0xe]
        %v1518 = vld [vmem:[%s226 + $0xe0] sm:$0xf]
        %v1519 = vld [vmem:[%s226 + $0xe4] sm:$0xf]
        %v1520 = vld [vmem:[%s226 + $0xe8] sm:$0xf]
        %v1521 = vld [vmem:[%s226 + $0xec] sm:$0x1]
        %v1522 = vld [vmem:[%s226 + $0xf0] sm:$0xe]
        %v1523 = vld [vmem:[%s226 + $0xf4] sm:$0xf]
        %v1524 = vld [vmem:[%s226 + $0xf8] sm:$0xf]
        %v1525 = vld [vmem:[%s226 + $0xfc] sm:$0xf]
        %v1526 = vld [vmem:[%s226 + $0x100] sm:$0x1]
        %v1527 = vld [vmem:[%s226 + $0x104] sm:$0xe]
        %v1528 = vld [vmem:[%s226 + $0x108] sm:$0xf]
        %v1529 = vld [vmem:[%s226 + $0x10c] sm:$0xf]
        %v1530 = vld [vmem:[%s226 + $0x110] sm:$0xf]
        %v1531 = vld [vmem:[%s226 + $0x114] sm:$0x1]
        %v1532 = vld [vmem:[%s226 + $0x118] sm:$0xe]
        %v1533 = vld [vmem:[%s226 + $0x11c] sm:$0xf]
        %v1534 = vld [vmem:[%s226 + $0x120] sm:$0xf]
        %v1535 = vld [vmem:[%s226 + $0x124] sm:$0xf]
        %v1536 = vld [vmem:[%s226 + $0x128] sm:$0x1]
        %v1537 = vld [vmem:[%s226 + $0x12c] sm:$0xe]
        %v1538 = vld [vmem:[%s226 + $0x130] sm:$0xf]
        %v1539 = vld [vmem:[%s226 + $0x134] sm:$0xf]
        %v1540 = vld [vmem:[%s226 + $0x138] sm:$0xf]
        %v1541 = vld [vmem:[%s226 + $0x13c] sm:$0x1]
        %vm1622 = vcmask 1042432
        %vm1623 = vcmask 1046532
        %vm1624 = vmor %vm1622, %vm1623
        %v1625 = vrot.slane %v1462, 5
        %v1626 = vrot.slane %v1625, 4
        %v1627 = vrot.slane %v1463, 5
        %v1628 = vsel %vm1624, %v1626, %v1627
        %v1629 = vrot.slane %v1627, 4
        %v1630 = vrot.slane %v1464, 5
        %v1631 = vsel %vm1624, %v1629, %v1630
        %v1632 = vrot.slane %v1630, 4
        %v1633 = vrot.slane %v1465, 5
        %v1634 = vsel %vm1624, %v1632, %v1633
        %v1635 = vrot.slane %v1633, 4
        %v1636 = vrot.slane %v1466, 5
        %v1637 = vsel %vm1624, %v1635, %v1636
        %v1638 = vrot.slane %v1467, 5
        %v1639 = vrot.slane %v1638, 4
        %v1640 = vrot.slane %v1468, 5
        %v1641 = vsel %vm1624, %v1639, %v1640
        %v1642 = vrot.slane %v1640, 4
        %v1643 = vrot.slane %v1469, 5
        %v1644 = vsel %vm1624, %v1642, %v1643
        %v1645 = vrot.slane %v1643, 4
        %v1646 = vrot.slane %v1470, 5
        %v1647 = vsel %vm1624, %v1645, %v1646
        %v1648 = vrot.slane %v1646, 4
        %v1649 = vrot.slane %v1471, 5
        %v1650 = vsel %vm1624, %v1648, %v1649
        %v1651 = vrot.slane %v1472, 5
        %v1652 = vrot.slane %v1651, 4
        %v1653 = vrot.slane %v1473, 5
        %v1654 = vsel %vm1624, %v1652, %v1653
        %v1655 = vrot.slane %v1653, 4
        %v1656 = vrot.slane %v1474, 5
        %v1657 = vsel %vm1624, %v1655, %v1656
        %v1658 = vrot.slane %v1656, 4
        %v1659 = vrot.slane %v1475, 5
        %v1660 = vsel %vm1624, %v1658, %v1659
        %v1661 = vrot.slane %v1659, 4
        %v1662 = vrot.slane %v1476, 5
        %v1663 = vsel %vm1624, %v1661, %v1662
        %v1664 = vrot.slane %v1477, 5
        %v1665 = vrot.slane %v1664, 4
        %v1666 = vrot.slane %v1478, 5
        %v1667 = vsel %vm1624, %v1665, %v1666
        %v1668 = vrot.slane %v1666, 4
        %v1669 = vrot.slane %v1479, 5
        %v1670 = vsel %vm1624, %v1668, %v1669
        %v1671 = vrot.slane %v1669, 4
        %v1672 = vrot.slane %v1480, 5
        %v1673 = vsel %vm1624, %v1671, %v1672
        %v1674 = vrot.slane %v1672, 4
        %v1675 = vrot.slane %v1481, 5
        %v1676 = vsel %vm1624, %v1674, %v1675
        %v1677 = vrot.slane %v1482, 5
        %v1678 = vrot.slane %v1677, 4
        %v1679 = vrot.slane %v1483, 5
        %v1680 = vsel %vm1624, %v1678, %v1679
        %v1681 = vrot.slane %v1679, 4
        %v1682 = vrot.slane %v1484, 5
        %v1683 = vsel %vm1624, %v1681, %v1682
        %v1684 = vrot.slane %v1682, 4
        %v1685 = vrot.slane %v1485, 5
        %v1686 = vsel %vm1624, %v1684, %v1685
        %v1687 = vrot.slane %v1685, 4
        %v1688 = vrot.slane %v1486, 5
        %v1689 = vsel %vm1624, %v1687, %v1688
        %v1690 = vrot.slane %v1487, 5
        %v1691 = vrot.slane %v1690, 4
        %v1692 = vrot.slane %v1488, 5
        %v1693 = vsel %vm1624, %v1691, %v1692
        %v1694 = vrot.slane %v1692, 4
        %v1695 = vrot.slane %v1489, 5
        %v1696 = vsel %vm1624, %v1694, %v1695
        %v1697 = vrot.slane %v1695, 4
        %v1698 = vrot.slane %v1490, 5
        %v1699 = vsel %vm1624, %v1697, %v1698
        %v1700 = vrot.slane %v1698, 4
        %v1701 = vrot.slane %v1491, 5
        %v1702 = vsel %vm1624, %v1700, %v1701
        %v1703 = vrot.slane %v1492, 5
        %v1704 = vrot.slane %v1703, 4
        %v1705 = vrot.slane %v1493, 5
        %v1706 = vsel %vm1624, %v1704, %v1705
        %v1707 = vrot.slane %v1705, 4
        %v1708 = vrot.slane %v1494, 5
        %v1709 = vsel %vm1624, %v1707, %v1708
        %v1710 = vrot.slane %v1708, 4
        %v1711 = vrot.slane %v1495, 5
        %v1712 = vsel %vm1624, %v1710, %v1711
        %v1713 = vrot.slane %v1711, 4
        %v1714 = vrot.slane %v1496, 5
        %v1715 = vsel %vm1624, %v1713, %v1714
        %v1716 = vrot.slane %v1497, 5
        %v1717 = vrot.slane %v1716, 4
        %v1718 = vrot.slane %v1498, 5
        %v1719 = vsel %vm1624, %v1717, %v1718
        %v1720 = vrot.slane %v1718, 4
        %v1721 = vrot.slane %v1499, 5
        %v1722 = vsel %vm1624, %v1720, %v1721
        %v1723 = vrot.slane %v1721, 4
        %v1724 = vrot.slane %v1500, 5
        %v1725 = vsel %vm1624, %v1723, %v1724
        %v1726 = vrot.slane %v1724, 4
        %v1727 = vrot.slane %v1501, 5
        %v1728 = vsel %vm1624, %v1726, %v1727
        %v1729 = vrot.slane %v1502, 5
        %v1730 = vrot.slane %v1729, 4
        %v1731 = vrot.slane %v1503, 5
        %v1732 = vsel %vm1624, %v1730, %v1731
        %v1733 = vrot.slane %v1731, 4
        %v1734 = vrot.slane %v1504, 5
        %v1735 = vsel %vm1624, %v1733, %v1734
        %v1736 = vrot.slane %v1734, 4
        %v1737 = vrot.slane %v1505, 5
        %v1738 = vsel %vm1624, %v1736, %v1737
        %v1739 = vrot.slane %v1737, 4
        %v1740 = vrot.slane %v1506, 5
        %v1741 = vsel %vm1624, %v1739, %v1740
        %v1742 = vrot.slane %v1507, 5
        %v1743 = vrot.slane %v1742, 4
        %v1744 = vrot.slane %v1508, 5
        %v1745 = vsel %vm1624, %v1743, %v1744
        %v1746 = vrot.slane %v1744, 4
        %v1747 = vrot.slane %v1509, 5
        %v1748 = vsel %vm1624, %v1746, %v1747
        %v1749 = vrot.slane %v1747, 4
        %v1750 = vrot.slane %v1510, 5
        %v1751 = vsel %vm1624, %v1749, %v1750
        %v1752 = vrot.slane %v1750, 4
        %v1753 = vrot.slane %v1511, 5
        %v1754 = vsel %vm1624, %v1752, %v1753
        %v1755 = vrot.slane %v1512, 5
        %v1756 = vrot.slane %v1755, 4
        %v1757 = vrot.slane %v1513, 5
        %v1758 = vsel %vm1624, %v1756, %v1757
        %v1759 = vrot.slane %v1757, 4
        %v1760 = vrot.slane %v1514, 5
        %v1761 = vsel %vm1624, %v1759, %v1760
        %v1762 = vrot.slane %v1760, 4
        %v1763 = vrot.slane %v1515, 5
        %v1764 = vsel %vm1624, %v1762, %v1763
        %v1765 = vrot.slane %v1763, 4
        %v1766 = vrot.slane %v1516, 5
        %v1767 = vsel %vm1624, %v1765, %v1766
        %v1768 = vrot.slane %v1517, 5
        %v1769 = vrot.slane %v1768, 4
        %v1770 = vrot.slane %v1518, 5
        %v1771 = vsel %vm1624, %v1769, %v1770
        %v1772 = vrot.slane %v1770, 4
        %v1773 = vrot.slane %v1519, 5
        %v1774 = vsel %vm1624, %v1772, %v1773
        %v1775 = vrot.slane %v1773, 4
        %v1776 = vrot.slane %v1520, 5
        %v1777 = vsel %vm1624, %v1775, %v1776
        %v1778 = vrot.slane %v1776, 4
        %v1779 = vrot.slane %v1521, 5
        %v1780 = vsel %vm1624, %v1778, %v1779
        %v1781 = vrot.slane %v1522, 5
        %v1782 = vrot.slane %v1781, 4
        %v1783 = vrot.slane %v1523, 5
        %v1784 = vsel %vm1624, %v1782, %v1783
        %v1785 = vrot.slane %v1783, 4
        %v1786 = vrot.slane %v1524, 5
        %v1787 = vsel %vm1624, %v1785, %v1786
        %v1788 = vrot.slane %v1786, 4
        %v1789 = vrot.slane %v1525, 5
        %v1790 = vsel %vm1624, %v1788, %v1789
        %v1791 = vrot.slane %v1789, 4
        %v1792 = vrot.slane %v1526, 5
        %v1793 = vsel %vm1624, %v1791, %v1792
        %v1794 = vrot.slane %v1527, 5
        %v1795 = vrot.slane %v1794, 4
        %v1796 = vrot.slane %v1528, 5
        %v1797 = vsel %vm1624, %v1795, %v1796
        %v1798 = vrot.slane %v1796, 4
        %v1799 = vrot.slane %v1529, 5
        %v1800 = vsel %vm1624, %v1798, %v1799
        %v1801 = vrot.slane %v1799, 4
        %v1802 = vrot.slane %v1530, 5
        %v1803 = vsel %vm1624, %v1801, %v1802
        %v1804 = vrot.slane %v1802, 4
        %v1805 = vrot.slane %v1531, 5
        %v1806 = vsel %vm1624, %v1804, %v1805
        %v1807 = vrot.slane %v1532, 5
        %v1808 = vrot.slane %v1807, 4
        %v1809 = vrot.slane %v1533, 5
        %v1810 = vsel %vm1624, %v1808, %v1809
        %v1811 = vrot.slane %v1809, 4
        %v1812 = vrot.slane %v1534, 5
        %v1813 = vsel %vm1624, %v1811, %v1812
        %v1814 = vrot.slane %v1812, 4
        %v1815 = vrot.slane %v1535, 5
        %v1816 = vsel %vm1624, %v1814, %v1815
        %v1817 = vrot.slane %v1815, 4
        %v1818 = vrot.slane %v1536, 5
        %v1819 = vsel %vm1624, %v1817, %v1818
        %v1820 = vrot.slane %v1537, 5
        %v1821 = vrot.slane %v1820, 4
        %v1822 = vrot.slane %v1538, 5
        %v1823 = vsel %vm1624, %v1821, %v1822
        %v1824 = vrot.slane %v1822, 4
        %v1825 = vrot.slane %v1539, 5
        %v1826 = vsel %vm1624, %v1824, %v1825
        %v1827 = vrot.slane %v1825, 4
        %v1828 = vrot.slane %v1540, 5
        %v1829 = vsel %vm1624, %v1827, %v1828
        %v1830 = vrot.slane %v1828, 4
        %v1831 = vrot.slane %v1541, 5
        %v1832 = vsel %vm1624, %v1830, %v1831
        %v1833 = vunpack.c.l.b16 %v1628
        %v1834 = vunpack.c.l.b16 %v1631
        %v1835 = vunpack.c.l.b16 %v1634
        %v1836 = vunpack.c.l.b16 %v1637
        %v1837 = vunpack.c.l.b16 %v1641
        %v1838 = vunpack.c.l.b16 %v1644
        %v1839 = vunpack.c.l.b16 %v1647
        %v1840 = vunpack.c.l.b16 %v1650
        %v1841 = vunpack.c.l.b16 %v1654
        %v1842 = vunpack.c.l.b16 %v1657
        %v1843 = vunpack.c.l.b16 %v1660
        %v1844 = vunpack.c.l.b16 %v1663
        %v1845 = vunpack.c.l.b16 %v1667
        %v1846 = vunpack.c.l.b16 %v1670
        %v1847 = vunpack.c.l.b16 %v1673
        %v1848 = vunpack.c.l.b16 %v1676
        %v1849 = vunpack.c.l.b16 %v1680
        %v1850 = vunpack.c.l.b16 %v1683
        %v1851 = vunpack.c.l.b16 %v1686
        %v1852 = vunpack.c.l.b16 %v1689
        %v1853 = vunpack.c.l.b16 %v1693
        %v1854 = vunpack.c.l.b16 %v1696
        %v1855 = vunpack.c.l.b16 %v1699
        %v1856 = vunpack.c.l.b16 %v1702
        %v1857 = vunpack.c.l.b16 %v1706
        %v1858 = vunpack.c.l.b16 %v1709
        %v1859 = vunpack.c.l.b16 %v1712
        %v1860 = vunpack.c.l.b16 %v1715
        %v1861 = vunpack.c.l.b16 %v1719
        %v1862 = vunpack.c.l.b16 %v1722
        %v1863 = vunpack.c.l.b16 %v1725
        %v1864 = vunpack.c.l.b16 %v1728
        %v1865 = vunpack.c.l.b16 %v1732
        %v1866 = vunpack.c.l.b16 %v1735
        %v1867 = vunpack.c.l.b16 %v1738
        %v1868 = vunpack.c.l.b16 %v1741
        %v1869 = vunpack.c.l.b16 %v1745
        %v1870 = vunpack.c.l.b16 %v1748
        %v1871 = vunpack.c.l.b16 %v1751
        %v1872 = vunpack.c.l.b16 %v1754
        %v1873 = vunpack.c.l.b16 %v1758
        %v1874 = vunpack.c.l.b16 %v1761
        %v1875 = vunpack.c.l.b16 %v1764
        %v1876 = vunpack.c.l.b16 %v1767
        %v1877 = vunpack.c.l.b16 %v1771
        %v1878 = vunpack.c.l.b16 %v1774
        %v1879 = vunpack.c.l.b16 %v1777
        %v1880 = vunpack.c.l.b16 %v1780
        %v1881 = vunpack.c.l.b16 %v1784
        %v1882 = vunpack.c.l.b16 %v1787
        %v1883 = vunpack.c.l.b16 %v1790
        %v1884 = vunpack.c.l.b16 %v1793
        %v1885 = vunpack.c.l.b16 %v1797
        %v1886 = vunpack.c.l.b16 %v1800
        %v1887 = vunpack.c.l.b16 %v1803
        %v1888 = vunpack.c.l.b16 %v1806
        %v1889 = vunpack.c.l.b16 %v1810
        %v1890 = vunpack.c.l.b16 %v1813
        %v1891 = vunpack.c.l.b16 %v1816
        %v1892 = vunpack.c.l.b16 %v1819
        %v1893 = vunpack.c.l.b16 %v1823
        %v1894 = vunpack.c.l.b16 %v1826
        %v1895 = vunpack.c.l.b16 %v1829
        %v1896 = vunpack.c.l.b16 %v1832
        %v1897 = vpack.c.b16 %v1834, %v1833
        %v1898 = vpack.c.b16 %v1836, %v1835
        %v1899 = vpack.c.b16 %v1838, %v1837
        %v1900 = vpack.c.b16 %v1840, %v1839
        %v1901 = vpack.c.b16 %v1842, %v1841
        %v1902 = vpack.c.b16 %v1844, %v1843
        %v1903 = vpack.c.b16 %v1846, %v1845
        %v1904 = vpack.c.b16 %v1848, %v1847
        %v1905 = vpack.c.b16 %v1850, %v1849
        %v1906 = vpack.c.b16 %v1852, %v1851
        %v1907 = vpack.c.b16 %v1854, %v1853
        %v1908 = vpack.c.b16 %v1856, %v1855
        %v1909 = vpack.c.b16 %v1858, %v1857
        %v1910 = vpack.c.b16 %v1860, %v1859
        %v1911 = vpack.c.b16 %v1862, %v1861
        %v1912 = vpack.c.b16 %v1864, %v1863
        %v1913 = vpack.c.b16 %v1866, %v1865
        %v1914 = vpack.c.b16 %v1868, %v1867
        %v1915 = vpack.c.b16 %v1870, %v1869
        %v1916 = vpack.c.b16 %v1872, %v1871
        %v1917 = vpack.c.b16 %v1874, %v1873
        %v1918 = vpack.c.b16 %v1876, %v1875
        %v1919 = vpack.c.b16 %v1878, %v1877
        %v1920 = vpack.c.b16 %v1880, %v1879
        %v1921 = vpack.c.b16 %v1882, %v1881
        %v1922 = vpack.c.b16 %v1884, %v1883
        %v1923 = vpack.c.b16 %v1886, %v1885
        %v1924 = vpack.c.b16 %v1888, %v1887
        %v1925 = vpack.c.b16 %v1890, %v1889
        %v1926 = vpack.c.b16 %v1892, %v1891
        %v1927 = vpack.c.b16 %v1894, %v1893
        %v1928 = vpack.c.b16 %v1896, %v1895
        %1961 = vst [vmem:[#allocation2 + $0x10] sm:$0xff] %v1897
        %1962 = vst [vmem:[#allocation2 + $0x58] sm:$0xff] %v1898
        %1963 = vst [vmem:[#allocation2 + $0xa0] sm:$0xff] %v1899
        %1964 = vst [vmem:[#allocation2 + $0xe8] sm:$0xff] %v1900
        %1965 = vst [vmem:[#allocation2 + $0x130] sm:$0xff] %v1901
        %1966 = vst [vmem:[#allocation2 + $0x178] sm:$0xff] %v1902
        %1967 = vst [vmem:[#allocation2 + $0x1c0] sm:$0xff] %v1903
        %1968 = vst [vmem:[#allocation2 + $0x208] sm:$0xff] %v1904
        %1969 = vst [vmem:[#allocation2 + $0x250] sm:$0xff] %v1905
        %1970 = vst [vmem:[#allocation2 + $0x298] sm:$0xff] %v1906
        %1971 = vst [vmem:[#allocation2 + $0x2e0] sm:$0xff] %v1907
        %1972 = vst [vmem:[#allocation2 + $0x328] sm:$0xff] %v1908
        %1973 = vst [vmem:[#allocation2 + $0x370] sm:$0xff] %v1909
        %1974 = vst [vmem:[#allocation2 + $0x3b8] sm:$0xff] %v1910
        %1975 = vst [vmem:[#allocation2 + $0x400] sm:$0xff] %v1911
        %1976 = vst [vmem:[#allocation2 + $0x448] sm:$0xff] %v1912
        %1977 = vst [vmem:[#allocation2 + $0x490] sm:$0xff] %v1913
        %1978 = vst [vmem:[#allocation2 + $0x4d8] sm:$0xff] %v1914
        %1979 = vst [vmem:[#allocation2 + $0x520] sm:$0xff] %v1915
        %1980 = vst [vmem:[#allocation2 + $0x568] sm:$0xff] %v1916
        %1981 = vst [vmem:[#allocation2 + $0x5b0] sm:$0xff] %v1917
        %1982 = vst [vmem:[#allocation2 + $0x5f8] sm:$0xff] %v1918
        %1983 = vst [vmem:[#allocation2 + $0x640] sm:$0xff] %v1919
        %1984 = vst [vmem:[#allocation2 + $0x688] sm:$0xff] %v1920
        %1985 = vst [vmem:[#allocation2 + $0x6d0] sm:$0xff] %v1921
        %1986 = vst [vmem:[#allocation2 + $0x718] sm:$0xff] %v1922
        %1987 = vst [vmem:[#allocation2 + $0x760] sm:$0xff] %v1923
        %1988 = vst [vmem:[#allocation2 + $0x7a8] sm:$0xff] %v1924
        %1989 = vst [vmem:[#allocation2 + $0x7f0] sm:$0xff] %v1925
        %1990 = vst [vmem:[#allocation2 + $0x838] sm:$0xff] %v1926
        %1991 = vst [vmem:[#allocation2 + $0x880] sm:$0xff] %v1927
        %1992 = vst [vmem:[#allocation2 + $0x8c8] sm:$0xff] %v1928
        %s1993 = sadd.s32 %s223, 1
        %s1994 = smul.u32 %s1993, 5
        %s1995 = smul.addr %s1994, 4
        %s1996 = scalar_lea.vmem %s211, %s1995
        %v1997 = vld [vmem:[%s1996] sm:$0xf]
        %v1998 = vld [vmem:[%s1996 + $0x4] sm:$0xf]
        %v1999 = vld [vmem:[%s1996 + $0x8] sm:$0xf]
        %v2000 = vld [vmem:[%s1996 + $0xc] sm:$0xf]
        %v2001 = vld [vmem:[%s1996 + $0x14] sm:$0xf]
        %v2002 = vld [vmem:[%s1996 + $0x18] sm:$0xf]
        %v2003 = vld [vmem:[%s1996 + $0x1c] sm:$0xf]
        %v2004 = vld [vmem:[%s1996 + $0x20] sm:$0xf]
        %v2005 = vld [vmem:[%s1996 + $0x28] sm:$0xf]
        %v2006 = vld [vmem:[%s1996 + $0x2c] sm:$0xf]
        %v2007 = vld [vmem:[%s1996 + $0x30] sm:$0xf]
        %v2008 = vld [vmem:[%s1996 + $0x34] sm:$0xf]
        %v2009 = vld [vmem:[%s1996 + $0x3c] sm:$0xf]
        %v2010 = vld [vmem:[%s1996 + $0x40] sm:$0xf]
        %v2011 = vld [vmem:[%s1996 + $0x44] sm:$0xf]
        %v2012 = vld [vmem:[%s1996 + $0x48] sm:$0xf]
        %v2013 = vld [vmem:[%s1996 + $0x50] sm:$0xf]
        %v2014 = vld [vmem:[%s1996 + $0x54] sm:$0xf]
        %v2015 = vld [vmem:[%s1996 + $0x58] sm:$0xf]
        %v2016 = vld [vmem:[%s1996 + $0x5c] sm:$0xf]
        %v2017 = vld [vmem:[%s1996 + $0x64] sm:$0xf]
        %v2018 = vld [vmem:[%s1996 + $0x68] sm:$0xf]
        %v2019 = vld [vmem:[%s1996 + $0x6c] sm:$0xf]
        %v2020 = vld [vmem:[%s1996 + $0x70] sm:$0xf]
        %v2021 = vld [vmem:[%s1996 + $0x78] sm:$0xf]
        %v2022 = vld [vmem:[%s1996 + $0x7c] sm:$0xf]
        %v2023 = vld [vmem:[%s1996 + $0x80] sm:$0xf]
        %v2024 = vld [vmem:[%s1996 + $0x84] sm:$0xf]
        %v2025 = vld [vmem:[%s1996 + $0x8c] sm:$0xf]
        %v2026 = vld [vmem:[%s1996 + $0x90] sm:$0xf]
        %v2027 = vld [vmem:[%s1996 + $0x94] sm:$0xf]
        %v2028 = vld [vmem:[%s1996 + $0x98] sm:$0xf]
        %v2029 = vld [vmem:[%s1996 + $0xa0] sm:$0xf]
        %v2030 = vld [vmem:[%s1996 + $0xa4] sm:$0xf]
        %v2031 = vld [vmem:[%s1996 + $0xa8] sm:$0xf]
        %v2032 = vld [vmem:[%s1996 + $0xac] sm:$0xf]
        %v2033 = vld [vmem:[%s1996 + $0xb4] sm:$0xf]
        %v2034 = vld [vmem:[%s1996 + $0xb8] sm:$0xf]
        %v2035 = vld [vmem:[%s1996 + $0xbc] sm:$0xf]
        %v2036 = vld [vmem:[%s1996 + $0xc0] sm:$0xf]
        %v2037 = vld [vmem:[%s1996 + $0xc8] sm:$0xf]
        %v2038 = vld [vmem:[%s1996 + $0xcc] sm:$0xf]
        %v2039 = vld [vmem:[%s1996 + $0xd0] sm:$0xf]
        %v2040 = vld [vmem:[%s1996 + $0xd4] sm:$0xf]
        %v2041 = vld [vmem:[%s1996 + $0xdc] sm:$0xf]
        %v2042 = vld [vmem:[%s1996 + $0xe0] sm:$0xf]
        %v2043 = vld [vmem:[%s1996 + $0xe4] sm:$0xf]
        %v2044 = vld [vmem:[%s1996 + $0xe8] sm:$0xf]
        %v2045 = vld [vmem:[%s1996 + $0xf0] sm:$0xf]
        %v2046 = vld [vmem:[%s1996 + $0xf4] sm:$0xf]
        %v2047 = vld [vmem:[%s1996 + $0xf8] sm:$0xf]
        %v2048 = vld [vmem:[%s1996 + $0xfc] sm:$0xf]
        %v2049 = vld [vmem:[%s1996 + $0x104] sm:$0xf]
        %v2050 = vld [vmem:[%s1996 + $0x108] sm:$0xf]
        %v2051 = vld [vmem:[%s1996 + $0x10c] sm:$0xf]
        %v2052 = vld [vmem:[%s1996 + $0x110] sm:$0xf]
        %v2053 = vld [vmem:[%s1996 + $0x118] sm:$0xf]
        %v2054 = vld [vmem:[%s1996 + $0x11c] sm:$0xf]
        %v2055 = vld [vmem:[%s1996 + $0x120] sm:$0xf]
        %v2056 = vld [vmem:[%s1996 + $0x124] sm:$0xf]
        %v2057 = vld [vmem:[%s1996 + $0x12c] sm:$0xf]
        %v2058 = vld [vmem:[%s1996 + $0x130] sm:$0xf]
        %v2059 = vld [vmem:[%s1996 + $0x134] sm:$0xf]
        %v2060 = vld [vmem:[%s1996 + $0x138] sm:$0xf]
        %v2125 = vunpack.c.l.b16 %v1997
        %v2126 = vunpack.c.l.b16 %v1998
        %v2127 = vunpack.c.l.b16 %v1999
        %v2128 = vunpack.c.l.b16 %v2000
        %v2129 = vunpack.c.l.b16 %v2001
        %v2130 = vunpack.c.l.b16 %v2002
        %v2131 = vunpack.c.l.b16 %v2003
        %v2132 = vunpack.c.l.b16 %v2004
        %v2133 = vunpack.c.l.b16 %v2005
        %v2134 = vunpack.c.l.b16 %v2006
        %v2135 = vunpack.c.l.b16 %v2007
        %v2136 = vunpack.c.l.b16 %v2008
        %v2137 = vunpack.c.l.b16 %v2009
        %v2138 = vunpack.c.l.b16 %v2010
        %v2139 = vunpack.c.l.b16 %v2011
        %v2140 = vunpack.c.l.b16 %v2012
        %v2141 = vunpack.c.l.b16 %v2013
        %v2142 = vunpack.c.l.b16 %v2014
        %v2143 = vunpack.c.l.b16 %v2015
        %v2144 = vunpack.c.l.b16 %v2016
        %v2145 = vunpack.c.l.b16 %v2017
        %v2146 = vunpack.c.l.b16 %v2018
        %v2147 = vunpack.c.l.b16 %v2019
        %v2148 = vunpack.c.l.b16 %v2020
        %v2149 = vunpack.c.l.b16 %v2021
        %v2150 = vunpack.c.l.b16 %v2022
        %v2151 = vunpack.c.l.b16 %v2023
        %v2152 = vunpack.c.l.b16 %v2024
        %v2153 = vunpack.c.l.b16 %v2025
        %v2154 = vunpack.c.l.b16 %v2026
        %v2155 = vunpack.c.l.b16 %v2027
        %v2156 = vunpack.c.l.b16 %v2028
        %v2157 = vunpack.c.l.b16 %v2029
        %v2158 = vunpack.c.l.b16 %v2030
        %v2159 = vunpack.c.l.b16 %v2031
        %v2160 = vunpack.c.l.b16 %v2032
        %v2161 = vunpack.c.l.b16 %v2033
        %v2162 = vunpack.c.l.b16 %v2034
        %v2163 = vunpack.c.l.b16 %v2035
        %v2164 = vunpack.c.l.b16 %v2036
        %v2165 = vunpack.c.l.b16 %v2037
        %v2166 = vunpack.c.l.b16 %v2038
        %v2167 = vunpack.c.l.b16 %v2039
        %v2168 = vunpack.c.l.b16 %v2040
        %v2169 = vunpack.c.l.b16 %v2041
        %v2170 = vunpack.c.l.b16 %v2042
        %v2171 = vunpack.c.l.b16 %v2043
        %v2172 = vunpack.c.l.b16 %v2044
        %v2173 = vunpack.c.l.b16 %v2045
        %v2174 = vunpack.c.l.b16 %v2046
        %v2175 = vunpack.c.l.b16 %v2047
        %v2176 = vunpack.c.l.b16 %v2048
        %v2177 = vunpack.c.l.b16 %v2049
        %v2178 = vunpack.c.l.b16 %v2050
        %v2179 = vunpack.c.l.b16 %v2051
        %v2180 = vunpack.c.l.b16 %v2052
        %v2181 = vunpack.c.l.b16 %v2053
        %v2182 = vunpack.c.l.b16 %v2054
        %v2183 = vunpack.c.l.b16 %v2055
        %v2184 = vunpack.c.l.b16 %v2056
        %v2185 = vunpack.c.l.b16 %v2057
        %v2186 = vunpack.c.l.b16 %v2058
        %v2187 = vunpack.c.l.b16 %v2059
        %v2188 = vunpack.c.l.b16 %v2060
        %v2189 = vpack.c.b16 %v2126, %v2125
        %v2190 = vpack.c.b16 %v2128, %v2127
        %v2191 = vpack.c.b16 %v2130, %v2129
        %v2192 = vpack.c.b16 %v2132, %v2131
        %v2193 = vpack.c.b16 %v2134, %v2133
        %v2194 = vpack.c.b16 %v2136, %v2135
        %v2195 = vpack.c.b16 %v2138, %v2137
        %v2196 = vpack.c.b16 %v2140, %v2139
        %v2197 = vpack.c.b16 %v2142, %v2141
        %v2198 = vpack.c.b16 %v2144, %v2143
        %v2199 = vpack.c.b16 %v2146, %v2145
        %v2200 = vpack.c.b16 %v2148, %v2147
        %v2201 = vpack.c.b16 %v2150, %v2149
        %v2202 = vpack.c.b16 %v2152, %v2151
        %v2203 = vpack.c.b16 %v2154, %v2153
        %v2204 = vpack.c.b16 %v2156, %v2155
        %v2205 = vpack.c.b16 %v2158, %v2157
        %v2206 = vpack.c.b16 %v2160, %v2159
        %v2207 = vpack.c.b16 %v2162, %v2161
        %v2208 = vpack.c.b16 %v2164, %v2163
        %v2209 = vpack.c.b16 %v2166, %v2165
        %v2210 = vpack.c.b16 %v2168, %v2167
        %v2211 = vpack.c.b16 %v2170, %v2169
        %v2212 = vpack.c.b16 %v2172, %v2171
        %v2213 = vpack.c.b16 %v2174, %v2173
        %v2214 = vpack.c.b16 %v2176, %v2175
        %v2215 = vpack.c.b16 %v2178, %v2177
        %v2216 = vpack.c.b16 %v2180, %v2179
        %v2217 = vpack.c.b16 %v2182, %v2181
        %v2218 = vpack.c.b16 %v2184, %v2183
        %v2219 = vpack.c.b16 %v2186, %v2185
        %v2220 = vpack.c.b16 %v2188, %v2187
        %2253 = vst [vmem:[#allocation2 + $0x18] sm:$0xff] %v2189
        %2254 = vst [vmem:[#allocation2 + $0x60] sm:$0xff] %v2190
        %2255 = vst [vmem:[#allocation2 + $0xa8] sm:$0xff] %v2191
        %2256 = vst [vmem:[#allocation2 + $0xf0] sm:$0xff] %v2192
        %2257 = vst [vmem:[#allocation2 + $0x138] sm:$0xff] %v2193
        %2258 = vst [vmem:[#allocation2 + $0x180] sm:$0xff] %v2194
        %2259 = vst [vmem:[#allocation2 + $0x1c8] sm:$0xff] %v2195
        %2260 = vst [vmem:[#allocation2 + $0x210] sm:$0xff] %v2196
        %2261 = vst [vmem:[#allocation2 + $0x258] sm:$0xff] %v2197
        %2262 = vst [vmem:[#allocation2 + $0x2a0] sm:$0xff] %v2198
        %2263 = vst [vmem:[#allocation2 + $0x2e8] sm:$0xff] %v2199
        %2264 = vst [vmem:[#allocation2 + $0x330] sm:$0xff] %v2200
        %2265 = vst [vmem:[#allocation2 + $0x378] sm:$0xff] %v2201
        %2266 = vst [vmem:[#allocation2 + $0x3c0] sm:$0xff] %v2202
        %2267 = vst [vmem:[#allocation2 + $0x408] sm:$0xff] %v2203
        %2268 = vst [vmem:[#allocation2 + $0x450] sm:$0xff] %v2204
        %2269 = vst [vmem:[#allocation2 + $0x498] sm:$0xff] %v2205
        %2270 = vst [vmem:[#allocation2 + $0x4e0] sm:$0xff] %v2206
        %2271 = vst [vmem:[#allocation2 + $0x528] sm:$0xff] %v2207
        %2272 = vst [vmem:[#allocation2 + $0x570] sm:$0xff] %v2208
        %2273 = vst [vmem:[#allocation2 + $0x5b8] sm:$0xff] %v2209
        %2274 = vst [vmem:[#allocation2 + $0x600] sm:$0xff] %v2210
        %2275 = vst [vmem:[#allocation2 + $0x648] sm:$0xff] %v2211
        %2276 = vst [vmem:[#allocation2 + $0x690] sm:$0xff] %v2212
        %2277 = vst [vmem:[#allocation2 + $0x6d8] sm:$0xff] %v2213
        %2278 = vst [vmem:[#allocation2 + $0x720] sm:$0xff] %v2214
        %2279 = vst [vmem:[#allocation2 + $0x768] sm:$0xff] %v2215
        %2280 = vst [vmem:[#allocation2 + $0x7b0] sm:$0xff] %v2216
        %2281 = vst [vmem:[#allocation2 + $0x7f8] sm:$0xff] %v2217
        %2282 = vst [vmem:[#allocation2 + $0x840] sm:$0xff] %v2218
        %2283 = vst [vmem:[#allocation2 + $0x888] sm:$0xff] %v2219
        %2284 = vst [vmem:[#allocation2 + $0x8d0] sm:$0xff] %v2220
        %v2285 = vld [vmem:[%s1996] sm:$0xf]
        %v2286 = vld [vmem:[%s1996 + $0x4] sm:$0xf]
        %v2287 = vld [vmem:[%s1996 + $0x8] sm:$0xf]
        %v2288 = vld [vmem:[%s1996 + $0xc] sm:$0xf]
        %v2289 = vld [vmem:[%s1996 + $0x10] sm:$0x1]
        %v2290 = vld [vmem:[%s1996 + $0x14] sm:$0xf]
        %v2291 = vld [vmem:[%s1996 + $0x18] sm:$0xf]
        %v2292 = vld [vmem:[%s1996 + $0x1c] sm:$0xf]
        %v2293 = vld [vmem:[%s1996 + $0x20] sm:$0xf]
        %v2294 = vld [vmem:[%s1996 + $0x24] sm:$0x1]
        %v2295 = vld [vmem:[%s1996 + $0x28] sm:$0xf]
        %v2296 = vld [vmem:[%s1996 + $0x2c] sm:$0xf]
        %v2297 = vld [vmem:[%s1996 + $0x30] sm:$0xf]
        %v2298 = vld [vmem:[%s1996 + $0x34] sm:$0xf]
        %v2299 = vld [vmem:[%s1996 + $0x38] sm:$0x1]
        %v2300 = vld [vmem:[%s1996 + $0x3c] sm:$0xf]
        %v2301 = vld [vmem:[%s1996 + $0x40] sm:$0xf]
        %v2302 = vld [vmem:[%s1996 + $0x44] sm:$0xf]
        %v2303 = vld [vmem:[%s1996 + $0x48] sm:$0xf]
        %v2304 = vld [vmem:[%s1996 + $0x4c] sm:$0x1]
        %v2305 = vld [vmem:[%s1996 + $0x50] sm:$0xf]
        %v2306 = vld [vmem:[%s1996 + $0x54] sm:$0xf]
        %v2307 = vld [vmem:[%s1996 + $0x58] sm:$0xf]
        %v2308 = vld [vmem:[%s1996 + $0x5c] sm:$0xf]
        %v2309 = vld [vmem:[%s1996 + $0x60] sm:$0x1]
        %v2310 = vld [vmem:[%s1996 + $0x64] sm:$0xf]
        %v2311 = vld [vmem:[%s1996 + $0x68] sm:$0xf]
        %v2312 = vld [vmem:[%s1996 + $0x6c] sm:$0xf]
        %v2313 = vld [vmem:[%s1996 + $0x70] sm:$0xf]
        %v2314 = vld [vmem:[%s1996 + $0x74] sm:$0x1]
        %v2315 = vld [vmem:[%s1996 + $0x78] sm:$0xf]
        %v2316 = vld [vmem:[%s1996 + $0x7c] sm:$0xf]
        %v2317 = vld [vmem:[%s1996 + $0x80] sm:$0xf]
        %v2318 = vld [vmem:[%s1996 + $0x84] sm:$0xf]
        %v2319 = vld [vmem:[%s1996 + $0x88] sm:$0x1]
        %v2320 = vld [vmem:[%s1996 + $0x8c] sm:$0xf]
        %v2321 = vld [vmem:[%s1996 + $0x90] sm:$0xf]
        %v2322 = vld [vmem:[%s1996 + $0x94] sm:$0xf]
        %v2323 = vld [vmem:[%s1996 + $0x98] sm:$0xf]
        %v2324 = vld [vmem:[%s1996 + $0x9c] sm:$0x1]
        %v2325 = vld [vmem:[%s1996 + $0xa0] sm:$0xf]
        %v2326 = vld [vmem:[%s1996 + $0xa4] sm:$0xf]
        %v2327 = vld [vmem:[%s1996 + $0xa8] sm:$0xf]
        %v2328 = vld [vmem:[%s1996 + $0xac] sm:$0xf]
        %v2329 = vld [vmem:[%s1996 + $0xb0] sm:$0x1]
        %v2330 = vld [vmem:[%s1996 + $0xb4] sm:$0xf]
        %v2331 = vld [vmem:[%s1996 + $0xb8] sm:$0xf]
        %v2332 = vld [vmem:[%s1996 + $0xbc] sm:$0xf]
        %v2333 = vld [vmem:[%s1996 + $0xc0] sm:$0xf]
        %v2334 = vld [vmem:[%s1996 + $0xc4] sm:$0x1]
        %v2335 = vld [vmem:[%s1996 + $0xc8] sm:$0xf]
        %v2336 = vld [vmem:[%s1996 + $0xcc] sm:$0xf]
        %v2337 = vld [vmem:[%s1996 + $0xd0] sm:$0xf]
        %v2338 = vld [vmem:[%s1996 + $0xd4] sm:$0xf]
        %v2339 = vld [vmem:[%s1996 + $0xd8] sm:$0x1]
        %v2340 = vld [vmem:[%s1996 + $0xdc] sm:$0xf]
        %v2341 = vld [vmem:[%s1996 + $0xe0] sm:$0xf]
        %v2342 = vld [vmem:[%s1996 + $0xe4] sm:$0xf]
        %v2343 = vld [vmem:[%s1996 + $0xe8] sm:$0xf]
        %v2344 = vld [vmem:[%s1996 + $0xec] sm:$0x1]
        %v2345 = vld [vmem:[%s1996 + $0xf0] sm:$0xf]
        %v2346 = vld [vmem:[%s1996 + $0xf4] sm:$0xf]
        %v2347 = vld [vmem:[%s1996 + $0xf8] sm:$0xf]
        %v2348 = vld [vmem:[%s1996 + $0xfc] sm:$0xf]
        %v2349 = vld [vmem:[%s1996 + $0x100] sm:$0x1]
        %v2350 = vld [vmem:[%s1996 + $0x104] sm:$0xf]
        %v2351 = vld [vmem:[%s1996 + $0x108] sm:$0xf]
        %v2352 = vld [vmem:[%s1996 + $0x10c] sm:$0xf]
        %v2353 = vld [vmem:[%s1996 + $0x110] sm:$0xf]
        %v2354 = vld [vmem:[%s1996 + $0x114] sm:$0x1]
        %v2355 = vld [vmem:[%s1996 + $0x118] sm:$0xf]
        %v2356 = vld [vmem:[%s1996 + $0x11c] sm:$0xf]
        %v2357 = vld [vmem:[%s1996 + $0x120] sm:$0xf]
        %v2358 = vld [vmem:[%s1996 + $0x124] sm:$0xf]
        %v2359 = vld [vmem:[%s1996 + $0x128] sm:$0x1]
        %v2360 = vld [vmem:[%s1996 + $0x12c] sm:$0xf]
        %v2361 = vld [vmem:[%s1996 + $0x130] sm:$0xf]
        %v2362 = vld [vmem:[%s1996 + $0x134] sm:$0xf]
        %v2363 = vld [vmem:[%s1996 + $0x138] sm:$0xf]
        %v2364 = vld [vmem:[%s1996 + $0x13c] sm:$0x1]
        %v2366 = vshrl.u32 %v2285, 16
        %v2368 = vrot.slane %v2366, 4
        %v2369 = vshll.u32 %v2285, 16
        %v2371 = vrot.slane %v2369, 5
        %v2372 = vor.u32 %v2368, %v2371
        %v2373 = vrot.slane %v2372, 4
        %v2375 = vshll.u32 %v2286, 16
        %v2377 = vrot.slane %v2375, 5
        %v2378 = vsel %vm597, %v2373, %v2377
        %v2379 = vshrl.u32 %v2286, 16
        %v2381 = vrot.slane %v2379, 4
        %v2382 = vor.u32 %v2381, %v2377
        %v2383 = vrot.slane %v2382, 4
        %v2385 = vshll.u32 %v2287, 16
        %v2387 = vrot.slane %v2385, 5
        %v2388 = vsel %vm597, %v2383, %v2387
        %v2389 = vshrl.u32 %v2287, 16
        %v2391 = vrot.slane %v2389, 4
        %v2392 = vor.u32 %v2391, %v2387
        %v2393 = vrot.slane %v2392, 4
        %v2395 = vshll.u32 %v2288, 16
        %v2397 = vrot.slane %v2395, 5
        %v2398 = vsel %vm597, %v2393, %v2397
        %v2399 = vshrl.u32 %v2288, 16
        %v2401 = vrot.slane %v2399, 4
        %v2402 = vor.u32 %v2401, %v2397
        %v2403 = vrot.slane %v2402, 4
        %v2405 = vshll.u32 %v2289, 16
        %v2407 = vrot.slane %v2405, 5
        %v2408 = vsel %vm597, %v2403, %v2407
        %v2410 = vshrl.u32 %v2290, 16
        %v2412 = vrot.slane %v2410, 4
        %v2413 = vshll.u32 %v2290, 16
        %v2415 = vrot.slane %v2413, 5
        %v2416 = vor.u32 %v2412, %v2415
        %v2417 = vrot.slane %v2416, 4
        %v2419 = vshll.u32 %v2291, 16
        %v2421 = vrot.slane %v2419, 5
        %v2422 = vsel %vm597, %v2417, %v2421
        %v2423 = vshrl.u32 %v2291, 16
        %v2425 = vrot.slane %v2423, 4
        %v2426 = vor.u32 %v2425, %v2421
        %v2427 = vrot.slane %v2426, 4
        %v2429 = vshll.u32 %v2292, 16
        %v2431 = vrot.slane %v2429, 5
        %v2432 = vsel %vm597, %v2427, %v2431
        %v2433 = vshrl.u32 %v2292, 16
        %v2435 = vrot.slane %v2433, 4
        %v2436 = vor.u32 %v2435, %v2431
        %v2437 = vrot.slane %v2436, 4
        %v2439 = vshll.u32 %v2293, 16
        %v2441 = vrot.slane %v2439, 5
        %v2442 = vsel %vm597, %v2437, %v2441
        %v2443 = vshrl.u32 %v2293, 16
        %v2445 = vrot.slane %v2443, 4
        %v2446 = vor.u32 %v2445, %v2441
        %v2447 = vrot.slane %v2446, 4
        %v2449 = vshll.u32 %v2294, 16
        %v2451 = vrot.slane %v2449, 5
        %v2452 = vsel %vm597, %v2447, %v2451
        %v2454 = vshrl.u32 %v2295, 16
        %v2456 = vrot.slane %v2454, 4
        %v2457 = vshll.u32 %v2295, 16
        %v2459 = vrot.slane %v2457, 5
        %v2460 = vor.u32 %v2456, %v2459
        %v2461 = vrot.slane %v2460, 4
        %v2463 = vshll.u32 %v2296, 16
        %v2465 = vrot.slane %v2463, 5
        %v2466 = vsel %vm597, %v2461, %v2465
        %v2467 = vshrl.u32 %v2296, 16
        %v2469 = vrot.slane %v2467, 4
        %v2470 = vor.u32 %v2469, %v2465
        %v2471 = vrot.slane %v2470, 4
        %v2473 = vshll.u32 %v2297, 16
        %v2475 = vrot.slane %v2473, 5
        %v2476 = vsel %vm597, %v2471, %v2475
        %v2477 = vshrl.u32 %v2297, 16
        %v2479 = vrot.slane %v2477, 4
        %v2480 = vor.u32 %v2479, %v2475
        %v2481 = vrot.slane %v2480, 4
        %v2483 = vshll.u32 %v2298, 16
        %v2485 = vrot.slane %v2483, 5
        %v2486 = vsel %vm597, %v2481, %v2485
        %v2487 = vshrl.u32 %v2298, 16
        %v2489 = vrot.slane %v2487, 4
        %v2490 = vor.u32 %v2489, %v2485
        %v2491 = vrot.slane %v2490, 4
        %v2493 = vshll.u32 %v2299, 16
        %v2495 = vrot.slane %v2493, 5
        %v2496 = vsel %vm597, %v2491, %v2495
        %v2498 = vshrl.u32 %v2300, 16
        %v2500 = vrot.slane %v2498, 4
        %v2501 = vshll.u32 %v2300, 16
        %v2503 = vrot.slane %v2501, 5
        %v2504 = vor.u32 %v2500, %v2503
        %v2505 = vrot.slane %v2504, 4
        %v2507 = vshll.u32 %v2301, 16
        %v2509 = vrot.slane %v2507, 5
        %v2510 = vsel %vm597, %v2505, %v2509
        %v2511 = vshrl.u32 %v2301, 16
        %v2513 = vrot.slane %v2511, 4
        %v2514 = vor.u32 %v2513, %v2509
        %v2515 = vrot.slane %v2514, 4
        %v2517 = vshll.u32 %v2302, 16
        %v2519 = vrot.slane %v2517, 5
        %v2520 = vsel %vm597, %v2515, %v2519
        %v2521 = vshrl.u32 %v2302, 16
        %v2523 = vrot.slane %v2521, 4
        %v2524 = vor.u32 %v2523, %v2519
        %v2525 = vrot.slane %v2524, 4
        %v2527 = vshll.u32 %v2303, 16
        %v2529 = vrot.slane %v2527, 5
        %v2530 = vsel %vm597, %v2525, %v2529
        %v2531 = vshrl.u32 %v2303, 16
        %v2533 = vrot.slane %v2531, 4
        %v2534 = vor.u32 %v2533, %v2529
        %v2535 = vrot.slane %v2534, 4
        %v2537 = vshll.u32 %v2304, 16
        %v2539 = vrot.slane %v2537, 5
        %v2540 = vsel %vm597, %v2535, %v2539
        %v2542 = vshrl.u32 %v2305, 16
        %v2544 = vrot.slane %v2542, 4
        %v2545 = vshll.u32 %v2305, 16
        %v2547 = vrot.slane %v2545, 5
        %v2548 = vor.u32 %v2544, %v2547
        %v2549 = vrot.slane %v2548, 4
        %v2551 = vshll.u32 %v2306, 16
        %v2553 = vrot.slane %v2551, 5
        %v2554 = vsel %vm597, %v2549, %v2553
        %v2555 = vshrl.u32 %v2306, 16
        %v2557 = vrot.slane %v2555, 4
        %v2558 = vor.u32 %v2557, %v2553
        %v2559 = vrot.slane %v2558, 4
        %v2561 = vshll.u32 %v2307, 16
        %v2563 = vrot.slane %v2561, 5
        %v2564 = vsel %vm597, %v2559, %v2563
        %v2565 = vshrl.u32 %v2307, 16
        %v2567 = vrot.slane %v2565, 4
        %v2568 = vor.u32 %v2567, %v2563
        %v2569 = vrot.slane %v2568, 4
        %v2571 = vshll.u32 %v2308, 16
        %v2573 = vrot.slane %v2571, 5
        %v2574 = vsel %vm597, %v2569, %v2573
        %v2575 = vshrl.u32 %v2308, 16
        %v2577 = vrot.slane %v2575, 4
        %v2578 = vor.u32 %v2577, %v2573
        %v2579 = vrot.slane %v2578, 4
        %v2581 = vshll.u32 %v2309, 16
        %v2583 = vrot.slane %v2581, 5
        %v2584 = vsel %vm597, %v2579, %v2583
        %v2586 = vshrl.u32 %v2310, 16
        %v2588 = vrot.slane %v2586, 4
        %v2589 = vshll.u32 %v2310, 16
        %v2591 = vrot.slane %v2589, 5
        %v2592 = vor.u32 %v2588, %v2591
        %v2593 = vrot.slane %v2592, 4
        %v2595 = vshll.u32 %v2311, 16
        %v2597 = vrot.slane %v2595, 5
        %v2598 = vsel %vm597, %v2593, %v2597
        %v2599 = vshrl.u32 %v2311, 16
        %v2601 = vrot.slane %v2599, 4
        %v2602 = vor.u32 %v2601, %v2597
        %v2603 = vrot.slane %v2602, 4
        %v2605 = vshll.u32 %v2312, 16
        %v2607 = vrot.slane %v2605, 5
        %v2608 = vsel %vm597, %v2603, %v2607
        %v2609 = vshrl.u32 %v2312, 16
        %v2611 = vrot.slane %v2609, 4
        %v2612 = vor.u32 %v2611, %v2607
        %v2613 = vrot.slane %v2612, 4
        %v2615 = vshll.u32 %v2313, 16
        %v2617 = vrot.slane %v2615, 5
        %v2618 = vsel %vm597, %v2613, %v2617
        %v2619 = vshrl.u32 %v2313, 16
        %v2621 = vrot.slane %v2619, 4
        %v2622 = vor.u32 %v2621, %v2617
        %v2623 = vrot.slane %v2622, 4
        %v2625 = vshll.u32 %v2314, 16
        %v2627 = vrot.slane %v2625, 5
        %v2628 = vsel %vm597, %v2623, %v2627
        %v2630 = vshrl.u32 %v2315, 16
        %v2632 = vrot.slane %v2630, 4
        %v2633 = vshll.u32 %v2315, 16
        %v2635 = vrot.slane %v2633, 5
        %v2636 = vor.u32 %v2632, %v2635
        %v2637 = vrot.slane %v2636, 4
        %v2639 = vshll.u32 %v2316, 16
        %v2641 = vrot.slane %v2639, 5
        %v2642 = vsel %vm597, %v2637, %v2641
        %v2643 = vshrl.u32 %v2316, 16
        %v2645 = vrot.slane %v2643, 4
        %v2646 = vor.u32 %v2645, %v2641
        %v2647 = vrot.slane %v2646, 4
        %v2649 = vshll.u32 %v2317, 16
        %v2651 = vrot.slane %v2649, 5
        %v2652 = vsel %vm597, %v2647, %v2651
        %v2653 = vshrl.u32 %v2317, 16
        %v2655 = vrot.slane %v2653, 4
        %v2656 = vor.u32 %v2655, %v2651
        %v2657 = vrot.slane %v2656, 4
        %v2659 = vshll.u32 %v2318, 16
        %v2661 = vrot.slane %v2659, 5
        %v2662 = vsel %vm597, %v2657, %v2661
        %v2663 = vshrl.u32 %v2318, 16
        %v2665 = vrot.slane %v2663, 4
        %v2666 = vor.u32 %v2665, %v2661
        %v2667 = vrot.slane %v2666, 4
        %v2669 = vshll.u32 %v2319, 16
        %v2671 = vrot.slane %v2669, 5
        %v2672 = vsel %vm597, %v2667, %v2671
        %v2674 = vshrl.u32 %v2320, 16
        %v2676 = vrot.slane %v2674, 4
        %v2677 = vshll.u32 %v2320, 16
        %v2679 = vrot.slane %v2677, 5
        %v2680 = vor.u32 %v2676, %v2679
        %v2681 = vrot.slane %v2680, 4
        %v2683 = vshll.u32 %v2321, 16
        %v2685 = vrot.slane %v2683, 5
        %v2686 = vsel %vm597, %v2681, %v2685
        %v2687 = vshrl.u32 %v2321, 16
        %v2689 = vrot.slane %v2687, 4
        %v2690 = vor.u32 %v2689, %v2685
        %v2691 = vrot.slane %v2690, 4
        %v2693 = vshll.u32 %v2322, 16
        %v2695 = vrot.slane %v2693, 5
        %v2696 = vsel %vm597, %v2691, %v2695
        %v2697 = vshrl.u32 %v2322, 16
        %v2699 = vrot.slane %v2697, 4
        %v2700 = vor.u32 %v2699, %v2695
        %v2701 = vrot.slane %v2700, 4
        %v2703 = vshll.u32 %v2323, 16
        %v2705 = vrot.slane %v2703, 5
        %v2706 = vsel %vm597, %v2701, %v2705
        %v2707 = vshrl.u32 %v2323, 16
        %v2709 = vrot.slane %v2707, 4
        %v2710 = vor.u32 %v2709, %v2705
        %v2711 = vrot.slane %v2710, 4
        %v2713 = vshll.u32 %v2324, 16
        %v2715 = vrot.slane %v2713, 5
        %v2716 = vsel %vm597, %v2711, %v2715
        %v2718 = vshrl.u32 %v2325, 16
        %v2720 = vrot.slane %v2718, 4
        %v2721 = vshll.u32 %v2325, 16
        %v2723 = vrot.slane %v2721, 5
        %v2724 = vor.u32 %v2720, %v2723
        %v2725 = vrot.slane %v2724, 4
        %v2727 = vshll.u32 %v2326, 16
        %v2729 = vrot.slane %v2727, 5
        %v2730 = vsel %vm597, %v2725, %v2729
        %v2731 = vshrl.u32 %v2326, 16
        %v2733 = vrot.slane %v2731, 4
        %v2734 = vor.u32 %v2733, %v2729
        %v2735 = vrot.slane %v2734, 4
        %v2737 = vshll.u32 %v2327, 16
        %v2739 = vrot.slane %v2737, 5
        %v2740 = vsel %vm597, %v2735, %v2739
        %v2741 = vshrl.u32 %v2327, 16
        %v2743 = vrot.slane %v2741, 4
        %v2744 = vor.u32 %v2743, %v2739
        %v2745 = vrot.slane %v2744, 4
        %v2747 = vshll.u32 %v2328, 16
        %v2749 = vrot.slane %v2747, 5
        %v2750 = vsel %vm597, %v2745, %v2749
        %v2751 = vshrl.u32 %v2328, 16
        %v2753 = vrot.slane %v2751, 4
        %v2754 = vor.u32 %v2753, %v2749
        %v2755 = vrot.slane %v2754, 4
        %v2757 = vshll.u32 %v2329, 16
        %v2759 = vrot.slane %v2757, 5
        %v2760 = vsel %vm597, %v2755, %v2759
        %v2762 = vshrl.u32 %v2330, 16
        %v2764 = vrot.slane %v2762, 4
        %v2765 = vshll.u32 %v2330, 16
        %v2767 = vrot.slane %v2765, 5
        %v2768 = vor.u32 %v2764, %v2767
        %v2769 = vrot.slane %v2768, 4
        %v2771 = vshll.u32 %v2331, 16
        %v2773 = vrot.slane %v2771, 5
        %v2774 = vsel %vm597, %v2769, %v2773
        %v2775 = vshrl.u32 %v2331, 16
        %v2777 = vrot.slane %v2775, 4
        %v2778 = vor.u32 %v2777, %v2773
        %v2779 = vrot.slane %v2778, 4
        %v2781 = vshll.u32 %v2332, 16
        %v2783 = vrot.slane %v2781, 5
        %v2784 = vsel %vm597, %v2779, %v2783
        %v2785 = vshrl.u32 %v2332, 16
        %v2787 = vrot.slane %v2785, 4
        %v2788 = vor.u32 %v2787, %v2783
        %v2789 = vrot.slane %v2788, 4
        %v2791 = vshll.u32 %v2333, 16
        %v2793 = vrot.slane %v2791, 5
        %v2794 = vsel %vm597, %v2789, %v2793
        %v2795 = vshrl.u32 %v2333, 16
        %v2797 = vrot.slane %v2795, 4
        %v2798 = vor.u32 %v2797, %v2793
        %v2799 = vrot.slane %v2798, 4
        %v2801 = vshll.u32 %v2334, 16
        %v2803 = vrot.slane %v2801, 5
        %v2804 = vsel %vm597, %v2799, %v2803
        %v2806 = vshrl.u32 %v2335, 16
        %v2808 = vrot.slane %v2806, 4
        %v2809 = vshll.u32 %v2335, 16
        %v2811 = vrot.slane %v2809, 5
        %v2812 = vor.u32 %v2808, %v2811
        %v2813 = vrot.slane %v2812, 4
        %v2815 = vshll.u32 %v2336, 16
        %v2817 = vrot.slane %v2815, 5
        %v2818 = vsel %vm597, %v2813, %v2817
        %v2819 = vshrl.u32 %v2336, 16
        %v2821 = vrot.slane %v2819, 4
        %v2822 = vor.u32 %v2821, %v2817
        %v2823 = vrot.slane %v2822, 4
        %v2825 = vshll.u32 %v2337, 16
        %v2827 = vrot.slane %v2825, 5
        %v2828 = vsel %vm597, %v2823, %v2827
        %v2829 = vshrl.u32 %v2337, 16
        %v2831 = vrot.slane %v2829, 4
        %v2832 = vor.u32 %v2831, %v2827
        %v2833 = vrot.slane %v2832, 4
        %v2835 = vshll.u32 %v2338, 16
        %v2837 = vrot.slane %v2835, 5
        %v2838 = vsel %vm597, %v2833, %v2837
        %v2839 = vshrl.u32 %v2338, 16
        %v2841 = vrot.slane %v2839, 4
        %v2842 = vor.u32 %v2841, %v2837
        %v2843 = vrot.slane %v2842, 4
        %v2845 = vshll.u32 %v2339, 16
        %v2847 = vrot.slane %v2845, 5
        %v2848 = vsel %vm597, %v2843, %v2847
        %v2850 = vshrl.u32 %v2340, 16
        %v2852 = vrot.slane %v2850, 4
        %v2853 = vshll.u32 %v2340, 16
        %v2855 = vrot.slane %v2853, 5
        %v2856 = vor.u32 %v2852, %v2855
        %v2857 = vrot.slane %v2856, 4
        %v2859 = vshll.u32 %v2341, 16
        %v2861 = vrot.slane %v2859, 5
        %v2862 = vsel %vm597, %v2857, %v2861
        %v2863 = vshrl.u32 %v2341, 16
        %v2865 = vrot.slane %v2863, 4
        %v2866 = vor.u32 %v2865, %v2861
        %v2867 = vrot.slane %v2866, 4
        %v2869 = vshll.u32 %v2342, 16
        %v2871 = vrot.slane %v2869, 5
        %v2872 = vsel %vm597, %v2867, %v2871
        %v2873 = vshrl.u32 %v2342, 16
        %v2875 = vrot.slane %v2873, 4
        %v2876 = vor.u32 %v2875, %v2871
        %v2877 = vrot.slane %v2876, 4
        %v2879 = vshll.u32 %v2343, 16
        %v2881 = vrot.slane %v2879, 5
        %v2882 = vsel %vm597, %v2877, %v2881
        %v2883 = vshrl.u32 %v2343, 16
        %v2885 = vrot.slane %v2883, 4
        %v2886 = vor.u32 %v2885, %v2881
        %v2887 = vrot.slane %v2886, 4
        %v2889 = vshll.u32 %v2344, 16
        %v2891 = vrot.slane %v2889, 5
        %v2892 = vsel %vm597, %v2887, %v2891
        %v2894 = vshrl.u32 %v2345, 16
        %v2896 = vrot.slane %v2894, 4
        %v2897 = vshll.u32 %v2345, 16
        %v2899 = vrot.slane %v2897, 5
        %v2900 = vor.u32 %v2896, %v2899
        %v2901 = vrot.slane %v2900, 4
        %v2903 = vshll.u32 %v2346, 16
        %v2905 = vrot.slane %v2903, 5
        %v2906 = vsel %vm597, %v2901, %v2905
        %v2907 = vshrl.u32 %v2346, 16
        %v2909 = vrot.slane %v2907, 4
        %v2910 = vor.u32 %v2909, %v2905
        %v2911 = vrot.slane %v2910, 4
        %v2913 = vshll.u32 %v2347, 16
        %v2915 = vrot.slane %v2913, 5
        %v2916 = vsel %vm597, %v2911, %v2915
        %v2917 = vshrl.u32 %v2347, 16
        %v2919 = vrot.slane %v2917, 4
        %v2920 = vor.u32 %v2919, %v2915
        %v2921 = vrot.slane %v2920, 4
        %v2923 = vshll.u32 %v2348, 16
        %v2925 = vrot.slane %v2923, 5
        %v2926 = vsel %vm597, %v2921, %v2925
        %v2927 = vshrl.u32 %v2348, 16
        %v2929 = vrot.slane %v2927, 4
        %v2930 = vor.u32 %v2929, %v2925
        %v2931 = vrot.slane %v2930, 4
        %v2933 = vshll.u32 %v2349, 16
        %v2935 = vrot.slane %v2933, 5
        %v2936 = vsel %vm597, %v2931, %v2935
        %v2938 = vshrl.u32 %v2350, 16
        %v2940 = vrot.slane %v2938, 4
        %v2941 = vshll.u32 %v2350, 16
        %v2943 = vrot.slane %v2941, 5
        %v2944 = vor.u32 %v2940, %v2943
        %v2945 = vrot.slane %v2944, 4
        %v2947 = vshll.u32 %v2351, 16
        %v2949 = vrot.slane %v2947, 5
        %v2950 = vsel %vm597, %v2945, %v2949
        %v2951 = vshrl.u32 %v2351, 16
        %v2953 = vrot.slane %v2951, 4
        %v2954 = vor.u32 %v2953, %v2949
        %v2955 = vrot.slane %v2954, 4
        %v2957 = vshll.u32 %v2352, 16
        %v2959 = vrot.slane %v2957, 5
        %v2960 = vsel %vm597, %v2955, %v2959
        %v2961 = vshrl.u32 %v2352, 16
        %v2963 = vrot.slane %v2961, 4
        %v2964 = vor.u32 %v2963, %v2959
        %v2965 = vrot.slane %v2964, 4
        %v2967 = vshll.u32 %v2353, 16
        %v2969 = vrot.slane %v2967, 5
        %v2970 = vsel %vm597, %v2965, %v2969
        %v2971 = vshrl.u32 %v2353, 16
        %v2973 = vrot.slane %v2971, 4
        %v2974 = vor.u32 %v2973, %v2969
        %v2975 = vrot.slane %v2974, 4
        %v2977 = vshll.u32 %v2354, 16
        %v2979 = vrot.slane %v2977, 5
        %v2980 = vsel %vm597, %v2975, %v2979
        %v2982 = vshrl.u32 %v2355, 16
        %v2984 = vrot.slane %v2982, 4
        %v2985 = vshll.u32 %v2355, 16
        %v2987 = vrot.slane %v2985, 5
        %v2988 = vor.u32 %v2984, %v2987
        %v2989 = vrot.slane %v2988, 4
        %v2991 = vshll.u32 %v2356, 16
        %v2993 = vrot.slane %v2991, 5
        %v2994 = vsel %vm597, %v2989, %v2993
        %v2995 = vshrl.u32 %v2356, 16
        %v2997 = vrot.slane %v2995, 4
        %v2998 = vor.u32 %v2997, %v2993
        %v2999 = vrot.slane %v2998, 4
        %v3001 = vshll.u32 %v2357, 16
        %v3003 = vrot.slane %v3001, 5
        %v3004 = vsel %vm597, %v2999, %v3003
        %v3005 = vshrl.u32 %v2357, 16
        %v3007 = vrot.slane %v3005, 4
        %v3008 = vor.u32 %v3007, %v3003
        %v3009 = vrot.slane %v3008, 4
        %v3011 = vshll.u32 %v2358, 16
        %v3013 = vrot.slane %v3011, 5
        %v3014 = vsel %vm597, %v3009, %v3013
        %v3015 = vshrl.u32 %v2358, 16
        %v3017 = vrot.slane %v3015, 4
        %v3018 = vor.u32 %v3017, %v3013
        %v3019 = vrot.slane %v3018, 4
        %v3021 = vshll.u32 %v2359, 16
        %v3023 = vrot.slane %v3021, 5
        %v3024 = vsel %vm597, %v3019, %v3023
        %v3026 = vshrl.u32 %v2360, 16
        %v3028 = vrot.slane %v3026, 4
        %v3029 = vshll.u32 %v2360, 16
        %v3031 = vrot.slane %v3029, 5
        %v3032 = vor.u32 %v3028, %v3031
        %v3033 = vrot.slane %v3032, 4
        %v3035 = vshll.u32 %v2361, 16
        %v3037 = vrot.slane %v3035, 5
        %v3038 = vsel %vm597, %v3033, %v3037
        %v3039 = vshrl.u32 %v2361, 16
        %v3041 = vrot.slane %v3039, 4
        %v3042 = vor.u32 %v3041, %v3037
        %v3043 = vrot.slane %v3042, 4
        %v3045 = vshll.u32 %v2362, 16
        %v3047 = vrot.slane %v3045, 5
        %v3048 = vsel %vm597, %v3043, %v3047
        %v3049 = vshrl.u32 %v2362, 16
        %v3051 = vrot.slane %v3049, 4
        %v3052 = vor.u32 %v3051, %v3047
        %v3053 = vrot.slane %v3052, 4
        %v3055 = vshll.u32 %v2363, 16
        %v3057 = vrot.slane %v3055, 5
        %v3058 = vsel %vm597, %v3053, %v3057
        %v3059 = vshrl.u32 %v2363, 16
        %v3061 = vrot.slane %v3059, 4
        %v3062 = vor.u32 %v3061, %v3057
        %v3063 = vrot.slane %v3062, 4
        %v3065 = vshll.u32 %v2364, 16
        %v3067 = vrot.slane %v3065, 5
        %v3068 = vsel %vm597, %v3063, %v3067
        %v3069 = vunpack.c.l.b16 %v2378
        %v3070 = vunpack.c.l.b16 %v2388
        %v3071 = vunpack.c.l.b16 %v2398
        %v3072 = vunpack.c.l.b16 %v2408
        %v3073 = vunpack.c.l.b16 %v2422
        %v3074 = vunpack.c.l.b16 %v2432
        %v3075 = vunpack.c.l.b16 %v2442
        %v3076 = vunpack.c.l.b16 %v2452
        %v3077 = vunpack.c.l.b16 %v2466
        %v3078 = vunpack.c.l.b16 %v2476
        %v3079 = vunpack.c.l.b16 %v2486
        %v3080 = vunpack.c.l.b16 %v2496
        %v3081 = vunpack.c.l.b16 %v2510
        %v3082 = vunpack.c.l.b16 %v2520
        %v3083 = vunpack.c.l.b16 %v2530
        %v3084 = vunpack.c.l.b16 %v2540
        %v3085 = vunpack.c.l.b16 %v2554
        %v3086 = vunpack.c.l.b16 %v2564
        %v3087 = vunpack.c.l.b16 %v2574
        %v3088 = vunpack.c.l.b16 %v2584
        %v3089 = vunpack.c.l.b16 %v2598
        %v3090 = vunpack.c.l.b16 %v2608
        %v3091 = vunpack.c.l.b16 %v2618
        %v3092 = vunpack.c.l.b16 %v2628
        %v3093 = vunpack.c.l.b16 %v2642
        %v3094 = vunpack.c.l.b16 %v2652
        %v3095 = vunpack.c.l.b16 %v2662
        %v3096 = vunpack.c.l.b16 %v2672
        %v3097 = vunpack.c.l.b16 %v2686
        %v3098 = vunpack.c.l.b16 %v2696
        %v3099 = vunpack.c.l.b16 %v2706
        %v3100 = vunpack.c.l.b16 %v2716
        %v3101 = vunpack.c.l.b16 %v2730
        %v3102 = vunpack.c.l.b16 %v2740
        %v3103 = vunpack.c.l.b16 %v2750
        %v3104 = vunpack.c.l.b16 %v2760
        %v3105 = vunpack.c.l.b16 %v2774
        %v3106 = vunpack.c.l.b16 %v2784
        %v3107 = vunpack.c.l.b16 %v2794
        %v3108 = vunpack.c.l.b16 %v2804
        %v3109 = vunpack.c.l.b16 %v2818
        %v3110 = vunpack.c.l.b16 %v2828
        %v3111 = vunpack.c.l.b16 %v2838
        %v3112 = vunpack.c.l.b16 %v2848
        %v3113 = vunpack.c.l.b16 %v2862
        %v3114 = vunpack.c.l.b16 %v2872
        %v3115 = vunpack.c.l.b16 %v2882
        %v3116 = vunpack.c.l.b16 %v2892
        %v3117 = vunpack.c.l.b16 %v2906
        %v3118 = vunpack.c.l.b16 %v2916
        %v3119 = vunpack.c.l.b16 %v2926
        %v3120 = vunpack.c.l.b16 %v2936
        %v3121 = vunpack.c.l.b16 %v2950
        %v3122 = vunpack.c.l.b16 %v2960
        %v3123 = vunpack.c.l.b16 %v2970
        %v3124 = vunpack.c.l.b16 %v2980
        %v3125 = vunpack.c.l.b16 %v2994
        %v3126 = vunpack.c.l.b16 %v3004
        %v3127 = vunpack.c.l.b16 %v3014
        %v3128 = vunpack.c.l.b16 %v3024
        %v3129 = vunpack.c.l.b16 %v3038
        %v3130 = vunpack.c.l.b16 %v3048
        %v3131 = vunpack.c.l.b16 %v3058
        %v3132 = vunpack.c.l.b16 %v3068
        %v3133 = vpack.c.b16 %v3070, %v3069
        %v3134 = vpack.c.b16 %v3072, %v3071
        %v3135 = vpack.c.b16 %v3074, %v3073
        %v3136 = vpack.c.b16 %v3076, %v3075
        %v3137 = vpack.c.b16 %v3078, %v3077
        %v3138 = vpack.c.b16 %v3080, %v3079
        %v3139 = vpack.c.b16 %v3082, %v3081
        %v3140 = vpack.c.b16 %v3084, %v3083
        %v3141 = vpack.c.b16 %v3086, %v3085
        %v3142 = vpack.c.b16 %v3088, %v3087
        %v3143 = vpack.c.b16 %v3090, %v3089
        %v3144 = vpack.c.b16 %v3092, %v3091
        %v3145 = vpack.c.b16 %v3094, %v3093
        %v3146 = vpack.c.b16 %v3096, %v3095
        %v3147 = vpack.c.b16 %v3098, %v3097
        %v3148 = vpack.c.b16 %v3100, %v3099
        %v3149 = vpack.c.b16 %v3102, %v3101
        %v3150 = vpack.c.b16 %v3104, %v3103
        %v3151 = vpack.c.b16 %v3106, %v3105
        %v3152 = vpack.c.b16 %v3108, %v3107
        %v3153 = vpack.c.b16 %v3110, %v3109
        %v3154 = vpack.c.b16 %v3112, %v3111
        %v3155 = vpack.c.b16 %v3114, %v3113
        %v3156 = vpack.c.b16 %v3116, %v3115
        %v3157 = vpack.c.b16 %v3118, %v3117
        %v3158 = vpack.c.b16 %v3120, %v3119
        %v3159 = vpack.c.b16 %v3122, %v3121
        %v3160 = vpack.c.b16 %v3124, %v3123
        %v3161 = vpack.c.b16 %v3126, %v3125
        %v3162 = vpack.c.b16 %v3128, %v3127
        %v3163 = vpack.c.b16 %v3130, %v3129
        %v3164 = vpack.c.b16 %v3132, %v3131
        %3197 = vst [vmem:[#allocation2 + $0x20] sm:$0xff] %v3133
        %3198 = vst [vmem:[#allocation2 + $0x68] sm:$0xff] %v3134
        %3199 = vst [vmem:[#allocation2 + $0xb0] sm:$0xff] %v3135
        %3200 = vst [vmem:[#allocation2 + $0xf8] sm:$0xff] %v3136
        %3201 = vst [vmem:[#allocation2 + $0x140] sm:$0xff] %v3137
        %3202 = vst [vmem:[#allocation2 + $0x188] sm:$0xff] %v3138
        %3203 = vst [vmem:[#allocation2 + $0x1d0] sm:$0xff] %v3139
        %3204 = vst [vmem:[#allocation2 + $0x218] sm:$0xff] %v3140
        %3205 = vst [vmem:[#allocation2 + $0x260] sm:$0xff] %v3141
        %3206 = vst [vmem:[#allocation2 + $0x2a8] sm:$0xff] %v3142
        %3207 = vst [vmem:[#allocation2 + $0x2f0] sm:$0xff] %v3143
        %3208 = vst [vmem:[#allocation2 + $0x338] sm:$0xff] %v3144
        %3209 = vst [vmem:[#allocation2 + $0x380] sm:$0xff] %v3145
        %3210 = vst [vmem:[#allocation2 + $0x3c8] sm:$0xff] %v3146
        %3211 = vst [vmem:[#allocation2 + $0x410] sm:$0xff] %v3147
        %3212 = vst [vmem:[#allocation2 + $0x458] sm:$0xff] %v3148
        %3213 = vst [vmem:[#allocation2 + $0x4a0] sm:$0xff] %v3149
        %3214 = vst [vmem:[#allocation2 + $0x4e8] sm:$0xff] %v3150
        %3215 = vst [vmem:[#allocation2 + $0x530] sm:$0xff] %v3151
        %3216 = vst [vmem:[#allocation2 + $0x578] sm:$0xff] %v3152
        %3217 = vst [vmem:[#allocation2 + $0x5c0] sm:$0xff] %v3153
        %3218 = vst [vmem:[#allocation2 + $0x608] sm:$0xff] %v3154
        %3219 = vst [vmem:[#allocation2 + $0x650] sm:$0xff] %v3155
        %3220 = vst [vmem:[#allocation2 + $0x698] sm:$0xff] %v3156
        %3221 = vst [vmem:[#allocation2 + $0x6e0] sm:$0xff] %v3157
        %3222 = vst [vmem:[#allocation2 + $0x728] sm:$0xff] %v3158
        %3223 = vst [vmem:[#allocation2 + $0x770] sm:$0xff] %v3159
        %3224 = vst [vmem:[#allocation2 + $0x7b8] sm:$0xff] %v3160
        %3225 = vst [vmem:[#allocation2 + $0x800] sm:$0xff] %v3161
        %3226 = vst [vmem:[#allocation2 + $0x848] sm:$0xff] %v3162
        %3227 = vst [vmem:[#allocation2 + $0x890] sm:$0xff] %v3163
        %3228 = vst [vmem:[#allocation2 + $0x8d8] sm:$0xff] %v3164
        %v3229 = vld [vmem:[%s1996] sm:$0xe]
        %v3230 = vld [vmem:[%s1996 + $0x4] sm:$0xf]
        %v3231 = vld [vmem:[%s1996 + $0x8] sm:$0xf]
        %v3232 = vld [vmem:[%s1996 + $0xc] sm:$0xf]
        %v3233 = vld [vmem:[%s1996 + $0x10] sm:$0x1]
        %v3234 = vld [vmem:[%s1996 + $0x14] sm:$0xe]
        %v3235 = vld [vmem:[%s1996 + $0x18] sm:$0xf]
        %v3236 = vld [vmem:[%s1996 + $0x1c] sm:$0xf]
        %v3237 = vld [vmem:[%s1996 + $0x20] sm:$0xf]
        %v3238 = vld [vmem:[%s1996 + $0x24] sm:$0x1]
        %v3239 = vld [vmem:[%s1996 + $0x28] sm:$0xe]
        %v3240 = vld [vmem:[%s1996 + $0x2c] sm:$0xf]
        %v3241 = vld [vmem:[%s1996 + $0x30] sm:$0xf]
        %v3242 = vld [vmem:[%s1996 + $0x34] sm:$0xf]
        %v3243 = vld [vmem:[%s1996 + $0x38] sm:$0x1]
        %v3244 = vld [vmem:[%s1996 + $0x3c] sm:$0xe]
        %v3245 = vld [vmem:[%s1996 + $0x40] sm:$0xf]
        %v3246 = vld [vmem:[%s1996 + $0x44] sm:$0xf]
        %v3247 = vld [vmem:[%s1996 + $0x48] sm:$0xf]
        %v3248 = vld [vmem:[%s1996 + $0x4c] sm:$0x1]
        %v3249 = vld [vmem:[%s1996 + $0x50] sm:$0xe]
        %v3250 = vld [vmem:[%s1996 + $0x54] sm:$0xf]
        %v3251 = vld [vmem:[%s1996 + $0x58] sm:$0xf]
        %v3252 = vld [vmem:[%s1996 + $0x5c] sm:$0xf]
        %v3253 = vld [vmem:[%s1996 + $0x60] sm:$0x1]
        %v3254 = vld [vmem:[%s1996 + $0x64] sm:$0xe]
        %v3255 = vld [vmem:[%s1996 + $0x68] sm:$0xf]
        %v3256 = vld [vmem:[%s1996 + $0x6c] sm:$0xf]
        %v3257 = vld [vmem:[%s1996 + $0x70] sm:$0xf]
        %v3258 = vld [vmem:[%s1996 + $0x74] sm:$0x1]
        %v3259 = vld [vmem:[%s1996 + $0x78] sm:$0xe]
        %v3260 = vld [vmem:[%s1996 + $0x7c] sm:$0xf]
        %v3261 = vld [vmem:[%s1996 + $0x80] sm:$0xf]
        %v3262 = vld [vmem:[%s1996 + $0x84] sm:$0xf]
        %v3263 = vld [vmem:[%s1996 + $0x88] sm:$0x1]
        %v3264 = vld [vmem:[%s1996 + $0x8c] sm:$0xe]
        %v3265 = vld [vmem:[%s1996 + $0x90] sm:$0xf]
        %v3266 = vld [vmem:[%s1996 + $0x94] sm:$0xf]
        %v3267 = vld [vmem:[%s1996 + $0x98] sm:$0xf]
        %v3268 = vld [vmem:[%s1996 + $0x9c] sm:$0x1]
        %v3269 = vld [vmem:[%s1996 + $0xa0] sm:$0xe]
        %v3270 = vld [vmem:[%s1996 + $0xa4] sm:$0xf]
        %v3271 = vld [vmem:[%s1996 + $0xa8] sm:$0xf]
        %v3272 = vld [vmem:[%s1996 + $0xac] sm:$0xf]
        %v3273 = vld [vmem:[%s1996 + $0xb0] sm:$0x1]
        %v3274 = vld [vmem:[%s1996 + $0xb4] sm:$0xe]
        %v3275 = vld [vmem:[%s1996 + $0xb8] sm:$0xf]
        %v3276 = vld [vmem:[%s1996 + $0xbc] sm:$0xf]
        %v3277 = vld [vmem:[%s1996 + $0xc0] sm:$0xf]
        %v3278 = vld [vmem:[%s1996 + $0xc4] sm:$0x1]
        %v3279 = vld [vmem:[%s1996 + $0xc8] sm:$0xe]
        %v3280 = vld [vmem:[%s1996 + $0xcc] sm:$0xf]
        %v3281 = vld [vmem:[%s1996 + $0xd0] sm:$0xf]
        %v3282 = vld [vmem:[%s1996 + $0xd4] sm:$0xf]
        %v3283 = vld [vmem:[%s1996 + $0xd8] sm:$0x1]
        %v3284 = vld [vmem:[%s1996 + $0xdc] sm:$0xe]
        %v3285 = vld [vmem:[%s1996 + $0xe0] sm:$0xf]
        %v3286 = vld [vmem:[%s1996 + $0xe4] sm:$0xf]
        %v3287 = vld [vmem:[%s1996 + $0xe8] sm:$0xf]
        %v3288 = vld [vmem:[%s1996 + $0xec] sm:$0x1]
        %v3289 = vld [vmem:[%s1996 + $0xf0] sm:$0xe]
        %v3290 = vld [vmem:[%s1996 + $0xf4] sm:$0xf]
        %v3291 = vld [vmem:[%s1996 + $0xf8] sm:$0xf]
        %v3292 = vld [vmem:[%s1996 + $0xfc] sm:$0xf]
        %v3293 = vld [vmem:[%s1996 + $0x100] sm:$0x1]
        %v3294 = vld [vmem:[%s1996 + $0x104] sm:$0xe]
        %v3295 = vld [vmem:[%s1996 + $0x108] sm:$0xf]
        %v3296 = vld [vmem:[%s1996 + $0x10c] sm:$0xf]
        %v3297 = vld [vmem:[%s1996 + $0x110] sm:$0xf]
        %v3298 = vld [vmem:[%s1996 + $0x114] sm:$0x1]
        %v3299 = vld [vmem:[%s1996 + $0x118] sm:$0xe]
        %v3300 = vld [vmem:[%s1996 + $0x11c] sm:$0xf]
        %v3301 = vld [vmem:[%s1996 + $0x120] sm:$0xf]
        %v3302 = vld [vmem:[%s1996 + $0x124] sm:$0xf]
        %v3303 = vld [vmem:[%s1996 + $0x128] sm:$0x1]
        %v3304 = vld [vmem:[%s1996 + $0x12c] sm:$0xe]
        %v3305 = vld [vmem:[%s1996 + $0x130] sm:$0xf]
        %v3306 = vld [vmem:[%s1996 + $0x134] sm:$0xf]
        %v3307 = vld [vmem:[%s1996 + $0x138] sm:$0xf]
        %v3308 = vld [vmem:[%s1996 + $0x13c] sm:$0x1]
        %v3389 = vrot.slane %v3229, 5
        %v3390 = vrot.slane %v3389, 4
        %v3391 = vrot.slane %v3230, 5
        %v3392 = vsel %vm1624, %v3390, %v3391
        %v3393 = vrot.slane %v3391, 4
        %v3394 = vrot.slane %v3231, 5
        %v3395 = vsel %vm1624, %v3393, %v3394
        %v3396 = vrot.slane %v3394, 4
        %v3397 = vrot.slane %v3232, 5
        %v3398 = vsel %vm1624, %v3396, %v3397
        %v3399 = vrot.slane %v3397, 4
        %v3400 = vrot.slane %v3233, 5
        %v3401 = vsel %vm1624, %v3399, %v3400
        %v3402 = vrot.slane %v3234, 5
        %v3403 = vrot.slane %v3402, 4
        %v3404 = vrot.slane %v3235, 5
        %v3405 = vsel %vm1624, %v3403, %v3404
        %v3406 = vrot.slane %v3404, 4
        %v3407 = vrot.slane %v3236, 5
        %v3408 = vsel %vm1624, %v3406, %v3407
        %v3409 = vrot.slane %v3407, 4
        %v3410 = vrot.slane %v3237, 5
        %v3411 = vsel %vm1624, %v3409, %v3410
        %v3412 = vrot.slane %v3410, 4
        %v3413 = vrot.slane %v3238, 5
        %v3414 = vsel %vm1624, %v3412, %v3413
        %v3415 = vrot.slane %v3239, 5
        %v3416 = vrot.slane %v3415, 4
        %v3417 = vrot.slane %v3240, 5
        %v3418 = vsel %vm1624, %v3416, %v3417
        %v3419 = vrot.slane %v3417, 4
        %v3420 = vrot.slane %v3241, 5
        %v3421 = vsel %vm1624, %v3419, %v3420
        %v3422 = vrot.slane %v3420, 4
        %v3423 = vrot.slane %v3242, 5
        %v3424 = vsel %vm1624, %v3422, %v3423
        %v3425 = vrot.slane %v3423, 4
        %v3426 = vrot.slane %v3243, 5
        %v3427 = vsel %vm1624, %v3425, %v3426
        %v3428 = vrot.slane %v3244, 5
        %v3429 = vrot.slane %v3428, 4
        %v3430 = vrot.slane %v3245, 5
        %v3431 = vsel %vm1624, %v3429, %v3430
        %v3432 = vrot.slane %v3430, 4
        %v3433 = vrot.slane %v3246, 5
        %v3434 = vsel %vm1624, %v3432, %v3433
        %v3435 = vrot.slane %v3433, 4
        %v3436 = vrot.slane %v3247, 5
        %v3437 = vsel %vm1624, %v3435, %v3436
        %v3438 = vrot.slane %v3436, 4
        %v3439 = vrot.slane %v3248, 5
        %v3440 = vsel %vm1624, %v3438, %v3439
        %v3441 = vrot.slane %v3249, 5
        %v3442 = vrot.slane %v3441, 4
        %v3443 = vrot.slane %v3250, 5
        %v3444 = vsel %vm1624, %v3442, %v3443
        %v3445 = vrot.slane %v3443, 4
        %v3446 = vrot.slane %v3251, 5
        %v3447 = vsel %vm1624, %v3445, %v3446
        %v3448 = vrot.slane %v3446, 4
        %v3449 = vrot.slane %v3252, 5
        %v3450 = vsel %vm1624, %v3448, %v3449
        %v3451 = vrot.slane %v3449, 4
        %v3452 = vrot.slane %v3253, 5
        %v3453 = vsel %vm1624, %v3451, %v3452
        %v3454 = vrot.slane %v3254, 5
        %v3455 = vrot.slane %v3454, 4
        %v3456 = vrot.slane %v3255, 5
        %v3457 = vsel %vm1624, %v3455, %v3456
        %v3458 = vrot.slane %v3456, 4
        %v3459 = vrot.slane %v3256, 5
        %v3460 = vsel %vm1624, %v3458, %v3459
        %v3461 = vrot.slane %v3459, 4
        %v3462 = vrot.slane %v3257, 5
        %v3463 = vsel %vm1624, %v3461, %v3462
        %v3464 = vrot.slane %v3462, 4
        %v3465 = vrot.slane %v3258, 5
        %v3466 = vsel %vm1624, %v3464, %v3465
        %v3467 = vrot.slane %v3259, 5
        %v3468 = vrot.slane %v3467, 4
        %v3469 = vrot.slane %v3260, 5
        %v3470 = vsel %vm1624, %v3468, %v3469
        %v3471 = vrot.slane %v3469, 4
        %v3472 = vrot.slane %v3261, 5
        %v3473 = vsel %vm1624, %v3471, %v3472
        %v3474 = vrot.slane %v3472, 4
        %v3475 = vrot.slane %v3262, 5
        %v3476 = vsel %vm1624, %v3474, %v3475
        %v3477 = vrot.slane %v3475, 4
        %v3478 = vrot.slane %v3263, 5
        %v3479 = vsel %vm1624, %v3477, %v3478
        %v3480 = vrot.slane %v3264, 5
        %v3481 = vrot.slane %v3480, 4
        %v3482 = vrot.slane %v3265, 5
        %v3483 = vsel %vm1624, %v3481, %v3482
        %v3484 = vrot.slane %v3482, 4
        %v3485 = vrot.slane %v3266, 5
        %v3486 = vsel %vm1624, %v3484, %v3485
        %v3487 = vrot.slane %v3485, 4
        %v3488 = vrot.slane %v3267, 5
        %v3489 = vsel %vm1624, %v3487, %v3488
        %v3490 = vrot.slane %v3488, 4
        %v3491 = vrot.slane %v3268, 5
        %v3492 = vsel %vm1624, %v3490, %v3491
        %v3493 = vrot.slane %v3269, 5
        %v3494 = vrot.slane %v3493, 4
        %v3495 = vrot.slane %v3270, 5
        %v3496 = vsel %vm1624, %v3494, %v3495
        %v3497 = vrot.slane %v3495, 4
        %v3498 = vrot.slane %v3271, 5
        %v3499 = vsel %vm1624, %v3497, %v3498
        %v3500 = vrot.slane %v3498, 4
        %v3501 = vrot.slane %v3272, 5
        %v3502 = vsel %vm1624, %v3500, %v3501
        %v3503 = vrot.slane %v3501, 4
        %v3504 = vrot.slane %v3273, 5
        %v3505 = vsel %vm1624, %v3503, %v3504
        %v3506 = vrot.slane %v3274, 5
        %v3507 = vrot.slane %v3506, 4
        %v3508 = vrot.slane %v3275, 5
        %v3509 = vsel %vm1624, %v3507, %v3508
        %v3510 = vrot.slane %v3508, 4
        %v3511 = vrot.slane %v3276, 5
        %v3512 = vsel %vm1624, %v3510, %v3511
        %v3513 = vrot.slane %v3511, 4
        %v3514 = vrot.slane %v3277, 5
        %v3515 = vsel %vm1624, %v3513, %v3514
        %v3516 = vrot.slane %v3514, 4
        %v3517 = vrot.slane %v3278, 5
        %v3518 = vsel %vm1624, %v3516, %v3517
        %v3519 = vrot.slane %v3279, 5
        %v3520 = vrot.slane %v3519, 4
        %v3521 = vrot.slane %v3280, 5
        %v3522 = vsel %vm1624, %v3520, %v3521
        %v3523 = vrot.slane %v3521, 4
        %v3524 = vrot.slane %v3281, 5
        %v3525 = vsel %vm1624, %v3523, %v3524
        %v3526 = vrot.slane %v3524, 4
        %v3527 = vrot.slane %v3282, 5
        %v3528 = vsel %vm1624, %v3526, %v3527
        %v3529 = vrot.slane %v3527, 4
        %v3530 = vrot.slane %v3283, 5
        %v3531 = vsel %vm1624, %v3529, %v3530
        %v3532 = vrot.slane %v3284, 5
        %v3533 = vrot.slane %v3532, 4
        %v3534 = vrot.slane %v3285, 5
        %v3535 = vsel %vm1624, %v3533, %v3534
        %v3536 = vrot.slane %v3534, 4
        %v3537 = vrot.slane %v3286, 5
        %v3538 = vsel %vm1624, %v3536, %v3537
        %v3539 = vrot.slane %v3537, 4
        %v3540 = vrot.slane %v3287, 5
        %v3541 = vsel %vm1624, %v3539, %v3540
        %v3542 = vrot.slane %v3540, 4
        %v3543 = vrot.slane %v3288, 5
        %v3544 = vsel %vm1624, %v3542, %v3543
        %v3545 = vrot.slane %v3289, 5
        %v3546 = vrot.slane %v3545, 4
        %v3547 = vrot.slane %v3290, 5
        %v3548 = vsel %vm1624, %v3546, %v3547
        %v3549 = vrot.slane %v3547, 4
        %v3550 = vrot.slane %v3291, 5
        %v3551 = vsel %vm1624, %v3549, %v3550
        %v3552 = vrot.slane %v3550, 4
        %v3553 = vrot.slane %v3292, 5
        %v3554 = vsel %vm1624, %v3552, %v3553
        %v3555 = vrot.slane %v3553, 4
        %v3556 = vrot.slane %v3293, 5
        %v3557 = vsel %vm1624, %v3555, %v3556
        %v3558 = vrot.slane %v3294, 5
        %v3559 = vrot.slane %v3558, 4
        %v3560 = vrot.slane %v3295, 5
        %v3561 = vsel %vm1624, %v3559, %v3560
        %v3562 = vrot.slane %v3560, 4
        %v3563 = vrot.slane %v3296, 5
        %v3564 = vsel %vm1624, %v3562, %v3563
        %v3565 = vrot.slane %v3563, 4
        %v3566 = vrot.slane %v3297, 5
        %v3567 = vsel %vm1624, %v3565, %v3566
        %v3568 = vrot.slane %v3566, 4
        %v3569 = vrot.slane %v3298, 5
        %v3570 = vsel %vm1624, %v3568, %v3569
        %v3571 = vrot.slane %v3299, 5
        %v3572 = vrot.slane %v3571, 4
        %v3573 = vrot.slane %v3300, 5
        %v3574 = vsel %vm1624, %v3572, %v3573
        %v3575 = vrot.slane %v3573, 4
        %v3576 = vrot.slane %v3301, 5
        %v3577 = vsel %vm1624, %v3575, %v3576
        %v3578 = vrot.slane %v3576, 4
        %v3579 = vrot.slane %v3302, 5
        %v3580 = vsel %vm1624, %v3578, %v3579
        %v3581 = vrot.slane %v3579, 4
        %v3582 = vrot.slane %v3303, 5
        %v3583 = vsel %vm1624, %v3581, %v3582
        %v3584 = vrot.slane %v3304, 5
        %v3585 = vrot.slane %v3584, 4
        %v3586 = vrot.slane %v3305, 5
        %v3587 = vsel %vm1624, %v3585, %v3586
        %v3588 = vrot.slane %v3586, 4
        %v3589 = vrot.slane %v3306, 5
        %v3590 = vsel %vm1624, %v3588, %v3589
        %v3591 = vrot.slane %v3589, 4
        %v3592 = vrot.slane %v3307, 5
        %v3593 = vsel %vm1624, %v3591, %v3592
        %v3594 = vrot.slane %v3592, 4
        %v3595 = vrot.slane %v3308, 5
        %v3596 = vsel %vm1624, %v3594, %v3595
        %v3597 = vunpack.c.l.b16 %v3392
        %v3598 = vunpack.c.l.b16 %v3395
        %v3599 = vunpack.c.l.b16 %v3398
        %v3600 = vunpack.c.l.b16 %v3401
        %v3601 = vunpack.c.l.b16 %v3405
        %v3602 = vunpack.c.l.b16 %v3408
        %v3603 = vunpack.c.l.b16 %v3411
        %v3604 = vunpack.c.l.b16 %v3414
        %v3605 = vunpack.c.l.b16 %v3418
        %v3606 = vunpack.c.l.b16 %v3421
        %v3607 = vunpack.c.l.b16 %v3424
        %v3608 = vunpack.c.l.b16 %v3427
        %v3609 = vunpack.c.l.b16 %v3431
        %v3610 = vunpack.c.l.b16 %v3434
        %v3611 = vunpack.c.l.b16 %v3437
        %v3612 = vunpack.c.l.b16 %v3440
        %v3613 = vunpack.c.l.b16 %v3444
        %v3614 = vunpack.c.l.b16 %v3447
        %v3615 = vunpack.c.l.b16 %v3450
        %v3616 = vunpack.c.l.b16 %v3453
        %v3617 = vunpack.c.l.b16 %v3457
        %v3618 = vunpack.c.l.b16 %v3460
        %v3619 = vunpack.c.l.b16 %v3463
        %v3620 = vunpack.c.l.b16 %v3466
        %v3621 = vunpack.c.l.b16 %v3470
        %v3622 = vunpack.c.l.b16 %v3473
        %v3623 = vunpack.c.l.b16 %v3476
        %v3624 = vunpack.c.l.b16 %v3479
        %v3625 = vunpack.c.l.b16 %v3483
        %v3626 = vunpack.c.l.b16 %v3486
        %v3627 = vunpack.c.l.b16 %v3489
        %v3628 = vunpack.c.l.b16 %v3492
        %v3629 = vunpack.c.l.b16 %v3496
        %v3630 = vunpack.c.l.b16 %v3499
        %v3631 = vunpack.c.l.b16 %v3502
        %v3632 = vunpack.c.l.b16 %v3505
        %v3633 = vunpack.c.l.b16 %v3509
        %v3634 = vunpack.c.l.b16 %v3512
        %v3635 = vunpack.c.l.b16 %v3515
        %v3636 = vunpack.c.l.b16 %v3518
        %v3637 = vunpack.c.l.b16 %v3522
        %v3638 = vunpack.c.l.b16 %v3525
        %v3639 = vunpack.c.l.b16 %v3528
        %v3640 = vunpack.c.l.b16 %v3531
        %v3641 = vunpack.c.l.b16 %v3535
        %v3642 = vunpack.c.l.b16 %v3538
        %v3643 = vunpack.c.l.b16 %v3541
        %v3644 = vunpack.c.l.b16 %v3544
        %v3645 = vunpack.c.l.b16 %v3548
        %v3646 = vunpack.c.l.b16 %v3551
        %v3647 = vunpack.c.l.b16 %v3554
        %v3648 = vunpack.c.l.b16 %v3557
        %v3649 = vunpack.c.l.b16 %v3561
        %v3650 = vunpack.c.l.b16 %v3564
        %v3651 = vunpack.c.l.b16 %v3567
        %v3652 = vunpack.c.l.b16 %v3570
        %v3653 = vunpack.c.l.b16 %v3574
        %v3654 = vunpack.c.l.b16 %v3577
        %v3655 = vunpack.c.l.b16 %v3580
        %v3656 = vunpack.c.l.b16 %v3583
        %v3657 = vunpack.c.l.b16 %v3587
        %v3658 = vunpack.c.l.b16 %v3590
        %v3659 = vunpack.c.l.b16 %v3593
        %v3660 = vunpack.c.l.b16 %v3596
        %v3661 = vpack.c.b16 %v3598, %v3597
        %v3662 = vpack.c.b16 %v3600, %v3599
        %v3663 = vpack.c.b16 %v3602, %v3601
        %v3664 = vpack.c.b16 %v3604, %v3603
        %v3665 = vpack.c.b16 %v3606, %v3605
        %v3666 = vpack.c.b16 %v3608, %v3607
        %v3667 = vpack.c.b16 %v3610, %v3609
        %v3668 = vpack.c.b16 %v3612, %v3611
        %v3669 = vpack.c.b16 %v3614, %v3613
        %v3670 = vpack.c.b16 %v3616, %v3615
        %v3671 = vpack.c.b16 %v3618, %v3617
        %v3672 = vpack.c.b16 %v3620, %v3619
        %v3673 = vpack.c.b16 %v3622, %v3621
        %v3674 = vpack.c.b16 %v3624, %v3623
        %v3675 = vpack.c.b16 %v3626, %v3625
        %v3676 = vpack.c.b16 %v3628, %v3627
        %v3677 = vpack.c.b16 %v3630, %v3629
        %v3678 = vpack.c.b16 %v3632, %v3631
        %v3679 = vpack.c.b16 %v3634, %v3633
        %v3680 = vpack.c.b16 %v3636, %v3635
        %v3681 = vpack.c.b16 %v3638, %v3637
        %v3682 = vpack.c.b16 %v3640, %v3639
        %v3683 = vpack.c.b16 %v3642, %v3641
        %v3684 = vpack.c.b16 %v3644, %v3643
        %v3685 = vpack.c.b16 %v3646, %v3645
        %v3686 = vpack.c.b16 %v3648, %v3647
        %v3687 = vpack.c.b16 %v3650, %v3649
        %v3688 = vpack.c.b16 %v3652, %v3651
        %v3689 = vpack.c.b16 %v3654, %v3653
        %v3690 = vpack.c.b16 %v3656, %v3655
        %v3691 = vpack.c.b16 %v3658, %v3657
        %v3692 = vpack.c.b16 %v3660, %v3659
        %3725 = vst [vmem:[#allocation2 + $0x28] sm:$0xff] %v3661
        %3726 = vst [vmem:[#allocation2 + $0x70] sm:$0xff] %v3662
        %3727 = vst [vmem:[#allocation2 + $0xb8] sm:$0xff] %v3663
        %3728 = vst [vmem:[#allocation2 + $0x100] sm:$0xff] %v3664
        %3729 = vst [vmem:[#allocation2 + $0x148] sm:$0xff] %v3665
        %3730 = vst [vmem:[#allocation2 + $0x190] sm:$0xff] %v3666
        %3731 = vst [vmem:[#allocation2 + $0x1d8] sm:$0xff] %v3667
        %3732 = vst [vmem:[#allocation2 + $0x220] sm:$0xff] %v3668
        %3733 = vst [vmem:[#allocation2 + $0x268] sm:$0xff] %v3669
        %3734 = vst [vmem:[#allocation2 + $0x2b0] sm:$0xff] %v3670
        %3735 = vst [vmem:[#allocation2 + $0x2f8] sm:$0xff] %v3671
        %3736 = vst [vmem:[#allocation2 + $0x340] sm:$0xff] %v3672
        %3737 = vst [vmem:[#allocation2 + $0x388] sm:$0xff] %v3673
        %3738 = vst [vmem:[#allocation2 + $0x3d0] sm:$0xff] %v3674
        %3739 = vst [vmem:[#allocation2 + $0x418] sm:$0xff] %v3675
        %3740 = vst [vmem:[#allocation2 + $0x460] sm:$0xff] %v3676
        %3741 = vst [vmem:[#allocation2 + $0x4a8] sm:$0xff] %v3677
        %3742 = vst [vmem:[#allocation2 + $0x4f0] sm:$0xff] %v3678
        %3743 = vst [vmem:[#allocation2 + $0x538] sm:$0xff] %v3679
        %3744 = vst [vmem:[#allocation2 + $0x580] sm:$0xff] %v3680
        %3745 = vst [vmem:[#allocation2 + $0x5c8] sm:$0xff] %v3681
        %3746 = vst [vmem:[#allocation2 + $0x610] sm:$0xff] %v3682
        %3747 = vst [vmem:[#allocation2 + $0x658] sm:$0xff] %v3683
        %3748 = vst [vmem:[#allocation2 + $0x6a0] sm:$0xff] %v3684
        %3749 = vst [vmem:[#allocation2 + $0x6e8] sm:$0xff] %v3685
        %3750 = vst [vmem:[#allocation2 + $0x730] sm:$0xff] %v3686
        %3751 = vst [vmem:[#allocation2 + $0x778] sm:$0xff] %v3687
        %3752 = vst [vmem:[#allocation2 + $0x7c0] sm:$0xff] %v3688
        %3753 = vst [vmem:[#allocation2 + $0x808] sm:$0xff] %v3689
        %3754 = vst [vmem:[#allocation2 + $0x850] sm:$0xff] %v3690
        %3755 = vst [vmem:[#allocation2 + $0x898] sm:$0xff] %v3691
        %3756 = vst [vmem:[#allocation2 + $0x8e0] sm:$0xff] %v3692
        %s3757 = sadd.s32 %s223, 2
        %s3758 = smul.u32 %s3757, 5
        %s3759 = smul.addr %s3758, 4
        %s3760 = scalar_lea.vmem %s211, %s3759
        %v3761 = vld [vmem:[%s3760] sm:$0xf]
        %v3762 = vld [vmem:[%s3760 + $0x4] sm:$0xf]
        %v3763 = vld [vmem:[%s3760 + $0x8] sm:$0xf]
        %v3764 = vld [vmem:[%s3760 + $0xc] sm:$0xf]
        %v3765 = vld [vmem:[%s3760 + $0x14] sm:$0xf]
        %v3766 = vld [vmem:[%s3760 + $0x18] sm:$0xf]
        %v3767 = vld [vmem:[%s3760 + $0x1c] sm:$0xf]
        %v3768 = vld [vmem:[%s3760 + $0x20] sm:$0xf]
        %v3769 = vld [vmem:[%s3760 + $0x28] sm:$0xf]
        %v3770 = vld [vmem:[%s3760 + $0x2c] sm:$0xf]
        %v3771 = vld [vmem:[%s3760 + $0x30] sm:$0xf]
        %v3772 = vld [vmem:[%s3760 + $0x34] sm:$0xf]
        %v3773 = vld [vmem:[%s3760 + $0x3c] sm:$0xf]
        %v3774 = vld [vmem:[%s3760 + $0x40] sm:$0xf]
        %v3775 = vld [vmem:[%s3760 + $0x44] sm:$0xf]
        %v3776 = vld [vmem:[%s3760 + $0x48] sm:$0xf]
        %v3777 = vld [vmem:[%s3760 + $0x50] sm:$0xf]
        %v3778 = vld [vmem:[%s3760 + $0x54] sm:$0xf]
        %v3779 = vld [vmem:[%s3760 + $0x58] sm:$0xf]
        %v3780 = vld [vmem:[%s3760 + $0x5c] sm:$0xf]
        %v3781 = vld [vmem:[%s3760 + $0x64] sm:$0xf]
        %v3782 = vld [vmem:[%s3760 + $0x68] sm:$0xf]
        %v3783 = vld [vmem:[%s3760 + $0x6c] sm:$0xf]
        %v3784 = vld [vmem:[%s3760 + $0x70] sm:$0xf]
        %v3785 = vld [vmem:[%s3760 + $0x78] sm:$0xf]
        %v3786 = vld [vmem:[%s3760 + $0x7c] sm:$0xf]
        %v3787 = vld [vmem:[%s3760 + $0x80] sm:$0xf]
        %v3788 = vld [vmem:[%s3760 + $0x84] sm:$0xf]
        %v3789 = vld [vmem:[%s3760 + $0x8c] sm:$0xf]
        %v3790 = vld [vmem:[%s3760 + $0x90] sm:$0xf]
        %v3791 = vld [vmem:[%s3760 + $0x94] sm:$0xf]
        %v3792 = vld [vmem:[%s3760 + $0x98] sm:$0xf]
        %v3793 = vld [vmem:[%s3760 + $0xa0] sm:$0xf]
        %v3794 = vld [vmem:[%s3760 + $0xa4] sm:$0xf]
        %v3795 = vld [vmem:[%s3760 + $0xa8] sm:$0xf]
        %v3796 = vld [vmem:[%s3760 + $0xac] sm:$0xf]
        %v3797 = vld [vmem:[%s3760 + $0xb4] sm:$0xf]
        %v3798 = vld [vmem:[%s3760 + $0xb8] sm:$0xf]
        %v3799 = vld [vmem:[%s3760 + $0xbc] sm:$0xf]
        %v3800 = vld [vmem:[%s3760 + $0xc0] sm:$0xf]
        %v3801 = vld [vmem:[%s3760 + $0xc8] sm:$0xf]
        %v3802 = vld [vmem:[%s3760 + $0xcc] sm:$0xf]
        %v3803 = vld [vmem:[%s3760 + $0xd0] sm:$0xf]
        %v3804 = vld [vmem:[%s3760 + $0xd4] sm:$0xf]
        %v3805 = vld [vmem:[%s3760 + $0xdc] sm:$0xf]
        %v3806 = vld [vmem:[%s3760 + $0xe0] sm:$0xf]
        %v3807 = vld [vmem:[%s3760 + $0xe4] sm:$0xf]
        %v3808 = vld [vmem:[%s3760 + $0xe8] sm:$0xf]
        %v3809 = vld [vmem:[%s3760 + $0xf0] sm:$0xf]
        %v3810 = vld [vmem:[%s3760 + $0xf4] sm:$0xf]
        %v3811 = vld [vmem:[%s3760 + $0xf8] sm:$0xf]
        %v3812 = vld [vmem:[%s3760 + $0xfc] sm:$0xf]
        %v3813 = vld [vmem:[%s3760 + $0x104] sm:$0xf]
        %v3814 = vld [vmem:[%s3760 + $0x108] sm:$0xf]
        %v3815 = vld [vmem:[%s3760 + $0x10c] sm:$0xf]
        %v3816 = vld [vmem:[%s3760 + $0x110] sm:$0xf]
        %v3817 = vld [vmem:[%s3760 + $0x118] sm:$0xf]
        %v3818 = vld [vmem:[%s3760 + $0x11c] sm:$0xf]
        %v3819 = vld [vmem:[%s3760 + $0x120] sm:$0xf]
        %v3820 = vld [vmem:[%s3760 + $0x124] sm:$0xf]
        %v3821 = vld [vmem:[%s3760 + $0x12c] sm:$0xf]
        %v3822 = vld [vmem:[%s3760 + $0x130] sm:$0xf]
        %v3823 = vld [vmem:[%s3760 + $0x134] sm:$0xf]
        %v3824 = vld [vmem:[%s3760 + $0x138] sm:$0xf]
        %v3889 = vunpack.c.l.b16 %v3761
        %v3890 = vunpack.c.l.b16 %v3762
        %v3891 = vunpack.c.l.b16 %v3763
        %v3892 = vunpack.c.l.b16 %v3764
        %v3893 = vunpack.c.l.b16 %v3765
        %v3894 = vunpack.c.l.b16 %v3766
        %v3895 = vunpack.c.l.b16 %v3767
        %v3896 = vunpack.c.l.b16 %v3768
        %v3897 = vunpack.c.l.b16 %v3769
        %v3898 = vunpack.c.l.b16 %v3770
        %v3899 = vunpack.c.l.b16 %v3771
        %v3900 = vunpack.c.l.b16 %v3772
        %v3901 = vunpack.c.l.b16 %v3773
        %v3902 = vunpack.c.l.b16 %v3774
        %v3903 = vunpack.c.l.b16 %v3775
        %v3904 = vunpack.c.l.b16 %v3776
        %v3905 = vunpack.c.l.b16 %v3777
        %v3906 = vunpack.c.l.b16 %v3778
        %v3907 = vunpack.c.l.b16 %v3779
        %v3908 = vunpack.c.l.b16 %v3780
        %v3909 = vunpack.c.l.b16 %v3781
        %v3910 = vunpack.c.l.b16 %v3782
        %v3911 = vunpack.c.l.b16 %v3783
        %v3912 = vunpack.c.l.b16 %v3784
        %v3913 = vunpack.c.l.b16 %v3785
        %v3914 = vunpack.c.l.b16 %v3786
        %v3915 = vunpack.c.l.b16 %v3787
        %v3916 = vunpack.c.l.b16 %v3788
        %v3917 = vunpack.c.l.b16 %v3789
        %v3918 = vunpack.c.l.b16 %v3790
        %v3919 = vunpack.c.l.b16 %v3791
        %v3920 = vunpack.c.l.b16 %v3792
        %v3921 = vunpack.c.l.b16 %v3793
        %v3922 = vunpack.c.l.b16 %v3794
        %v3923 = vunpack.c.l.b16 %v3795
        %v3924 = vunpack.c.l.b16 %v3796
        %v3925 = vunpack.c.l.b16 %v3797
        %v3926 = vunpack.c.l.b16 %v3798
        %v3927 = vunpack.c.l.b16 %v3799
        %v3928 = vunpack.c.l.b16 %v3800
        %v3929 = vunpack.c.l.b16 %v3801
        %v3930 = vunpack.c.l.b16 %v3802
        %v3931 = vunpack.c.l.b16 %v3803
        %v3932 = vunpack.c.l.b16 %v3804
        %v3933 = vunpack.c.l.b16 %v3805
        %v3934 = vunpack.c.l.b16 %v3806
        %v3935 = vunpack.c.l.b16 %v3807
        %v3936 = vunpack.c.l.b16 %v3808
        %v3937 = vunpack.c.l.b16 %v3809
        %v3938 = vunpack.c.l.b16 %v3810
        %v3939 = vunpack.c.l.b16 %v3811
        %v3940 = vunpack.c.l.b16 %v3812
        %v3941 = vunpack.c.l.b16 %v3813
        %v3942 = vunpack.c.l.b16 %v3814
        %v3943 = vunpack.c.l.b16 %v3815
        %v3944 = vunpack.c.l.b16 %v3816
        %v3945 = vunpack.c.l.b16 %v3817
        %v3946 = vunpack.c.l.b16 %v3818
        %v3947 = vunpack.c.l.b16 %v3819
        %v3948 = vunpack.c.l.b16 %v3820
        %v3949 = vunpack.c.l.b16 %v3821
        %v3950 = vunpack.c.l.b16 %v3822
        %v3951 = vunpack.c.l.b16 %v3823
        %v3952 = vunpack.c.l.b16 %v3824
        %v3953 = vpack.c.b16 %v3890, %v3889
        %v3954 = vpack.c.b16 %v3892, %v3891
        %v3955 = vpack.c.b16 %v3894, %v3893
        %v3956 = vpack.c.b16 %v3896, %v3895
        %v3957 = vpack.c.b16 %v3898, %v3897
        %v3958 = vpack.c.b16 %v3900, %v3899
        %v3959 = vpack.c.b16 %v3902, %v3901
        %v3960 = vpack.c.b16 %v3904, %v3903
        %v3961 = vpack.c.b16 %v3906, %v3905
        %v3962 = vpack.c.b16 %v3908, %v3907
        %v3963 = vpack.c.b16 %v3910, %v3909
        %v3964 = vpack.c.b16 %v3912, %v3911
        %v3965 = vpack.c.b16 %v3914, %v3913
        %v3966 = vpack.c.b16 %v3916, %v3915
        %v3967 = vpack.c.b16 %v3918, %v3917
        %v3968 = vpack.c.b16 %v3920, %v3919
        %v3969 = vpack.c.b16 %v3922, %v3921
        %v3970 = vpack.c.b16 %v3924, %v3923
        %v3971 = vpack.c.b16 %v3926, %v3925
        %v3972 = vpack.c.b16 %v3928, %v3927
        %v3973 = vpack.c.b16 %v3930, %v3929
        %v3974 = vpack.c.b16 %v3932, %v3931
        %v3975 = vpack.c.b16 %v3934, %v3933
        %v3976 = vpack.c.b16 %v3936, %v3935
        %v3977 = vpack.c.b16 %v3938, %v3937
        %v3978 = vpack.c.b16 %v3940, %v3939
        %v3979 = vpack.c.b16 %v3942, %v3941
        %v3980 = vpack.c.b16 %v3944, %v3943
        %v3981 = vpack.c.b16 %v3946, %v3945
        %v3982 = vpack.c.b16 %v3948, %v3947
        %v3983 = vpack.c.b16 %v3950, %v3949
        %v3984 = vpack.c.b16 %v3952, %v3951
        %4017 = vst [vmem:[#allocation2 + $0x30] sm:$0xff] %v3953
        %4018 = vst [vmem:[#allocation2 + $0x78] sm:$0xff] %v3954
        %4019 = vst [vmem:[#allocation2 + $0xc0] sm:$0xff] %v3955
        %4020 = vst [vmem:[#allocation2 + $0x108] sm:$0xff] %v3956
        %4021 = vst [vmem:[#allocation2 + $0x150] sm:$0xff] %v3957
        %4022 = vst [vmem:[#allocation2 + $0x198] sm:$0xff] %v3958
        %4023 = vst [vmem:[#allocation2 + $0x1e0] sm:$0xff] %v3959
        %4024 = vst [vmem:[#allocation2 + $0x228] sm:$0xff] %v3960
        %4025 = vst [vmem:[#allocation2 + $0x270] sm:$0xff] %v3961
        %4026 = vst [vmem:[#allocation2 + $0x2b8] sm:$0xff] %v3962
        %4027 = vst [vmem:[#allocation2 + $0x300] sm:$0xff] %v3963
        %4028 = vst [vmem:[#allocation2 + $0x348] sm:$0xff] %v3964
        %4029 = vst [vmem:[#allocation2 + $0x390] sm:$0xff] %v3965
        %4030 = vst [vmem:[#allocation2 + $0x3d8] sm:$0xff] %v3966
        %4031 = vst [vmem:[#allocation2 + $0x420] sm:$0xff] %v3967
        %4032 = vst [vmem:[#allocation2 + $0x468] sm:$0xff] %v3968
        %4033 = vst [vmem:[#allocation2 + $0x4b0] sm:$0xff] %v3969
        %4034 = vst [vmem:[#allocation2 + $0x4f8] sm:$0xff] %v3970
        %4035 = vst [vmem:[#allocation2 + $0x540] sm:$0xff] %v3971
        %4036 = vst [vmem:[#allocation2 + $0x588] sm:$0xff] %v3972
        %4037 = vst [vmem:[#allocation2 + $0x5d0] sm:$0xff] %v3973
        %4038 = vst [vmem:[#allocation2 + $0x618] sm:$0xff] %v3974
        %4039 = vst [vmem:[#allocation2 + $0x660] sm:$0xff] %v3975
        %4040 = vst [vmem:[#allocation2 + $0x6a8] sm:$0xff] %v3976
        %4041 = vst [vmem:[#allocation2 + $0x6f0] sm:$0xff] %v3977
        %4042 = vst [vmem:[#allocation2 + $0x738] sm:$0xff] %v3978
        %4043 = vst [vmem:[#allocation2 + $0x780] sm:$0xff] %v3979
        %4044 = vst [vmem:[#allocation2 + $0x7c8] sm:$0xff] %v3980
        %4045 = vst [vmem:[#allocation2 + $0x810] sm:$0xff] %v3981
        %4046 = vst [vmem:[#allocation2 + $0x858] sm:$0xff] %v3982
        %4047 = vst [vmem:[#allocation2 + $0x8a0] sm:$0xff] %v3983
        %4048 = vst [vmem:[#allocation2 + $0x8e8] sm:$0xff] %v3984
        %v4049 = vld [vmem:[%s3760] sm:$0xf]
        %v4050 = vld [vmem:[%s3760 + $0x4] sm:$0xf]
        %v4051 = vld [vmem:[%s3760 + $0x8] sm:$0xf]
        %v4052 = vld [vmem:[%s3760 + $0xc] sm:$0xf]
        %v4053 = vld [vmem:[%s3760 + $0x10] sm:$0x1]
        %v4054 = vld [vmem:[%s3760 + $0x14] sm:$0xf]
        %v4055 = vld [vmem:[%s3760 + $0x18] sm:$0xf]
        %v4056 = vld [vmem:[%s3760 + $0x1c] sm:$0xf]
        %v4057 = vld [vmem:[%s3760 + $0x20] sm:$0xf]
        %v4058 = vld [vmem:[%s3760 + $0x24] sm:$0x1]
        %v4059 = vld [vmem:[%s3760 + $0x28] sm:$0xf]
        %v4060 = vld [vmem:[%s3760 + $0x2c] sm:$0xf]
        %v4061 = vld [vmem:[%s3760 + $0x30] sm:$0xf]
        %v4062 = vld [vmem:[%s3760 + $0x34] sm:$0xf]
        %v4063 = vld [vmem:[%s3760 + $0x38] sm:$0x1]
        %v4064 = vld [vmem:[%s3760 + $0x3c] sm:$0xf]
        %v4065 = vld [vmem:[%s3760 + $0x40] sm:$0xf]
        %v4066 = vld [vmem:[%s3760 + $0x44] sm:$0xf]
        %v4067 = vld [vmem:[%s3760 + $0x48] sm:$0xf]
        %v4068 = vld [vmem:[%s3760 + $0x4c] sm:$0x1]
        %v4069 = vld [vmem:[%s3760 + $0x50] sm:$0xf]
        %v4070 = vld [vmem:[%s3760 + $0x54] sm:$0xf]
        %v4071 = vld [vmem:[%s3760 + $0x58] sm:$0xf]
        %v4072 = vld [vmem:[%s3760 + $0x5c] sm:$0xf]
        %v4073 = vld [vmem:[%s3760 + $0x60] sm:$0x1]
        %v4074 = vld [vmem:[%s3760 + $0x64] sm:$0xf]
        %v4075 = vld [vmem:[%s3760 + $0x68] sm:$0xf]
        %v4076 = vld [vmem:[%s3760 + $0x6c] sm:$0xf]
        %v4077 = vld [vmem:[%s3760 + $0x70] sm:$0xf]
        %v4078 = vld [vmem:[%s3760 + $0x74] sm:$0x1]
        %v4079 = vld [vmem:[%s3760 + $0x78] sm:$0xf]
        %v4080 = vld [vmem:[%s3760 + $0x7c] sm:$0xf]
        %v4081 = vld [vmem:[%s3760 + $0x80] sm:$0xf]
        %v4082 = vld [vmem:[%s3760 + $0x84] sm:$0xf]
        %v4083 = vld [vmem:[%s3760 + $0x88] sm:$0x1]
        %v4084 = vld [vmem:[%s3760 + $0x8c] sm:$0xf]
        %v4085 = vld [vmem:[%s3760 + $0x90] sm:$0xf]
        %v4086 = vld [vmem:[%s3760 + $0x94] sm:$0xf]
        %v4087 = vld [vmem:[%s3760 + $0x98] sm:$0xf]
        %v4088 = vld [vmem:[%s3760 + $0x9c] sm:$0x1]
        %v4089 = vld [vmem:[%s3760 + $0xa0] sm:$0xf]
        %v4090 = vld [vmem:[%s3760 + $0xa4] sm:$0xf]
        %v4091 = vld [vmem:[%s3760 + $0xa8] sm:$0xf]
        %v4092 = vld [vmem:[%s3760 + $0xac] sm:$0xf]
        %v4093 = vld [vmem:[%s3760 + $0xb0] sm:$0x1]
        %v4094 = vld [vmem:[%s3760 + $0xb4] sm:$0xf]
        %v4095 = vld [vmem:[%s3760 + $0xb8] sm:$0xf]
        %v4096 = vld [vmem:[%s3760 + $0xbc] sm:$0xf]
        %v4097 = vld [vmem:[%s3760 + $0xc0] sm:$0xf]
        %v4098 = vld [vmem:[%s3760 + $0xc4] sm:$0x1]
        %v4099 = vld [vmem:[%s3760 + $0xc8] sm:$0xf]
        %v4100 = vld [vmem:[%s3760 + $0xcc] sm:$0xf]
        %v4101 = vld [vmem:[%s3760 + $0xd0] sm:$0xf]
        %v4102 = vld [vmem:[%s3760 + $0xd4] sm:$0xf]
        %v4103 = vld [vmem:[%s3760 + $0xd8] sm:$0x1]
        %v4104 = vld [vmem:[%s3760 + $0xdc] sm:$0xf]
        %v4105 = vld [vmem:[%s3760 + $0xe0] sm:$0xf]
        %v4106 = vld [vmem:[%s3760 + $0xe4] sm:$0xf]
        %v4107 = vld [vmem:[%s3760 + $0xe8] sm:$0xf]
        %v4108 = vld [vmem:[%s3760 + $0xec] sm:$0x1]
        %v4109 = vld [vmem:[%s3760 + $0xf0] sm:$0xf]
        %v4110 = vld [vmem:[%s3760 + $0xf4] sm:$0xf]
        %v4111 = vld [vmem:[%s3760 + $0xf8] sm:$0xf]
        %v4112 = vld [vmem:[%s3760 + $0xfc] sm:$0xf]
        %v4113 = vld [vmem:[%s3760 + $0x100] sm:$0x1]
        %v4114 = vld [vmem:[%s3760 + $0x104] sm:$0xf]
        %v4115 = vld [vmem:[%s3760 + $0x108] sm:$0xf]
        %v4116 = vld [vmem:[%s3760 + $0x10c] sm:$0xf]
        %v4117 = vld [vmem:[%s3760 + $0x110] sm:$0xf]
        %v4118 = vld [vmem:[%s3760 + $0x114] sm:$0x1]
        %v4119 = vld [vmem:[%s3760 + $0x118] sm:$0xf]
        %v4120 = vld [vmem:[%s3760 + $0x11c] sm:$0xf]
        %v4121 = vld [vmem:[%s3760 + $0x120] sm:$0xf]
        %v4122 = vld [vmem:[%s3760 + $0x124] sm:$0xf]
        %v4123 = vld [vmem:[%s3760 + $0x128] sm:$0x1]
        %v4124 = vld [vmem:[%s3760 + $0x12c] sm:$0xf]
        %v4125 = vld [vmem:[%s3760 + $0x130] sm:$0xf]
        %v4126 = vld [vmem:[%s3760 + $0x134] sm:$0xf]
        %v4127 = vld [vmem:[%s3760 + $0x138] sm:$0xf]
        %v4128 = vld [vmem:[%s3760 + $0x13c] sm:$0x1]
        %v4130 = vshrl.u32 %v4049, 16
        %v4132 = vrot.slane %v4130, 4
        %v4133 = vshll.u32 %v4049, 16
        %v4135 = vrot.slane %v4133, 5
        %v4136 = vor.u32 %v4132, %v4135
        %v4137 = vrot.slane %v4136, 4
        %v4139 = vshll.u32 %v4050, 16
        %v4141 = vrot.slane %v4139, 5
        %v4142 = vsel %vm597, %v4137, %v4141
        %v4143 = vshrl.u32 %v4050, 16
        %v4145 = vrot.slane %v4143, 4
        %v4146 = vor.u32 %v4145, %v4141
        %v4147 = vrot.slane %v4146, 4
        %v4149 = vshll.u32 %v4051, 16
        %v4151 = vrot.slane %v4149, 5
        %v4152 = vsel %vm597, %v4147, %v4151
        %v4153 = vshrl.u32 %v4051, 16
        %v4155 = vrot.slane %v4153, 4
        %v4156 = vor.u32 %v4155, %v4151
        %v4157 = vrot.slane %v4156, 4
        %v4159 = vshll.u32 %v4052, 16
        %v4161 = vrot.slane %v4159, 5
        %v4162 = vsel %vm597, %v4157, %v4161
        %v4163 = vshrl.u32 %v4052, 16
        %v4165 = vrot.slane %v4163, 4
        %v4166 = vor.u32 %v4165, %v4161
        %v4167 = vrot.slane %v4166, 4
        %v4169 = vshll.u32 %v4053, 16
        %v4171 = vrot.slane %v4169, 5
        %v4172 = vsel %vm597, %v4167, %v4171
        %v4174 = vshrl.u32 %v4054, 16
        %v4176 = vrot.slane %v4174, 4
        %v4177 = vshll.u32 %v4054, 16
        %v4179 = vrot.slane %v4177, 5
        %v4180 = vor.u32 %v4176, %v4179
        %v4181 = vrot.slane %v4180, 4
        %v4183 = vshll.u32 %v4055, 16
        %v4185 = vrot.slane %v4183, 5
        %v4186 = vsel %vm597, %v4181, %v4185
        %v4187 = vshrl.u32 %v4055, 16
        %v4189 = vrot.slane %v4187, 4
        %v4190 = vor.u32 %v4189, %v4185
        %v4191 = vrot.slane %v4190, 4
        %v4193 = vshll.u32 %v4056, 16
        %v4195 = vrot.slane %v4193, 5
        %v4196 = vsel %vm597, %v4191, %v4195
        %v4197 = vshrl.u32 %v4056, 16
        %v4199 = vrot.slane %v4197, 4
        %v4200 = vor.u32 %v4199, %v4195
        %v4201 = vrot.slane %v4200, 4
        %v4203 = vshll.u32 %v4057, 16
        %v4205 = vrot.slane %v4203, 5
        %v4206 = vsel %vm597, %v4201, %v4205
        %v4207 = vshrl.u32 %v4057, 16
        %v4209 = vrot.slane %v4207, 4
        %v4210 = vor.u32 %v4209, %v4205
        %v4211 = vrot.slane %v4210, 4
        %v4213 = vshll.u32 %v4058, 16
        %v4215 = vrot.slane %v4213, 5
        %v4216 = vsel %vm597, %v4211, %v4215
        %v4218 = vshrl.u32 %v4059, 16
        %v4220 = vrot.slane %v4218, 4
        %v4221 = vshll.u32 %v4059, 16
        %v4223 = vrot.slane %v4221, 5
        %v4224 = vor.u32 %v4220, %v4223
        %v4225 = vrot.slane %v4224, 4
        %v4227 = vshll.u32 %v4060, 16
        %v4229 = vrot.slane %v4227, 5
        %v4230 = vsel %vm597, %v4225, %v4229
        %v4231 = vshrl.u32 %v4060, 16
        %v4233 = vrot.slane %v4231, 4
        %v4234 = vor.u32 %v4233, %v4229
        %v4235 = vrot.slane %v4234, 4
        %v4237 = vshll.u32 %v4061, 16
        %v4239 = vrot.slane %v4237, 5
        %v4240 = vsel %vm597, %v4235, %v4239
        %v4241 = vshrl.u32 %v4061, 16
        %v4243 = vrot.slane %v4241, 4
        %v4244 = vor.u32 %v4243, %v4239
        %v4245 = vrot.slane %v4244, 4
        %v4247 = vshll.u32 %v4062, 16
        %v4249 = vrot.slane %v4247, 5
        %v4250 = vsel %vm597, %v4245, %v4249
        %v4251 = vshrl.u32 %v4062, 16
        %v4253 = vrot.slane %v4251, 4
        %v4254 = vor.u32 %v4253, %v4249
        %v4255 = vrot.slane %v4254, 4
        %v4257 = vshll.u32 %v4063, 16
        %v4259 = vrot.slane %v4257, 5
        %v4260 = vsel %vm597, %v4255, %v4259
        %v4262 = vshrl.u32 %v4064, 16
        %v4264 = vrot.slane %v4262, 4
        %v4265 = vshll.u32 %v4064, 16
        %v4267 = vrot.slane %v4265, 5
        %v4268 = vor.u32 %v4264, %v4267
        %v4269 = vrot.slane %v4268, 4
        %v4271 = vshll.u32 %v4065, 16
        %v4273 = vrot.slane %v4271, 5
        %v4274 = vsel %vm597, %v4269, %v4273
        %v4275 = vshrl.u32 %v4065, 16
        %v4277 = vrot.slane %v4275, 4
        %v4278 = vor.u32 %v4277, %v4273
        %v4279 = vrot.slane %v4278, 4
        %v4281 = vshll.u32 %v4066, 16
        %v4283 = vrot.slane %v4281, 5
        %v4284 = vsel %vm597, %v4279, %v4283
        %v4285 = vshrl.u32 %v4066, 16
        %v4287 = vrot.slane %v4285, 4
        %v4288 = vor.u32 %v4287, %v4283
        %v4289 = vrot.slane %v4288, 4
        %v4291 = vshll.u32 %v4067, 16
        %v4293 = vrot.slane %v4291, 5
        %v4294 = vsel %vm597, %v4289, %v4293
        %v4295 = vshrl.u32 %v4067, 16
        %v4297 = vrot.slane %v4295, 4
        %v4298 = vor.u32 %v4297, %v4293
        %v4299 = vrot.slane %v4298, 4
        %v4301 = vshll.u32 %v4068, 16
        %v4303 = vrot.slane %v4301, 5
        %v4304 = vsel %vm597, %v4299, %v4303
        %v4306 = vshrl.u32 %v4069, 16
        %v4308 = vrot.slane %v4306, 4
        %v4309 = vshll.u32 %v4069, 16
        %v4311 = vrot.slane %v4309, 5
        %v4312 = vor.u32 %v4308, %v4311
        %v4313 = vrot.slane %v4312, 4
        %v4315 = vshll.u32 %v4070, 16
        %v4317 = vrot.slane %v4315, 5
        %v4318 = vsel %vm597, %v4313, %v4317
        %v4319 = vshrl.u32 %v4070, 16
        %v4321 = vrot.slane %v4319, 4
        %v4322 = vor.u32 %v4321, %v4317
        %v4323 = vrot.slane %v4322, 4
        %v4325 = vshll.u32 %v4071, 16
        %v4327 = vrot.slane %v4325, 5
        %v4328 = vsel %vm597, %v4323, %v4327
        %v4329 = vshrl.u32 %v4071, 16
        %v4331 = vrot.slane %v4329, 4
        %v4332 = vor.u32 %v4331, %v4327
        %v4333 = vrot.slane %v4332, 4
        %v4335 = vshll.u32 %v4072, 16
        %v4337 = vrot.slane %v4335, 5
        %v4338 = vsel %vm597, %v4333, %v4337
        %v4339 = vshrl.u32 %v4072, 16
        %v4341 = vrot.slane %v4339, 4
        %v4342 = vor.u32 %v4341, %v4337
        %v4343 = vrot.slane %v4342, 4
        %v4345 = vshll.u32 %v4073, 16
        %v4347 = vrot.slane %v4345, 5
        %v4348 = vsel %vm597, %v4343, %v4347
        %v4350 = vshrl.u32 %v4074, 16
        %v4352 = vrot.slane %v4350, 4
        %v4353 = vshll.u32 %v4074, 16
        %v4355 = vrot.slane %v4353, 5
        %v4356 = vor.u32 %v4352, %v4355
        %v4357 = vrot.slane %v4356, 4
        %v4359 = vshll.u32 %v4075, 16
        %v4361 = vrot.slane %v4359, 5
        %v4362 = vsel %vm597, %v4357, %v4361
        %v4363 = vshrl.u32 %v4075, 16
        %v4365 = vrot.slane %v4363, 4
        %v4366 = vor.u32 %v4365, %v4361
        %v4367 = vrot.slane %v4366, 4
        %v4369 = vshll.u32 %v4076, 16
        %v4371 = vrot.slane %v4369, 5
        %v4372 = vsel %vm597, %v4367, %v4371
        %v4373 = vshrl.u32 %v4076, 16
        %v4375 = vrot.slane %v4373, 4
        %v4376 = vor.u32 %v4375, %v4371
        %v4377 = vrot.slane %v4376, 4
        %v4379 = vshll.u32 %v4077, 16
        %v4381 = vrot.slane %v4379, 5
        %v4382 = vsel %vm597, %v4377, %v4381
        %v4383 = vshrl.u32 %v4077, 16
        %v4385 = vrot.slane %v4383, 4
        %v4386 = vor.u32 %v4385, %v4381
        %v4387 = vrot.slane %v4386, 4
        %v4389 = vshll.u32 %v4078, 16
        %v4391 = vrot.slane %v4389, 5
        %v4392 = vsel %vm597, %v4387, %v4391
        %v4394 = vshrl.u32 %v4079, 16
        %v4396 = vrot.slane %v4394, 4
        %v4397 = vshll.u32 %v4079, 16
        %v4399 = vrot.slane %v4397, 5
        %v4400 = vor.u32 %v4396, %v4399
        %v4401 = vrot.slane %v4400, 4
        %v4403 = vshll.u32 %v4080, 16
        %v4405 = vrot.slane %v4403, 5
        %v4406 = vsel %vm597, %v4401, %v4405
        %v4407 = vshrl.u32 %v4080, 16
        %v4409 = vrot.slane %v4407, 4
        %v4410 = vor.u32 %v4409, %v4405
        %v4411 = vrot.slane %v4410, 4
        %v4413 = vshll.u32 %v4081, 16
        %v4415 = vrot.slane %v4413, 5
        %v4416 = vsel %vm597, %v4411, %v4415
        %v4417 = vshrl.u32 %v4081, 16
        %v4419 = vrot.slane %v4417, 4
        %v4420 = vor.u32 %v4419, %v4415
        %v4421 = vrot.slane %v4420, 4
        %v4423 = vshll.u32 %v4082, 16
        %v4425 = vrot.slane %v4423, 5
        %v4426 = vsel %vm597, %v4421, %v4425
        %v4427 = vshrl.u32 %v4082, 16
        %v4429 = vrot.slane %v4427, 4
        %v4430 = vor.u32 %v4429, %v4425
        %v4431 = vrot.slane %v4430, 4
        %v4433 = vshll.u32 %v4083, 16
        %v4435 = vrot.slane %v4433, 5
        %v4436 = vsel %vm597, %v4431, %v4435
        %v4438 = vshrl.u32 %v4084, 16
        %v4440 = vrot.slane %v4438, 4
        %v4441 = vshll.u32 %v4084, 16
        %v4443 = vrot.slane %v4441, 5
        %v4444 = vor.u32 %v4440, %v4443
        %v4445 = vrot.slane %v4444, 4
        %v4447 = vshll.u32 %v4085, 16
        %v4449 = vrot.slane %v4447, 5
        %v4450 = vsel %vm597, %v4445, %v4449
        %v4451 = vshrl.u32 %v4085, 16
        %v4453 = vrot.slane %v4451, 4
        %v4454 = vor.u32 %v4453, %v4449
        %v4455 = vrot.slane %v4454, 4
        %v4457 = vshll.u32 %v4086, 16
        %v4459 = vrot.slane %v4457, 5
        %v4460 = vsel %vm597, %v4455, %v4459
        %v4461 = vshrl.u32 %v4086, 16
        %v4463 = vrot.slane %v4461, 4
        %v4464 = vor.u32 %v4463, %v4459
        %v4465 = vrot.slane %v4464, 4
        %v4467 = vshll.u32 %v4087, 16
        %v4469 = vrot.slane %v4467, 5
        %v4470 = vsel %vm597, %v4465, %v4469
        %v4471 = vshrl.u32 %v4087, 16
        %v4473 = vrot.slane %v4471, 4
        %v4474 = vor.u32 %v4473, %v4469
        %v4475 = vrot.slane %v4474, 4
        %v4477 = vshll.u32 %v4088, 16
        %v4479 = vrot.slane %v4477, 5
        %v4480 = vsel %vm597, %v4475, %v4479
        %v4482 = vshrl.u32 %v4089, 16
        %v4484 = vrot.slane %v4482, 4
        %v4485 = vshll.u32 %v4089, 16
        %v4487 = vrot.slane %v4485, 5
        %v4488 = vor.u32 %v4484, %v4487
        %v4489 = vrot.slane %v4488, 4
        %v4491 = vshll.u32 %v4090, 16
        %v4493 = vrot.slane %v4491, 5
        %v4494 = vsel %vm597, %v4489, %v4493
        %v4495 = vshrl.u32 %v4090, 16
        %v4497 = vrot.slane %v4495, 4
        %v4498 = vor.u32 %v4497, %v4493
        %v4499 = vrot.slane %v4498, 4
        %v4501 = vshll.u32 %v4091, 16
        %v4503 = vrot.slane %v4501, 5
        %v4504 = vsel %vm597, %v4499, %v4503
        %v4505 = vshrl.u32 %v4091, 16
        %v4507 = vrot.slane %v4505, 4
        %v4508 = vor.u32 %v4507, %v4503
        %v4509 = vrot.slane %v4508, 4
        %v4511 = vshll.u32 %v4092, 16
        %v4513 = vrot.slane %v4511, 5
        %v4514 = vsel %vm597, %v4509, %v4513
        %v4515 = vshrl.u32 %v4092, 16
        %v4517 = vrot.slane %v4515, 4
        %v4518 = vor.u32 %v4517, %v4513
        %v4519 = vrot.slane %v4518, 4
        %v4521 = vshll.u32 %v4093, 16
        %v4523 = vrot.slane %v4521, 5
        %v4524 = vsel %vm597, %v4519, %v4523
        %v4526 = vshrl.u32 %v4094, 16
        %v4528 = vrot.slane %v4526, 4
        %v4529 = vshll.u32 %v4094, 16
        %v4531 = vrot.slane %v4529, 5
        %v4532 = vor.u32 %v4528, %v4531
        %v4533 = vrot.slane %v4532, 4
        %v4535 = vshll.u32 %v4095, 16
        %v4537 = vrot.slane %v4535, 5
        %v4538 = vsel %vm597, %v4533, %v4537
        %v4539 = vshrl.u32 %v4095, 16
        %v4541 = vrot.slane %v4539, 4
        %v4542 = vor.u32 %v4541, %v4537
        %v4543 = vrot.slane %v4542, 4
        %v4545 = vshll.u32 %v4096, 16
        %v4547 = vrot.slane %v4545, 5
        %v4548 = vsel %vm597, %v4543, %v4547
        %v4549 = vshrl.u32 %v4096, 16
        %v4551 = vrot.slane %v4549, 4
        %v4552 = vor.u32 %v4551, %v4547
        %v4553 = vrot.slane %v4552, 4
        %v4555 = vshll.u32 %v4097, 16
        %v4557 = vrot.slane %v4555, 5
        %v4558 = vsel %vm597, %v4553, %v4557
        %v4559 = vshrl.u32 %v4097, 16
        %v4561 = vrot.slane %v4559, 4
        %v4562 = vor.u32 %v4561, %v4557
        %v4563 = vrot.slane %v4562, 4
        %v4565 = vshll.u32 %v4098, 16
        %v4567 = vrot.slane %v4565, 5
        %v4568 = vsel %vm597, %v4563, %v4567
        %v4570 = vshrl.u32 %v4099, 16
        %v4572 = vrot.slane %v4570, 4
        %v4573 = vshll.u32 %v4099, 16
        %v4575 = vrot.slane %v4573, 5
        %v4576 = vor.u32 %v4572, %v4575
        %v4577 = vrot.slane %v4576, 4
        %v4579 = vshll.u32 %v4100, 16
        %v4581 = vrot.slane %v4579, 5
        %v4582 = vsel %vm597, %v4577, %v4581
        %v4583 = vshrl.u32 %v4100, 16
        %v4585 = vrot.slane %v4583, 4
        %v4586 = vor.u32 %v4585, %v4581
        %v4587 = vrot.slane %v4586, 4
        %v4589 = vshll.u32 %v4101, 16
        %v4591 = vrot.slane %v4589, 5
        %v4592 = vsel %vm597, %v4587, %v4591
        %v4593 = vshrl.u32 %v4101, 16
        %v4595 = vrot.slane %v4593, 4
        %v4596 = vor.u32 %v4595, %v4591
        %v4597 = vrot.slane %v4596, 4
        %v4599 = vshll.u32 %v4102, 16
        %v4601 = vrot.slane %v4599, 5
        %v4602 = vsel %vm597, %v4597, %v4601
        %v4603 = vshrl.u32 %v4102, 16
        %v4605 = vrot.slane %v4603, 4
        %v4606 = vor.u32 %v4605, %v4601
        %v4607 = vrot.slane %v4606, 4
        %v4609 = vshll.u32 %v4103, 16
        %v4611 = vrot.slane %v4609, 5
        %v4612 = vsel %vm597, %v4607, %v4611
        %v4614 = vshrl.u32 %v4104, 16
        %v4616 = vrot.slane %v4614, 4
        %v4617 = vshll.u32 %v4104, 16
        %v4619 = vrot.slane %v4617, 5
        %v4620 = vor.u32 %v4616, %v4619
        %v4621 = vrot.slane %v4620, 4
        %v4623 = vshll.u32 %v4105, 16
        %v4625 = vrot.slane %v4623, 5
        %v4626 = vsel %vm597, %v4621, %v4625
        %v4627 = vshrl.u32 %v4105, 16
        %v4629 = vrot.slane %v4627, 4
        %v4630 = vor.u32 %v4629, %v4625
        %v4631 = vrot.slane %v4630, 4
        %v4633 = vshll.u32 %v4106, 16
        %v4635 = vrot.slane %v4633, 5
        %v4636 = vsel %vm597, %v4631, %v4635
        %v4637 = vshrl.u32 %v4106, 16
        %v4639 = vrot.slane %v4637, 4
        %v4640 = vor.u32 %v4639, %v4635
        %v4641 = vrot.slane %v4640, 4
        %v4643 = vshll.u32 %v4107, 16
        %v4645 = vrot.slane %v4643, 5
        %v4646 = vsel %vm597, %v4641, %v4645
        %v4647 = vshrl.u32 %v4107, 16
        %v4649 = vrot.slane %v4647, 4
        %v4650 = vor.u32 %v4649, %v4645
        %v4651 = vrot.slane %v4650, 4
        %v4653 = vshll.u32 %v4108, 16
        %v4655 = vrot.slane %v4653, 5
        %v4656 = vsel %vm597, %v4651, %v4655
        %v4658 = vshrl.u32 %v4109, 16
        %v4660 = vrot.slane %v4658, 4
        %v4661 = vshll.u32 %v4109, 16
        %v4663 = vrot.slane %v4661, 5
        %v4664 = vor.u32 %v4660, %v4663
        %v4665 = vrot.slane %v4664, 4
        %v4667 = vshll.u32 %v4110, 16
        %v4669 = vrot.slane %v4667, 5
        %v4670 = vsel %vm597, %v4665, %v4669
        %v4671 = vshrl.u32 %v4110, 16
        %v4673 = vrot.slane %v4671, 4
        %v4674 = vor.u32 %v4673, %v4669
        %v4675 = vrot.slane %v4674, 4
        %v4677 = vshll.u32 %v4111, 16
        %v4679 = vrot.slane %v4677, 5
        %v4680 = vsel %vm597, %v4675, %v4679
        %v4681 = vshrl.u32 %v4111, 16
        %v4683 = vrot.slane %v4681, 4
        %v4684 = vor.u32 %v4683, %v4679
        %v4685 = vrot.slane %v4684, 4
        %v4687 = vshll.u32 %v4112, 16
        %v4689 = vrot.slane %v4687, 5
        %v4690 = vsel %vm597, %v4685, %v4689
        %v4691 = vshrl.u32 %v4112, 16
        %v4693 = vrot.slane %v4691, 4
        %v4694 = vor.u32 %v4693, %v4689
        %v4695 = vrot.slane %v4694, 4
        %v4697 = vshll.u32 %v4113, 16
        %v4699 = vrot.slane %v4697, 5
        %v4700 = vsel %vm597, %v4695, %v4699
        %v4702 = vshrl.u32 %v4114, 16
        %v4704 = vrot.slane %v4702, 4
        %v4705 = vshll.u32 %v4114, 16
        %v4707 = vrot.slane %v4705, 5
        %v4708 = vor.u32 %v4704, %v4707
        %v4709 = vrot.slane %v4708, 4
        %v4711 = vshll.u32 %v4115, 16
        %v4713 = vrot.slane %v4711, 5
        %v4714 = vsel %vm597, %v4709, %v4713
        %v4715 = vshrl.u32 %v4115, 16
        %v4717 = vrot.slane %v4715, 4
        %v4718 = vor.u32 %v4717, %v4713
        %v4719 = vrot.slane %v4718, 4
        %v4721 = vshll.u32 %v4116, 16
        %v4723 = vrot.slane %v4721, 5
        %v4724 = vsel %vm597, %v4719, %v4723
        %v4725 = vshrl.u32 %v4116, 16
        %v4727 = vrot.slane %v4725, 4
        %v4728 = vor.u32 %v4727, %v4723
        %v4729 = vrot.slane %v4728, 4
        %v4731 = vshll.u32 %v4117, 16
        %v4733 = vrot.slane %v4731, 5
        %v4734 = vsel %vm597, %v4729, %v4733
        %v4735 = vshrl.u32 %v4117, 16
        %v4737 = vrot.slane %v4735, 4
        %v4738 = vor.u32 %v4737, %v4733
        %v4739 = vrot.slane %v4738, 4
        %v4741 = vshll.u32 %v4118, 16
        %v4743 = vrot.slane %v4741, 5
        %v4744 = vsel %vm597, %v4739, %v4743
        %v4746 = vshrl.u32 %v4119, 16
        %v4748 = vrot.slane %v4746, 4
        %v4749 = vshll.u32 %v4119, 16
        %v4751 = vrot.slane %v4749, 5
        %v4752 = vor.u32 %v4748, %v4751
        %v4753 = vrot.slane %v4752, 4
        %v4755 = vshll.u32 %v4120, 16
        %v4757 = vrot.slane %v4755, 5
        %v4758 = vsel %vm597, %v4753, %v4757
        %v4759 = vshrl.u32 %v4120, 16
        %v4761 = vrot.slane %v4759, 4
        %v4762 = vor.u32 %v4761, %v4757
        %v4763 = vrot.slane %v4762, 4
        %v4765 = vshll.u32 %v4121, 16
        %v4767 = vrot.slane %v4765, 5
        %v4768 = vsel %vm597, %v4763, %v4767
        %v4769 = vshrl.u32 %v4121, 16
        %v4771 = vrot.slane %v4769, 4
        %v4772 = vor.u32 %v4771, %v4767
        %v4773 = vrot.slane %v4772, 4
        %v4775 = vshll.u32 %v4122, 16
        %v4777 = vrot.slane %v4775, 5
        %v4778 = vsel %vm597, %v4773, %v4777
        %v4779 = vshrl.u32 %v4122, 16
        %v4781 = vrot.slane %v4779, 4
        %v4782 = vor.u32 %v4781, %v4777
        %v4783 = vrot.slane %v4782, 4
        %v4785 = vshll.u32 %v4123, 16
        %v4787 = vrot.slane %v4785, 5
        %v4788 = vsel %vm597, %v4783, %v4787
        %v4790 = vshrl.u32 %v4124, 16
        %v4792 = vrot.slane %v4790, 4
        %v4793 = vshll.u32 %v4124, 16
        %v4795 = vrot.slane %v4793, 5
        %v4796 = vor.u32 %v4792, %v4795
        %v4797 = vrot.slane %v4796, 4
        %v4799 = vshll.u32 %v4125, 16
        %v4801 = vrot.slane %v4799, 5
        %v4802 = vsel %vm597, %v4797, %v4801
        %v4803 = vshrl.u32 %v4125, 16
        %v4805 = vrot.slane %v4803, 4
        %v4806 = vor.u32 %v4805, %v4801
        %v4807 = vrot.slane %v4806, 4
        %v4809 = vshll.u32 %v4126, 16
        %v4811 = vrot.slane %v4809, 5
        %v4812 = vsel %vm597, %v4807, %v4811
        %v4813 = vshrl.u32 %v4126, 16
        %v4815 = vrot.slane %v4813, 4
        %v4816 = vor.u32 %v4815, %v4811
        %v4817 = vrot.slane %v4816, 4
        %v4819 = vshll.u32 %v4127, 16
        %v4821 = vrot.slane %v4819, 5
        %v4822 = vsel %vm597, %v4817, %v4821
        %v4823 = vshrl.u32 %v4127, 16
        %v4825 = vrot.slane %v4823, 4
        %v4826 = vor.u32 %v4825, %v4821
        %v4827 = vrot.slane %v4826, 4
        %v4829 = vshll.u32 %v4128, 16
        %v4831 = vrot.slane %v4829, 5
        %v4832 = vsel %vm597, %v4827, %v4831
        %v4833 = vunpack.c.l.b16 %v4142
        %v4834 = vunpack.c.l.b16 %v4152
        %v4835 = vunpack.c.l.b16 %v4162
        %v4836 = vunpack.c.l.b16 %v4172
        %v4837 = vunpack.c.l.b16 %v4186
        %v4838 = vunpack.c.l.b16 %v4196
        %v4839 = vunpack.c.l.b16 %v4206
        %v4840 = vunpack.c.l.b16 %v4216
        %v4841 = vunpack.c.l.b16 %v4230
        %v4842 = vunpack.c.l.b16 %v4240
        %v4843 = vunpack.c.l.b16 %v4250
        %v4844 = vunpack.c.l.b16 %v4260
        %v4845 = vunpack.c.l.b16 %v4274
        %v4846 = vunpack.c.l.b16 %v4284
        %v4847 = vunpack.c.l.b16 %v4294
        %v4848 = vunpack.c.l.b16 %v4304
        %v4849 = vunpack.c.l.b16 %v4318
        %v4850 = vunpack.c.l.b16 %v4328
        %v4851 = vunpack.c.l.b16 %v4338
        %v4852 = vunpack.c.l.b16 %v4348
        %v4853 = vunpack.c.l.b16 %v4362
        %v4854 = vunpack.c.l.b16 %v4372
        %v4855 = vunpack.c.l.b16 %v4382
        %v4856 = vunpack.c.l.b16 %v4392
        %v4857 = vunpack.c.l.b16 %v4406
        %v4858 = vunpack.c.l.b16 %v4416
        %v4859 = vunpack.c.l.b16 %v4426
        %v4860 = vunpack.c.l.b16 %v4436
        %v4861 = vunpack.c.l.b16 %v4450
        %v4862 = vunpack.c.l.b16 %v4460
        %v4863 = vunpack.c.l.b16 %v4470
        %v4864 = vunpack.c.l.b16 %v4480
        %v4865 = vunpack.c.l.b16 %v4494
        %v4866 = vunpack.c.l.b16 %v4504
        %v4867 = vunpack.c.l.b16 %v4514
        %v4868 = vunpack.c.l.b16 %v4524
        %v4869 = vunpack.c.l.b16 %v4538
        %v4870 = vunpack.c.l.b16 %v4548
        %v4871 = vunpack.c.l.b16 %v4558
        %v4872 = vunpack.c.l.b16 %v4568
        %v4873 = vunpack.c.l.b16 %v4582
        %v4874 = vunpack.c.l.b16 %v4592
        %v4875 = vunpack.c.l.b16 %v4602
        %v4876 = vunpack.c.l.b16 %v4612
        %v4877 = vunpack.c.l.b16 %v4626
        %v4878 = vunpack.c.l.b16 %v4636
        %v4879 = vunpack.c.l.b16 %v4646
        %v4880 = vunpack.c.l.b16 %v4656
        %v4881 = vunpack.c.l.b16 %v4670
        %v4882 = vunpack.c.l.b16 %v4680
        %v4883 = vunpack.c.l.b16 %v4690
        %v4884 = vunpack.c.l.b16 %v4700
        %v4885 = vunpack.c.l.b16 %v4714
        %v4886 = vunpack.c.l.b16 %v4724
        %v4887 = vunpack.c.l.b16 %v4734
        %v4888 = vunpack.c.l.b16 %v4744
        %v4889 = vunpack.c.l.b16 %v4758
        %v4890 = vunpack.c.l.b16 %v4768
        %v4891 = vunpack.c.l.b16 %v4778
        %v4892 = vunpack.c.l.b16 %v4788
        %v4893 = vunpack.c.l.b16 %v4802
        %v4894 = vunpack.c.l.b16 %v4812
        %v4895 = vunpack.c.l.b16 %v4822
        %v4896 = vunpack.c.l.b16 %v4832
        %v4897 = vpack.c.b16 %v4834, %v4833
        %v4898 = vpack.c.b16 %v4836, %v4835
        %v4899 = vpack.c.b16 %v4838, %v4837
        %v4900 = vpack.c.b16 %v4840, %v4839
        %v4901 = vpack.c.b16 %v4842, %v4841
        %v4902 = vpack.c.b16 %v4844, %v4843
        %v4903 = vpack.c.b16 %v4846, %v4845
        %v4904 = vpack.c.b16 %v4848, %v4847
        %v4905 = vpack.c.b16 %v4850, %v4849
        %v4906 = vpack.c.b16 %v4852, %v4851
        %v4907 = vpack.c.b16 %v4854, %v4853
        %v4908 = vpack.c.b16 %v4856, %v4855
        %v4909 = vpack.c.b16 %v4858, %v4857
        %v4910 = vpack.c.b16 %v4860, %v4859
        %v4911 = vpack.c.b16 %v4862, %v4861
        %v4912 = vpack.c.b16 %v4864, %v4863
        %v4913 = vpack.c.b16 %v4866, %v4865
        %v4914 = vpack.c.b16 %v4868, %v4867
        %v4915 = vpack.c.b16 %v4870, %v4869
        %v4916 = vpack.c.b16 %v4872, %v4871
        %v4917 = vpack.c.b16 %v4874, %v4873
        %v4918 = vpack.c.b16 %v4876, %v4875
        %v4919 = vpack.c.b16 %v4878, %v4877
        %v4920 = vpack.c.b16 %v4880, %v4879
        %v4921 = vpack.c.b16 %v4882, %v4881
        %v4922 = vpack.c.b16 %v4884, %v4883
        %v4923 = vpack.c.b16 %v4886, %v4885
        %v4924 = vpack.c.b16 %v4888, %v4887
        %v4925 = vpack.c.b16 %v4890, %v4889
        %v4926 = vpack.c.b16 %v4892, %v4891
        %v4927 = vpack.c.b16 %v4894, %v4893
        %v4928 = vpack.c.b16 %v4896, %v4895
        %4961 = vst [vmem:[#allocation2 + $0x38] sm:$0xff] %v4897
        %4962 = vst [vmem:[#allocation2 + $0x80] sm:$0xff] %v4898
        %4963 = vst [vmem:[#allocation2 + $0xc8] sm:$0xff] %v4899
        %4964 = vst [vmem:[#allocation2 + $0x110] sm:$0xff] %v4900
        %4965 = vst [vmem:[#allocation2 + $0x158] sm:$0xff] %v4901
        %4966 = vst [vmem:[#allocation2 + $0x1a0] sm:$0xff] %v4902
        %4967 = vst [vmem:[#allocation2 + $0x1e8] sm:$0xff] %v4903
        %4968 = vst [vmem:[#allocation2 + $0x230] sm:$0xff] %v4904
        %4969 = vst [vmem:[#allocation2 + $0x278] sm:$0xff] %v4905
        %4970 = vst [vmem:[#allocation2 + $0x2c0] sm:$0xff] %v4906
        %4971 = vst [vmem:[#allocation2 + $0x308] sm:$0xff] %v4907
        %4972 = vst [vmem:[#allocation2 + $0x350] sm:$0xff] %v4908
        %4973 = vst [vmem:[#allocation2 + $0x398] sm:$0xff] %v4909
        %4974 = vst [vmem:[#allocation2 + $0x3e0] sm:$0xff] %v4910
        %4975 = vst [vmem:[#allocation2 + $0x428] sm:$0xff] %v4911
        %4976 = vst [vmem:[#allocation2 + $0x470] sm:$0xff] %v4912
        %4977 = vst [vmem:[#allocation2 + $0x4b8] sm:$0xff] %v4913
        %4978 = vst [vmem:[#allocation2 + $0x500] sm:$0xff] %v4914
        %4979 = vst [vmem:[#allocation2 + $0x548] sm:$0xff] %v4915
        %4980 = vst [vmem:[#allocation2 + $0x590] sm:$0xff] %v4916
        %4981 = vst [vmem:[#allocation2 + $0x5d8] sm:$0xff] %v4917
        %4982 = vst [vmem:[#allocation2 + $0x620] sm:$0xff] %v4918
        %4983 = vst [vmem:[#allocation2 + $0x668] sm:$0xff] %v4919
        %4984 = vst [vmem:[#allocation2 + $0x6b0] sm:$0xff] %v4920
        %4985 = vst [vmem:[#allocation2 + $0x6f8] sm:$0xff] %v4921
        %4986 = vst [vmem:[#allocation2 + $0x740] sm:$0xff] %v4922
        %4987 = vst [vmem:[#allocation2 + $0x788] sm:$0xff] %v4923
        %4988 = vst [vmem:[#allocation2 + $0x7d0] sm:$0xff] %v4924
        %4989 = vst [vmem:[#allocation2 + $0x818] sm:$0xff] %v4925
        %4990 = vst [vmem:[#allocation2 + $0x860] sm:$0xff] %v4926
        %4991 = vst [vmem:[#allocation2 + $0x8a8] sm:$0xff] %v4927
        %4992 = vst [vmem:[#allocation2 + $0x8f0] sm:$0xff] %v4928
        %v4993 = vld [vmem:[%s3760] sm:$0xe]
        %v4994 = vld [vmem:[%s3760 + $0x4] sm:$0xf]
        %v4995 = vld [vmem:[%s3760 + $0x8] sm:$0xf]
        %v4996 = vld [vmem:[%s3760 + $0xc] sm:$0xf]
        %v4997 = vld [vmem:[%s3760 + $0x10] sm:$0x1]
        %v4998 = vld [vmem:[%s3760 + $0x14] sm:$0xe]
        %v4999 = vld [vmem:[%s3760 + $0x18] sm:$0xf]
        %v5000 = vld [vmem:[%s3760 + $0x1c] sm:$0xf]
        %v5001 = vld [vmem:[%s3760 + $0x20] sm:$0xf]
        %v5002 = vld [vmem:[%s3760 + $0x24] sm:$0x1]
        %v5003 = vld [vmem:[%s3760 + $0x28] sm:$0xe]
        %v5004 = vld [vmem:[%s3760 + $0x2c] sm:$0xf]
        %v5005 = vld [vmem:[%s3760 + $0x30] sm:$0xf]
        %v5006 = vld [vmem:[%s3760 + $0x34] sm:$0xf]
        %v5007 = vld [vmem:[%s3760 + $0x38] sm:$0x1]
        %v5008 = vld [vmem:[%s3760 + $0x3c] sm:$0xe]
        %v5009 = vld [vmem:[%s3760 + $0x40] sm:$0xf]
        %v5010 = vld [vmem:[%s3760 + $0x44] sm:$0xf]
        %v5011 = vld [vmem:[%s3760 + $0x48] sm:$0xf]
        %v5012 = vld [vmem:[%s3760 + $0x4c] sm:$0x1]
        %v5013 = vld [vmem:[%s3760 + $0x50] sm:$0xe]
        %v5014 = vld [vmem:[%s3760 + $0x54] sm:$0xf]
        %v5015 = vld [vmem:[%s3760 + $0x58] sm:$0xf]
        %v5016 = vld [vmem:[%s3760 + $0x5c] sm:$0xf]
        %v5017 = vld [vmem:[%s3760 + $0x60] sm:$0x1]
        %v5018 = vld [vmem:[%s3760 + $0x64] sm:$0xe]
        %v5019 = vld [vmem:[%s3760 + $0x68] sm:$0xf]
        %v5020 = vld [vmem:[%s3760 + $0x6c] sm:$0xf]
        %v5021 = vld [vmem:[%s3760 + $0x70] sm:$0xf]
        %v5022 = vld [vmem:[%s3760 + $0x74] sm:$0x1]
        %v5023 = vld [vmem:[%s3760 + $0x78] sm:$0xe]
        %v5024 = vld [vmem:[%s3760 + $0x7c] sm:$0xf]
        %v5025 = vld [vmem:[%s3760 + $0x80] sm:$0xf]
        %v5026 = vld [vmem:[%s3760 + $0x84] sm:$0xf]
        %v5027 = vld [vmem:[%s3760 + $0x88] sm:$0x1]
        %v5028 = vld [vmem:[%s3760 + $0x8c] sm:$0xe]
        %v5029 = vld [vmem:[%s3760 + $0x90] sm:$0xf]
        %v5030 = vld [vmem:[%s3760 + $0x94] sm:$0xf]
        %v5031 = vld [vmem:[%s3760 + $0x98] sm:$0xf]
        %v5032 = vld [vmem:[%s3760 + $0x9c] sm:$0x1]
        %v5033 = vld [vmem:[%s3760 + $0xa0] sm:$0xe]
        %v5034 = vld [vmem:[%s3760 + $0xa4] sm:$0xf]
        %v5035 = vld [vmem:[%s3760 + $0xa8] sm:$0xf]
        %v5036 = vld [vmem:[%s3760 + $0xac] sm:$0xf]
        %v5037 = vld [vmem:[%s3760 + $0xb0] sm:$0x1]
        %v5038 = vld [vmem:[%s3760 + $0xb4] sm:$0xe]
        %v5039 = vld [vmem:[%s3760 + $0xb8] sm:$0xf]
        %v5040 = vld [vmem:[%s3760 + $0xbc] sm:$0xf]
        %v5041 = vld [vmem:[%s3760 + $0xc0] sm:$0xf]
        %v5042 = vld [vmem:[%s3760 + $0xc4] sm:$0x1]
        %v5043 = vld [vmem:[%s3760 + $0xc8] sm:$0xe]
        %v5044 = vld [vmem:[%s3760 + $0xcc] sm:$0xf]
        %v5045 = vld [vmem:[%s3760 + $0xd0] sm:$0xf]
        %v5046 = vld [vmem:[%s3760 + $0xd4] sm:$0xf]
        %v5047 = vld [vmem:[%s3760 + $0xd8] sm:$0x1]
        %v5048 = vld [vmem:[%s3760 + $0xdc] sm:$0xe]
        %v5049 = vld [vmem:[%s3760 + $0xe0] sm:$0xf]
        %v5050 = vld [vmem:[%s3760 + $0xe4] sm:$0xf]
        %v5051 = vld [vmem:[%s3760 + $0xe8] sm:$0xf]
        %v5052 = vld [vmem:[%s3760 + $0xec] sm:$0x1]
        %v5053 = vld [vmem:[%s3760 + $0xf0] sm:$0xe]
        %v5054 = vld [vmem:[%s3760 + $0xf4] sm:$0xf]
        %v5055 = vld [vmem:[%s3760 + $0xf8] sm:$0xf]
        %v5056 = vld [vmem:[%s3760 + $0xfc] sm:$0xf]
        %v5057 = vld [vmem:[%s3760 + $0x100] sm:$0x1]
        %v5058 = vld [vmem:[%s3760 + $0x104] sm:$0xe]
        %v5059 = vld [vmem:[%s3760 + $0x108] sm:$0xf]
        %v5060 = vld [vmem:[%s3760 + $0x10c] sm:$0xf]
        %v5061 = vld [vmem:[%s3760 + $0x110] sm:$0xf]
        %v5062 = vld [vmem:[%s3760 + $0x114] sm:$0x1]
        %v5063 = vld [vmem:[%s3760 + $0x118] sm:$0xe]
        %v5064 = vld [vmem:[%s3760 + $0x11c] sm:$0xf]
        %v5065 = vld [vmem:[%s3760 + $0x120] sm:$0xf]
        %v5066 = vld [vmem:[%s3760 + $0x124] sm:$0xf]
        %v5067 = vld [vmem:[%s3760 + $0x128] sm:$0x1]
        %v5068 = vld [vmem:[%s3760 + $0x12c] sm:$0xe]
        %v5069 = vld [vmem:[%s3760 + $0x130] sm:$0xf]
        %v5070 = vld [vmem:[%s3760 + $0x134] sm:$0xf]
        %v5071 = vld [vmem:[%s3760 + $0x138] sm:$0xf]
        %v5072 = vld [vmem:[%s3760 + $0x13c] sm:$0x1]
        %v5153 = vrot.slane %v4993, 5
        %v5154 = vrot.slane %v5153, 4
        %v5155 = vrot.slane %v4994, 5
        %v5156 = vsel %vm1624, %v5154, %v5155
        %v5157 = vrot.slane %v5155, 4
        %v5158 = vrot.slane %v4995, 5
        %v5159 = vsel %vm1624, %v5157, %v5158
        %v5160 = vrot.slane %v5158, 4
        %v5161 = vrot.slane %v4996, 5
        %v5162 = vsel %vm1624, %v5160, %v5161
        %v5163 = vrot.slane %v5161, 4
        %v5164 = vrot.slane %v4997, 5
        %v5165 = vsel %vm1624, %v5163, %v5164
        %v5166 = vrot.slane %v4998, 5
        %v5167 = vrot.slane %v5166, 4
        %v5168 = vrot.slane %v4999, 5
        %v5169 = vsel %vm1624, %v5167, %v5168
        %v5170 = vrot.slane %v5168, 4
        %v5171 = vrot.slane %v5000, 5
        %v5172 = vsel %vm1624, %v5170, %v5171
        %v5173 = vrot.slane %v5171, 4
        %v5174 = vrot.slane %v5001, 5
        %v5175 = vsel %vm1624, %v5173, %v5174
        %v5176 = vrot.slane %v5174, 4
        %v5177 = vrot.slane %v5002, 5
        %v5178 = vsel %vm1624, %v5176, %v5177
        %v5179 = vrot.slane %v5003, 5
        %v5180 = vrot.slane %v5179, 4
        %v5181 = vrot.slane %v5004, 5
        %v5182 = vsel %vm1624, %v5180, %v5181
        %v5183 = vrot.slane %v5181, 4
        %v5184 = vrot.slane %v5005, 5
        %v5185 = vsel %vm1624, %v5183, %v5184
        %v5186 = vrot.slane %v5184, 4
        %v5187 = vrot.slane %v5006, 5
        %v5188 = vsel %vm1624, %v5186, %v5187
        %v5189 = vrot.slane %v5187, 4
        %v5190 = vrot.slane %v5007, 5
        %v5191 = vsel %vm1624, %v5189, %v5190
        %v5192 = vrot.slane %v5008, 5
        %v5193 = vrot.slane %v5192, 4
        %v5194 = vrot.slane %v5009, 5
        %v5195 = vsel %vm1624, %v5193, %v5194
        %v5196 = vrot.slane %v5194, 4
        %v5197 = vrot.slane %v5010, 5
        %v5198 = vsel %vm1624, %v5196, %v5197
        %v5199 = vrot.slane %v5197, 4
        %v5200 = vrot.slane %v5011, 5
        %v5201 = vsel %vm1624, %v5199, %v5200
        %v5202 = vrot.slane %v5200, 4
        %v5203 = vrot.slane %v5012, 5
        %v5204 = vsel %vm1624, %v5202, %v5203
        %v5205 = vrot.slane %v5013, 5
        %v5206 = vrot.slane %v5205, 4
        %v5207 = vrot.slane %v5014, 5
        %v5208 = vsel %vm1624, %v5206, %v5207
        %v5209 = vrot.slane %v5207, 4
        %v5210 = vrot.slane %v5015, 5
        %v5211 = vsel %vm1624, %v5209, %v5210
        %v5212 = vrot.slane %v5210, 4
        %v5213 = vrot.slane %v5016, 5
        %v5214 = vsel %vm1624, %v5212, %v5213
        %v5215 = vrot.slane %v5213, 4
        %v5216 = vrot.slane %v5017, 5
        %v5217 = vsel %vm1624, %v5215, %v5216
        %v5218 = vrot.slane %v5018, 5
        %v5219 = vrot.slane %v5218, 4
        %v5220 = vrot.slane %v5019, 5
        %v5221 = vsel %vm1624, %v5219, %v5220
        %v5222 = vrot.slane %v5220, 4
        %v5223 = vrot.slane %v5020, 5
        %v5224 = vsel %vm1624, %v5222, %v5223
        %v5225 = vrot.slane %v5223, 4
        %v5226 = vrot.slane %v5021, 5
        %v5227 = vsel %vm1624, %v5225, %v5226
        %v5228 = vrot.slane %v5226, 4
        %v5229 = vrot.slane %v5022, 5
        %v5230 = vsel %vm1624, %v5228, %v5229
        %v5231 = vrot.slane %v5023, 5
        %v5232 = vrot.slane %v5231, 4
        %v5233 = vrot.slane %v5024, 5
        %v5234 = vsel %vm1624, %v5232, %v5233
        %v5235 = vrot.slane %v5233, 4
        %v5236 = vrot.slane %v5025, 5
        %v5237 = vsel %vm1624, %v5235, %v5236
        %v5238 = vrot.slane %v5236, 4
        %v5239 = vrot.slane %v5026, 5
        %v5240 = vsel %vm1624, %v5238, %v5239
        %v5241 = vrot.slane %v5239, 4
        %v5242 = vrot.slane %v5027, 5
        %v5243 = vsel %vm1624, %v5241, %v5242
        %v5244 = vrot.slane %v5028, 5
        %v5245 = vrot.slane %v5244, 4
        %v5246 = vrot.slane %v5029, 5
        %v5247 = vsel %vm1624, %v5245, %v5246
        %v5248 = vrot.slane %v5246, 4
        %v5249 = vrot.slane %v5030, 5
        %v5250 = vsel %vm1624, %v5248, %v5249
        %v5251 = vrot.slane %v5249, 4
        %v5252 = vrot.slane %v5031, 5
        %v5253 = vsel %vm1624, %v5251, %v5252
        %v5254 = vrot.slane %v5252, 4
        %v5255 = vrot.slane %v5032, 5
        %v5256 = vsel %vm1624, %v5254, %v5255
        %v5257 = vrot.slane %v5033, 5
        %v5258 = vrot.slane %v5257, 4
        %v5259 = vrot.slane %v5034, 5
        %v5260 = vsel %vm1624, %v5258, %v5259
        %v5261 = vrot.slane %v5259, 4
        %v5262 = vrot.slane %v5035, 5
        %v5263 = vsel %vm1624, %v5261, %v5262
        %v5264 = vrot.slane %v5262, 4
        %v5265 = vrot.slane %v5036, 5
        %v5266 = vsel %vm1624, %v5264, %v5265
        %v5267 = vrot.slane %v5265, 4
        %v5268 = vrot.slane %v5037, 5
        %v5269 = vsel %vm1624, %v5267, %v5268
        %v5270 = vrot.slane %v5038, 5
        %v5271 = vrot.slane %v5270, 4
        %v5272 = vrot.slane %v5039, 5
        %v5273 = vsel %vm1624, %v5271, %v5272
        %v5274 = vrot.slane %v5272, 4
        %v5275 = vrot.slane %v5040, 5
        %v5276 = vsel %vm1624, %v5274, %v5275
        %v5277 = vrot.slane %v5275, 4
        %v5278 = vrot.slane %v5041, 5
        %v5279 = vsel %vm1624, %v5277, %v5278
        %v5280 = vrot.slane %v5278, 4
        %v5281 = vrot.slane %v5042, 5
        %v5282 = vsel %vm1624, %v5280, %v5281
        %v5283 = vrot.slane %v5043, 5
        %v5284 = vrot.slane %v5283, 4
        %v5285 = vrot.slane %v5044, 5
        %v5286 = vsel %vm1624, %v5284, %v5285
        %v5287 = vrot.slane %v5285, 4
        %v5288 = vrot.slane %v5045, 5
        %v5289 = vsel %vm1624, %v5287, %v5288
        %v5290 = vrot.slane %v5288, 4
        %v5291 = vrot.slane %v5046, 5
        %v5292 = vsel %vm1624, %v5290, %v5291
        %v5293 = vrot.slane %v5291, 4
        %v5294 = vrot.slane %v5047, 5
        %v5295 = vsel %vm1624, %v5293, %v5294
        %v5296 = vrot.slane %v5048, 5
        %v5297 = vrot.slane %v5296, 4
        %v5298 = vrot.slane %v5049, 5
        %v5299 = vsel %vm1624, %v5297, %v5298
        %v5300 = vrot.slane %v5298, 4
        %v5301 = vrot.slane %v5050, 5
        %v5302 = vsel %vm1624, %v5300, %v5301
        %v5303 = vrot.slane %v5301, 4
        %v5304 = vrot.slane %v5051, 5
        %v5305 = vsel %vm1624, %v5303, %v5304
        %v5306 = vrot.slane %v5304, 4
        %v5307 = vrot.slane %v5052, 5
        %v5308 = vsel %vm1624, %v5306, %v5307
        %v5309 = vrot.slane %v5053, 5
        %v5310 = vrot.slane %v5309, 4
        %v5311 = vrot.slane %v5054, 5
        %v5312 = vsel %vm1624, %v5310, %v5311
        %v5313 = vrot.slane %v5311, 4
        %v5314 = vrot.slane %v5055, 5
        %v5315 = vsel %vm1624, %v5313, %v5314
        %v5316 = vrot.slane %v5314, 4
        %v5317 = vrot.slane %v5056, 5
        %v5318 = vsel %vm1624, %v5316, %v5317
        %v5319 = vrot.slane %v5317, 4
        %v5320 = vrot.slane %v5057, 5
        %v5321 = vsel %vm1624, %v5319, %v5320
        %v5322 = vrot.slane %v5058, 5
        %v5323 = vrot.slane %v5322, 4
        %v5324 = vrot.slane %v5059, 5
        %v5325 = vsel %vm1624, %v5323, %v5324
        %v5326 = vrot.slane %v5324, 4
        %v5327 = vrot.slane %v5060, 5
        %v5328 = vsel %vm1624, %v5326, %v5327
        %v5329 = vrot.slane %v5327, 4
        %v5330 = vrot.slane %v5061, 5
        %v5331 = vsel %vm1624, %v5329, %v5330
        %v5332 = vrot.slane %v5330, 4
        %v5333 = vrot.slane %v5062, 5
        %v5334 = vsel %vm1624, %v5332, %v5333
        %v5335 = vrot.slane %v5063, 5
        %v5336 = vrot.slane %v5335, 4
        %v5337 = vrot.slane %v5064, 5
        %v5338 = vsel %vm1624, %v5336, %v5337
        %v5339 = vrot.slane %v5337, 4
        %v5340 = vrot.slane %v5065, 5
        %v5341 = vsel %vm1624, %v5339, %v5340
        %v5342 = vrot.slane %v5340, 4
        %v5343 = vrot.slane %v5066, 5
        %v5344 = vsel %vm1624, %v5342, %v5343
        %v5345 = vrot.slane %v5343, 4
        %v5346 = vrot.slane %v5067, 5
        %v5347 = vsel %vm1624, %v5345, %v5346
        %v5348 = vrot.slane %v5068, 5
        %v5349 = vrot.slane %v5348, 4
        %v5350 = vrot.slane %v5069, 5
        %v5351 = vsel %vm1624, %v5349, %v5350
        %v5352 = vrot.slane %v5350, 4
        %v5353 = vrot.slane %v5070, 5
        %v5354 = vsel %vm1624, %v5352, %v5353
        %v5355 = vrot.slane %v5353, 4
        %v5356 = vrot.slane %v5071, 5
        %v5357 = vsel %vm1624, %v5355, %v5356
        %v5358 = vrot.slane %v5356, 4
        %v5359 = vrot.slane %v5072, 5
        %v5360 = vsel %vm1624, %v5358, %v5359
        %v5361 = vunpack.c.l.b16 %v5156
        %v5362 = vunpack.c.l.b16 %v5159
        %v5363 = vunpack.c.l.b16 %v5162
        %v5364 = vunpack.c.l.b16 %v5165
        %v5365 = vunpack.c.l.b16 %v5169
        %v5366 = vunpack.c.l.b16 %v5172
        %v5367 = vunpack.c.l.b16 %v5175
        %v5368 = vunpack.c.l.b16 %v5178
        %v5369 = vunpack.c.l.b16 %v5182
        %v5370 = vunpack.c.l.b16 %v5185
        %v5371 = vunpack.c.l.b16 %v5188
        %v5372 = vunpack.c.l.b16 %v5191
        %v5373 = vunpack.c.l.b16 %v5195
        %v5374 = vunpack.c.l.b16 %v5198
        %v5375 = vunpack.c.l.b16 %v5201
        %v5376 = vunpack.c.l.b16 %v5204
        %v5377 = vunpack.c.l.b16 %v5208
        %v5378 = vunpack.c.l.b16 %v5211
        %v5379 = vunpack.c.l.b16 %v5214
        %v5380 = vunpack.c.l.b16 %v5217
        %v5381 = vunpack.c.l.b16 %v5221
        %v5382 = vunpack.c.l.b16 %v5224
        %v5383 = vunpack.c.l.b16 %v5227
        %v5384 = vunpack.c.l.b16 %v5230
        %v5385 = vunpack.c.l.b16 %v5234
        %v5386 = vunpack.c.l.b16 %v5237
        %v5387 = vunpack.c.l.b16 %v5240
        %v5388 = vunpack.c.l.b16 %v5243
        %v5389 = vunpack.c.l.b16 %v5247
        %v5390 = vunpack.c.l.b16 %v5250
        %v5391 = vunpack.c.l.b16 %v5253
        %v5392 = vunpack.c.l.b16 %v5256
        %v5393 = vunpack.c.l.b16 %v5260
        %v5394 = vunpack.c.l.b16 %v5263
        %v5395 = vunpack.c.l.b16 %v5266
        %v5396 = vunpack.c.l.b16 %v5269
        %v5397 = vunpack.c.l.b16 %v5273
        %v5398 = vunpack.c.l.b16 %v5276
        %v5399 = vunpack.c.l.b16 %v5279
        %v5400 = vunpack.c.l.b16 %v5282
        %v5401 = vunpack.c.l.b16 %v5286
        %v5402 = vunpack.c.l.b16 %v5289
        %v5403 = vunpack.c.l.b16 %v5292
        %v5404 = vunpack.c.l.b16 %v5295
        %v5405 = vunpack.c.l.b16 %v5299
        %v5406 = vunpack.c.l.b16 %v5302
        %v5407 = vunpack.c.l.b16 %v5305
        %v5408 = vunpack.c.l.b16 %v5308
        %v5409 = vunpack.c.l.b16 %v5312
        %v5410 = vunpack.c.l.b16 %v5315
        %v5411 = vunpack.c.l.b16 %v5318
        %v5412 = vunpack.c.l.b16 %v5321
        %v5413 = vunpack.c.l.b16 %v5325
        %v5414 = vunpack.c.l.b16 %v5328
        %v5415 = vunpack.c.l.b16 %v5331
        %v5416 = vunpack.c.l.b16 %v5334
        %v5417 = vunpack.c.l.b16 %v5338
        %v5418 = vunpack.c.l.b16 %v5341
        %v5419 = vunpack.c.l.b16 %v5344
        %v5420 = vunpack.c.l.b16 %v5347
        %v5421 = vunpack.c.l.b16 %v5351
        %v5422 = vunpack.c.l.b16 %v5354
        %v5423 = vunpack.c.l.b16 %v5357
        %v5424 = vunpack.c.l.b16 %v5360
        %v5425 = vpack.c.b16 %v5362, %v5361
        %v5426 = vpack.c.b16 %v5364, %v5363
        %v5427 = vpack.c.b16 %v5366, %v5365
        %v5428 = vpack.c.b16 %v5368, %v5367
        %v5429 = vpack.c.b16 %v5370, %v5369
        %v5430 = vpack.c.b16 %v5372, %v5371
        %v5431 = vpack.c.b16 %v5374, %v5373
        %v5432 = vpack.c.b16 %v5376, %v5375
        %v5433 = vpack.c.b16 %v5378, %v5377
        %v5434 = vpack.c.b16 %v5380, %v5379
        %v5435 = vpack.c.b16 %v5382, %v5381
        %v5436 = vpack.c.b16 %v5384, %v5383
        %v5437 = vpack.c.b16 %v5386, %v5385
        %v5438 = vpack.c.b16 %v5388, %v5387
        %v5439 = vpack.c.b16 %v5390, %v5389
        %v5440 = vpack.c.b16 %v5392, %v5391
        %v5441 = vpack.c.b16 %v5394, %v5393
        %v5442 = vpack.c.b16 %v5396, %v5395
        %v5443 = vpack.c.b16 %v5398, %v5397
        %v5444 = vpack.c.b16 %v5400, %v5399
        %v5445 = vpack.c.b16 %v5402, %v5401
        %v5446 = vpack.c.b16 %v5404, %v5403
        %v5447 = vpack.c.b16 %v5406, %v5405
        %v5448 = vpack.c.b16 %v5408, %v5407
        %v5449 = vpack.c.b16 %v5410, %v5409
        %v5450 = vpack.c.b16 %v5412, %v5411
        %v5451 = vpack.c.b16 %v5414, %v5413
        %v5452 = vpack.c.b16 %v5416, %v5415
        %v5453 = vpack.c.b16 %v5418, %v5417
        %v5454 = vpack.c.b16 %v5420, %v5419
        %v5455 = vpack.c.b16 %v5422, %v5421
        %v5456 = vpack.c.b16 %v5424, %v5423
        %5489 = vst [vmem:[#allocation2 + $0x40] sm:$0xff] %v5425
        %5490 = vst [vmem:[#allocation2 + $0x88] sm:$0xff] %v5426
        %5491 = vst [vmem:[#allocation2 + $0xd0] sm:$0xff] %v5427
        %5492 = vst [vmem:[#allocation2 + $0x118] sm:$0xff] %v5428
        %5493 = vst [vmem:[#allocation2 + $0x160] sm:$0xff] %v5429
        %5494 = vst [vmem:[#allocation2 + $0x1a8] sm:$0xff] %v5430
        %5495 = vst [vmem:[#allocation2 + $0x1f0] sm:$0xff] %v5431
        %5496 = vst [vmem:[#allocation2 + $0x238] sm:$0xff] %v5432
        %5497 = vst [vmem:[#allocation2 + $0x280] sm:$0xff] %v5433
        %5498 = vst [vmem:[#allocation2 + $0x2c8] sm:$0xff] %v5434
        %5499 = vst [vmem:[#allocation2 + $0x310] sm:$0xff] %v5435
        %5500 = vst [vmem:[#allocation2 + $0x358] sm:$0xff] %v5436
        %5501 = vst [vmem:[#allocation2 + $0x3a0] sm:$0xff] %v5437
        %5502 = vst [vmem:[#allocation2 + $0x3e8] sm:$0xff] %v5438
        %5503 = vst [vmem:[#allocation2 + $0x430] sm:$0xff] %v5439
        %5504 = vst [vmem:[#allocation2 + $0x478] sm:$0xff] %v5440
        %5505 = vst [vmem:[#allocation2 + $0x4c0] sm:$0xff] %v5441
        %5506 = vst [vmem:[#allocation2 + $0x508] sm:$0xff] %v5442
        %5507 = vst [vmem:[#allocation2 + $0x550] sm:$0xff] %v5443
        %5508 = vst [vmem:[#allocation2 + $0x598] sm:$0xff] %v5444
        %5509 = vst [vmem:[#allocation2 + $0x5e0] sm:$0xff] %v5445
        %5510 = vst [vmem:[#allocation2 + $0x628] sm:$0xff] %v5446
        %5511 = vst [vmem:[#allocation2 + $0x670] sm:$0xff] %v5447
        %5512 = vst [vmem:[#allocation2 + $0x6b8] sm:$0xff] %v5448
        %5513 = vst [vmem:[#allocation2 + $0x700] sm:$0xff] %v5449
        %5514 = vst [vmem:[#allocation2 + $0x748] sm:$0xff] %v5450
        %5515 = vst [vmem:[#allocation2 + $0x790] sm:$0xff] %v5451
        %5516 = vst [vmem:[#allocation2 + $0x7d8] sm:$0xff] %v5452
        %5517 = vst [vmem:[#allocation2 + $0x820] sm:$0xff] %v5453
        %5518 = vst [vmem:[#allocation2 + $0x868] sm:$0xff] %v5454
        %5519 = vst [vmem:[#allocation2 + $0x8b0] sm:$0xff] %v5455
        %5520 = vst [vmem:[#allocation2 + $0x8f8] sm:$0xff] %v5456
        %v5521 = vld [vmem:[#allocation2] sm:$0xff]
        %v5522 = vld [vmem:[#allocation2 + $0x8] sm:$0xff]
        %v5523 = vld [vmem:[#allocation2 + $0x10] sm:$0xff]
        %v5524 = vld [vmem:[#allocation2 + $0x18] sm:$0xff]
        %v5525 = vld [vmem:[#allocation2 + $0x20] sm:$0xff]
        %v5526 = vld [vmem:[#allocation2 + $0x28] sm:$0xff]
        %v5527 = vld [vmem:[#allocation2 + $0x30] sm:$0xff]
        %v5528 = vld [vmem:[#allocation2 + $0x38] sm:$0xff]
        %v5529 = vld [vmem:[#allocation2 + $0x40] sm:$0xff]
        %v5530 = vld [vmem:[#allocation2 + $0x48] sm:$0xff]
        %v5531 = vld [vmem:[#allocation2 + $0x50] sm:$0xff]
        %v5532 = vld [vmem:[#allocation2 + $0x58] sm:$0xff]
        %v5533 = vld [vmem:[#allocation2 + $0x60] sm:$0xff]
        %v5534 = vld [vmem:[#allocation2 + $0x68] sm:$0xff]
        %v5535 = vld [vmem:[#allocation2 + $0x70] sm:$0xff]
        %v5536 = vld [vmem:[#allocation2 + $0x78] sm:$0xff]
        %v5537 = vld [vmem:[#allocation2 + $0x80] sm:$0xff]
        %v5538 = vld [vmem:[#allocation2 + $0x88] sm:$0xff]
        %v5539 = vld [vmem:[#allocation2 + $0x90] sm:$0xff]
        %v5540 = vld [vmem:[#allocation2 + $0x98] sm:$0xff]
        %v5541 = vld [vmem:[#allocation2 + $0xa0] sm:$0xff]
        %v5542 = vld [vmem:[#allocation2 + $0xa8] sm:$0xff]
        %v5543 = vld [vmem:[#allocation2 + $0xb0] sm:$0xff]
        %v5544 = vld [vmem:[#allocation2 + $0xb8] sm:$0xff]
        %v5545 = vld [vmem:[#allocation2 + $0xc0] sm:$0xff]
        %v5546 = vld [vmem:[#allocation2 + $0xc8] sm:$0xff]
        %v5547 = vld [vmem:[#allocation2 + $0xd0] sm:$0xff]
        %v5548 = vld [vmem:[#allocation2 + $0xd8] sm:$0xff]
        %v5549 = vld [vmem:[#allocation2 + $0xe0] sm:$0xff]
        %v5550 = vld [vmem:[#allocation2 + $0xe8] sm:$0xff]
        %v5551 = vld [vmem:[#allocation2 + $0xf0] sm:$0xff]
        %v5552 = vld [vmem:[#allocation2 + $0xf8] sm:$0xff]
        %v5553 = vld [vmem:[#allocation2 + $0x100] sm:$0xff]
        %v5554 = vld [vmem:[#allocation2 + $0x108] sm:$0xff]
        %v5555 = vld [vmem:[#allocation2 + $0x110] sm:$0xff]
        %v5556 = vld [vmem:[#allocation2 + $0x118] sm:$0xff]
        %v5557 = vld [vmem:[#allocation2 + $0x120] sm:$0xff]
        %v5558 = vld [vmem:[#allocation2 + $0x128] sm:$0xff]
        %v5559 = vld [vmem:[#allocation2 + $0x130] sm:$0xff]
        %v5560 = vld [vmem:[#allocation2 + $0x138] sm:$0xff]
        %v5561 = vld [vmem:[#allocation2 + $0x140] sm:$0xff]
        %v5562 = vld [vmem:[#allocation2 + $0x148] sm:$0xff]
        %v5563 = vld [vmem:[#allocation2 + $0x150] sm:$0xff]
        %v5564 = vld [vmem:[#allocation2 + $0x158] sm:$0xff]
        %v5565 = vld [vmem:[#allocation2 + $0x160] sm:$0xff]
        %v5566 = vld [vmem:[#allocation2 + $0x168] sm:$0xff]
        %v5567 = vld [vmem:[#allocation2 + $0x170] sm:$0xff]
        %v5568 = vld [vmem:[#allocation2 + $0x178] sm:$0xff]
        %v5569 = vld [vmem:[#allocation2 + $0x180] sm:$0xff]
        %v5570 = vld [vmem:[#allocation2 + $0x188] sm:$0xff]
        %v5571 = vld [vmem:[#allocation2 + $0x190] sm:$0xff]
        %v5572 = vld [vmem:[#allocation2 + $0x198] sm:$0xff]
        %v5573 = vld [vmem:[#allocation2 + $0x1a0] sm:$0xff]
        %v5574 = vld [vmem:[#allocation2 + $0x1a8] sm:$0xff]
        %v5575 = vld [vmem:[#allocation2 + $0x1b0] sm:$0xff]
        %v5576 = vld [vmem:[#allocation2 + $0x1b8] sm:$0xff]
        %v5577 = vld [vmem:[#allocation2 + $0x1c0] sm:$0xff]
        %v5578 = vld [vmem:[#allocation2 + $0x1c8] sm:$0xff]
        %v5579 = vld [vmem:[#allocation2 + $0x1d0] sm:$0xff]
        %v5580 = vld [vmem:[#allocation2 + $0x1d8] sm:$0xff]
        %v5581 = vld [vmem:[#allocation2 + $0x1e0] sm:$0xff]
        %v5582 = vld [vmem:[#allocation2 + $0x1e8] sm:$0xff]
        %v5583 = vld [vmem:[#allocation2 + $0x1f0] sm:$0xff]
        %v5584 = vld [vmem:[#allocation2 + $0x1f8] sm:$0xff]
        %v5585 = vld [vmem:[#allocation2 + $0x200] sm:$0xff]
        %v5586 = vld [vmem:[#allocation2 + $0x208] sm:$0xff]
        %v5587 = vld [vmem:[#allocation2 + $0x210] sm:$0xff]
        %v5588 = vld [vmem:[#allocation2 + $0x218] sm:$0xff]
        %v5589 = vld [vmem:[#allocation2 + $0x220] sm:$0xff]
        %v5590 = vld [vmem:[#allocation2 + $0x228] sm:$0xff]
        %v5591 = vld [vmem:[#allocation2 + $0x230] sm:$0xff]
        %v5592 = vld [vmem:[#allocation2 + $0x238] sm:$0xff]
        %v5593 = vld [vmem:[#allocation2 + $0x240] sm:$0xff]
        %v5594 = vld [vmem:[#allocation2 + $0x248] sm:$0xff]
        %v5595 = vld [vmem:[#allocation2 + $0x250] sm:$0xff]
        %v5596 = vld [vmem:[#allocation2 + $0x258] sm:$0xff]
        %v5597 = vld [vmem:[#allocation2 + $0x260] sm:$0xff]
        %v5598 = vld [vmem:[#allocation2 + $0x268] sm:$0xff]
        %v5599 = vld [vmem:[#allocation2 + $0x270] sm:$0xff]
        %v5600 = vld [vmem:[#allocation2 + $0x278] sm:$0xff]
        %v5601 = vld [vmem:[#allocation2 + $0x280] sm:$0xff]
        %v5602 = vld [vmem:[#allocation2 + $0x288] sm:$0xff]
        %v5603 = vld [vmem:[#allocation2 + $0x290] sm:$0xff]
        %v5604 = vld [vmem:[#allocation2 + $0x298] sm:$0xff]
        %v5605 = vld [vmem:[#allocation2 + $0x2a0] sm:$0xff]
        %v5606 = vld [vmem:[#allocation2 + $0x2a8] sm:$0xff]
        %v5607 = vld [vmem:[#allocation2 + $0x2b0] sm:$0xff]
        %v5608 = vld [vmem:[#allocation2 + $0x2b8] sm:$0xff]
        %v5609 = vld [vmem:[#allocation2 + $0x2c0] sm:$0xff]
        %v5610 = vld [vmem:[#allocation2 + $0x2c8] sm:$0xff]
        %v5611 = vld [vmem:[#allocation2 + $0x2d0] sm:$0xff]
        %v5612 = vld [vmem:[#allocation2 + $0x2d8] sm:$0xff]
        %v5613 = vld [vmem:[#allocation2 + $0x2e0] sm:$0xff]
        %v5614 = vld [vmem:[#allocation2 + $0x2e8] sm:$0xff]
        %v5615 = vld [vmem:[#allocation2 + $0x2f0] sm:$0xff]
        %v5616 = vld [vmem:[#allocation2 + $0x2f8] sm:$0xff]
        %v5617 = vld [vmem:[#allocation2 + $0x300] sm:$0xff]
        %v5618 = vld [vmem:[#allocation2 + $0x308] sm:$0xff]
        %v5619 = vld [vmem:[#allocation2 + $0x310] sm:$0xff]
        %v5620 = vld [vmem:[#allocation2 + $0x318] sm:$0xff]
        %v5621 = vld [vmem:[#allocation2 + $0x320] sm:$0xff]
        %v5622 = vld [vmem:[#allocation2 + $0x328] sm:$0xff]
        %v5623 = vld [vmem:[#allocation2 + $0x330] sm:$0xff]
        %v5624 = vld [vmem:[#allocation2 + $0x338] sm:$0xff]
        %v5625 = vld [vmem:[#allocation2 + $0x340] sm:$0xff]
        %v5626 = vld [vmem:[#allocation2 + $0x348] sm:$0xff]
        %v5627 = vld [vmem:[#allocation2 + $0x350] sm:$0xff]
        %v5628 = vld [vmem:[#allocation2 + $0x358] sm:$0xff]
        %v5629 = vld [vmem:[#allocation2 + $0x360] sm:$0xff]
        %v5630 = vld [vmem:[#allocation2 + $0x368] sm:$0xff]
        %v5631 = vld [vmem:[#allocation2 + $0x370] sm:$0xff]
        %v5632 = vld [vmem:[#allocation2 + $0x378] sm:$0xff]
        %v5633 = vld [vmem:[#allocation2 + $0x380] sm:$0xff]
        %v5634 = vld [vmem:[#allocation2 + $0x388] sm:$0xff]
        %v5635 = vld [vmem:[#allocation2 + $0x390] sm:$0xff]
        %v5636 = vld [vmem:[#allocation2 + $0x398] sm:$0xff]
        %v5637 = vld [vmem:[#allocation2 + $0x3a0] sm:$0xff]
        %v5638 = vld [vmem:[#allocation2 + $0x3a8] sm:$0xff]
        %v5639 = vld [vmem:[#allocation2 + $0x3b0] sm:$0xff]
        %v5640 = vld [vmem:[#allocation2 + $0x3b8] sm:$0xff]
        %v5641 = vld [vmem:[#allocation2 + $0x3c0] sm:$0xff]
        %v5642 = vld [vmem:[#allocation2 + $0x3c8] sm:$0xff]
        %v5643 = vld [vmem:[#allocation2 + $0x3d0] sm:$0xff]
        %v5644 = vld [vmem:[#allocation2 + $0x3d8] sm:$0xff]
        %v5645 = vld [vmem:[#allocation2 + $0x3e0] sm:$0xff]
        %v5646 = vld [vmem:[#allocation2 + $0x3e8] sm:$0xff]
        %v5647 = vld [vmem:[#allocation2 + $0x3f0] sm:$0xff]
        %v5648 = vld [vmem:[#allocation2 + $0x3f8] sm:$0xff]
        %v5649 = vld [vmem:[#allocation2 + $0x400] sm:$0xff]
        %v5650 = vld [vmem:[#allocation2 + $0x408] sm:$0xff]
        %v5651 = vld [vmem:[#allocation2 + $0x410] sm:$0xff]
        %v5652 = vld [vmem:[#allocation2 + $0x418] sm:$0xff]
        %v5653 = vld [vmem:[#allocation2 + $0x420] sm:$0xff]
        %v5654 = vld [vmem:[#allocation2 + $0x428] sm:$0xff]
        %v5655 = vld [vmem:[#allocation2 + $0x430] sm:$0xff]
        %v5656 = vld [vmem:[#allocation2 + $0x438] sm:$0xff]
        %v5657 = vld [vmem:[#allocation2 + $0x440] sm:$0xff]
        %v5658 = vld [vmem:[#allocation2 + $0x448] sm:$0xff]
        %v5659 = vld [vmem:[#allocation2 + $0x450] sm:$0xff]
        %v5660 = vld [vmem:[#allocation2 + $0x458] sm:$0xff]
        %v5661 = vld [vmem:[#allocation2 + $0x460] sm:$0xff]
        %v5662 = vld [vmem:[#allocation2 + $0x468] sm:$0xff]
        %v5663 = vld [vmem:[#allocation2 + $0x470] sm:$0xff]
        %v5664 = vld [vmem:[#allocation2 + $0x478] sm:$0xff]
        %v5665 = vld [vmem:[#allocation2 + $0x480] sm:$0xff]
        %v5666 = vld [vmem:[#allocation2 + $0x488] sm:$0xff]
        %v5667 = vld [vmem:[#allocation2 + $0x490] sm:$0xff]
        %v5668 = vld [vmem:[#allocation2 + $0x498] sm:$0xff]
        %v5669 = vld [vmem:[#allocation2 + $0x4a0] sm:$0xff]
        %v5670 = vld [vmem:[#allocation2 + $0x4a8] sm:$0xff]
        %v5671 = vld [vmem:[#allocation2 + $0x4b0] sm:$0xff]
        %v5672 = vld [vmem:[#allocation2 + $0x4b8] sm:$0xff]
        %v5673 = vld [vmem:[#allocation2 + $0x4c0] sm:$0xff]
        %v5674 = vld [vmem:[#allocation2 + $0x4c8] sm:$0xff]
        %v5675 = vld [vmem:[#allocation2 + $0x4d0] sm:$0xff]
        %v5676 = vld [vmem:[#allocation2 + $0x4d8] sm:$0xff]
        %v5677 = vld [vmem:[#allocation2 + $0x4e0] sm:$0xff]
        %v5678 = vld [vmem:[#allocation2 + $0x4e8] sm:$0xff]
        %v5679 = vld [vmem:[#allocation2 + $0x4f0] sm:$0xff]
        %v5680 = vld [vmem:[#allocation2 + $0x4f8] sm:$0xff]
        %v5681 = vld [vmem:[#allocation2 + $0x500] sm:$0xff]
        %v5682 = vld [vmem:[#allocation2 + $0x508] sm:$0xff]
        %v5683 = vld [vmem:[#allocation2 + $0x510] sm:$0xff]
        %v5684 = vld [vmem:[#allocation2 + $0x518] sm:$0xff]
        %v5685 = vld [vmem:[#allocation2 + $0x520] sm:$0xff]
        %v5686 = vld [vmem:[#allocation2 + $0x528] sm:$0xff]
        %v5687 = vld [vmem:[#allocation2 + $0x530] sm:$0xff]
        %v5688 = vld [vmem:[#allocation2 + $0x538] sm:$0xff]
        %v5689 = vld [vmem:[#allocation2 + $0x540] sm:$0xff]
        %v5690 = vld [vmem:[#allocation2 + $0x548] sm:$0xff]
        %v5691 = vld [vmem:[#allocation2 + $0x550] sm:$0xff]
        %v5692 = vld [vmem:[#allocation2 + $0x558] sm:$0xff]
        %v5693 = vld [vmem:[#allocation2 + $0x560] sm:$0xff]
        %v5694 = vld [vmem:[#allocation2 + $0x568] sm:$0xff]
        %v5695 = vld [vmem:[#allocation2 + $0x570] sm:$0xff]
        %v5696 = vld [vmem:[#allocation2 + $0x578] sm:$0xff]
        %v5697 = vld [vmem:[#allocation2 + $0x580] sm:$0xff]
        %v5698 = vld [vmem:[#allocation2 + $0x588] sm:$0xff]
        %v5699 = vld [vmem:[#allocation2 + $0x590] sm:$0xff]
        %v5700 = vld [vmem:[#allocation2 + $0x598] sm:$0xff]
        %v5701 = vld [vmem:[#allocation2 + $0x5a0] sm:$0xff]
        %v5702 = vld [vmem:[#allocation2 + $0x5a8] sm:$0xff]
        %v5703 = vld [vmem:[#allocation2 + $0x5b0] sm:$0xff]
        %v5704 = vld [vmem:[#allocation2 + $0x5b8] sm:$0xff]
        %v5705 = vld [vmem:[#allocation2 + $0x5c0] sm:$0xff]
        %v5706 = vld [vmem:[#allocation2 + $0x5c8] sm:$0xff]
        %v5707 = vld [vmem:[#allocation2 + $0x5d0] sm:$0xff]
        %v5708 = vld [vmem:[#allocation2 + $0x5d8] sm:$0xff]
        %v5709 = vld [vmem:[#allocation2 + $0x5e0] sm:$0xff]
        %v5710 = vld [vmem:[#allocation2 + $0x5e8] sm:$0xff]
        %v5711 = vld [vmem:[#allocation2 + $0x5f0] sm:$0xff]
        %v5712 = vld [vmem:[#allocation2 + $0x5f8] sm:$0xff]
        %v5713 = vld [vmem:[#allocation2 + $0x600] sm:$0xff]
        %v5714 = vld [vmem:[#allocation2 + $0x608] sm:$0xff]
        %v5715 = vld [vmem:[#allocation2 + $0x610] sm:$0xff]
        %v5716 = vld [vmem:[#allocation2 + $0x618] sm:$0xff]
        %v5717 = vld [vmem:[#allocation2 + $0x620] sm:$0xff]
        %v5718 = vld [vmem:[#allocation2 + $0x628] sm:$0xff]
        %v5719 = vld [vmem:[#allocation2 + $0x630] sm:$0xff]
        %v5720 = vld [vmem:[#allocation2 + $0x638] sm:$0xff]
        %v5721 = vld [vmem:[#allocation2 + $0x640] sm:$0xff]
        %v5722 = vld [vmem:[#allocation2 + $0x648] sm:$0xff]
        %v5723 = vld [vmem:[#allocation2 + $0x650] sm:$0xff]
        %v5724 = vld [vmem:[#allocation2 + $0x658] sm:$0xff]
        %v5725 = vld [vmem:[#allocation2 + $0x660] sm:$0xff]
        %v5726 = vld [vmem:[#allocation2 + $0x668] sm:$0xff]
        %v5727 = vld [vmem:[#allocation2 + $0x670] sm:$0xff]
        %v5728 = vld [vmem:[#allocation2 + $0x678] sm:$0xff]
        %v5729 = vld [vmem:[#allocation2 + $0x680] sm:$0xff]
        %v5730 = vld [vmem:[#allocation2 + $0x688] sm:$0xff]
        %v5731 = vld [vmem:[#allocation2 + $0x690] sm:$0xff]
        %v5732 = vld [vmem:[#allocation2 + $0x698] sm:$0xff]
        %v5733 = vld [vmem:[#allocation2 + $0x6a0] sm:$0xff]
        %v5734 = vld [vmem:[#allocation2 + $0x6a8] sm:$0xff]
        %v5735 = vld [vmem:[#allocation2 + $0x6b0] sm:$0xff]
        %v5736 = vld [vmem:[#allocation2 + $0x6b8] sm:$0xff]
        %v5737 = vld [vmem:[#allocation2 + $0x6c0] sm:$0xff]
        %v5738 = vld [vmem:[#allocation2 + $0x6c8] sm:$0xff]
        %v5739 = vld [vmem:[#allocation2 + $0x6d0] sm:$0xff]
        %v5740 = vld [vmem:[#allocation2 + $0x6d8] sm:$0xff]
        %v5741 = vld [vmem:[#allocation2 + $0x6e0] sm:$0xff]
        %v5742 = vld [vmem:[#allocation2 + $0x6e8] sm:$0xff]
        %v5743 = vld [vmem:[#allocation2 + $0x6f0] sm:$0xff]
        %v5744 = vld [vmem:[#allocation2 + $0x6f8] sm:$0xff]
        %v5745 = vld [vmem:[#allocation2 + $0x700] sm:$0xff]
        %v5746 = vld [vmem:[#allocation2 + $0x708] sm:$0xff]
        %v5747 = vld [vmem:[#allocation2 + $0x710] sm:$0xff]
        %v5748 = vld [vmem:[#allocation2 + $0x718] sm:$0xff]
        %v5749 = vld [vmem:[#allocation2 + $0x720] sm:$0xff]
        %v5750 = vld [vmem:[#allocation2 + $0x728] sm:$0xff]
        %v5751 = vld [vmem:[#allocation2 + $0x730] sm:$0xff]
        %v5752 = vld [vmem:[#allocation2 + $0x738] sm:$0xff]
        %v5753 = vld [vmem:[#allocation2 + $0x740] sm:$0xff]
        %v5754 = vld [vmem:[#allocation2 + $0x748] sm:$0xff]
        %v5755 = vld [vmem:[#allocation2 + $0x750] sm:$0xff]
        %v5756 = vld [vmem:[#allocation2 + $0x758] sm:$0xff]
        %v5757 = vld [vmem:[#allocation2 + $0x760] sm:$0xff]
        %v5758 = vld [vmem:[#allocation2 + $0x768] sm:$0xff]
        %v5759 = vld [vmem:[#allocation2 + $0x770] sm:$0xff]
        %v5760 = vld [vmem:[#allocation2 + $0x778] sm:$0xff]
        %v5761 = vld [vmem:[#allocation2 + $0x780] sm:$0xff]
        %v5762 = vld [vmem:[#allocation2 + $0x788] sm:$0xff]
        %v5763 = vld [vmem:[#allocation2 + $0x790] sm:$0xff]
        %v5764 = vld [vmem:[#allocation2 + $0x798] sm:$0xff]
        %v5765 = vld [vmem:[#allocation2 + $0x7a0] sm:$0xff]
        %v5766 = vld [vmem:[#allocation2 + $0x7a8] sm:$0xff]
        %v5767 = vld [vmem:[#allocation2 + $0x7b0] sm:$0xff]
        %v5768 = vld [vmem:[#allocation2 + $0x7b8] sm:$0xff]
        %v5769 = vld [vmem:[#allocation2 + $0x7c0] sm:$0xff]
        %v5770 = vld [vmem:[#allocation2 + $0x7c8] sm:$0xff]
        %v5771 = vld [vmem:[#allocation2 + $0x7d0] sm:$0xff]
        %v5772 = vld [vmem:[#allocation2 + $0x7d8] sm:$0xff]
        %v5773 = vld [vmem:[#allocation2 + $0x7e0] sm:$0xff]
        %v5774 = vld [vmem:[#allocation2 + $0x7e8] sm:$0xff]
        %v5775 = vld [vmem:[#allocation2 + $0x7f0] sm:$0xff]
        %v5776 = vld [vmem:[#allocation2 + $0x7f8] sm:$0xff]
        %v5777 = vld [vmem:[#allocation2 + $0x800] sm:$0xff]
        %v5778 = vld [vmem:[#allocation2 + $0x808] sm:$0xff]
        %v5779 = vld [vmem:[#allocation2 + $0x810] sm:$0xff]
        %v5780 = vld [vmem:[#allocation2 + $0x818] sm:$0xff]
        %v5781 = vld [vmem:[#allocation2 + $0x820] sm:$0xff]
        %v5782 = vld [vmem:[#allocation2 + $0x828] sm:$0xff]
        %v5783 = vld [vmem:[#allocation2 + $0x830] sm:$0xff]
        %v5784 = vld [vmem:[#allocation2 + $0x838] sm:$0xff]
        %v5785 = vld [vmem:[#allocation2 + $0x840] sm:$0xff]
        %v5786 = vld [vmem:[#allocation2 + $0x848] sm:$0xff]
        %v5787 = vld [vmem:[#allocation2 + $0x850] sm:$0xff]
        %v5788 = vld [vmem:[#allocation2 + $0x858] sm:$0xff]
        %v5789 = vld [vmem:[#allocation2 + $0x860] sm:$0xff]
        %v5790 = vld [vmem:[#allocation2 + $0x868] sm:$0xff]
        %v5791 = vld [vmem:[#allocation2 + $0x870] sm:$0xff]
        %v5792 = vld [vmem:[#allocation2 + $0x878] sm:$0xff]
        %v5793 = vld [vmem:[#allocation2 + $0x880] sm:$0xff]
        %v5794 = vld [vmem:[#allocation2 + $0x888] sm:$0xff]
        %v5795 = vld [vmem:[#allocation2 + $0x890] sm:$0xff]
        %v5796 = vld [vmem:[#allocation2 + $0x898] sm:$0xff]
        %v5797 = vld [vmem:[#allocation2 + $0x8a0] sm:$0xff]
        %v5798 = vld [vmem:[#allocation2 + $0x8a8] sm:$0xff]
        %v5799 = vld [vmem:[#allocation2 + $0x8b0] sm:$0xff]
        %v5800 = vld [vmem:[#allocation2 + $0x8b8] sm:$0xff]
        %v5801 = vld [vmem:[#allocation2 + $0x8c0] sm:$0xff]
        %v5802 = vld [vmem:[#allocation2 + $0x8c8] sm:$0xff]
        %v5803 = vld [vmem:[#allocation2 + $0x8d0] sm:$0xff]
        %v5804 = vld [vmem:[#allocation2 + $0x8d8] sm:$0xff]
        %v5805 = vld [vmem:[#allocation2 + $0x8e0] sm:$0xff]
        %v5806 = vld [vmem:[#allocation2 + $0x8e8] sm:$0xff]
        %v5807 = vld [vmem:[#allocation2 + $0x8f0] sm:$0xff]
        %v5808 = vld [vmem:[#allocation2 + $0x8f8] sm:$0xff]
        %v5809 = vld [vmem:[#allocation3] sm:$0xf]
        %v5810 = vld [vmem:[#allocation3 + $0x4] sm:$0xf]
        %v5811 = vld [vmem:[#allocation3 + $0x8] sm:$0xf]
        %v5812 = vld [vmem:[#allocation3 + $0xc] sm:$0xf]
        %v5813 = vld [vmem:[#allocation3 + $0x10] sm:$0xf]
        %v5814 = vld [vmem:[#allocation3 + $0x14] sm:$0xf]
        %v5815 = vld [vmem:[#allocation3 + $0x18] sm:$0xf]
        %v5816 = vld [vmem:[#allocation3 + $0x1c] sm:$0xf]
        %v5817 = vld [vmem:[#allocation3 + $0x20] sm:$0xf]
        %v5818 = vld [vmem:[#allocation3 + $0x24] sm:$0xf]
        %v5819 = vld [vmem:[#allocation3 + $0x28] sm:$0xf]
        %v5820 = vld [vmem:[#allocation3 + $0x2c] sm:$0xf]
        %v5821 = vld [vmem:[#allocation3 + $0x30] sm:$0xf]
        %v5822 = vld [vmem:[#allocation3 + $0x34] sm:$0xf]
        %v5823 = vld [vmem:[#allocation3 + $0x38] sm:$0xf]
        %v5824 = vld [vmem:[#allocation3 + $0x3c] sm:$0xf]
        %v5825 = vld [vmem:[#allocation3 + $0x40] sm:$0xf]
        %v5826 = vld [vmem:[#allocation3 + $0x44] sm:$0xf]
        %v5827 = vld [vmem:[#allocation3 + $0x48] sm:$0xf]
        %v5828 = vld [vmem:[#allocation3 + $0x4c] sm:$0xf]
        %v5829 = vld [vmem:[#allocation3 + $0x50] sm:$0xf]
        %v5830 = vld [vmem:[#allocation3 + $0x54] sm:$0xf]
        %v5831 = vld [vmem:[#allocation3 + $0x58] sm:$0xf]
        %v5832 = vld [vmem:[#allocation3 + $0x5c] sm:$0xf]
        %v5833 = vld [vmem:[#allocation3 + $0x60] sm:$0xf]
        %v5834 = vld [vmem:[#allocation3 + $0x64] sm:$0xf]
        %v5835 = vld [vmem:[#allocation3 + $0x68] sm:$0xf]
        %v5836 = vld [vmem:[#allocation3 + $0x6c] sm:$0xf]
        %v5837 = vld [vmem:[#allocation3 + $0x70] sm:$0xf]
        %v5838 = vld [vmem:[#allocation3 + $0x74] sm:$0xf]
        %v5839 = vld [vmem:[#allocation3 + $0x78] sm:$0xf]
        %v5840 = vld [vmem:[#allocation3 + $0x7c] sm:$0xf]
        %v5841 = vld [vmem:[#allocation3 + $0x80] sm:$0xf]
        %v5842 = vld [vmem:[#allocation3 + $0x84] sm:$0xf]
        %v5843 = vld [vmem:[#allocation3 + $0x88] sm:$0xf]
        %v5844 = vld [vmem:[#allocation3 + $0x8c] sm:$0xf]
        %v5845 = vld [vmem:[#allocation3 + $0x90] sm:$0xf]
        %v5846 = vld [vmem:[#allocation3 + $0x94] sm:$0xf]
        %v5847 = vld [vmem:[#allocation3 + $0x98] sm:$0xf]
        %v5848 = vld [vmem:[#allocation3 + $0x9c] sm:$0xf]
        %v5849 = vld [vmem:[#allocation3 + $0xa0] sm:$0xf]
        %v5850 = vld [vmem:[#allocation3 + $0xa4] sm:$0xf]
        %v5851 = vld [vmem:[#allocation3 + $0xa8] sm:$0xf]
        %v5852 = vld [vmem:[#allocation3 + $0xac] sm:$0xf]
        %v5853 = vld [vmem:[#allocation3 + $0xb0] sm:$0xf]
        %v5854 = vld [vmem:[#allocation3 + $0xb4] sm:$0xf]
        %v5855 = vld [vmem:[#allocation3 + $0xb8] sm:$0xf]
        %v5856 = vld [vmem:[#allocation3 + $0xbc] sm:$0xf]
        %v5857 = vld [vmem:[#allocation3 + $0xc0] sm:$0xf]
        %v5858 = vld [vmem:[#allocation3 + $0xc4] sm:$0xf]
        %v5859 = vld [vmem:[#allocation3 + $0xc8] sm:$0xf]
        %v5860 = vld [vmem:[#allocation3 + $0xcc] sm:$0xf]
        %v5861 = vld [vmem:[#allocation3 + $0xd0] sm:$0xf]
        %v5862 = vld [vmem:[#allocation3 + $0xd4] sm:$0xf]
        %v5863 = vld [vmem:[#allocation3 + $0xd8] sm:$0xf]
        %v5864 = vld [vmem:[#allocation3 + $0xdc] sm:$0xf]
        %v5865 = vld [vmem:[#allocation3 + $0xe0] sm:$0xf]
        %v5866 = vld [vmem:[#allocation3 + $0xe4] sm:$0xf]
        %v5867 = vld [vmem:[#allocation3 + $0xe8] sm:$0xf]
        %v5868 = vld [vmem:[#allocation3 + $0xec] sm:$0xf]
        %v5869 = vld [vmem:[#allocation3 + $0xf0] sm:$0xf]
        %v5870 = vld [vmem:[#allocation3 + $0xf4] sm:$0xf]
        %v5871 = vld [vmem:[#allocation3 + $0xf8] sm:$0xf]
        %v5872 = vld [vmem:[#allocation3 + $0xfc] sm:$0xf]
        %v5873 = vld [vmem:[#allocation3 + $0x100] sm:$0xf]
        %v5874 = vld [vmem:[#allocation3 + $0x104] sm:$0xf]
        %v5875 = vld [vmem:[#allocation3 + $0x108] sm:$0xf]
        %v5876 = vld [vmem:[#allocation3 + $0x10c] sm:$0xf]
        %v5877 = vld [vmem:[#allocation3 + $0x110] sm:$0xf]
        %v5878 = vld [vmem:[#allocation3 + $0x114] sm:$0xf]
        %v5879 = vld [vmem:[#allocation3 + $0x118] sm:$0xf]
        %v5880 = vld [vmem:[#allocation3 + $0x11c] sm:$0xf]
        %v5881 = vld [vmem:[#allocation3 + $0x120] sm:$0xf]
        %v5882 = vld [vmem:[#allocation3 + $0x124] sm:$0xf]
        %v5883 = vld [vmem:[#allocation3 + $0x128] sm:$0xf]
        %v5884 = vld [vmem:[#allocation3 + $0x12c] sm:$0xf]
        %v5885 = vld [vmem:[#allocation3 + $0x130] sm:$0xf]
        %v5886 = vld [vmem:[#allocation3 + $0x134] sm:$0xf]
        %v5887 = vld [vmem:[#allocation3 + $0x138] sm:$0xf]
        %v5888 = vld [vmem:[#allocation3 + $0x13c] sm:$0xf]
        %v5889 = vld [vmem:[#allocation3 + $0x140] sm:$0xf]
        %v5890 = vld [vmem:[#allocation3 + $0x144] sm:$0xf]
        %v5891 = vld [vmem:[#allocation3 + $0x148] sm:$0xf]
        %v5892 = vld [vmem:[#allocation3 + $0x14c] sm:$0xf]
        %v5893 = vld [vmem:[#allocation3 + $0x150] sm:$0xf]
        %v5894 = vld [vmem:[#allocation3 + $0x154] sm:$0xf]
        %v5895 = vld [vmem:[#allocation3 + $0x158] sm:$0xf]
        %v5896 = vld [vmem:[#allocation3 + $0x15c] sm:$0xf]
        %v5897 = vld [vmem:[#allocation3 + $0x160] sm:$0xf]
        %v5898 = vld [vmem:[#allocation3 + $0x164] sm:$0xf]
        %v5899 = vld [vmem:[#allocation3 + $0x168] sm:$0xf]
        %v5900 = vld [vmem:[#allocation3 + $0x16c] sm:$0xf]
        %v5901 = vld [vmem:[#allocation3 + $0x170] sm:$0xf]
        %v5902 = vld [vmem:[#allocation3 + $0x174] sm:$0xf]
        %v5903 = vld [vmem:[#allocation3 + $0x178] sm:$0xf]
        %v5904 = vld [vmem:[#allocation3 + $0x17c] sm:$0xf]
        %v5905 = vld [vmem:[#allocation3 + $0x180] sm:$0xf]
        %v5906 = vld [vmem:[#allocation3 + $0x184] sm:$0xf]
        %v5907 = vld [vmem:[#allocation3 + $0x188] sm:$0xf]
        %v5908 = vld [vmem:[#allocation3 + $0x18c] sm:$0xf]
        %v5909 = vld [vmem:[#allocation3 + $0x190] sm:$0xf]
        %v5910 = vld [vmem:[#allocation3 + $0x194] sm:$0xf]
        %v5911 = vld [vmem:[#allocation3 + $0x198] sm:$0xf]
        %v5912 = vld [vmem:[#allocation3 + $0x19c] sm:$0xf]
        %v5913 = vld [vmem:[#allocation3 + $0x1a0] sm:$0xf]
        %v5914 = vld [vmem:[#allocation3 + $0x1a4] sm:$0xf]
        %v5915 = vld [vmem:[#allocation3 + $0x1a8] sm:$0xf]
        %v5916 = vld [vmem:[#allocation3 + $0x1ac] sm:$0xf]
        %v5917 = vld [vmem:[#allocation3 + $0x1b0] sm:$0xf]
        %v5918 = vld [vmem:[#allocation3 + $0x1b4] sm:$0xf]
        %v5919 = vld [vmem:[#allocation3 + $0x1b8] sm:$0xf]
        %v5920 = vld [vmem:[#allocation3 + $0x1bc] sm:$0xf]
        %v5921 = vld [vmem:[#allocation3 + $0x1c0] sm:$0xf]
        %v5922 = vld [vmem:[#allocation3 + $0x1c4] sm:$0xf]
        %v5923 = vld [vmem:[#allocation3 + $0x1c8] sm:$0xf]
        %v5924 = vld [vmem:[#allocation3 + $0x1cc] sm:$0xf]
        %v5925 = vld [vmem:[#allocation3 + $0x1d0] sm:$0xf]
        %v5926 = vld [vmem:[#allocation3 + $0x1d4] sm:$0xf]
        %v5927 = vld [vmem:[#allocation3 + $0x1d8] sm:$0xf]
        %v5928 = vld [vmem:[#allocation3 + $0x1dc] sm:$0xf]
        %v5929 = vld [vmem:[#allocation3 + $0x1e0] sm:$0xf]
        %v5930 = vld [vmem:[#allocation3 + $0x1e4] sm:$0xf]
        %v5931 = vld [vmem:[#allocation3 + $0x1e8] sm:$0xf]
        %v5932 = vld [vmem:[#allocation3 + $0x1ec] sm:$0xf]
        %v5933 = vld [vmem:[#allocation3 + $0x1f0] sm:$0xf]
        %v5934 = vld [vmem:[#allocation3 + $0x1f4] sm:$0xf]
        %v5935 = vld [vmem:[#allocation3 + $0x1f8] sm:$0xf]
        %v5936 = vld [vmem:[#allocation3 + $0x1fc] sm:$0xf]
        %v5937 = vld [vmem:[#allocation3 + $0x200] sm:$0xf]
        %v5938 = vld [vmem:[#allocation3 + $0x204] sm:$0xf]
        %v5939 = vld [vmem:[#allocation3 + $0x208] sm:$0xf]
        %v5940 = vld [vmem:[#allocation3 + $0x20c] sm:$0xf]
        %v5941 = vld [vmem:[#allocation3 + $0x210] sm:$0xf]
        %v5942 = vld [vmem:[#allocation3 + $0x214] sm:$0xf]
        %v5943 = vld [vmem:[#allocation3 + $0x218] sm:$0xf]
        %v5944 = vld [vmem:[#allocation3 + $0x21c] sm:$0xf]
        %v5945 = vld [vmem:[#allocation3 + $0x220] sm:$0xf]
        %v5946 = vld [vmem:[#allocation3 + $0x224] sm:$0xf]
        %v5947 = vld [vmem:[#allocation3 + $0x228] sm:$0xf]
        %v5948 = vld [vmem:[#allocation3 + $0x22c] sm:$0xf]
        %v5949 = vld [vmem:[#allocation3 + $0x230] sm:$0xf]
        %v5950 = vld [vmem:[#allocation3 + $0x234] sm:$0xf]
        %v5951 = vld [vmem:[#allocation3 + $0x238] sm:$0xf]
        %v5952 = vld [vmem:[#allocation3 + $0x23c] sm:$0xf]
        %v5953 = vld [vmem:[#allocation5] sm:$0x1]
        %v5955 = vlaneseq
        %v5956 = vshrl.u32 %v5955, 7
        %v5957 = vsub.s32 0, %v5956
        %v5958 = vrot.slane %v5953, %v5957
        %v6104 = vunpack.c.l.b16 %v5809
        %v6105 = vunpack.c.l.b16 %v5810
        %v6106 = vunpack.c.l.b16 %v5811
        %v6107 = vunpack.c.l.b16 %v5812
        %v6108 = vunpack.c.l.b16 %v5813
        %v6109 = vunpack.c.l.b16 %v5814
        %v6110 = vunpack.c.l.b16 %v5815
        %v6111 = vunpack.c.l.b16 %v5816
        %v6112 = vunpack.c.l.b16 %v5817
        %v6113 = vunpack.c.l.b16 %v5818
        %v6114 = vunpack.c.l.b16 %v5819
        %v6115 = vunpack.c.l.b16 %v5820
        %v6116 = vunpack.c.l.b16 %v5821
        %v6117 = vunpack.c.l.b16 %v5822
        %v6118 = vunpack.c.l.b16 %v5823
        %v6119 = vunpack.c.l.b16 %v5824
        %v6120 = vunpack.c.l.b16 %v5825
        %v6121 = vunpack.c.l.b16 %v5826
        %v6122 = vunpack.c.l.b16 %v5827
        %v6123 = vunpack.c.l.b16 %v5828
        %v6124 = vunpack.c.l.b16 %v5829
        %v6125 = vunpack.c.l.b16 %v5830
        %v6126 = vunpack.c.l.b16 %v5831
        %v6127 = vunpack.c.l.b16 %v5832
        %v6128 = vunpack.c.l.b16 %v5833
        %v6129 = vunpack.c.l.b16 %v5834
        %v6130 = vunpack.c.l.b16 %v5835
        %v6131 = vunpack.c.l.b16 %v5836
        %v6132 = vunpack.c.l.b16 %v5837
        %v6133 = vunpack.c.l.b16 %v5838
        %v6134 = vunpack.c.l.b16 %v5839
        %v6135 = vunpack.c.l.b16 %v5840
        %v6136 = vunpack.c.l.b16 %v5841
        %v6137 = vunpack.c.l.b16 %v5842
        %v6138 = vunpack.c.l.b16 %v5843
        %v6139 = vunpack.c.l.b16 %v5844
        %v6140 = vunpack.c.l.b16 %v5845
        %v6141 = vunpack.c.l.b16 %v5846
        %v6142 = vunpack.c.l.b16 %v5847
        %v6143 = vunpack.c.l.b16 %v5848
        %v6144 = vunpack.c.l.b16 %v5849
        %v6145 = vunpack.c.l.b16 %v5850
        %v6146 = vunpack.c.l.b16 %v5851
        %v6147 = vunpack.c.l.b16 %v5852
        %v6148 = vunpack.c.l.b16 %v5853
        %v6149 = vunpack.c.l.b16 %v5854
        %v6150 = vunpack.c.l.b16 %v5855
        %v6151 = vunpack.c.l.b16 %v5856
        %v6152 = vunpack.c.l.b16 %v5857
        %v6153 = vunpack.c.l.b16 %v5858
        %v6154 = vunpack.c.l.b16 %v5859
        %v6155 = vunpack.c.l.b16 %v5860
        %v6156 = vunpack.c.l.b16 %v5861
        %v6157 = vunpack.c.l.b16 %v5862
        %v6158 = vunpack.c.l.b16 %v5863
        %v6159 = vunpack.c.l.b16 %v5864
        %v6160 = vunpack.c.l.b16 %v5865
        %v6161 = vunpack.c.l.b16 %v5866
        %v6162 = vunpack.c.l.b16 %v5867
        %v6163 = vunpack.c.l.b16 %v5868
        %v6164 = vunpack.c.l.b16 %v5869
        %v6165 = vunpack.c.l.b16 %v5870
        %v6166 = vunpack.c.l.b16 %v5871
        %v6167 = vunpack.c.l.b16 %v5872
        %v6168 = vunpack.c.l.b16 %v5873
        %v6169 = vunpack.c.l.b16 %v5874
        %v6170 = vunpack.c.l.b16 %v5875
        %v6171 = vunpack.c.l.b16 %v5876
        %v6172 = vunpack.c.l.b16 %v5877
        %v6173 = vunpack.c.l.b16 %v5878
        %v6174 = vunpack.c.l.b16 %v5879
        %v6175 = vunpack.c.l.b16 %v5880
        %v6176 = vunpack.c.l.b16 %v5881
        %v6177 = vunpack.c.l.b16 %v5882
        %v6178 = vunpack.c.l.b16 %v5883
        %v6179 = vunpack.c.l.b16 %v5884
        %v6180 = vunpack.c.l.b16 %v5885
        %v6181 = vunpack.c.l.b16 %v5886
        %v6182 = vunpack.c.l.b16 %v5887
        %v6183 = vunpack.c.l.b16 %v5888
        %v6184 = vunpack.c.l.b16 %v5889
        %v6185 = vunpack.c.l.b16 %v5890
        %v6186 = vunpack.c.l.b16 %v5891
        %v6187 = vunpack.c.l.b16 %v5892
        %v6188 = vunpack.c.l.b16 %v5893
        %v6189 = vunpack.c.l.b16 %v5894
        %v6190 = vunpack.c.l.b16 %v5895
        %v6191 = vunpack.c.l.b16 %v5896
        %v6192 = vunpack.c.l.b16 %v5897
        %v6193 = vunpack.c.l.b16 %v5898
        %v6194 = vunpack.c.l.b16 %v5899
        %v6195 = vunpack.c.l.b16 %v5900
        %v6196 = vunpack.c.l.b16 %v5901
        %v6197 = vunpack.c.l.b16 %v5902
        %v6198 = vunpack.c.l.b16 %v5903
        %v6199 = vunpack.c.l.b16 %v5904
        %v6200 = vunpack.c.l.b16 %v5905
        %v6201 = vunpack.c.l.b16 %v5906
        %v6202 = vunpack.c.l.b16 %v5907
        %v6203 = vunpack.c.l.b16 %v5908
        %v6204 = vunpack.c.l.b16 %v5909
        %v6205 = vunpack.c.l.b16 %v5910
        %v6206 = vunpack.c.l.b16 %v5911
        %v6207 = vunpack.c.l.b16 %v5912
        %v6208 = vunpack.c.l.b16 %v5913
        %v6209 = vunpack.c.l.b16 %v5914
        %v6210 = vunpack.c.l.b16 %v5915
        %v6211 = vunpack.c.l.b16 %v5916
        %v6212 = vunpack.c.l.b16 %v5917
        %v6213 = vunpack.c.l.b16 %v5918
        %v6214 = vunpack.c.l.b16 %v5919
        %v6215 = vunpack.c.l.b16 %v5920
        %v6216 = vunpack.c.l.b16 %v5921
        %v6217 = vunpack.c.l.b16 %v5922
        %v6218 = vunpack.c.l.b16 %v5923
        %v6219 = vunpack.c.l.b16 %v5924
        %v6220 = vunpack.c.l.b16 %v5925
        %v6221 = vunpack.c.l.b16 %v5926
        %v6222 = vunpack.c.l.b16 %v5927
        %v6223 = vunpack.c.l.b16 %v5928
        %v6224 = vunpack.c.l.b16 %v5929
        %v6225 = vunpack.c.l.b16 %v5930
        %v6226 = vunpack.c.l.b16 %v5931
        %v6227 = vunpack.c.l.b16 %v5932
        %v6228 = vunpack.c.l.b16 %v5933
        %v6229 = vunpack.c.l.b16 %v5934
        %v6230 = vunpack.c.l.b16 %v5935
        %v6231 = vunpack.c.l.b16 %v5936
        %v6232 = vunpack.c.l.b16 %v5937
        %v6233 = vunpack.c.l.b16 %v5938
        %v6234 = vunpack.c.l.b16 %v5939
        %v6235 = vunpack.c.l.b16 %v5940
        %v6236 = vunpack.c.l.b16 %v5941
        %v6237 = vunpack.c.l.b16 %v5942
        %v6238 = vunpack.c.l.b16 %v5943
        %v6239 = vunpack.c.l.b16 %v5944
        %v6240 = vunpack.c.l.b16 %v5945
        %v6241 = vunpack.c.l.b16 %v5946
        %v6242 = vunpack.c.l.b16 %v5947
        %v6243 = vunpack.c.l.b16 %v5948
        %v6244 = vunpack.c.l.b16 %v5949
        %v6245 = vunpack.c.l.b16 %v5950
        %v6246 = vunpack.c.l.b16 %v5951
        %v6247 = vunpack.c.l.b16 %v5952
        %v6248 = vpack.c.b16 %v6105, %v6104
        %v6249 = vpack.c.b16 %v6107, %v6106
        %v6250 = vpack.c.b16 %v6109, %v6108
        %v6251 = vpack.c.b16 %v6111, %v6110
        %v6252 = vpack.c.b16 %v6113, %v6112
        %v6253 = vpack.c.b16 %v6115, %v6114
        %v6254 = vpack.c.b16 %v6117, %v6116
        %v6255 = vpack.c.b16 %v6119, %v6118
        %v6256 = vpack.c.b16 %v6121, %v6120
        %v6257 = vpack.c.b16 %v6123, %v6122
        %v6258 = vpack.c.b16 %v6125, %v6124
        %v6259 = vpack.c.b16 %v6127, %v6126
        %v6260 = vpack.c.b16 %v6129, %v6128
        %v6261 = vpack.c.b16 %v6131, %v6130
        %v6262 = vpack.c.b16 %v6133, %v6132
        %v6263 = vpack.c.b16 %v6135, %v6134
        %v6264 = vpack.c.b16 %v6137, %v6136
        %v6265 = vpack.c.b16 %v6139, %v6138
        %v6266 = vpack.c.b16 %v6141, %v6140
        %v6267 = vpack.c.b16 %v6143, %v6142
        %v6268 = vpack.c.b16 %v6145, %v6144
        %v6269 = vpack.c.b16 %v6147, %v6146
        %v6270 = vpack.c.b16 %v6149, %v6148
        %v6271 = vpack.c.b16 %v6151, %v6150
        %v6272 = vpack.c.b16 %v6153, %v6152
        %v6273 = vpack.c.b16 %v6155, %v6154
        %v6274 = vpack.c.b16 %v6157, %v6156
        %v6275 = vpack.c.b16 %v6159, %v6158
        %v6276 = vpack.c.b16 %v6161, %v6160
        %v6277 = vpack.c.b16 %v6163, %v6162
        %v6278 = vpack.c.b16 %v6165, %v6164
        %v6279 = vpack.c.b16 %v6167, %v6166
        %v6280 = vpack.c.b16 %v6169, %v6168
        %v6281 = vpack.c.b16 %v6171, %v6170
        %v6282 = vpack.c.b16 %v6173, %v6172
        %v6283 = vpack.c.b16 %v6175, %v6174
        %v6284 = vpack.c.b16 %v6177, %v6176
        %v6285 = vpack.c.b16 %v6179, %v6178
        %v6286 = vpack.c.b16 %v6181, %v6180
        %v6287 = vpack.c.b16 %v6183, %v6182
        %v6288 = vpack.c.b16 %v6185, %v6184
        %v6289 = vpack.c.b16 %v6187, %v6186
        %v6290 = vpack.c.b16 %v6189, %v6188
        %v6291 = vpack.c.b16 %v6191, %v6190
        %v6292 = vpack.c.b16 %v6193, %v6192
        %v6293 = vpack.c.b16 %v6195, %v6194
        %v6294 = vpack.c.b16 %v6197, %v6196
        %v6295 = vpack.c.b16 %v6199, %v6198
        %v6296 = vpack.c.b16 %v6201, %v6200
        %v6297 = vpack.c.b16 %v6203, %v6202
        %v6298 = vpack.c.b16 %v6205, %v6204
        %v6299 = vpack.c.b16 %v6207, %v6206
        %v6300 = vpack.c.b16 %v6209, %v6208
        %v6301 = vpack.c.b16 %v6211, %v6210
        %v6302 = vpack.c.b16 %v6213, %v6212
        %v6303 = vpack.c.b16 %v6215, %v6214
        %v6304 = vpack.c.b16 %v6217, %v6216
        %v6305 = vpack.c.b16 %v6219, %v6218
        %v6306 = vpack.c.b16 %v6221, %v6220
        %v6307 = vpack.c.b16 %v6223, %v6222
        %v6308 = vpack.c.b16 %v6225, %v6224
        %v6309 = vpack.c.b16 %v6227, %v6226
        %v6310 = vpack.c.b16 %v6229, %v6228
        %v6311 = vpack.c.b16 %v6231, %v6230
        %v6312 = vpack.c.b16 %v6233, %v6232
        %v6313 = vpack.c.b16 %v6235, %v6234
        %v6314 = vpack.c.b16 %v6237, %v6236
        %v6315 = vpack.c.b16 %v6239, %v6238
        %v6316 = vpack.c.b16 %v6241, %v6240
        %v6317 = vpack.c.b16 %v6243, %v6242
        %v6318 = vpack.c.b16 %v6245, %v6244
        %v6319 = vpack.c.b16 %v6247, %v6246
        %6392 = vmatprep.subr.bf16.mxu0 0
        %6393 = vmatpush1.bf16.msra.mxu0 %v6248
        %6394 = vmatprep.subr.bf16.mxu0 0
        %6395 = vmatpush1.bf16.msra.mxu0 %v6249
        %6396 = vmatprep.subr.bf16.mxu0 0
        %6397 = vmatpush1.bf16.msra.mxu0 %v6250
        %6398 = vmatprep.subr.bf16.mxu0 0
        %6399 = vmatpush1.bf16.msra.mxu0 %v6251
        %6400 = vmatprep.subr.bf16.mxu0 0
        %6401 = vmatpush1.bf16.msra.mxu0 %v6252
        %6402 = vmatprep.subr.bf16.mxu0 0
        %6403 = vmatpush1.bf16.msra.mxu0 %v6253
        %6404 = vmatprep.subr.bf16.mxu0 0
        %6405 = vmatpush1.bf16.msra.mxu0 %v6254
        %6406 = vmatprep.subr.bf16.mxu0 0
        %6407 = vmatpush1.bf16.msra.mxu0 %v6255
        %6408 = vmatprep.subr.bf16.mxu0 0
        %6409 = vmatpush1.bf16.msra.mxu0 %v6256
        %6410 = vmatprep.subr.bf16.mxu0 0
        %6411 = vmatpush1.bf16.msra.mxu0 %v6257
        %6412 = vmatprep.subr.bf16.mxu0 0
        %6413 = vmatpush1.bf16.msra.mxu0 %v6258
        %6414 = vmatprep.subr.bf16.mxu0 0
        %6415 = vmatpush1.bf16.msra.mxu0 %v6259
        %6416 = vmatprep.subr.bf16.mxu0 0
        %6417 = vmatpush1.bf16.msra.mxu0 %v6260
        %6418 = vmatprep.subr.bf16.mxu0 0
        %6419 = vmatpush1.bf16.msra.mxu0 %v6261
        %6420 = vmatprep.subr.bf16.mxu0 0
        %6421 = vmatpush1.bf16.msra.mxu0 %v6262
        %6422 = vmatprep.subr.bf16.mxu0 0
        %6423 = vmatpush1.bf16.msra.mxu0 %v6263
        %6424 = vmatprep.mubr.bf16.mxu0 %v5522
        %6425 = vmatmul.mubr.bf16.gmra.mrb[0].mxu0 %v5521
        %v6426 = vpop.f32.mrb[0].mxu0
        %v6427 = vadd.f32 %v5958, %v6426
        %v6428 = vpop.f32.mrb[0].mxu0
        %v6429 = vpop.f32.mrb[0].mxu0
        %v6430 = vadd.f32 %v5958, %v6429
        %v6431 = vpop.f32.mrb[0].mxu0
        %6432 = vmatprep.mubr.bf16.mxu0 %v5531
        %6433 = vmatmul.mubr.bf16.gmra.mrb[0].mxu0 %v5530
        %v6434 = vpop.f32.mrb[0].mxu0
        %v6435 = vadd.f32 %v5958, %v6434
        %v6436 = vpop.f32.mrb[0].mxu0
        %v6437 = vpop.f32.mrb[0].mxu0
        %v6438 = vadd.f32 %v5958, %v6437
        %v6439 = vpop.f32.mrb[0].mxu0
        %6440 = vmatprep.mubr.bf16.mxu0 %v5540
        %6441 = vmatmul.mubr.bf16.gmra.mrb[0].mxu0 %v5539
        %v6442 = vpop.f32.mrb[0].mxu0
        %v6443 = vadd.f32 %v5958, %v6442
        %v6444 = vpop.f32.mrb[0].mxu0
        %v6445 = vpop.f32.mrb[0].mxu0
        %v6446 = vadd.f32 %v5958, %v6445
        %v6447 = vpop.f32.mrb[0].mxu0
        %6448 = vmatprep.mubr.bf16.mxu0 %v5549
        %6449 = vmatmul.mubr.bf16.gmra.mrb[0].mxu0 %v5548
        %v6450 = vpop.f32.mrb[0].mxu0
        %v6451 = vadd.f32 %v5958, %v6450
        %v6452 = vpop.f32.mrb[0].mxu0
        %v6453 = vpop.f32.mrb[0].mxu0
        %v6454 = vadd.f32 %v5958, %v6453
        %v6455 = vpop.f32.mrb[0].mxu0
        %6456 = vmatprep.mubr.bf16.mxu0 %v5558
        %6457 = vmatmul.mubr.bf16.gmra.mrb[0].mxu0 %v5557
        %v6458 = vpop.f32.mrb[0].mxu0
        %v6459 = vadd.f32 %v5958, %v6458
        %v6460 = vpop.f32.mrb[0].mxu0
        %v6461 = vpop.f32.mrb[0].mxu0
        %v6462 = vadd.f32 %v5958, %v6461
        %v6463 = vpop.f32.mrb[0].mxu0
        %6464 = vmatprep.mubr.bf16.mxu0 %v5567
        %6465 = vmatmul.mubr.bf16.gmra.mrb[0].mxu0 %v5566
        %v6466 = vpop.f32.mrb[0].mxu0
        %v6467 = vadd.f32 %v5958, %v6466
        %v6468 = vpop.f32.mrb[0].mxu0
        %v6469 = vpop.f32.mrb[0].mxu0
        %v6470 = vadd.f32 %v5958, %v6469
        %v6471 = vpop.f32.mrb[0].mxu0
        %6472 = vmatprep.mubr.bf16.mxu0 %v5576
        %6473 = vmatmul.mubr.bf16.gmra.mrb[0].mxu0 %v5575
        %v6474 = vpop.f32.mrb[0].mxu0
        %v6475 = vadd.f32 %v5958, %v6474
        %v6476 = vpop.f32.mrb[0].mxu0
        %v6477 = vpop.f32.mrb[0].mxu0
        %v6478 = vadd.f32 %v5958, %v6477
        %v6479 = vpop.f32.mrb[0].mxu0
        %6480 = vmatprep.mubr.bf16.mxu0 %v5585
        %6481 = vmatmul.mubr.bf16.gmra.mrb[0].mxu0 %v5584
        %v6482 = vpop.f32.mrb[0].mxu0
        %v6483 = vadd.f32 %v5958, %v6482
        %v6484 = vpop.f32.mrb[0].mxu0
        %v6485 = vpop.f32.mrb[0].mxu0
        %v6486 = vadd.f32 %v5958, %v6485
        %v6487 = vpop.f32.mrb[0].mxu0
        %6488 = vmatprep.mubr.bf16.mxu0 %v5594
        %6489 = vmatmul.mubr.bf16.gmra.mrb[0].mxu0 %v5593
        %v6490 = vpop.f32.mrb[0].mxu0
        %v6491 = vadd.f32 %v5958, %v6490
        %v6492 = vpop.f32.mrb[0].mxu0
        %v6493 = vpop.f32.mrb[0].mxu0
        %v6494 = vadd.f32 %v5958, %v6493
        %v6495 = vpop.f32.mrb[0].mxu0
        %6496 = vmatprep.mubr.bf16.mxu0 %v5603
        %6497 = vmatmul.mubr.bf16.gmra.mrb[0].mxu0 %v5602
        %v6498 = vpop.f32.mrb[0].mxu0
        %v6499 = vadd.f32 %v5958, %v6498
        %v6500 = vpop.f32.mrb[0].mxu0
        %v6501 = vpop.f32.mrb[0].mxu0
        %v6502 = vadd.f32 %v5958, %v6501
        %v6503 = vpop.f32.mrb[0].mxu0
        %6504 = vmatprep.mubr.bf16.mxu0 %v5612
        %6505 = vmatmul.mubr.bf16.gmra.mrb[0].mxu0 %v5611
        %v6506 = vpop.f32.mrb[0].mxu0
        %v6507 = vadd.f32 %v5958, %v6506
        %v6508 = vpop.f32.mrb[0].mxu0
        %v6509 = vpop.f32.mrb[0].mxu0
        %v6510 = vadd.f32 %v5958, %v6509
        %v6511 = vpop.f32.mrb[0].mxu0
        %6512 = vmatprep.mubr.bf16.mxu0 %v5621
        %6513 = vmatmul.mubr.bf16.gmra.mrb[0].mxu0 %v5620
        %v6514 = vpop.f32.mrb[0].mxu0
        %v6515 = vadd.f32 %v5958, %v6514
        %v6516 = vpop.f32.mrb[0].mxu0
        %v6517 = vpop.f32.mrb[0].mxu0
        %v6518 = vadd.f32 %v5958, %v6517
        %v6519 = vpop.f32.mrb[0].mxu0
        %6520 = vmatprep.mubr.bf16.mxu0 %v5630
        %6521 = vmatmul.mubr.bf16.gmra.mrb[0].mxu0 %v5629
        %v6522 = vpop.f32.mrb[0].mxu0
        %v6523 = vadd.f32 %v5958, %v6522
        %v6524 = vpop.f32.mrb[0].mxu0
        %v6525 = vpop.f32.mrb[0].mxu0
        %v6526 = vadd.f32 %v5958, %v6525
        %v6527 = vpop.f32.mrb[0].mxu0
        %6528 = vmatprep.mubr.bf16.mxu0 %v5639
        %6529 = vmatmul.mubr.bf16.gmra.mrb[0].mxu0 %v5638
        %v6530 = vpop.f32.mrb[0].mxu0
        %v6531 = vadd.f32 %v5958, %v6530
        %v6532 = vpop.f32.mrb[0].mxu0
        %v6533 = vpop.f32.mrb[0].mxu0
        %v6534 = vadd.f32 %v5958, %v6533
        %v6535 = vpop.f32.mrb[0].mxu0
        %6536 = vmatprep.mubr.bf16.mxu0 %v5648
        %6537 = vmatmul.mubr.bf16.gmra.mrb[0].mxu0 %v5647
        %v6538 = vpop.f32.mrb[0].mxu0
        %v6539 = vadd.f32 %v5958, %v6538
        %v6540 = vpop.f32.mrb[0].mxu0
        %v6541 = vpop.f32.mrb[0].mxu0
        %v6542 = vadd.f32 %v5958, %v6541
        %v6543 = vpop.f32.mrb[0].mxu0
        %6544 = vmatprep.mubr.bf16.mxu0 %v5657
        %6545 = vmatmul.mubr.bf16.gmra.mrb[0].mxu0 %v5656
        %v6546 = vpop.f32.mrb[0].mxu0
        %v6547 = vadd.f32 %v5958, %v6546
        %v6548 = vpop.f32.mrb[0].mxu0
        %v6549 = vpop.f32.mrb[0].mxu0
        %v6550 = vadd.f32 %v5958, %v6549
        %v6551 = vpop.f32.mrb[0].mxu0
        %6552 = vmatprep.mubr.bf16.mxu0 %v5666
        %6553 = vmatmul.mubr.bf16.gmra.mrb[0].mxu0 %v5665
        %v6554 = vpop.f32.mrb[0].mxu0
        %v6555 = vadd.f32 %v5958, %v6554
        %v6556 = vpop.f32.mrb[0].mxu0
        %v6557 = vpop.f32.mrb[0].mxu0
        %v6558 = vadd.f32 %v5958, %v6557
        %v6559 = vpop.f32.mrb[0].mxu0
        %6560 = vmatprep.mubr.bf16.mxu0 %v5675
        %6561 = vmatmul.mubr.bf16.gmra.mrb[0].mxu0 %v5674
        %v6562 = vpop.f32.mrb[0].mxu0
        %v6563 = vadd.f32 %v5958, %v6562
        %v6564 = vpop.f32.mrb[0].mxu0
        %v6565 = vpop.f32.mrb[0].mxu0
        %v6566 = vadd.f32 %v5958, %v6565
        %v6567 = vpop.f32.mrb[0].mxu0
        %6568 = vmatprep.mubr.bf16.mxu0 %v5684
        %6569 = vmatmul.mubr.bf16.gmra.mrb[0].mxu0 %v5683
        %v6570 = vpop.f32.mrb[0].mxu0
        %v6571 = vadd.f32 %v5958, %v6570
        %v6572 = vpop.f32.mrb[0].mxu0
        %v6573 = vpop.f32.mrb[0].mxu0
        %v6574 = vadd.f32 %v5958, %v6573
        %v6575 = vpop.f32.mrb[0].mxu0
        %6576 = vmatprep.mubr.bf16.mxu0 %v5693
        %6577 = vmatmul.mubr.bf16.gmra.mrb[0].mxu0 %v5692
        %v6578 = vpop.f32.mrb[0].mxu0
        %v6579 = vadd.f32 %v5958, %v6578
        %v6580 = vpop.f32.mrb[0].mxu0
        %v6581 = vpop.f32.mrb[0].mxu0
        %v6582 = vadd.f32 %v5958, %v6581
        %v6583 = vpop.f32.mrb[0].mxu0
        %6584 = vmatprep.mubr.bf16.mxu0 %v5702
        %6585 = vmatmul.mubr.bf16.gmra.mrb[0].mxu0 %v5701
        %v6586 = vpop.f32.mrb[0].mxu0
        %v6587 = vadd.f32 %v5958, %v6586
        %v6588 = vpop.f32.mrb[0].mxu0
        %v6589 = vpop.f32.mrb[0].mxu0
        %v6590 = vadd.f32 %v5958, %v6589
        %v6591 = vpop.f32.mrb[0].mxu0
        %6592 = vmatprep.mubr.bf16.mxu0 %v5711
        %6593 = vmatmul.mubr.bf16.gmra.mrb[0].mxu0 %v5710
        %v6594 = vpop.f32.mrb[0].mxu0
        %v6595 = vadd.f32 %v5958, %v6594
        %v6596 = vpop.f32.mrb[0].mxu0
        %v6597 = vpop.f32.mrb[0].mxu0
        %v6598 = vadd.f32 %v5958, %v6597
        %v6599 = vpop.f32.mrb[0].mxu0
        %6600 = vmatprep.mubr.bf16.mxu0 %v5720
        %6601 = vmatmul.mubr.bf16.gmra.mrb[0].mxu0 %v5719
        %v6602 = vpop.f32.mrb[0].mxu0
        %v6603 = vadd.f32 %v5958, %v6602
        %v6604 = vpop.f32.mrb[0].mxu0
        %v6605 = vpop.f32.mrb[0].mxu0
        %v6606 = vadd.f32 %v5958, %v6605
        %v6607 = vpop.f32.mrb[0].mxu0
        %6608 = vmatprep.mubr.bf16.mxu0 %v5729
        %6609 = vmatmul.mubr.bf16.gmra.mrb[0].mxu0 %v5728
        %v6610 = vpop.f32.mrb[0].mxu0
        %v6611 = vadd.f32 %v5958, %v6610
        %v6612 = vpop.f32.mrb[0].mxu0
        %v6613 = vpop.f32.mrb[0].mxu0
        %v6614 = vadd.f32 %v5958, %v6613
        %v6615 = vpop.f32.mrb[0].mxu0
        %6616 = vmatprep.mubr.bf16.mxu0 %v5738
        %6617 = vmatmul.mubr.bf16.gmra.mrb[0].mxu0 %v5737
        %v6618 = vpop.f32.mrb[0].mxu0
        %v6619 = vadd.f32 %v5958, %v6618
        %v6620 = vpop.f32.mrb[0].mxu0
        %v6621 = vpop.f32.mrb[0].mxu0
        %v6622 = vadd.f32 %v5958, %v6621
        %v6623 = vpop.f32.mrb[0].mxu0
        %6624 = vmatprep.mubr.bf16.mxu0 %v5747
        %6625 = vmatmul.mubr.bf16.gmra.mrb[0].mxu0 %v5746
        %v6626 = vpop.f32.mrb[0].mxu0
        %v6627 = vadd.f32 %v5958, %v6626
        %v6628 = vpop.f32.mrb[0].mxu0
        %v6629 = vpop.f32.mrb[0].mxu0
        %v6630 = vadd.f32 %v5958, %v6629
        %v6631 = vpop.f32.mrb[0].mxu0
        %6632 = vmatprep.mubr.bf16.mxu0 %v5756
        %6633 = vmatmul.mubr.bf16.gmra.mrb[0].mxu0 %v5755
        %v6634 = vpop.f32.mrb[0].mxu0
        %v6635 = vadd.f32 %v5958, %v6634
        %v6636 = vpop.f32.mrb[0].mxu0
        %v6637 = vpop.f32.mrb[0].mxu0
        %v6638 = vadd.f32 %v5958, %v6637
        %v6639 = vpop.f32.mrb[0].mxu0
        %6640 = vmatprep.mubr.bf16.mxu0 %v5765
        %6641 = vmatmul.mubr.bf16.gmra.mrb[0].mxu0 %v5764
        %v6642 = vpop.f32.mrb[0].mxu0
        %v6643 = vadd.f32 %v5958, %v6642
        %v6644 = vpop.f32.mrb[0].mxu0
        %v6645 = vpop.f32.mrb[0].mxu0
        %v6646 = vadd.f32 %v5958, %v6645
        %v6647 = vpop.f32.mrb[0].mxu0
        %6648 = vmatprep.mubr.bf16.mxu0 %v5774
        %6649 = vmatmul.mubr.bf16.gmra.mrb[0].mxu0 %v5773
        %v6650 = vpop.f32.mrb[0].mxu0
        %v6651 = vadd.f32 %v5958, %v6650
        %v6652 = vpop.f32.mrb[0].mxu0
        %v6653 = vpop.f32.mrb[0].mxu0
        %v6654 = vadd.f32 %v5958, %v6653
        %v6655 = vpop.f32.mrb[0].mxu0
        %6656 = vmatprep.mubr.bf16.mxu0 %v5783
        %6657 = vmatmul.mubr.bf16.gmra.mrb[0].mxu0 %v5782
        %v6658 = vpop.f32.mrb[0].mxu0
        %v6659 = vadd.f32 %v5958, %v6658
        %v6660 = vpop.f32.mrb[0].mxu0
        %v6661 = vpop.f32.mrb[0].mxu0
        %v6662 = vadd.f32 %v5958, %v6661
        %v6663 = vpop.f32.mrb[0].mxu0
        %6664 = vmatprep.mubr.bf16.mxu0 %v5792
        %6665 = vmatmul.mubr.bf16.gmra.mrb[0].mxu0 %v5791
        %v6666 = vpop.f32.mrb[0].mxu0
        %v6667 = vadd.f32 %v5958, %v6666
        %v6668 = vpop.f32.mrb[0].mxu0
        %v6669 = vpop.f32.mrb[0].mxu0
        %v6670 = vadd.f32 %v5958, %v6669
        %v6671 = vpop.f32.mrb[0].mxu0
        %6672 = vmatprep.mubr.bf16.mxu0 %v5801
        %6673 = vmatmul.mubr.bf16.gmra.mrb[0].mxu0 %v5800
        %v6674 = vpop.f32.mrb[0].mxu0
        %v6675 = vadd.f32 %v5958, %v6674
        %v6676 = vpop.f32.mrb[0].mxu0
        %v6677 = vpop.f32.mrb[0].mxu0
        %v6678 = vadd.f32 %v5958, %v6677
        %v6679 = vpop.f32.mrb[0].mxu0
        %6680 = vdwg.mxu0
        %6681 = vmatprep.subr.bf16.mxu0 0
        %6682 = vmatpush1.bf16.msra.mxu0 %v6264
        %6683 = vmatprep.subr.bf16.mxu0 0
        %6684 = vmatpush1.bf16.msra.mxu0 %v6265
        %6685 = vmatprep.subr.bf16.mxu0 0
        %6686 = vmatpush1.bf16.msra.mxu0 %v6266
        %6687 = vmatprep.subr.bf16.mxu0 0
        %6688 = vmatpush1.bf16.msra.mxu0 %v6267
        %6689 = vmatprep.subr.bf16.mxu0 0
        %6690 = vmatpush1.bf16.msra.mxu0 %v6268
        %6691 = vmatprep.subr.bf16.mxu0 0
        %6692 = vmatpush1.bf16.msra.mxu0 %v6269
        %6693 = vmatprep.subr.bf16.mxu0 0
        %6694 = vmatpush1.bf16.msra.mxu0 %v6270
        %6695 = vmatprep.subr.bf16.mxu0 0
        %6696 = vmatpush1.bf16.msra.mxu0 %v6271
        %6697 = vmatprep.subr.bf16.mxu0 0
        %6698 = vmatpush1.bf16.msra.mxu0 %v6272
        %6699 = vmatprep.subr.bf16.mxu0 0
        %6700 = vmatpush1.bf16.msra.mxu0 %v6273
        %6701 = vmatprep.subr.bf16.mxu0 0
        %6702 = vmatpush1.bf16.msra.mxu0 %v6274
        %6703 = vmatprep.subr.bf16.mxu0 0
        %6704 = vmatpush1.bf16.msra.mxu0 %v6275
        %6705 = vmatprep.subr.bf16.mxu0 0
        %6706 = vmatpush1.bf16.msra.mxu0 %v6276
        %6707 = vmatprep.subr.bf16.mxu0 0
        %6708 = vmatpush1.bf16.msra.mxu0 %v6277
        %6709 = vmatprep.subr.bf16.mxu0 0
        %6710 = vmatpush1.bf16.msra.mxu0 %v6278
        %6711 = vmatprep.subr.bf16.mxu0 0
        %6712 = vmatpush1.bf16.msra.mxu0 %v6279
        %6713 = vmatprep.mubr.bf16.mxu0 %v5524
        %6714 = vmatmul.mubr.bf16.gmra.mrb[0].mxu0 %v5523
        %v6715 = vpop.f32.mrb[0].mxu0
        %v6716 = vadd.f32 %v6427, %v6715
        %v6717 = vpop.f32.mrb[0].mxu0
        %v6718 = vpop.f32.mrb[0].mxu0
        %v6719 = vadd.f32 %v6430, %v6718
        %v6720 = vpop.f32.mrb[0].mxu0
        %6721 = vmatprep.mubr.bf16.mxu0 %v5533
        %6722 = vmatmul.mubr.bf16.gmra.mrb[0].mxu0 %v5532
        %v6723 = vpop.f32.mrb[0].mxu0
        %v6724 = vadd.f32 %v6435, %v6723
        %v6725 = vpop.f32.mrb[0].mxu0
        %v6726 = vpop.f32.mrb[0].mxu0
        %v6727 = vadd.f32 %v6438, %v6726
        %v6728 = vpop.f32.mrb[0].mxu0
        %6729 = vmatprep.mubr.bf16.mxu0 %v5542
        %6730 = vmatmul.mubr.bf16.gmra.mrb[0].mxu0 %v5541
        %v6731 = vpop.f32.mrb[0].mxu0
        %v6732 = vadd.f32 %v6443, %v6731
        %v6733 = vpop.f32.mrb[0].mxu0
        %v6734 = vpop.f32.mrb[0].mxu0
        %v6735 = vadd.f32 %v6446, %v6734
        %v6736 = vpop.f32.mrb[0].mxu0
        %6737 = vmatprep.mubr.bf16.mxu0 %v5551
        %6738 = vmatmul.mubr.bf16.gmra.mrb[0].mxu0 %v5550
        %v6739 = vpop.f32.mrb[0].mxu0
        %v6740 = vadd.f32 %v6451, %v6739
        %v6741 = vpop.f32.mrb[0].mxu0
        %v6742 = vpop.f32.mrb[0].mxu0
        %v6743 = vadd.f32 %v6454, %v6742
        %v6744 = vpop.f32.mrb[0].mxu0
        %6745 = vmatprep.mubr.bf16.mxu0 %v5560
        %6746 = vmatmul.mubr.bf16.gmra.mrb[0].mxu0 %v5559
        %v6747 = vpop.f32.mrb[0].mxu0
        %v6748 = vadd.f32 %v6459, %v6747
        %v6749 = vpop.f32.mrb[0].mxu0
        %v6750 = vpop.f32.mrb[0].mxu0
        %v6751 = vadd.f32 %v6462, %v6750
        %v6752 = vpop.f32.mrb[0].mxu0
        %6753 = vmatprep.mubr.bf16.mxu0 %v5569
        %6754 = vmatmul.mubr.bf16.gmra.mrb[0].mxu0 %v5568
        %v6755 = vpop.f32.mrb[0].mxu0
        %v6756 = vadd.f32 %v6467, %v6755
        %v6757 = vpop.f32.mrb[0].mxu0
        %v6758 = vpop.f32.mrb[0].mxu0
        %v6759 = vadd.f32 %v6470, %v6758
        %v6760 = vpop.f32.mrb[0].mxu0
        %6761 = vmatprep.mubr.bf16.mxu0 %v5578
        %6762 = vmatmul.mubr.bf16.gmra.mrb[0].mxu0 %v5577
        %v6763 = vpop.f32.mrb[0].mxu0
        %v6764 = vadd.f32 %v6475, %v6763
        %v6765 = vpop.f32.mrb[0].mxu0
        %v6766 = vpop.f32.mrb[0].mxu0
        %v6767 = vadd.f32 %v6478, %v6766
        %v6768 = vpop.f32.mrb[0].mxu0
        %6769 = vmatprep.mubr.bf16.mxu0 %v5587
        %6770 = vmatmul.mubr.bf16.gmra.mrb[0].mxu0 %v5586
        %v6771 = vpop.f32.mrb[0].mxu0
        %v6772 = vadd.f32 %v6483, %v6771
        %v6773 = vpop.f32.mrb[0].mxu0
        %v6774 = vpop.f32.mrb[0].mxu0
        %v6775 = vadd.f32 %v6486, %v6774
        %v6776 = vpop.f32.mrb[0].mxu0
        %6777 = vmatprep.mubr.bf16.mxu0 %v5596
        %6778 = vmatmul.mubr.bf16.gmra.mrb[0].mxu0 %v5595
        %v6779 = vpop.f32.mrb[0].mxu0
        %v6780 = vadd.f32 %v6491, %v6779
        %v6781 = vpop.f32.mrb[0].mxu0
        %v6782 = vpop.f32.mrb[0].mxu0
        %v6783 = vadd.f32 %v6494, %v6782
        %v6784 = vpop.f32.mrb[0].mxu0
        %6785 = vmatprep.mubr.bf16.mxu0 %v5605
        %6786 = vmatmul.mubr.bf16.gmra.mrb[0].mxu0 %v5604
        %v6787 = vpop.f32.mrb[0].mxu0
        %v6788 = vadd.f32 %v6499, %v6787
        %v6789 = vpop.f32.mrb[0].mxu0
        %v6790 = vpop.f32.mrb[0].mxu0
        %v6791 = vadd.f32 %v6502, %v6790
        %v6792 = vpop.f32.mrb[0].mxu0
        %6793 = vmatprep.mubr.bf16.mxu0 %v5614
        %6794 = vmatmul.mubr.bf16.gmra.mrb[0].mxu0 %v5613
        %v6795 = vpop.f32.mrb[0].mxu0
        %v6796 = vadd.f32 %v6507, %v6795
        %v6797 = vpop.f32.mrb[0].mxu0
        %v6798 = vpop.f32.mrb[0].mxu0
        %v6799 = vadd.f32 %v6510, %v6798
        %v6800 = vpop.f32.mrb[0].mxu0
        %6801 = vmatprep.mubr.bf16.mxu0 %v5623
        %6802 = vmatmul.mubr.bf16.gmra.mrb[0].mxu0 %v5622
        %v6803 = vpop.f32.mrb[0].mxu0
        %v6804 = vadd.f32 %v6515, %v6803
        %v6805 = vpop.f32.mrb[0].mxu0
        %v6806 = vpop.f32.mrb[0].mxu0
        %v6807 = vadd.f32 %v6518, %v6806
        %v6808 = vpop.f32.mrb[0].mxu0
        %6809 = vmatprep.mubr.bf16.mxu0 %v5632
        %6810 = vmatmul.mubr.bf16.gmra.mrb[0].mxu0 %v5631
        %v6811 = vpop.f32.mrb[0].mxu0
        %v6812 = vadd.f32 %v6523, %v6811
        %v6813 = vpop.f32.mrb[0].mxu0
        %v6814 = vpop.f32.mrb[0].mxu0
        %v6815 = vadd.f32 %v6526, %v6814
        %v6816 = vpop.f32.mrb[0].mxu0
        %6817 = vmatprep.mubr.bf16.mxu0 %v5641
        %6818 = vmatmul.mubr.bf16.gmra.mrb[0].mxu0 %v5640
        %v6819 = vpop.f32.mrb[0].mxu0
        %v6820 = vadd.f32 %v6531, %v6819
        %v6821 = vpop.f32.mrb[0].mxu0
        %v6822 = vpop.f32.mrb[0].mxu0
        %v6823 = vadd.f32 %v6534, %v6822
        %v6824 = vpop.f32.mrb[0].mxu0
        %6825 = vmatprep.mubr.bf16.mxu0 %v5650
        %6826 = vmatmul.mubr.bf16.gmra.mrb[0].mxu0 %v5649
        %v6827 = vpop.f32.mrb[0].mxu0
        %v6828 = vadd.f32 %v6539, %v6827
        %v6829 = vpop.f32.mrb[0].mxu0
        %v6830 = vpop.f32.mrb[0].mxu0
        %v6831 = vadd.f32 %v6542, %v6830
        %v6832 = vpop.f32.mrb[0].mxu0
        %6833 = vmatprep.mubr.bf16.mxu0 %v5659
        %6834 = vmatmul.mubr.bf16.gmra.mrb[0].mxu0 %v5658
        %v6835 = vpop.f32.mrb[0].mxu0
        %v6836 = vadd.f32 %v6547, %v6835
        %v6837 = vpop.f32.mrb[0].mxu0
        %v6838 = vpop.f32.mrb[0].mxu0
        %v6839 = vadd.f32 %v6550, %v6838
        %v6840 = vpop.f32.mrb[0].mxu0
        %6841 = vmatprep.mubr.bf16.mxu0 %v5668
        %6842 = vmatmul.mubr.bf16.gmra.mrb[0].mxu0 %v5667
        %v6843 = vpop.f32.mrb[0].mxu0
        %v6844 = vadd.f32 %v6555, %v6843
        %v6845 = vpop.f32.mrb[0].mxu0
        %v6846 = vpop.f32.mrb[0].mxu0
        %v6847 = vadd.f32 %v6558, %v6846
        %v6848 = vpop.f32.mrb[0].mxu0
        %6849 = vmatprep.mubr.bf16.mxu0 %v5677
        %6850 = vmatmul.mubr.bf16.gmra.mrb[0].mxu0 %v5676
        %v6851 = vpop.f32.mrb[0].mxu0
        %v6852 = vadd.f32 %v6563, %v6851
        %v6853 = vpop.f32.mrb[0].mxu0
        %v6854 = vpop.f32.mrb[0].mxu0
        %v6855 = vadd.f32 %v6566, %v6854
        %v6856 = vpop.f32.mrb[0].mxu0
        %6857 = vmatprep.mubr.bf16.mxu0 %v5686
        %6858 = vmatmul.mubr.bf16.gmra.mrb[0].mxu0 %v5685
        %v6859 = vpop.f32.mrb[0].mxu0
        %v6860 = vadd.f32 %v6571, %v6859
        %v6861 = vpop.f32.mrb[0].mxu0
        %v6862 = vpop.f32.mrb[0].mxu0
        %v6863 = vadd.f32 %v6574, %v6862
        %v6864 = vpop.f32.mrb[0].mxu0
        %6865 = vmatprep.mubr.bf16.mxu0 %v5695
        %6866 = vmatmul.mubr.bf16.gmra.mrb[0].mxu0 %v5694
        %v6867 = vpop.f32.mrb[0].mxu0
        %v6868 = vadd.f32 %v6579, %v6867
        %v6869 = vpop.f32.mrb[0].mxu0
        %v6870 = vpop.f32.mrb[0].mxu0
        %v6871 = vadd.f32 %v6582, %v6870
        %v6872 = vpop.f32.mrb[0].mxu0
        %6873 = vmatprep.mubr.bf16.mxu0 %v5704
        %6874 = vmatmul.mubr.bf16.gmra.mrb[0].mxu0 %v5703
        %v6875 = vpop.f32.mrb[0].mxu0
        %v6876 = vadd.f32 %v6587, %v6875
        %v6877 = vpop.f32.mrb[0].mxu0
        %v6878 = vpop.f32.mrb[0].mxu0
        %v6879 = vadd.f32 %v6590, %v6878
        %v6880 = vpop.f32.mrb[0].mxu0
        %6881 = vmatprep.mubr.bf16.mxu0 %v5713
        %6882 = vmatmul.mubr.bf16.gmra.mrb[0].mxu0 %v5712
        %v6883 = vpop.f32.mrb[0].mxu0
        %v6884 = vadd.f32 %v6595, %v6883
        %v6885 = vpop.f32.mrb[0].mxu0
        %v6886 = vpop.f32.mrb[0].mxu0
        %v6887 = vadd.f32 %v6598, %v6886
        %v6888 = vpop.f32.mrb[0].mxu0
        %6889 = vmatprep.mubr.bf16.mxu0 %v5722
        %6890 = vmatmul.mubr.bf16.gmra.mrb[0].mxu0 %v5721
        %v6891 = vpop.f32.mrb[0].mxu0
        %v6892 = vadd.f32 %v6603, %v6891
        %v6893 = vpop.f32.mrb[0].mxu0
        %v6894 = vpop.f32.mrb[0].mxu0
        %v6895 = vadd.f32 %v6606, %v6894
        %v6896 = vpop.f32.mrb[0].mxu0
        %6897 = vmatprep.mubr.bf16.mxu0 %v5731
        %6898 = vmatmul.mubr.bf16.gmra.mrb[0].mxu0 %v5730
        %v6899 = vpop.f32.mrb[0].mxu0
        %v6900 = vadd.f32 %v6611, %v6899
        %v6901 = vpop.f32.mrb[0].mxu0
        %v6902 = vpop.f32.mrb[0].mxu0
        %v6903 = vadd.f32 %v6614, %v6902
        %v6904 = vpop.f32.mrb[0].mxu0
        %6905 = vmatprep.mubr.bf16.mxu0 %v5740
        %6906 = vmatmul.mubr.bf16.gmra.mrb[0].mxu0 %v5739
        %v6907 = vpop.f32.mrb[0].mxu0
        %v6908 = vadd.f32 %v6619, %v6907
        %v6909 = vpop.f32.mrb[0].mxu0
        %v6910 = vpop.f32.mrb[0].mxu0
        %v6911 = vadd.f32 %v6622, %v6910
        %v6912 = vpop.f32.mrb[0].mxu0
        %6913 = vmatprep.mubr.bf16.mxu0 %v5749
        %6914 = vmatmul.mubr.bf16.gmra.mrb[0].mxu0 %v5748
        %v6915 = vpop.f32.mrb[0].mxu0
        %v6916 = vadd.f32 %v6627, %v6915
        %v6917 = vpop.f32.mrb[0].mxu0
        %v6918 = vpop.f32.mrb[0].mxu0
        %v6919 = vadd.f32 %v6630, %v6918
        %v6920 = vpop.f32.mrb[0].mxu0
        %6921 = vmatprep.mubr.bf16.mxu0 %v5758
        %6922 = vmatmul.mubr.bf16.gmra.mrb[0].mxu0 %v5757
        %v6923 = vpop.f32.mrb[0].mxu0
        %v6924 = vadd.f32 %v6635, %v6923
        %v6925 = vpop.f32.mrb[0].mxu0
        %v6926 = vpop.f32.mrb[0].mxu0
        %v6927 = vadd.f32 %v6638, %v6926
        %v6928 = vpop.f32.mrb[0].mxu0
        %6929 = vmatprep.mubr.bf16.mxu0 %v5767
        %6930 = vmatmul.mubr.bf16.gmra.mrb[0].mxu0 %v5766
        %v6931 = vpop.f32.mrb[0].mxu0
        %v6932 = vadd.f32 %v6643, %v6931
        %v6933 = vpop.f32.mrb[0].mxu0
        %v6934 = vpop.f32.mrb[0].mxu0
        %v6935 = vadd.f32 %v6646, %v6934
        %v6936 = vpop.f32.mrb[0].mxu0
        %6937 = vmatprep.mubr.bf16.mxu0 %v5776
        %6938 = vmatmul.mubr.bf16.gmra.mrb[0].mxu0 %v5775
        %v6939 = vpop.f32.mrb[0].mxu0
        %v6940 = vadd.f32 %v6651, %v6939
        %v6941 = vpop.f32.mrb[0].mxu0
        %v6942 = vpop.f32.mrb[0].mxu0
        %v6943 = vadd.f32 %v6654, %v6942
        %v6944 = vpop.f32.mrb[0].mxu0
        %6945 = vmatprep.mubr.bf16.mxu0 %v5785
        %6946 = vmatmul.mubr.bf16.gmra.mrb[0].mxu0 %v5784
        %v6947 = vpop.f32.mrb[0].mxu0
        %v6948 = vadd.f32 %v6659, %v6947
        %v6949 = vpop.f32.mrb[0].mxu0
        %v6950 = vpop.f32.mrb[0].mxu0
        %v6951 = vadd.f32 %v6662, %v6950
        %v6952 = vpop.f32.mrb[0].mxu0
        %6953 = vmatprep.mubr.bf16.mxu0 %v5794
        %6954 = vmatmul.mubr.bf16.gmra.mrb[0].mxu0 %v5793
        %v6955 = vpop.f32.mrb[0].mxu0
        %v6956 = vadd.f32 %v6667, %v6955
        %v6957 = vpop.f32.mrb[0].mxu0
        %v6958 = vpop.f32.mrb[0].mxu0
        %v6959 = vadd.f32 %v6670, %v6958
        %v6960 = vpop.f32.mrb[0].mxu0
        %6961 = vmatprep.mubr.bf16.mxu0 %v5803
        %6962 = vmatmul.mubr.bf16.gmra.mrb[0].mxu0 %v5802
        %v6963 = vpop.f32.mrb[0].mxu0
        %v6964 = vadd.f32 %v6675, %v6963
        %v6965 = vpop.f32.mrb[0].mxu0
        %v6966 = vpop.f32.mrb[0].mxu0
        %v6967 = vadd.f32 %v6678, %v6966
        %v6968 = vpop.f32.mrb[0].mxu0
        %6969 = vdwg.mxu0
        %6970 = vmatprep.subr.bf16.mxu0 0
        %6971 = vmatpush1.bf16.msra.mxu0 %v6280
        %6972 = vmatprep.subr.bf16.mxu0 0
        %6973 = vmatpush1.bf16.msra.mxu0 %v6281
        %6974 = vmatprep.subr.bf16.mxu0 0
        %6975 = vmatpush1.bf16.msra.mxu0 %v6282
        %6976 = vmatprep.subr.bf16.mxu0 0
        %6977 = vmatpush1.bf16.msra.mxu0 %v6283
        %6978 = vmatprep.subr.bf16.mxu0 0
        %6979 = vmatpush1.bf16.msra.mxu0 %v6284
        %6980 = vmatprep.subr.bf16.mxu0 0
        %6981 = vmatpush1.bf16.msra.mxu0 %v6285
        %6982 = vmatprep.subr.bf16.mxu0 0
        %6983 = vmatpush1.bf16.msra.mxu0 %v6286
        %6984 = vmatprep.subr.bf16.mxu0 0
        %6985 = vmatpush1.bf16.msra.mxu0 %v6287
        %6986 = vmatprep.subr.bf16.mxu0 0
        %6987 = vmatpush1.bf16.msra.mxu0 %v6288
        %6988 = vmatprep.subr.bf16.mxu0 0
        %6989 = vmatpush1.bf16.msra.mxu0 %v6289
        %6990 = vmatprep.subr.bf16.mxu0 0
        %6991 = vmatpush1.bf16.msra.mxu0 %v6290
        %6992 = vmatprep.subr.bf16.mxu0 0
        %6993 = vmatpush1.bf16.msra.mxu0 %v6291
        %6994 = vmatprep.subr.bf16.mxu0 0
        %6995 = vmatpush1.bf16.msra.mxu0 %v6292
        %6996 = vmatprep.subr.bf16.mxu0 0
        %6997 = vmatpush1.bf16.msra.mxu0 %v6293
        %6998 = vmatprep.subr.bf16.mxu0 0
        %6999 = vmatpush1.bf16.msra.mxu0 %v6294
        %7000 = vmatprep.subr.bf16.mxu0 0
        %7001 = vmatpush1.bf16.msra.mxu0 %v6295
        %7002 = vmatprep.mubr.bf16.mxu0 %v5526
        %7003 = vmatmul.mubr.bf16.gmra.mrb[0].mxu0 %v5525
        %v7004 = vpop.f32.mrb[0].mxu0
        %v7005 = vadd.f32 %v6716, %v7004
        %v7006 = vpop.f32.mrb[0].mxu0
        %v7007 = vpop.f32.mrb[0].mxu0
        %v7008 = vadd.f32 %v6719, %v7007
        %v7009 = vpop.f32.mrb[0].mxu0
        %7010 = vmatprep.mubr.bf16.mxu0 %v5535
        %7011 = vmatmul.mubr.bf16.gmra.mrb[0].mxu0 %v5534
        %v7012 = vpop.f32.mrb[0].mxu0
        %v7013 = vadd.f32 %v6724, %v7012
        %v7014 = vpop.f32.mrb[0].mxu0
        %v7015 = vpop.f32.mrb[0].mxu0
        %v7016 = vadd.f32 %v6727, %v7015
        %v7017 = vpop.f32.mrb[0].mxu0
        %7018 = vmatprep.mubr.bf16.mxu0 %v5544
        %7019 = vmatmul.mubr.bf16.gmra.mrb[0].mxu0 %v5543
        %v7020 = vpop.f32.mrb[0].mxu0
        %v7021 = vadd.f32 %v6732, %v7020
        %v7022 = vpop.f32.mrb[0].mxu0
        %v7023 = vpop.f32.mrb[0].mxu0
        %v7024 = vadd.f32 %v6735, %v7023
        %v7025 = vpop.f32.mrb[0].mxu0
        %7026 = vmatprep.mubr.bf16.mxu0 %v5553
        %7027 = vmatmul.mubr.bf16.gmra.mrb[0].mxu0 %v5552
        %v7028 = vpop.f32.mrb[0].mxu0
        %v7029 = vadd.f32 %v6740, %v7028
        %v7030 = vpop.f32.mrb[0].mxu0
        %v7031 = vpop.f32.mrb[0].mxu0
        %v7032 = vadd.f32 %v6743, %v7031
        %v7033 = vpop.f32.mrb[0].mxu0
        %7034 = vmatprep.mubr.bf16.mxu0 %v5562
        %7035 = vmatmul.mubr.bf16.gmra.mrb[0].mxu0 %v5561
        %v7036 = vpop.f32.mrb[0].mxu0
        %v7037 = vadd.f32 %v6748, %v7036
        %v7038 = vpop.f32.mrb[0].mxu0
        %v7039 = vpop.f32.mrb[0].mxu0
        %v7040 = vadd.f32 %v6751, %v7039
        %v7041 = vpop.f32.mrb[0].mxu0
        %7042 = vmatprep.mubr.bf16.mxu0 %v5571
        %7043 = vmatmul.mubr.bf16.gmra.mrb[0].mxu0 %v5570
        %v7044 = vpop.f32.mrb[0].mxu0
        %v7045 = vadd.f32 %v6756, %v7044
        %v7046 = vpop.f32.mrb[0].mxu0
        %v7047 = vpop.f32.mrb[0].mxu0
        %v7048 = vadd.f32 %v6759, %v7047
        %v7049 = vpop.f32.mrb[0].mxu0
        %7050 = vmatprep.mubr.bf16.mxu0 %v5580
        %7051 = vmatmul.mubr.bf16.gmra.mrb[0].mxu0 %v5579
        %v7052 = vpop.f32.mrb[0].mxu0
        %v7053 = vadd.f32 %v6764, %v7052
        %v7054 = vpop.f32.mrb[0].mxu0
        %v7055 = vpop.f32.mrb[0].mxu0
        %v7056 = vadd.f32 %v6767, %v7055
        %v7057 = vpop.f32.mrb[0].mxu0
        %7058 = vmatprep.mubr.bf16.mxu0 %v5589
        %7059 = vmatmul.mubr.bf16.gmra.mrb[0].mxu0 %v5588
        %v7060 = vpop.f32.mrb[0].mxu0
        %v7061 = vadd.f32 %v6772, %v7060
        %v7062 = vpop.f32.mrb[0].mxu0
        %v7063 = vpop.f32.mrb[0].mxu0
        %v7064 = vadd.f32 %v6775, %v7063
        %v7065 = vpop.f32.mrb[0].mxu0
        %7066 = vmatprep.mubr.bf16.mxu0 %v5598
        %7067 = vmatmul.mubr.bf16.gmra.mrb[0].mxu0 %v5597
        %v7068 = vpop.f32.mrb[0].mxu0
        %v7069 = vadd.f32 %v6780, %v7068
        %v7070 = vpop.f32.mrb[0].mxu0
        %v7071 = vpop.f32.mrb[0].mxu0
        %v7072 = vadd.f32 %v6783, %v7071
        %v7073 = vpop.f32.mrb[0].mxu0
        %7074 = vmatprep.mubr.bf16.mxu0 %v5607
        %7075 = vmatmul.mubr.bf16.gmra.mrb[0].mxu0 %v5606
        %v7076 = vpop.f32.mrb[0].mxu0
        %v7077 = vadd.f32 %v6788, %v7076
        %v7078 = vpop.f32.mrb[0].mxu0
        %v7079 = vpop.f32.mrb[0].mxu0
        %v7080 = vadd.f32 %v6791, %v7079
        %v7081 = vpop.f32.mrb[0].mxu0
        %7082 = vmatprep.mubr.bf16.mxu0 %v5616
        %7083 = vmatmul.mubr.bf16.gmra.mrb[0].mxu0 %v5615
        %v7084 = vpop.f32.mrb[0].mxu0
        %v7085 = vadd.f32 %v6796, %v7084
        %v7086 = vpop.f32.mrb[0].mxu0
        %v7087 = vpop.f32.mrb[0].mxu0
        %v7088 = vadd.f32 %v6799, %v7087
        %v7089 = vpop.f32.mrb[0].mxu0
        %7090 = vmatprep.mubr.bf16.mxu0 %v5625
        %7091 = vmatmul.mubr.bf16.gmra.mrb[0].mxu0 %v5624
        %v7092 = vpop.f32.mrb[0].mxu0
        %v7093 = vadd.f32 %v6804, %v7092
        %v7094 = vpop.f32.mrb[0].mxu0
        %v7095 = vpop.f32.mrb[0].mxu0
        %v7096 = vadd.f32 %v6807, %v7095
        %v7097 = vpop.f32.mrb[0].mxu0
        %7098 = vmatprep.mubr.bf16.mxu0 %v5634
        %7099 = vmatmul.mubr.bf16.gmra.mrb[0].mxu0 %v5633
        %v7100 = vpop.f32.mrb[0].mxu0
        %v7101 = vadd.f32 %v6812, %v7100
        %v7102 = vpop.f32.mrb[0].mxu0
        %v7103 = vpop.f32.mrb[0].mxu0
        %v7104 = vadd.f32 %v6815, %v7103
        %v7105 = vpop.f32.mrb[0].mxu0
        %7106 = vmatprep.mubr.bf16.mxu0 %v5643
        %7107 = vmatmul.mubr.bf16.gmra.mrb[0].mxu0 %v5642
        %v7108 = vpop.f32.mrb[0].mxu0
        %v7109 = vadd.f32 %v6820, %v7108
        %v7110 = vpop.f32.mrb[0].mxu0
        %v7111 = vpop.f32.mrb[0].mxu0
        %v7112 = vadd.f32 %v6823, %v7111
        %v7113 = vpop.f32.mrb[0].mxu0
        %7114 = vmatprep.mubr.bf16.mxu0 %v5652
        %7115 = vmatmul.mubr.bf16.gmra.mrb[0].mxu0 %v5651
        %v7116 = vpop.f32.mrb[0].mxu0
        %v7117 = vadd.f32 %v6828, %v7116
        %v7118 = vpop.f32.mrb[0].mxu0
        %v7119 = vpop.f32.mrb[0].mxu0
        %v7120 = vadd.f32 %v6831, %v7119
        %v7121 = vpop.f32.mrb[0].mxu0
        %7122 = vmatprep.mubr.bf16.mxu0 %v5661
        %7123 = vmatmul.mubr.bf16.gmra.mrb[0].mxu0 %v5660
        %v7124 = vpop.f32.mrb[0].mxu0
        %v7125 = vadd.f32 %v6836, %v7124
        %v7126 = vpop.f32.mrb[0].mxu0
        %v7127 = vpop.f32.mrb[0].mxu0
        %v7128 = vadd.f32 %v6839, %v7127
        %v7129 = vpop.f32.mrb[0].mxu0
        %7130 = vmatprep.mubr.bf16.mxu0 %v5670
        %7131 = vmatmul.mubr.bf16.gmra.mrb[0].mxu0 %v5669
        %v7132 = vpop.f32.mrb[0].mxu0
        %v7133 = vadd.f32 %v6844, %v7132
        %v7134 = vpop.f32.mrb[0].mxu0
        %v7135 = vpop.f32.mrb[0].mxu0
        %v7136 = vadd.f32 %v6847, %v7135
        %v7137 = vpop.f32.mrb[0].mxu0
        %7138 = vmatprep.mubr.bf16.mxu0 %v5679
        %7139 = vmatmul.mubr.bf16.gmra.mrb[0].mxu0 %v5678
        %v7140 = vpop.f32.mrb[0].mxu0
        %v7141 = vadd.f32 %v6852, %v7140
        %v7142 = vpop.f32.mrb[0].mxu0
        %v7143 = vpop.f32.mrb[0].mxu0
        %v7144 = vadd.f32 %v6855, %v7143
        %v7145 = vpop.f32.mrb[0].mxu0
        %7146 = vmatprep.mubr.bf16.mxu0 %v5688
        %7147 = vmatmul.mubr.bf16.gmra.mrb[0].mxu0 %v5687
        %v7148 = vpop.f32.mrb[0].mxu0
        %v7149 = vadd.f32 %v6860, %v7148
        %v7150 = vpop.f32.mrb[0].mxu0
        %v7151 = vpop.f32.mrb[0].mxu0
        %v7152 = vadd.f32 %v6863, %v7151
        %v7153 = vpop.f32.mrb[0].mxu0
        %7154 = vmatprep.mubr.bf16.mxu0 %v5697
        %7155 = vmatmul.mubr.bf16.gmra.mrb[0].mxu0 %v5696
        %v7156 = vpop.f32.mrb[0].mxu0
        %v7157 = vadd.f32 %v6868, %v7156
        %v7158 = vpop.f32.mrb[0].mxu0
        %v7159 = vpop.f32.mrb[0].mxu0
        %v7160 = vadd.f32 %v6871, %v7159
        %v7161 = vpop.f32.mrb[0].mxu0
        %7162 = vmatprep.mubr.bf16.mxu0 %v5706
        %7163 = vmatmul.mubr.bf16.gmra.mrb[0].mxu0 %v5705
        %v7164 = vpop.f32.mrb[0].mxu0
        %v7165 = vadd.f32 %v6876, %v7164
        %v7166 = vpop.f32.mrb[0].mxu0
        %v7167 = vpop.f32.mrb[0].mxu0
        %v7168 = vadd.f32 %v6879, %v7167
        %v7169 = vpop.f32.mrb[0].mxu0
        %7170 = vmatprep.mubr.bf16.mxu0 %v5715
        %7171 = vmatmul.mubr.bf16.gmra.mrb[0].mxu0 %v5714
        %v7172 = vpop.f32.mrb[0].mxu0
        %v7173 = vadd.f32 %v6884, %v7172
        %v7174 = vpop.f32.mrb[0].mxu0
        %v7175 = vpop.f32.mrb[0].mxu0
        %v7176 = vadd.f32 %v6887, %v7175
        %v7177 = vpop.f32.mrb[0].mxu0
        %7178 = vmatprep.mubr.bf16.mxu0 %v5724
        %7179 = vmatmul.mubr.bf16.gmra.mrb[0].mxu0 %v5723
        %v7180 = vpop.f32.mrb[0].mxu0
        %v7181 = vadd.f32 %v6892, %v7180
        %v7182 = vpop.f32.mrb[0].mxu0
        %v7183 = vpop.f32.mrb[0].mxu0
        %v7184 = vadd.f32 %v6895, %v7183
        %v7185 = vpop.f32.mrb[0].mxu0
        %7186 = vmatprep.mubr.bf16.mxu0 %v5733
        %7187 = vmatmul.mubr.bf16.gmra.mrb[0].mxu0 %v5732
        %v7188 = vpop.f32.mrb[0].mxu0
        %v7189 = vadd.f32 %v6900, %v7188
        %v7190 = vpop.f32.mrb[0].mxu0
        %v7191 = vpop.f32.mrb[0].mxu0
        %v7192 = vadd.f32 %v6903, %v7191
        %v7193 = vpop.f32.mrb[0].mxu0
        %7194 = vmatprep.mubr.bf16.mxu0 %v5742
        %7195 = vmatmul.mubr.bf16.gmra.mrb[0].mxu0 %v5741
        %v7196 = vpop.f32.mrb[0].mxu0
        %v7197 = vadd.f32 %v6908, %v7196
        %v7198 = vpop.f32.mrb[0].mxu0
        %v7199 = vpop.f32.mrb[0].mxu0
        %v7200 = vadd.f32 %v6911, %v7199
        %v7201 = vpop.f32.mrb[0].mxu0
        %7202 = vmatprep.mubr.bf16.mxu0 %v5751
        %7203 = vmatmul.mubr.bf16.gmra.mrb[0].mxu0 %v5750
        %v7204 = vpop.f32.mrb[0].mxu0
        %v7205 = vadd.f32 %v6916, %v7204
        %v7206 = vpop.f32.mrb[0].mxu0
        %v7207 = vpop.f32.mrb[0].mxu0
        %v7208 = vadd.f32 %v6919, %v7207
        %v7209 = vpop.f32.mrb[0].mxu0
        %7210 = vmatprep.mubr.bf16.mxu0 %v5760
        %7211 = vmatmul.mubr.bf16.gmra.mrb[0].mxu0 %v5759
        %v7212 = vpop.f32.mrb[0].mxu0
        %v7213 = vadd.f32 %v6924, %v7212
        %v7214 = vpop.f32.mrb[0].mxu0
        %v7215 = vpop.f32.mrb[0].mxu0
        %v7216 = vadd.f32 %v6927, %v7215
        %v7217 = vpop.f32.mrb[0].mxu0
        %7218 = vmatprep.mubr.bf16.mxu0 %v5769
        %7219 = vmatmul.mubr.bf16.gmra.mrb[0].mxu0 %v5768
        %v7220 = vpop.f32.mrb[0].mxu0
        %v7221 = vadd.f32 %v6932, %v7220
        %v7222 = vpop.f32.mrb[0].mxu0
        %v7223 = vpop.f32.mrb[0].mxu0
        %v7224 = vadd.f32 %v6935, %v7223
        %v7225 = vpop.f32.mrb[0].mxu0
        %7226 = vmatprep.mubr.bf16.mxu0 %v5778
        %7227 = vmatmul.mubr.bf16.gmra.mrb[0].mxu0 %v5777
        %v7228 = vpop.f32.mrb[0].mxu0
        %v7229 = vadd.f32 %v6940, %v7228
        %v7230 = vpop.f32.mrb[0].mxu0
        %v7231 = vpop.f32.mrb[0].mxu0
        %v7232 = vadd.f32 %v6943, %v7231
        %v7233 = vpop.f32.mrb[0].mxu0
        %7234 = vmatprep.mubr.bf16.mxu0 %v5787
        %7235 = vmatmul.mubr.bf16.gmra.mrb[0].mxu0 %v5786
        %v7236 = vpop.f32.mrb[0].mxu0
        %v7237 = vadd.f32 %v6948, %v7236
        %v7238 = vpop.f32.mrb[0].mxu0
        %v7239 = vpop.f32.mrb[0].mxu0
        %v7240 = vadd.f32 %v6951, %v7239
        %v7241 = vpop.f32.mrb[0].mxu0
        %7242 = vmatprep.mubr.bf16.mxu0 %v5796
        %7243 = vmatmul.mubr.bf16.gmra.mrb[0].mxu0 %v5795
        %v7244 = vpop.f32.mrb[0].mxu0
        %v7245 = vadd.f32 %v6956, %v7244
        %v7246 = vpop.f32.mrb[0].mxu0
        %v7247 = vpop.f32.mrb[0].mxu0
        %v7248 = vadd.f32 %v6959, %v7247
        %v7249 = vpop.f32.mrb[0].mxu0
        %7250 = vmatprep.mubr.bf16.mxu0 %v5805
        %7251 = vmatmul.mubr.bf16.gmra.mrb[0].mxu0 %v5804
        %v7252 = vpop.f32.mrb[0].mxu0
        %v7253 = vadd.f32 %v6964, %v7252
        %v7254 = vpop.f32.mrb[0].mxu0
        %v7255 = vpop.f32.mrb[0].mxu0
        %v7256 = vadd.f32 %v6967, %v7255
        %v7257 = vpop.f32.mrb[0].mxu0
        %7258 = vdwg.mxu0
        %7259 = vmatprep.subr.bf16.mxu0 0
        %7260 = vmatpush1.bf16.msra.mxu0 %v6296
        %7261 = vmatprep.subr.bf16.mxu0 0
        %7262 = vmatpush1.bf16.msra.mxu0 %v6297
        %7263 = vmatprep.subr.bf16.mxu0 0
        %7264 = vmatpush1.bf16.msra.mxu0 %v6298
        %7265 = vmatprep.subr.bf16.mxu0 0
        %7266 = vmatpush1.bf16.msra.mxu0 %v6299
        %7267 = vmatprep.subr.bf16.mxu0 0
        %7268 = vmatpush1.bf16.msra.mxu0 %v6300
        %7269 = vmatprep.subr.bf16.mxu0 0
        %7270 = vmatpush1.bf16.msra.mxu0 %v6301
        %7271 = vmatprep.subr.bf16.mxu0 0
        %7272 = vmatpush1.bf16.msra.mxu0 %v6302
        %7273 = vmatprep.subr.bf16.mxu0 0
        %7274 = vmatpush1.bf16.msra.mxu0 %v6303
        %7275 = vmatprep.subr.bf16.mxu0 0
        %7276 = vmatpush1.bf16.msra.mxu0 %v6304
        %7277 = vmatprep.subr.bf16.mxu0 0
        %7278 = vmatpush1.bf16.msra.mxu0 %v6305
        %7279 = vmatprep.subr.bf16.mxu0 0
        %7280 = vmatpush1.bf16.msra.mxu0 %v6306
        %7281 = vmatprep.subr.bf16.mxu0 0
        %7282 = vmatpush1.bf16.msra.mxu0 %v6307
        %7283 = vmatprep.subr.bf16.mxu0 0
        %7284 = vmatpush1.bf16.msra.mxu0 %v6308
        %7285 = vmatprep.subr.bf16.mxu0 0
        %7286 = vmatpush1.bf16.msra.mxu0 %v6309
        %7287 = vmatprep.subr.bf16.mxu0 0
        %7288 = vmatpush1.bf16.msra.mxu0 %v6310
        %7289 = vmatprep.subr.bf16.mxu0 0
        %7290 = vmatpush1.bf16.msra.mxu0 %v6311
        %7291 = vmatprep.mubr.bf16.mxu0 %v5528
        %7292 = vmatmul.mubr.bf16.gmra.mrb[0].mxu0 %v5527
        %v7293 = vpop.f32.mrb[0].mxu0
        %v7294 = vadd.f32 %v7005, %v7293
        %v7295 = vpop.f32.mrb[0].mxu0
        %v7296 = vpop.f32.mrb[0].mxu0
        %v7297 = vadd.f32 %v7008, %v7296
        %v7298 = vpop.f32.mrb[0].mxu0
        %7299 = vmatprep.mubr.bf16.mxu0 %v5537
        %7300 = vmatmul.mubr.bf16.gmra.mrb[0].mxu0 %v5536
        %v7301 = vpop.f32.mrb[0].mxu0
        %v7302 = vadd.f32 %v7013, %v7301
        %v7303 = vpop.f32.mrb[0].mxu0
        %v7304 = vpop.f32.mrb[0].mxu0
        %v7305 = vadd.f32 %v7016, %v7304
        %v7306 = vpop.f32.mrb[0].mxu0
        %7307 = vmatprep.mubr.bf16.mxu0 %v5546
        %7308 = vmatmul.mubr.bf16.gmra.mrb[0].mxu0 %v5545
        %v7309 = vpop.f32.mrb[0].mxu0
        %v7310 = vadd.f32 %v7021, %v7309
        %v7311 = vpop.f32.mrb[0].mxu0
        %v7312 = vpop.f32.mrb[0].mxu0
        %v7313 = vadd.f32 %v7024, %v7312
        %v7314 = vpop.f32.mrb[0].mxu0
        %7315 = vmatprep.mubr.bf16.mxu0 %v5555
        %7316 = vmatmul.mubr.bf16.gmra.mrb[0].mxu0 %v5554
        %v7317 = vpop.f32.mrb[0].mxu0
        %v7318 = vadd.f32 %v7029, %v7317
        %v7319 = vpop.f32.mrb[0].mxu0
        %v7320 = vpop.f32.mrb[0].mxu0
        %v7321 = vadd.f32 %v7032, %v7320
        %v7322 = vpop.f32.mrb[0].mxu0
        %7323 = vmatprep.mubr.bf16.mxu0 %v5564
        %7324 = vmatmul.mubr.bf16.gmra.mrb[0].mxu0 %v5563
        %v7325 = vpop.f32.mrb[0].mxu0
        %v7326 = vadd.f32 %v7037, %v7325
        %v7327 = vpop.f32.mrb[0].mxu0
        %v7328 = vpop.f32.mrb[0].mxu0
        %v7329 = vadd.f32 %v7040, %v7328
        %v7330 = vpop.f32.mrb[0].mxu0
        %7331 = vmatprep.mubr.bf16.mxu0 %v5573
        %7332 = vmatmul.mubr.bf16.gmra.mrb[0].mxu0 %v5572
        %v7333 = vpop.f32.mrb[0].mxu0
        %v7334 = vadd.f32 %v7045, %v7333
        %v7335 = vpop.f32.mrb[0].mxu0
        %v7336 = vpop.f32.mrb[0].mxu0
        %v7337 = vadd.f32 %v7048, %v7336
        %v7338 = vpop.f32.mrb[0].mxu0
        %7339 = vmatprep.mubr.bf16.mxu0 %v5582
        %7340 = vmatmul.mubr.bf16.gmra.mrb[0].mxu0 %v5581
        %v7341 = vpop.f32.mrb[0].mxu0
        %v7342 = vadd.f32 %v7053, %v7341
        %v7343 = vpop.f32.mrb[0].mxu0
        %v7344 = vpop.f32.mrb[0].mxu0
        %v7345 = vadd.f32 %v7056, %v7344
        %v7346 = vpop.f32.mrb[0].mxu0
        %7347 = vmatprep.mubr.bf16.mxu0 %v5591
        %7348 = vmatmul.mubr.bf16.gmra.mrb[0].mxu0 %v5590
        %v7349 = vpop.f32.mrb[0].mxu0
        %v7350 = vadd.f32 %v7061, %v7349
        %v7351 = vpop.f32.mrb[0].mxu0
        %v7352 = vpop.f32.mrb[0].mxu0
        %v7353 = vadd.f32 %v7064, %v7352
        %v7354 = vpop.f32.mrb[0].mxu0
        %7355 = vmatprep.mubr.bf16.mxu0 %v5600
        %7356 = vmatmul.mubr.bf16.gmra.mrb[0].mxu0 %v5599
        %v7357 = vpop.f32.mrb[0].mxu0
        %v7358 = vadd.f32 %v7069, %v7357
        %v7359 = vpop.f32.mrb[0].mxu0
        %v7360 = vpop.f32.mrb[0].mxu0
        %v7361 = vadd.f32 %v7072, %v7360
        %v7362 = vpop.f32.mrb[0].mxu0
        %7363 = vmatprep.mubr.bf16.mxu0 %v5609
        %7364 = vmatmul.mubr.bf16.gmra.mrb[0].mxu0 %v5608
        %v7365 = vpop.f32.mrb[0].mxu0
        %v7366 = vadd.f32 %v7077, %v7365
        %v7367 = vpop.f32.mrb[0].mxu0
        %v7368 = vpop.f32.mrb[0].mxu0
        %v7369 = vadd.f32 %v7080, %v7368
        %v7370 = vpop.f32.mrb[0].mxu0
        %7371 = vmatprep.mubr.bf16.mxu0 %v5618
        %7372 = vmatmul.mubr.bf16.gmra.mrb[0].mxu0 %v5617
        %v7373 = vpop.f32.mrb[0].mxu0
        %v7374 = vadd.f32 %v7085, %v7373
        %v7375 = vpop.f32.mrb[0].mxu0
        %v7376 = vpop.f32.mrb[0].mxu0
        %v7377 = vadd.f32 %v7088, %v7376
        %v7378 = vpop.f32.mrb[0].mxu0
        %7379 = vmatprep.mubr.bf16.mxu0 %v5627
        %7380 = vmatmul.mubr.bf16.gmra.mrb[0].mxu0 %v5626
        %v7381 = vpop.f32.mrb[0].mxu0
        %v7382 = vadd.f32 %v7093, %v7381
        %v7383 = vpop.f32.mrb[0].mxu0
        %v7384 = vpop.f32.mrb[0].mxu0
        %v7385 = vadd.f32 %v7096, %v7384
        %v7386 = vpop.f32.mrb[0].mxu0
        %7387 = vmatprep.mubr.bf16.mxu0 %v5636
        %7388 = vmatmul.mubr.bf16.gmra.mrb[0].mxu0 %v5635
        %v7389 = vpop.f32.mrb[0].mxu0
        %v7390 = vadd.f32 %v7101, %v7389
        %v7391 = vpop.f32.mrb[0].mxu0
        %v7392 = vpop.f32.mrb[0].mxu0
        %v7393 = vadd.f32 %v7104, %v7392
        %v7394 = vpop.f32.mrb[0].mxu0
        %7395 = vmatprep.mubr.bf16.mxu0 %v5645
        %7396 = vmatmul.mubr.bf16.gmra.mrb[0].mxu0 %v5644
        %v7397 = vpop.f32.mrb[0].mxu0
        %v7398 = vadd.f32 %v7109, %v7397
        %v7399 = vpop.f32.mrb[0].mxu0
        %v7400 = vpop.f32.mrb[0].mxu0
        %v7401 = vadd.f32 %v7112, %v7400
        %v7402 = vpop.f32.mrb[0].mxu0
        %7403 = vmatprep.mubr.bf16.mxu0 %v5654
        %7404 = vmatmul.mubr.bf16.gmra.mrb[0].mxu0 %v5653
        %v7405 = vpop.f32.mrb[0].mxu0
        %v7406 = vadd.f32 %v7117, %v7405
        %v7407 = vpop.f32.mrb[0].mxu0
        %v7408 = vpop.f32.mrb[0].mxu0
        %v7409 = vadd.f32 %v7120, %v7408
        %v7410 = vpop.f32.mrb[0].mxu0
        %7411 = vmatprep.mubr.bf16.mxu0 %v5663
        %7412 = vmatmul.mubr.bf16.gmra.mrb[0].mxu0 %v5662
        %v7413 = vpop.f32.mrb[0].mxu0
        %v7414 = vadd.f32 %v7125, %v7413
        %v7415 = vpop.f32.mrb[0].mxu0
        %v7416 = vpop.f32.mrb[0].mxu0
        %v7417 = vadd.f32 %v7128, %v7416
        %v7418 = vpop.f32.mrb[0].mxu0
        %7419 = vmatprep.mubr.bf16.mxu0 %v5672
        %7420 = vmatmul.mubr.bf16.gmra.mrb[0].mxu0 %v5671
        %v7421 = vpop.f32.mrb[0].mxu0
        %v7422 = vadd.f32 %v7133, %v7421
        %v7423 = vpop.f32.mrb[0].mxu0
        %v7424 = vpop.f32.mrb[0].mxu0
        %v7425 = vadd.f32 %v7136, %v7424
        %v7426 = vpop.f32.mrb[0].mxu0
        %7427 = vmatprep.mubr.bf16.mxu0 %v5681
        %7428 = vmatmul.mubr.bf16.gmra.mrb[0].mxu0 %v5680
        %v7429 = vpop.f32.mrb[0].mxu0
        %v7430 = vadd.f32 %v7141, %v7429
        %v7431 = vpop.f32.mrb[0].mxu0
        %v7432 = vpop.f32.mrb[0].mxu0
        %v7433 = vadd.f32 %v7144, %v7432
        %v7434 = vpop.f32.mrb[0].mxu0
        %7435 = vmatprep.mubr.bf16.mxu0 %v5690
        %7436 = vmatmul.mubr.bf16.gmra.mrb[0].mxu0 %v5689
        %v7437 = vpop.f32.mrb[0].mxu0
        %v7438 = vadd.f32 %v7149, %v7437
        %v7439 = vpop.f32.mrb[0].mxu0
        %v7440 = vpop.f32.mrb[0].mxu0
        %v7441 = vadd.f32 %v7152, %v7440
        %v7442 = vpop.f32.mrb[0].mxu0
        %7443 = vmatprep.mubr.bf16.mxu0 %v5699
        %7444 = vmatmul.mubr.bf16.gmra.mrb[0].mxu0 %v5698
        %v7445 = vpop.f32.mrb[0].mxu0
        %v7446 = vadd.f32 %v7157, %v7445
        %v7447 = vpop.f32.mrb[0].mxu0
        %v7448 = vpop.f32.mrb[0].mxu0
        %v7449 = vadd.f32 %v7160, %v7448
        %v7450 = vpop.f32.mrb[0].mxu0
        %7451 = vmatprep.mubr.bf16.mxu0 %v5708
        %7452 = vmatmul.mubr.bf16.gmra.mrb[0].mxu0 %v5707
        %v7453 = vpop.f32.mrb[0].mxu0
        %v7454 = vadd.f32 %v7165, %v7453
        %v7455 = vpop.f32.mrb[0].mxu0
        %v7456 = vpop.f32.mrb[0].mxu0
        %v7457 = vadd.f32 %v7168, %v7456
        %v7458 = vpop.f32.mrb[0].mxu0
        %7459 = vmatprep.mubr.bf16.mxu0 %v5717
        %7460 = vmatmul.mubr.bf16.gmra.mrb[0].mxu0 %v5716
        %v7461 = vpop.f32.mrb[0].mxu0
        %v7462 = vadd.f32 %v7173, %v7461
        %v7463 = vpop.f32.mrb[0].mxu0
        %v7464 = vpop.f32.mrb[0].mxu0
        %v7465 = vadd.f32 %v7176, %v7464
        %v7466 = vpop.f32.mrb[0].mxu0
        %7467 = vmatprep.mubr.bf16.mxu0 %v5726
        %7468 = vmatmul.mubr.bf16.gmra.mrb[0].mxu0 %v5725
        %v7469 = vpop.f32.mrb[0].mxu0
        %v7470 = vadd.f32 %v7181, %v7469
        %v7471 = vpop.f32.mrb[0].mxu0
        %v7472 = vpop.f32.mrb[0].mxu0
        %v7473 = vadd.f32 %v7184, %v7472
        %v7474 = vpop.f32.mrb[0].mxu0
        %7475 = vmatprep.mubr.bf16.mxu0 %v5735
        %7476 = vmatmul.mubr.bf16.gmra.mrb[0].mxu0 %v5734
        %v7477 = vpop.f32.mrb[0].mxu0
        %v7478 = vadd.f32 %v7189, %v7477
        %v7479 = vpop.f32.mrb[0].mxu0
        %v7480 = vpop.f32.mrb[0].mxu0
        %v7481 = vadd.f32 %v7192, %v7480
        %v7482 = vpop.f32.mrb[0].mxu0
        %7483 = vmatprep.mubr.bf16.mxu0 %v5744
        %7484 = vmatmul.mubr.bf16.gmra.mrb[0].mxu0 %v5743
        %v7485 = vpop.f32.mrb[0].mxu0
        %v7486 = vadd.f32 %v7197, %v7485
        %v7487 = vpop.f32.mrb[0].mxu0
        %v7488 = vpop.f32.mrb[0].mxu0
        %v7489 = vadd.f32 %v7200, %v7488
        %v7490 = vpop.f32.mrb[0].mxu0
        %7491 = vmatprep.mubr.bf16.mxu0 %v5753
        %7492 = vmatmul.mubr.bf16.gmra.mrb[0].mxu0 %v5752
        %v7493 = vpop.f32.mrb[0].mxu0
        %v7494 = vadd.f32 %v7205, %v7493
        %v7495 = vpop.f32.mrb[0].mxu0
        %v7496 = vpop.f32.mrb[0].mxu0
        %v7497 = vadd.f32 %v7208, %v7496
        %v7498 = vpop.f32.mrb[0].mxu0
        %7499 = vmatprep.mubr.bf16.mxu0 %v5762
        %7500 = vmatmul.mubr.bf16.gmra.mrb[0].mxu0 %v5761
        %v7501 = vpop.f32.mrb[0].mxu0
        %v7502 = vadd.f32 %v7213, %v7501
        %v7503 = vpop.f32.mrb[0].mxu0
        %v7504 = vpop.f32.mrb[0].mxu0
        %v7505 = vadd.f32 %v7216, %v7504
        %v7506 = vpop.f32.mrb[0].mxu0
        %7507 = vmatprep.mubr.bf16.mxu0 %v5771
        %7508 = vmatmul.mubr.bf16.gmra.mrb[0].mxu0 %v5770
        %v7509 = vpop.f32.mrb[0].mxu0
        %v7510 = vadd.f32 %v7221, %v7509
        %v7511 = vpop.f32.mrb[0].mxu0
        %v7512 = vpop.f32.mrb[0].mxu0
        %v7513 = vadd.f32 %v7224, %v7512
        %v7514 = vpop.f32.mrb[0].mxu0
        %7515 = vmatprep.mubr.bf16.mxu0 %v5780
        %7516 = vmatmul.mubr.bf16.gmra.mrb[0].mxu0 %v5779
        %v7517 = vpop.f32.mrb[0].mxu0
        %v7518 = vadd.f32 %v7229, %v7517
        %v7519 = vpop.f32.mrb[0].mxu0
        %v7520 = vpop.f32.mrb[0].mxu0
        %v7521 = vadd.f32 %v7232, %v7520
        %v7522 = vpop.f32.mrb[0].mxu0
        %7523 = vmatprep.mubr.bf16.mxu0 %v5789
        %7524 = vmatmul.mubr.bf16.gmra.mrb[0].mxu0 %v5788
        %v7525 = vpop.f32.mrb[0].mxu0
        %v7526 = vadd.f32 %v7237, %v7525
        %v7527 = vpop.f32.mrb[0].mxu0
        %v7528 = vpop.f32.mrb[0].mxu0
        %v7529 = vadd.f32 %v7240, %v7528
        %v7530 = vpop.f32.mrb[0].mxu0
        %7531 = vmatprep.mubr.bf16.mxu0 %v5798
        %7532 = vmatmul.mubr.bf16.gmra.mrb[0].mxu0 %v5797
        %v7533 = vpop.f32.mrb[0].mxu0
        %v7534 = vadd.f32 %v7245, %v7533
        %v7535 = vpop.f32.mrb[0].mxu0
        %v7536 = vpop.f32.mrb[0].mxu0
        %v7537 = vadd.f32 %v7248, %v7536
        %v7538 = vpop.f32.mrb[0].mxu0
        %7539 = vmatprep.mubr.bf16.mxu0 %v5807
        %7540 = vmatmul.mubr.bf16.gmra.mrb[0].mxu0 %v5806
        %v7541 = vpop.f32.mrb[0].mxu0
        %v7542 = vadd.f32 %v7253, %v7541
        %v7543 = vpop.f32.mrb[0].mxu0
        %v7544 = vpop.f32.mrb[0].mxu0
        %v7545 = vadd.f32 %v7256, %v7544
        %v7546 = vpop.f32.mrb[0].mxu0
        %7547 = vdwg.mxu0
        %7548 = vmatprep.subr.bf16.mxu0 0
        %7549 = vmatpush1.bf16.msra.mxu0 %v6312
        %7550 = vmatprep.subr.bf16.mxu0 0
        %7551 = vmatpush1.bf16.msra.mxu0 %v6313
        %7552 = vmatprep.subr.bf16.mxu0 0
        %7553 = vmatpush1.bf16.msra.mxu0 %v6314
        %7554 = vmatprep.subr.bf16.mxu0 0
        %7555 = vmatpush1.bf16.msra.mxu0 %v6315
        %7556 = vmatprep.subr.bf16.mxu0 0
        %7557 = vmatpush1.bf16.msra.mxu0 %v6316
        %7558 = vmatprep.subr.bf16.mxu0 0
        %7559 = vmatpush1.bf16.msra.mxu0 %v6317
        %7560 = vmatprep.subr.bf16.mxu0 0
        %7561 = vmatpush1.bf16.msra.mxu0 %v6318
        %7562 = vmatprep.subr.bf16.mxu0 0
        %7563 = vmatpush1.bf16.msra.mxu0 %v6319
        %7564 = vmatprep.subr.bf16.mxu0 0
        %7565 = vmatpush1.bf16.msra.mxu0 0
        %7566 = vmatprep.subr.bf16.mxu0 0
        %7567 = vmatpush1.bf16.msra.mxu0 0
        %7568 = vmatprep.subr.bf16.mxu0 0
        %7569 = vmatpush1.bf16.msra.mxu0 0
        %7570 = vmatprep.subr.bf16.mxu0 0
        %7571 = vmatpush1.bf16.msra.mxu0 0
        %7572 = vmatprep.subr.bf16.mxu0 0
        %7573 = vmatpush1.bf16.msra.mxu0 0
        %7574 = vmatprep.subr.bf16.mxu0 0
        %7575 = vmatpush1.bf16.msra.mxu0 0
        %7576 = vmatprep.subr.bf16.mxu0 0
        %7577 = vmatpush1.bf16.msra.mxu0 0
        %7578 = vmatprep.subr.bf16.mxu0 0
        %7579 = vmatpush1.bf16.msra.mxu0 0
        %7580 = vmatprep.mubr.bf16.mxu0 0
        %7581 = vmatmul.mubr.bf16.gmra.mrb[0].mxu0 %v5529
        %v7582 = vpop.f32.mrb[0].mxu0
        %v7583 = vadd.f32 %v7294, %v7582
        %v7584 = vpop.f32.mrb[0].mxu0
        %v7585 = vpop.f32.mrb[0].mxu0
        %v7586 = vadd.f32 %v7297, %v7585
        %v7587 = vpop.f32.mrb[0].mxu0
        %7588 = vmatprep.mubr.bf16.mxu0 0
        %7589 = vmatmul.mubr.bf16.gmra.mrb[0].mxu0 %v5538
        %v7590 = vpop.f32.mrb[0].mxu0
        %v7591 = vadd.f32 %v7302, %v7590
        %v7592 = vpop.f32.mrb[0].mxu0
        %v7593 = vpop.f32.mrb[0].mxu0
        %v7594 = vadd.f32 %v7305, %v7593
        %v7595 = vpop.f32.mrb[0].mxu0
        %7596 = vmatprep.mubr.bf16.mxu0 0
        %7597 = vmatmul.mubr.bf16.gmra.mrb[0].mxu0 %v5547
        %v7598 = vpop.f32.mrb[0].mxu0
        %v7599 = vadd.f32 %v7310, %v7598
        %v7600 = vpop.f32.mrb[0].mxu0
        %v7601 = vpop.f32.mrb[0].mxu0
        %v7602 = vadd.f32 %v7313, %v7601
        %v7603 = vpop.f32.mrb[0].mxu0
        %7604 = vmatprep.mubr.bf16.mxu0 0
        %7605 = vmatmul.mubr.bf16.gmra.mrb[0].mxu0 %v5556
        %v7606 = vpop.f32.mrb[0].mxu0
        %v7607 = vadd.f32 %v7318, %v7606
        %v7608 = vpop.f32.mrb[0].mxu0
        %v7609 = vpop.f32.mrb[0].mxu0
        %v7610 = vadd.f32 %v7321, %v7609
        %v7611 = vpop.f32.mrb[0].mxu0
        %7612 = vmatprep.mubr.bf16.mxu0 0
        %7613 = vmatmul.mubr.bf16.gmra.mrb[0].mxu0 %v5565
        %v7614 = vpop.f32.mrb[0].mxu0
        %v7615 = vadd.f32 %v7326, %v7614
        %v7616 = vpop.f32.mrb[0].mxu0
        %v7617 = vpop.f32.mrb[0].mxu0
        %v7618 = vadd.f32 %v7329, %v7617
        %v7619 = vpop.f32.mrb[0].mxu0
        %7620 = vmatprep.mubr.bf16.mxu0 0
        %7621 = vmatmul.mubr.bf16.gmra.mrb[0].mxu0 %v5574
        %v7622 = vpop.f32.mrb[0].mxu0
        %v7623 = vadd.f32 %v7334, %v7622
        %v7624 = vpop.f32.mrb[0].mxu0
        %v7625 = vpop.f32.mrb[0].mxu0
        %v7626 = vadd.f32 %v7337, %v7625
        %v7627 = vpop.f32.mrb[0].mxu0
        %7628 = vmatprep.mubr.bf16.mxu0 0
        %7629 = vmatmul.mubr.bf16.gmra.mrb[0].mxu0 %v5583
        %v7630 = vpop.f32.mrb[0].mxu0
        %v7631 = vadd.f32 %v7342, %v7630
        %v7632 = vpop.f32.mrb[0].mxu0
        %v7633 = vpop.f32.mrb[0].mxu0
        %v7634 = vadd.f32 %v7345, %v7633
        %v7635 = vpop.f32.mrb[0].mxu0
        %7636 = vmatprep.mubr.bf16.mxu0 0
        %7637 = vmatmul.mubr.bf16.gmra.mrb[0].mxu0 %v5592
        %v7638 = vpop.f32.mrb[0].mxu0
        %v7639 = vadd.f32 %v7350, %v7638
        %v7640 = vpop.f32.mrb[0].mxu0
        %v7641 = vpop.f32.mrb[0].mxu0
        %v7642 = vadd.f32 %v7353, %v7641
        %v7643 = vpop.f32.mrb[0].mxu0
        %7644 = vmatprep.mubr.bf16.mxu0 0
        %7645 = vmatmul.mubr.bf16.gmra.mrb[0].mxu0 %v5601
        %v7646 = vpop.f32.mrb[0].mxu0
        %v7647 = vadd.f32 %v7358, %v7646
        %v7648 = vpop.f32.mrb[0].mxu0
        %v7649 = vpop.f32.mrb[0].mxu0
        %v7650 = vadd.f32 %v7361, %v7649
        %v7651 = vpop.f32.mrb[0].mxu0
        %7652 = vmatprep.mubr.bf16.mxu0 0
        %7653 = vmatmul.mubr.bf16.gmra.mrb[0].mxu0 %v5610
        %v7654 = vpop.f32.mrb[0].mxu0
        %v7655 = vadd.f32 %v7366, %v7654
        %v7656 = vpop.f32.mrb[0].mxu0
        %v7657 = vpop.f32.mrb[0].mxu0
        %v7658 = vadd.f32 %v7369, %v7657
        %v7659 = vpop.f32.mrb[0].mxu0
        %7660 = vmatprep.mubr.bf16.mxu0 0
        %7661 = vmatmul.mubr.bf16.gmra.mrb[0].mxu0 %v5619
        %v7662 = vpop.f32.mrb[0].mxu0
        %v7663 = vadd.f32 %v7374, %v7662
        %v7664 = vpop.f32.mrb[0].mxu0
        %v7665 = vpop.f32.mrb[0].mxu0
        %v7666 = vadd.f32 %v7377, %v7665
        %v7667 = vpop.f32.mrb[0].mxu0
        %7668 = vmatprep.mubr.bf16.mxu0 0
        %7669 = vmatmul.mubr.bf16.gmra.mrb[0].mxu0 %v5628
        %v7670 = vpop.f32.mrb[0].mxu0
        %v7671 = vadd.f32 %v7382, %v7670
        %v7672 = vpop.f32.mrb[0].mxu0
        %v7673 = vpop.f32.mrb[0].mxu0
        %v7674 = vadd.f32 %v7385, %v7673
        %v7675 = vpop.f32.mrb[0].mxu0
        %7676 = vmatprep.mubr.bf16.mxu0 0
        %7677 = vmatmul.mubr.bf16.gmra.mrb[0].mxu0 %v5637
        %v7678 = vpop.f32.mrb[0].mxu0
        %v7679 = vadd.f32 %v7390, %v7678
        %v7680 = vpop.f32.mrb[0].mxu0
        %v7681 = vpop.f32.mrb[0].mxu0
        %v7682 = vadd.f32 %v7393, %v7681
        %v7683 = vpop.f32.mrb[0].mxu0
        %7684 = vmatprep.mubr.bf16.mxu0 0
        %7685 = vmatmul.mubr.bf16.gmra.mrb[0].mxu0 %v5646
        %v7686 = vpop.f32.mrb[0].mxu0
        %v7687 = vadd.f32 %v7398, %v7686
        %v7688 = vpop.f32.mrb[0].mxu0
        %v7689 = vpop.f32.mrb[0].mxu0
        %v7690 = vadd.f32 %v7401, %v7689
        %v7691 = vpop.f32.mrb[0].mxu0
        %7692 = vmatprep.mubr.bf16.mxu0 0
        %7693 = vmatmul.mubr.bf16.gmra.mrb[0].mxu0 %v5655
        %v7694 = vpop.f32.mrb[0].mxu0
        %v7695 = vadd.f32 %v7406, %v7694
        %v7696 = vpop.f32.mrb[0].mxu0
        %v7697 = vpop.f32.mrb[0].mxu0
        %v7698 = vadd.f32 %v7409, %v7697
        %v7699 = vpop.f32.mrb[0].mxu0
        %7700 = vmatprep.mubr.bf16.mxu0 0
        %7701 = vmatmul.mubr.bf16.gmra.mrb[0].mxu0 %v5664
        %v7702 = vpop.f32.mrb[0].mxu0
        %v7703 = vadd.f32 %v7414, %v7702
        %v7704 = vpop.f32.mrb[0].mxu0
        %v7705 = vpop.f32.mrb[0].mxu0
        %v7706 = vadd.f32 %v7417, %v7705
        %v7707 = vpop.f32.mrb[0].mxu0
        %7708 = vmatprep.mubr.bf16.mxu0 0
        %7709 = vmatmul.mubr.bf16.gmra.mrb[0].mxu0 %v5673
        %v7710 = vpop.f32.mrb[0].mxu0
        %v7711 = vadd.f32 %v7422, %v7710
        %v7712 = vpop.f32.mrb[0].mxu0
        %v7713 = vpop.f32.mrb[0].mxu0
        %v7714 = vadd.f32 %v7425, %v7713
        %v7715 = vpop.f32.mrb[0].mxu0
        %7716 = vmatprep.mubr.bf16.mxu0 0
        %7717 = vmatmul.mubr.bf16.gmra.mrb[0].mxu0 %v5682
        %v7718 = vpop.f32.mrb[0].mxu0
        %v7719 = vadd.f32 %v7430, %v7718
        %v7720 = vpop.f32.mrb[0].mxu0
        %v7721 = vpop.f32.mrb[0].mxu0
        %v7722 = vadd.f32 %v7433, %v7721
        %v7723 = vpop.f32.mrb[0].mxu0
        %7724 = vmatprep.mubr.bf16.mxu0 0
        %7725 = vmatmul.mubr.bf16.gmra.mrb[0].mxu0 %v5691
        %v7726 = vpop.f32.mrb[0].mxu0
        %v7727 = vadd.f32 %v7438, %v7726
        %v7728 = vpop.f32.mrb[0].mxu0
        %v7729 = vpop.f32.mrb[0].mxu0
        %v7730 = vadd.f32 %v7441, %v7729
        %v7731 = vpop.f32.mrb[0].mxu0
        %7732 = vmatprep.mubr.bf16.mxu0 0
        %7733 = vmatmul.mubr.bf16.gmra.mrb[0].mxu0 %v5700
        %v7734 = vpop.f32.mrb[0].mxu0
        %v7735 = vadd.f32 %v7446, %v7734
        %v7736 = vpop.f32.mrb[0].mxu0
        %v7737 = vpop.f32.mrb[0].mxu0
        %v7738 = vadd.f32 %v7449, %v7737
        %v7739 = vpop.f32.mrb[0].mxu0
        %7740 = vmatprep.mubr.bf16.mxu0 0
        %7741 = vmatmul.mubr.bf16.gmra.mrb[0].mxu0 %v5709
        %v7742 = vpop.f32.mrb[0].mxu0
        %v7743 = vadd.f32 %v7454, %v7742
        %v7744 = vpop.f32.mrb[0].mxu0
        %v7745 = vpop.f32.mrb[0].mxu0
        %v7746 = vadd.f32 %v7457, %v7745
        %v7747 = vpop.f32.mrb[0].mxu0
        %7748 = vmatprep.mubr.bf16.mxu0 0
        %7749 = vmatmul.mubr.bf16.gmra.mrb[0].mxu0 %v5718
        %v7750 = vpop.f32.mrb[0].mxu0
        %v7751 = vadd.f32 %v7462, %v7750
        %v7752 = vpop.f32.mrb[0].mxu0
        %v7753 = vpop.f32.mrb[0].mxu0
        %v7754 = vadd.f32 %v7465, %v7753
        %v7755 = vpop.f32.mrb[0].mxu0
        %7756 = vmatprep.mubr.bf16.mxu0 0
        %7757 = vmatmul.mubr.bf16.gmra.mrb[0].mxu0 %v5727
        %v7758 = vpop.f32.mrb[0].mxu0
        %v7759 = vadd.f32 %v7470, %v7758
        %v7760 = vpop.f32.mrb[0].mxu0
        %v7761 = vpop.f32.mrb[0].mxu0
        %v7762 = vadd.f32 %v7473, %v7761
        %v7763 = vpop.f32.mrb[0].mxu0
        %7764 = vmatprep.mubr.bf16.mxu0 0
        %7765 = vmatmul.mubr.bf16.gmra.mrb[0].mxu0 %v5736
        %v7766 = vpop.f32.mrb[0].mxu0
        %v7767 = vadd.f32 %v7478, %v7766
        %v7768 = vpop.f32.mrb[0].mxu0
        %v7769 = vpop.f32.mrb[0].mxu0
        %v7770 = vadd.f32 %v7481, %v7769
        %v7771 = vpop.f32.mrb[0].mxu0
        %7772 = vmatprep.mubr.bf16.mxu0 0
        %7773 = vmatmul.mubr.bf16.gmra.mrb[0].mxu0 %v5745
        %v7774 = vpop.f32.mrb[0].mxu0
        %v7775 = vadd.f32 %v7486, %v7774
        %v7776 = vpop.f32.mrb[0].mxu0
        %v7777 = vpop.f32.mrb[0].mxu0
        %v7778 = vadd.f32 %v7489, %v7777
        %v7779 = vpop.f32.mrb[0].mxu0
        %7780 = vmatprep.mubr.bf16.mxu0 0
        %7781 = vmatmul.mubr.bf16.gmra.mrb[0].mxu0 %v5754
        %v7782 = vpop.f32.mrb[0].mxu0
        %v7783 = vadd.f32 %v7494, %v7782
        %v7784 = vpop.f32.mrb[0].mxu0
        %v7785 = vpop.f32.mrb[0].mxu0
        %v7786 = vadd.f32 %v7497, %v7785
        %v7787 = vpop.f32.mrb[0].mxu0
        %7788 = vmatprep.mubr.bf16.mxu0 0
        %7789 = vmatmul.mubr.bf16.gmra.mrb[0].mxu0 %v5763
        %v7790 = vpop.f32.mrb[0].mxu0
        %v7791 = vadd.f32 %v7502, %v7790
        %v7792 = vpop.f32.mrb[0].mxu0
        %v7793 = vpop.f32.mrb[0].mxu0
        %v7794 = vadd.f32 %v7505, %v7793
        %v7795 = vpop.f32.mrb[0].mxu0
        %7796 = vmatprep.mubr.bf16.mxu0 0
        %7797 = vmatmul.mubr.bf16.gmra.mrb[0].mxu0 %v5772
        %v7798 = vpop.f32.mrb[0].mxu0
        %v7799 = vadd.f32 %v7510, %v7798
        %v7800 = vpop.f32.mrb[0].mxu0
        %v7801 = vpop.f32.mrb[0].mxu0
        %v7802 = vadd.f32 %v7513, %v7801
        %v7803 = vpop.f32.mrb[0].mxu0
        %7804 = vmatprep.mubr.bf16.mxu0 0
        %7805 = vmatmul.mubr.bf16.gmra.mrb[0].mxu0 %v5781
        %v7806 = vpop.f32.mrb[0].mxu0
        %v7807 = vadd.f32 %v7518, %v7806
        %v7808 = vpop.f32.mrb[0].mxu0
        %v7809 = vpop.f32.mrb[0].mxu0
        %v7810 = vadd.f32 %v7521, %v7809
        %v7811 = vpop.f32.mrb[0].mxu0
        %7812 = vmatprep.mubr.bf16.mxu0 0
        %7813 = vmatmul.mubr.bf16.gmra.mrb[0].mxu0 %v5790
        %v7814 = vpop.f32.mrb[0].mxu0
        %v7815 = vadd.f32 %v7526, %v7814
        %v7816 = vpop.f32.mrb[0].mxu0
        %v7817 = vpop.f32.mrb[0].mxu0
        %v7818 = vadd.f32 %v7529, %v7817
        %v7819 = vpop.f32.mrb[0].mxu0
        %7820 = vmatprep.mubr.bf16.mxu0 0
        %7821 = vmatmul.mubr.bf16.gmra.mrb[0].mxu0 %v5799
        %v7822 = vpop.f32.mrb[0].mxu0
        %v7823 = vadd.f32 %v7534, %v7822
        %v7824 = vpop.f32.mrb[0].mxu0
        %v7825 = vpop.f32.mrb[0].mxu0
        %v7826 = vadd.f32 %v7537, %v7825
        %v7827 = vpop.f32.mrb[0].mxu0
        %7828 = vmatprep.mubr.bf16.mxu0 0
        %7829 = vmatmul.mubr.bf16.gmra.mrb[0].mxu0 %v5808
        %v7830 = vpop.f32.mrb[0].mxu0
        %v7831 = vadd.f32 %v7542, %v7830
        %v7832 = vpop.f32.mrb[0].mxu0
        %v7833 = vpop.f32.mrb[0].mxu0
        %v7834 = vadd.f32 %v7545, %v7833
        %v7835 = vpop.f32.mrb[0].mxu0
        %7836 = vdwg.mxu0
        %v7837 = vsub.f32 0.0, %v7583
        %v7838 = vsub.f32 0.0, %v7586
        %v7839 = vsub.f32 0.0, %v7591
        %v7840 = vsub.f32 0.0, %v7594
        %v7841 = vsub.f32 0.0, %v7599
        %v7842 = vsub.f32 0.0, %v7602
        %v7843 = vsub.f32 0.0, %v7607
        %v7844 = vsub.f32 0.0, %v7610
        %v7845 = vsub.f32 0.0, %v7615
        %v7846 = vsub.f32 0.0, %v7618
        %v7847 = vsub.f32 0.0, %v7623
        %v7848 = vsub.f32 0.0, %v7626
        %v7849 = vsub.f32 0.0, %v7631
        %v7850 = vsub.f32 0.0, %v7634
        %v7851 = vsub.f32 0.0, %v7639
        %v7852 = vsub.f32 0.0, %v7642
        %v7853 = vsub.f32 0.0, %v7647
        %v7854 = vsub.f32 0.0, %v7650
        %v7855 = vsub.f32 0.0, %v7655
        %v7856 = vsub.f32 0.0, %v7658
        %v7857 = vsub.f32 0.0, %v7663
        %v7858 = vsub.f32 0.0, %v7666
        %v7859 = vsub.f32 0.0, %v7671
        %v7860 = vsub.f32 0.0, %v7674
        %v7861 = vsub.f32 0.0, %v7679
        %v7862 = vsub.f32 0.0, %v7682
        %v7863 = vsub.f32 0.0, %v7687
        %v7864 = vsub.f32 0.0, %v7690
        %v7865 = vsub.f32 0.0, %v7695
        %v7866 = vsub.f32 0.0, %v7698
        %v7867 = vsub.f32 0.0, %v7703
        %v7868 = vsub.f32 0.0, %v7706
        %v7869 = vsub.f32 0.0, %v7711
        %v7870 = vsub.f32 0.0, %v7714
        %v7871 = vsub.f32 0.0, %v7719
        %v7872 = vsub.f32 0.0, %v7722
        %v7873 = vsub.f32 0.0, %v7727
        %v7874 = vsub.f32 0.0, %v7730
        %v7875 = vsub.f32 0.0, %v7735
        %v7876 = vsub.f32 0.0, %v7738
        %v7877 = vsub.f32 0.0, %v7743
        %v7878 = vsub.f32 0.0, %v7746
        %v7879 = vsub.f32 0.0, %v7751
        %v7880 = vsub.f32 0.0, %v7754
        %v7881 = vsub.f32 0.0, %v7759
        %v7882 = vsub.f32 0.0, %v7762
        %v7883 = vsub.f32 0.0, %v7767
        %v7884 = vsub.f32 0.0, %v7770
        %v7885 = vsub.f32 0.0, %v7775
        %v7886 = vsub.f32 0.0, %v7778
        %v7887 = vsub.f32 0.0, %v7783
        %v7888 = vsub.f32 0.0, %v7786
        %v7889 = vsub.f32 0.0, %v7791
        %v7890 = vsub.f32 0.0, %v7794
        %v7891 = vsub.f32 0.0, %v7799
        %v7892 = vsub.f32 0.0, %v7802
        %v7893 = vsub.f32 0.0, %v7807
        %v7894 = vsub.f32 0.0, %v7810
        %v7895 = vsub.f32 0.0, %v7815
        %v7896 = vsub.f32 0.0, %v7818
        %v7897 = vsub.f32 0.0, %v7823
        %v7898 = vsub.f32 0.0, %v7826
        %v7899 = vsub.f32 0.0, %v7831
        %v7900 = vsub.f32 0.0, %v7834
        %v7901 = vmul.f32 %v7837, 1.442695
        %v7902 = vpow.pop %v7901
        %v7903 = vmul.f32 %v7838, 1.442695
        %v7904 = vpow.pop %v7903
        %v7905 = vmul.f32 %v7839, 1.442695
        %v7906 = vpow.pop %v7905
        %v7907 = vmul.f32 %v7840, 1.442695
        %v7908 = vpow.pop %v7907
        %v7909 = vmul.f32 %v7841, 1.442695
        %v7910 = vpow.pop %v7909
        %v7911 = vmul.f32 %v7842, 1.442695
        %v7912 = vpow.pop %v7911
        %v7913 = vmul.f32 %v7843, 1.442695
        %v7914 = vpow.pop %v7913
        %v7915 = vmul.f32 %v7844, 1.442695
        %v7916 = vpow.pop %v7915
        %v7917 = vmul.f32 %v7845, 1.442695
        %v7918 = vpow.pop %v7917
        %v7919 = vmul.f32 %v7846, 1.442695
        %v7920 = vpow.pop %v7919
        %v7921 = vmul.f32 %v7847, 1.442695
        %v7922 = vpow.pop %v7921
        %v7923 = vmul.f32 %v7848, 1.442695
        %v7924 = vpow.pop %v7923
        %v7925 = vmul.f32 %v7849, 1.442695
        %v7926 = vpow.pop %v7925
        %v7927 = vmul.f32 %v7850, 1.442695
        %v7928 = vpow.pop %v7927
        %v7929 = vmul.f32 %v7851, 1.442695
        %v7930 = vpow.pop %v7929
        %v7931 = vmul.f32 %v7852, 1.442695
        %v7932 = vpow.pop %v7931
        %v7933 = vmul.f32 %v7853, 1.442695
        %v7934 = vpow.pop %v7933
        %v7935 = vmul.f32 %v7854, 1.442695
        %v7936 = vpow.pop %v7935
        %v7937 = vmul.f32 %v7855, 1.442695
        %v7938 = vpow.pop %v7937
        %v7939 = vmul.f32 %v7856, 1.442695
        %v7940 = vpow.pop %v7939
        %v7941 = vmul.f32 %v7857, 1.442695
        %v7942 = vpow.pop %v7941
        %v7943 = vmul.f32 %v7858, 1.442695
        %v7944 = vpow.pop %v7943
        %v7945 = vmul.f32 %v7859, 1.442695
        %v7946 = vpow.pop %v7945
        %v7947 = vmul.f32 %v7860, 1.442695
        %v7948 = vpow.pop %v7947
        %v7949 = vmul.f32 %v7861, 1.442695
        %v7950 = vpow.pop %v7949
        %v7951 = vmul.f32 %v7862, 1.442695
        %v7952 = vpow.pop %v7951
        %v7953 = vmul.f32 %v7863, 1.442695
        %v7954 = vpow.pop %v7953
        %v7955 = vmul.f32 %v7864, 1.442695
        %v7956 = vpow.pop %v7955
        %v7957 = vmul.f32 %v7865, 1.442695
        %v7958 = vpow.pop %v7957
        %v7959 = vmul.f32 %v7866, 1.442695
        %v7960 = vpow.pop %v7959
        %v7961 = vmul.f32 %v7867, 1.442695
        %v7962 = vpow.pop %v7961
        %v7963 = vmul.f32 %v7868, 1.442695
        %v7964 = vpow.pop %v7963
        %v7965 = vmul.f32 %v7869, 1.442695
        %v7966 = vpow.pop %v7965
        %v7967 = vmul.f32 %v7870, 1.442695
        %v7968 = vpow.pop %v7967
        %v7969 = vmul.f32 %v7871, 1.442695
        %v7970 = vpow.pop %v7969
        %v7971 = vmul.f32 %v7872, 1.442695
        %v7972 = vpow.pop %v7971
        %v7973 = vmul.f32 %v7873, 1.442695
        %v7974 = vpow.pop %v7973
        %v7975 = vmul.f32 %v7874, 1.442695
        %v7976 = vpow.pop %v7975
        %v7977 = vmul.f32 %v7875, 1.442695
        %v7978 = vpow.pop %v7977
        %v7979 = vmul.f32 %v7876, 1.442695
        %v7980 = vpow.pop %v7979
        %v7981 = vmul.f32 %v7877, 1.442695
        %v7982 = vpow.pop %v7981
        %v7983 = vmul.f32 %v7878, 1.442695
        %v7984 = vpow.pop %v7983
        %v7985 = vmul.f32 %v7879, 1.442695
        %v7986 = vpow.pop %v7985
        %v7987 = vmul.f32 %v7880, 1.442695
        %v7988 = vpow.pop %v7987
        %v7989 = vmul.f32 %v7881, 1.442695
        %v7990 = vpow.pop %v7989
        %v7991 = vmul.f32 %v7882, 1.442695
        %v7992 = vpow.pop %v7991
        %v7993 = vmul.f32 %v7883, 1.442695
        %v7994 = vpow.pop %v7993
        %v7995 = vmul.f32 %v7884, 1.442695
        %v7996 = vpow.pop %v7995
        %v7997 = vmul.f32 %v7885, 1.442695
        %v7998 = vpow.pop %v7997
        %v7999 = vmul.f32 %v7886, 1.442695
        %v8000 = vpow.pop %v7999
        %v8001 = vmul.f32 %v7887, 1.442695
        %v8002 = vpow.pop %v8001
        %v8003 = vmul.f32 %v7888, 1.442695
        %v8004 = vpow.pop %v8003
        %v8005 = vmul.f32 %v7889, 1.442695
        %v8006 = vpow.pop %v8005
        %v8007 = vmul.f32 %v7890, 1.442695
        %v8008 = vpow.pop %v8007
        %v8009 = vmul.f32 %v7891, 1.442695
        %v8010 = vpow.pop %v8009
        %v8011 = vmul.f32 %v7892, 1.442695
        %v8012 = vpow.pop %v8011
        %v8013 = vmul.f32 %v7893, 1.442695
        %v8014 = vpow.pop %v8013
        %v8015 = vmul.f32 %v7894, 1.442695
        %v8016 = vpow.pop %v8015
        %v8017 = vmul.f32 %v7895, 1.442695
        %v8018 = vpow.pop %v8017
        %v8019 = vmul.f32 %v7896, 1.442695
        %v8020 = vpow.pop %v8019
        %v8021 = vmul.f32 %v7897, 1.442695
        %v8022 = vpow.pop %v8021
        %v8023 = vmul.f32 %v7898, 1.442695
        %v8024 = vpow.pop %v8023
        %v8025 = vmul.f32 %v7899, 1.442695
        %v8026 = vpow.pop %v8025
        %v8027 = vmul.f32 %v7900, 1.442695
        %v8028 = vpow.pop %v8027
        %v8029 = vadd.f32 %v7902, 1.0
        %v8030 = vadd.f32 %v7904, 1.0
        %v8031 = vadd.f32 %v7906, 1.0
        %v8032 = vadd.f32 %v7908, 1.0
        %v8033 = vadd.f32 %v7910, 1.0
        %v8034 = vadd.f32 %v7912, 1.0
        %v8035 = vadd.f32 %v7914, 1.0
        %v8036 = vadd.f32 %v7916, 1.0
        %v8037 = vadd.f32 %v7918, 1.0
        %v8038 = vadd.f32 %v7920, 1.0
        %v8039 = vadd.f32 %v7922, 1.0
        %v8040 = vadd.f32 %v7924, 1.0
        %v8041 = vadd.f32 %v7926, 1.0
        %v8042 = vadd.f32 %v7928, 1.0
        %v8043 = vadd.f32 %v7930, 1.0
        %v8044 = vadd.f32 %v7932, 1.0
        %v8045 = vadd.f32 %v7934, 1.0
        %v8046 = vadd.f32 %v7936, 1.0
        %v8047 = vadd.f32 %v7938, 1.0
        %v8048 = vadd.f32 %v7940, 1.0
        %v8049 = vadd.f32 %v7942, 1.0
        %v8050 = vadd.f32 %v7944, 1.0
        %v8051 = vadd.f32 %v7946, 1.0
        %v8052 = vadd.f32 %v7948, 1.0
        %v8053 = vadd.f32 %v7950, 1.0
        %v8054 = vadd.f32 %v7952, 1.0
        %v8055 = vadd.f32 %v7954, 1.0
        %v8056 = vadd.f32 %v7956, 1.0
        %v8057 = vadd.f32 %v7958, 1.0
        %v8058 = vadd.f32 %v7960, 1.0
        %v8059 = vadd.f32 %v7962, 1.0
        %v8060 = vadd.f32 %v7964, 1.0
        %v8061 = vadd.f32 %v7966, 1.0
        %v8062 = vadd.f32 %v7968, 1.0
        %v8063 = vadd.f32 %v7970, 1.0
        %v8064 = vadd.f32 %v7972, 1.0
        %v8065 = vadd.f32 %v7974, 1.0
        %v8066 = vadd.f32 %v7976, 1.0
        %v8067 = vadd.f32 %v7978, 1.0
        %v8068 = vadd.f32 %v7980, 1.0
        %v8069 = vadd.f32 %v7982, 1.0
        %v8070 = vadd.f32 %v7984, 1.0
        %v8071 = vadd.f32 %v7986, 1.0
        %v8072 = vadd.f32 %v7988, 1.0
        %v8073 = vadd.f32 %v7990, 1.0
        %v8074 = vadd.f32 %v7992, 1.0
        %v8075 = vadd.f32 %v7994, 1.0
        %v8076 = vadd.f32 %v7996, 1.0
        %v8077 = vadd.f32 %v7998, 1.0
        %v8078 = vadd.f32 %v8000, 1.0
        %v8079 = vadd.f32 %v8002, 1.0
        %v8080 = vadd.f32 %v8004, 1.0
        %v8081 = vadd.f32 %v8006, 1.0
        %v8082 = vadd.f32 %v8008, 1.0
        %v8083 = vadd.f32 %v8010, 1.0
        %v8084 = vadd.f32 %v8012, 1.0
        %v8085 = vadd.f32 %v8014, 1.0
        %v8086 = vadd.f32 %v8016, 1.0
        %v8087 = vadd.f32 %v8018, 1.0
        %v8088 = vadd.f32 %v8020, 1.0
        %v8089 = vadd.f32 %v8022, 1.0
        %v8090 = vadd.f32 %v8024, 1.0
        %v8091 = vadd.f32 %v8026, 1.0
        %v8092 = vadd.f32 %v8028, 1.0
        %v8093 = vrcp.pop %v8029
        %v8094 = vrcp.pop %v8030
        %v8095 = vrcp.pop %v8031
        %v8096 = vrcp.pop %v8032
        %v8097 = vrcp.pop %v8033
        %v8098 = vrcp.pop %v8034
        %v8099 = vrcp.pop %v8035
        %v8100 = vrcp.pop %v8036
        %v8101 = vrcp.pop %v8037
        %v8102 = vrcp.pop %v8038
        %v8103 = vrcp.pop %v8039
        %v8104 = vrcp.pop %v8040
        %v8105 = vrcp.pop %v8041
        %v8106 = vrcp.pop %v8042
        %v8107 = vrcp.pop %v8043
        %v8108 = vrcp.pop %v8044
        %v8109 = vrcp.pop %v8045
        %v8110 = vrcp.pop %v8046
        %v8111 = vrcp.pop %v8047
        %v8112 = vrcp.pop %v8048
        %v8113 = vrcp.pop %v8049
        %v8114 = vrcp.pop %v8050
        %v8115 = vrcp.pop %v8051
        %v8116 = vrcp.pop %v8052
        %v8117 = vrcp.pop %v8053
        %v8118 = vrcp.pop %v8054
        %v8119 = vrcp.pop %v8055
        %v8120 = vrcp.pop %v8056
        %v8121 = vrcp.pop %v8057
        %v8122 = vrcp.pop %v8058
        %v8123 = vrcp.pop %v8059
        %v8124 = vrcp.pop %v8060
        %v8125 = vrcp.pop %v8061
        %v8126 = vrcp.pop %v8062
        %v8127 = vrcp.pop %v8063
        %v8128 = vrcp.pop %v8064
        %v8129 = vrcp.pop %v8065
        %v8130 = vrcp.pop %v8066
        %v8131 = vrcp.pop %v8067
        %v8132 = vrcp.pop %v8068
        %v8133 = vrcp.pop %v8069
        %v8134 = vrcp.pop %v8070
        %v8135 = vrcp.pop %v8071
        %v8136 = vrcp.pop %v8072
        %v8137 = vrcp.pop %v8073
        %v8138 = vrcp.pop %v8074
        %v8139 = vrcp.pop %v8075
        %v8140 = vrcp.pop %v8076
        %v8141 = vrcp.pop %v8077
        %v8142 = vrcp.pop %v8078
        %v8143 = vrcp.pop %v8079
        %v8144 = vrcp.pop %v8080
        %v8145 = vrcp.pop %v8081
        %v8146 = vrcp.pop %v8082
        %v8147 = vrcp.pop %v8083
        %v8148 = vrcp.pop %v8084
        %v8149 = vrcp.pop %v8085
        %v8150 = vrcp.pop %v8086
        %v8151 = vrcp.pop %v8087
        %v8152 = vrcp.pop %v8088
        %v8153 = vrcp.pop %v8089
        %v8154 = vrcp.pop %v8090
        %v8155 = vrcp.pop %v8091
        %v8156 = vrcp.pop %v8092
        %v8157 = vmul.f32 %v7583, %v8093
        %v8158 = vmul.f32 %v7586, %v8094
        %v8159 = vmul.f32 %v7591, %v8095
        %v8160 = vmul.f32 %v7594, %v8096
        %v8161 = vmul.f32 %v7599, %v8097
        %v8162 = vmul.f32 %v7602, %v8098
        %v8163 = vmul.f32 %v7607, %v8099
        %v8164 = vmul.f32 %v7610, %v8100
        %v8165 = vmul.f32 %v7615, %v8101
        %v8166 = vmul.f32 %v7618, %v8102
        %v8167 = vmul.f32 %v7623, %v8103
        %v8168 = vmul.f32 %v7626, %v8104
        %v8169 = vmul.f32 %v7631, %v8105
        %v8170 = vmul.f32 %v7634, %v8106
        %v8171 = vmul.f32 %v7639, %v8107
        %v8172 = vmul.f32 %v7642, %v8108
        %v8173 = vmul.f32 %v7647, %v8109
        %v8174 = vmul.f32 %v7650, %v8110
        %v8175 = vmul.f32 %v7655, %v8111
        %v8176 = vmul.f32 %v7658, %v8112
        %v8177 = vmul.f32 %v7663, %v8113
        %v8178 = vmul.f32 %v7666, %v8114
        %v8179 = vmul.f32 %v7671, %v8115
        %v8180 = vmul.f32 %v7674, %v8116
        %v8181 = vmul.f32 %v7679, %v8117
        %v8182 = vmul.f32 %v7682, %v8118
        %v8183 = vmul.f32 %v7687, %v8119
        %v8184 = vmul.f32 %v7690, %v8120
        %v8185 = vmul.f32 %v7695, %v8121
        %v8186 = vmul.f32 %v7698, %v8122
        %v8187 = vmul.f32 %v7703, %v8123
        %v8188 = vmul.f32 %v7706, %v8124
        %v8189 = vmul.f32 %v7711, %v8125
        %v8190 = vmul.f32 %v7714, %v8126
        %v8191 = vmul.f32 %v7719, %v8127
        %v8192 = vmul.f32 %v7722, %v8128
        %v8193 = vmul.f32 %v7727, %v8129
        %v8194 = vmul.f32 %v7730, %v8130
        %v8195 = vmul.f32 %v7735, %v8131
        %v8196 = vmul.f32 %v7738, %v8132
        %v8197 = vmul.f32 %v7743, %v8133
        %v8198 = vmul.f32 %v7746, %v8134
        %v8199 = vmul.f32 %v7751, %v8135
        %v8200 = vmul.f32 %v7754, %v8136
        %v8201 = vmul.f32 %v7759, %v8137
        %v8202 = vmul.f32 %v7762, %v8138
        %v8203 = vmul.f32 %v7767, %v8139
        %v8204 = vmul.f32 %v7770, %v8140
        %v8205 = vmul.f32 %v7775, %v8141
        %v8206 = vmul.f32 %v7778, %v8142
        %v8207 = vmul.f32 %v7783, %v8143
        %v8208 = vmul.f32 %v7786, %v8144
        %v8209 = vmul.f32 %v7791, %v8145
        %v8210 = vmul.f32 %v7794, %v8146
        %v8211 = vmul.f32 %v7799, %v8147
        %v8212 = vmul.f32 %v7802, %v8148
        %v8213 = vmul.f32 %v7807, %v8149
        %v8214 = vmul.f32 %v7810, %v8150
        %v8215 = vmul.f32 %v7815, %v8151
        %v8216 = vmul.f32 %v7818, %v8152
        %v8217 = vmul.f32 %v7823, %v8153
        %v8218 = vmul.f32 %v7826, %v8154
        %v8219 = vmul.f32 %v7831, %v8155
        %v8220 = vmul.f32 %v7834, %v8156
        %v8221 = vpack.c.bf16 %v8158, %v8157
        %v8222 = vpack.c.bf16 %v8160, %v8159
        %v8223 = vpack.c.bf16 %v8162, %v8161
        %v8224 = vpack.c.bf16 %v8164, %v8163
        %v8225 = vpack.c.bf16 %v8166, %v8165
        %v8226 = vpack.c.bf16 %v8168, %v8167
        %v8227 = vpack.c.bf16 %v8170, %v8169
        %v8228 = vpack.c.bf16 %v8172, %v8171
        %v8229 = vpack.c.bf16 %v8174, %v8173
        %v8230 = vpack.c.bf16 %v8176, %v8175
        %v8231 = vpack.c.bf16 %v8178, %v8177
        %v8232 = vpack.c.bf16 %v8180, %v8179
        %v8233 = vpack.c.bf16 %v8182, %v8181
        %v8234 = vpack.c.bf16 %v8184, %v8183
        %v8235 = vpack.c.bf16 %v8186, %v8185
        %v8236 = vpack.c.bf16 %v8188, %v8187
        %v8237 = vpack.c.bf16 %v8190, %v8189
        %v8238 = vpack.c.bf16 %v8192, %v8191
        %v8239 = vpack.c.bf16 %v8194, %v8193
        %v8240 = vpack.c.bf16 %v8196, %v8195
        %v8241 = vpack.c.bf16 %v8198, %v8197
        %v8242 = vpack.c.bf16 %v8200, %v8199
        %v8243 = vpack.c.bf16 %v8202, %v8201
        %v8244 = vpack.c.bf16 %v8204, %v8203
        %v8245 = vpack.c.bf16 %v8206, %v8205
        %v8246 = vpack.c.bf16 %v8208, %v8207
        %v8247 = vpack.c.bf16 %v8210, %v8209
        %v8248 = vpack.c.bf16 %v8212, %v8211
        %v8249 = vpack.c.bf16 %v8214, %v8213
        %v8250 = vpack.c.bf16 %v8216, %v8215
        %v8251 = vpack.c.bf16 %v8218, %v8217
        %v8252 = vpack.c.bf16 %v8220, %v8219
        %v8285 = vunpack.c.l.b16 %v8221
        %v8286 = vunpack.c.h.b16 %v8221
        %v8287 = vunpack.c.l.b16 %v8222
        %v8288 = vunpack.c.h.b16 %v8222
        %v8289 = vunpack.c.l.b16 %v8223
        %v8290 = vunpack.c.h.b16 %v8223
        %v8291 = vunpack.c.l.b16 %v8224
        %v8292 = vunpack.c.h.b16 %v8224
        %v8293 = vunpack.c.l.b16 %v8225
        %v8294 = vunpack.c.h.b16 %v8225
        %v8295 = vunpack.c.l.b16 %v8226
        %v8296 = vunpack.c.h.b16 %v8226
        %v8297 = vunpack.c.l.b16 %v8227
        %v8298 = vunpack.c.h.b16 %v8227
        %v8299 = vunpack.c.l.b16 %v8228
        %v8300 = vunpack.c.h.b16 %v8228
        %v8301 = vunpack.c.l.b16 %v8229
        %v8302 = vunpack.c.h.b16 %v8229
        %v8303 = vunpack.c.l.b16 %v8230
        %v8304 = vunpack.c.h.b16 %v8230
        %v8305 = vunpack.c.l.b16 %v8231
        %v8306 = vunpack.c.h.b16 %v8231
        %v8307 = vunpack.c.l.b16 %v8232
        %v8308 = vunpack.c.h.b16 %v8232
        %v8309 = vunpack.c.l.b16 %v8233
        %v8310 = vunpack.c.h.b16 %v8233
        %v8311 = vunpack.c.l.b16 %v8234
        %v8312 = vunpack.c.h.b16 %v8234
        %v8313 = vunpack.c.l.b16 %v8235
        %v8314 = vunpack.c.h.b16 %v8235
        %v8315 = vunpack.c.l.b16 %v8236
        %v8316 = vunpack.c.h.b16 %v8236
        %v8317 = vunpack.c.l.b16 %v8237
        %v8318 = vunpack.c.h.b16 %v8237
        %v8319 = vunpack.c.l.b16 %v8238
        %v8320 = vunpack.c.h.b16 %v8238
        %v8321 = vunpack.c.l.b16 %v8239
        %v8322 = vunpack.c.h.b16 %v8239
        %v8323 = vunpack.c.l.b16 %v8240
        %v8324 = vunpack.c.h.b16 %v8240
        %v8325 = vunpack.c.l.b16 %v8241
        %v8326 = vunpack.c.h.b16 %v8241
        %v8327 = vunpack.c.l.b16 %v8242
        %v8328 = vunpack.c.h.b16 %v8242
        %v8329 = vunpack.c.l.b16 %v8243
        %v8330 = vunpack.c.h.b16 %v8243
        %v8331 = vunpack.c.l.b16 %v8244
        %v8332 = vunpack.c.h.b16 %v8244
        %v8333 = vunpack.c.l.b16 %v8245
        %v8334 = vunpack.c.h.b16 %v8245
        %v8335 = vunpack.c.l.b16 %v8246
        %v8336 = vunpack.c.h.b16 %v8246
        %v8337 = vunpack.c.l.b16 %v8247
        %v8338 = vunpack.c.h.b16 %v8247
        %v8339 = vunpack.c.l.b16 %v8248
        %v8340 = vunpack.c.h.b16 %v8248
        %v8341 = vunpack.c.l.b16 %v8249
        %v8342 = vunpack.c.h.b16 %v8249
        %v8343 = vunpack.c.l.b16 %v8250
        %v8344 = vunpack.c.h.b16 %v8250
        %v8345 = vunpack.c.l.b16 %v8251
        %v8346 = vunpack.c.h.b16 %v8251
        %v8347 = vunpack.c.l.b16 %v8252
        %v8348 = vunpack.c.h.b16 %v8252
        %v8349 = vpack.c.b16 %v8285, %v8285
        %v8350 = vpack.c.b16 %v8286, %v8286
        %v8351 = vpack.c.b16 %v8287, %v8287
        %v8352 = vpack.c.b16 %v8288, %v8288
        %v8353 = vpack.c.b16 %v8289, %v8289
        %v8354 = vpack.c.b16 %v8290, %v8290
        %v8355 = vpack.c.b16 %v8291, %v8291
        %v8356 = vpack.c.b16 %v8292, %v8292
        %v8357 = vpack.c.b16 %v8293, %v8293
        %v8358 = vpack.c.b16 %v8294, %v8294
        %v8359 = vpack.c.b16 %v8295, %v8295
        %v8360 = vpack.c.b16 %v8296, %v8296
        %v8361 = vpack.c.b16 %v8297, %v8297
        %v8362 = vpack.c.b16 %v8298, %v8298
        %v8363 = vpack.c.b16 %v8299, %v8299
        %v8364 = vpack.c.b16 %v8300, %v8300
        %v8365 = vpack.c.b16 %v8301, %v8301
        %v8366 = vpack.c.b16 %v8302, %v8302
        %v8367 = vpack.c.b16 %v8303, %v8303
        %v8368 = vpack.c.b16 %v8304, %v8304
        %v8369 = vpack.c.b16 %v8305, %v8305
        %v8370 = vpack.c.b16 %v8306, %v8306
        %v8371 = vpack.c.b16 %v8307, %v8307
        %v8372 = vpack.c.b16 %v8308, %v8308
        %v8373 = vpack.c.b16 %v8309, %v8309
        %v8374 = vpack.c.b16 %v8310, %v8310
        %v8375 = vpack.c.b16 %v8311, %v8311
        %v8376 = vpack.c.b16 %v8312, %v8312
        %v8377 = vpack.c.b16 %v8313, %v8313
        %v8378 = vpack.c.b16 %v8314, %v8314
        %v8379 = vpack.c.b16 %v8315, %v8315
        %v8380 = vpack.c.b16 %v8316, %v8316
        %v8381 = vpack.c.b16 %v8317, %v8317
        %v8382 = vpack.c.b16 %v8318, %v8318
        %v8383 = vpack.c.b16 %v8319, %v8319
        %v8384 = vpack.c.b16 %v8320, %v8320
        %v8385 = vpack.c.b16 %v8321, %v8321
        %v8386 = vpack.c.b16 %v8322, %v8322
        %v8387 = vpack.c.b16 %v8323, %v8323
        %v8388 = vpack.c.b16 %v8324, %v8324
        %v8389 = vpack.c.b16 %v8325, %v8325
        %v8390 = vpack.c.b16 %v8326, %v8326
        %v8391 = vpack.c.b16 %v8327, %v8327
        %v8392 = vpack.c.b16 %v8328, %v8328
        %v8393 = vpack.c.b16 %v8329, %v8329
        %v8394 = vpack.c.b16 %v8330, %v8330
        %v8395 = vpack.c.b16 %v8331, %v8331
        %v8396 = vpack.c.b16 %v8332, %v8332
        %v8397 = vpack.c.b16 %v8333, %v8333
        %v8398 = vpack.c.b16 %v8334, %v8334
        %v8399 = vpack.c.b16 %v8335, %v8335
        %v8400 = vpack.c.b16 %v8336, %v8336
        %v8401 = vpack.c.b16 %v8337, %v8337
        %v8402 = vpack.c.b16 %v8338, %v8338
        %v8403 = vpack.c.b16 %v8339, %v8339
        %v8404 = vpack.c.b16 %v8340, %v8340
        %v8405 = vpack.c.b16 %v8341, %v8341
        %v8406 = vpack.c.b16 %v8342, %v8342
        %v8407 = vpack.c.b16 %v8343, %v8343
        %v8408 = vpack.c.b16 %v8344, %v8344
        %v8409 = vpack.c.b16 %v8345, %v8345
        %v8410 = vpack.c.b16 %v8346, %v8346
        %v8411 = vpack.c.b16 %v8347, %v8347
        %v8412 = vpack.c.b16 %v8348, %v8348
        %8477 = vst [vmem:[%s220] sm:$0xf] %v8349
        %8478 = vst [vmem:[%s220 + $0x4] sm:$0xf] %v8350
        %8479 = vst [vmem:[%s220 + $0x8] sm:$0xf] %v8351
        %8480 = vst [vmem:[%s220 + $0xc] sm:$0xf] %v8352
        %8481 = vst [vmem:[%s220 + $0x10] sm:$0xf] %v8353
        %8482 = vst [vmem:[%s220 + $0x14] sm:$0xf] %v8354
        %8483 = vst [vmem:[%s220 + $0x18] sm:$0xf] %v8355
        %8484 = vst [vmem:[%s220 + $0x1c] sm:$0xf] %v8356
        %8485 = vst [vmem:[%s220 + $0x20] sm:$0xf] %v8357
        %8486 = vst [vmem:[%s220 + $0x24] sm:$0xf] %v8358
        %8487 = vst [vmem:[%s220 + $0x28] sm:$0xf] %v8359
        %8488 = vst [vmem:[%s220 + $0x2c] sm:$0xf] %v8360
        %8489 = vst [vmem:[%s220 + $0x30] sm:$0xf] %v8361
        %8490 = vst [vmem:[%s220 + $0x34] sm:$0xf] %v8362
        %8491 = vst [vmem:[%s220 + $0x38] sm:$0xf] %v8363
        %8492 = vst [vmem:[%s220 + $0x3c] sm:$0xf] %v8364
        %8493 = vst [vmem:[%s220 + $0x40] sm:$0xf] %v8365
        %8494 = vst [vmem:[%s220 + $0x44] sm:$0xf] %v8366
        %8495 = vst [vmem:[%s220 + $0x48] sm:$0xf] %v8367
        %8496 = vst [vmem:[%s220 + $0x4c] sm:$0xf] %v8368
        %8497 = vst [vmem:[%s220 + $0x50] sm:$0xf] %v8369
        %8498 = vst [vmem:[%s220 + $0x54] sm:$0xf] %v8370
        %8499 = vst [vmem:[%s220 + $0x58] sm:$0xf] %v8371
        %8500 = vst [vmem:[%s220 + $0x5c] sm:$0xf] %v8372
        %8501 = vst [vmem:[%s220 + $0x60] sm:$0xf] %v8373
        %8502 = vst [vmem:[%s220 + $0x64] sm:$0xf] %v8374
        %8503 = vst [vmem:[%s220 + $0x68] sm:$0xf] %v8375
        %8504 = vst [vmem:[%s220 + $0x6c] sm:$0xf] %v8376
        %8505 = vst [vmem:[%s220 + $0x70] sm:$0xf] %v8377
        %8506 = vst [vmem:[%s220 + $0x74] sm:$0xf] %v8378
        %8507 = vst [vmem:[%s220 + $0x78] sm:$0xf] %v8379
        %8508 = vst [vmem:[%s220 + $0x7c] sm:$0xf] %v8380
        %8509 = vst [vmem:[%s220 + $0x80] sm:$0xf] %v8381
        %8510 = vst [vmem:[%s220 + $0x84] sm:$0xf] %v8382
        %8511 = vst [vmem:[%s220 + $0x88] sm:$0xf] %v8383
        %8512 = vst [vmem:[%s220 + $0x8c] sm:$0xf] %v8384
        %8513 = vst [vmem:[%s220 + $0x90] sm:$0xf] %v8385
        %8514 = vst [vmem:[%s220 + $0x94] sm:$0xf] %v8386
        %8515 = vst [vmem:[%s220 + $0x98] sm:$0xf] %v8387
        %8516 = vst [vmem:[%s220 + $0x9c] sm:$0xf] %v8388
        %8517 = vst [vmem:[%s220 + $0xa0] sm:$0xf] %v8389
        %8518 = vst [vmem:[%s220 + $0xa4] sm:$0xf] %v8390
        %8519 = vst [vmem:[%s220 + $0xa8] sm:$0xf] %v8391
        %8520 = vst [vmem:[%s220 + $0xac] sm:$0xf] %v8392
        %8521 = vst [vmem:[%s220 + $0xb0] sm:$0xf] %v8393
        %8522 = vst [vmem:[%s220 + $0xb4] sm:$0xf] %v8394
        %8523 = vst [vmem:[%s220 + $0xb8] sm:$0xf] %v8395
        %8524 = vst [vmem:[%s220 + $0xbc] sm:$0xf] %v8396
        %8525 = vst [vmem:[%s220 + $0xc0] sm:$0xf] %v8397
        %8526 = vst [vmem:[%s220 + $0xc4] sm:$0xf] %v8398
        %8527 = vst [vmem:[%s220 + $0xc8] sm:$0xf] %v8399
        %8528 = vst [vmem:[%s220 + $0xcc] sm:$0xf] %v8400
        %8529 = vst [vmem:[%s220 + $0xd0] sm:$0xf] %v8401
        %8530 = vst [vmem:[%s220 + $0xd4] sm:$0xf] %v8402
        %8531 = vst [vmem:[%s220 + $0xd8] sm:$0xf] %v8403
        %8532 = vst [vmem:[%s220 + $0xdc] sm:$0xf] %v8404
        %8533 = vst [vmem:[%s220 + $0xe0] sm:$0xf] %v8405
        %8534 = vst [vmem:[%s220 + $0xe4] sm:$0xf] %v8406
        %8535 = vst [vmem:[%s220 + $0xe8] sm:$0xf] %v8407
        %8536 = vst [vmem:[%s220 + $0xec] sm:$0xf] %v8408
        %8537 = vst [vmem:[%s220 + $0xf0] sm:$0xf] %v8409
        %8538 = vst [vmem:[%s220 + $0xf4] sm:$0xf] %v8410
        %8539 = vst [vmem:[%s220 + $0xf8] sm:$0xf] %v8411
        %8540 = vst [vmem:[%s220 + $0xfc] sm:$0xf] %v8412
        %s8541 = smul.u32 64, %s21
        %p8542 = scmp.lt.s32.totalorder %s20, 1
        %s8543 = scalar_select %p8542, %s20, 1
        %p8544 = scmp.lt.s32.totalorder %s8541, 127
        %s8545 = scalar_select %p8544, %s8541, 127
        %s8546 = smul.addr %s8543, 128
        %s8547 = sadd.s32 %s8545, %s8546
        %s8548 = smul.addr %s8547, 4
        %s8549 = scalar_lea.vmem %s3, %s8548
        // Predicated region
        $region41: #{conv_transpose_silu.1} parent=31 // pred_check
          %p8550 = pneg %p116
        $region42: #{conv_transpose_silu.1} parent=31 // pred_check_branch
          %8552 = sbr.rel (%p8550) target = $region44
        $region43: #{conv_transpose_silu.1} parent=31 // pred_region
          %s8553 = smul.u32 64, %s21
        $region44: #{conv_transpose_silu.1} parent=31 // pred_fallthru
          _
      $region32: #{conv_transpose_silu.1} parent=5 // pred_fallthru
        _
      %p8554 = scmp.le.s32.totalorder 2, %s11
      // Predicated region
      $region45: #{conv_transpose_silu.1} parent=5 // pred_check
        %p8555 = pneg %p8554
      $region46: #{conv_transpose_silu.1} parent=5 // pred_check_branch
        %8557 = sbr.rel (%p8555) target = $region48
      $region47: #{conv_transpose_silu.1} parent=5 // pred_region
        %s8558 = ssub.s32 %s11, 2
        // Predicated region
        $region49: #{conv_transpose_silu.1} parent=47 // pred_check
          %p8559 = pneg %p122
        $region50: #{conv_transpose_silu.1} parent=47 // pred_check_branch
          %8561 = sbr.rel (%p8559) target = $region52
        $region51: #{conv_transpose_silu.1} parent=47 // pred_region
          %s8562 = smul.u32 64, %s23
          %p8563 = scmp.lt.s32.totalorder %s22, 1
          %s8564 = scalar_select %p8563, %s22, 1
          %p8565 = scmp.lt.s32.totalorder %s8562, 127
          %s8566 = scalar_select %p8565, %s8562, 127
          %s8567 = smul.addr %s8564, 128
          %s8568 = sadd.s32 %s8566, %s8567
          %s8569 = smul.addr %s8568, 4
          %s8570 = scalar_lea.vmem %s3, %s8569
        $region52: #{conv_transpose_silu.1} parent=47 // pred_fallthru
          _
      $region48: #{conv_transpose_silu.1} parent=5 // pred_fallthru
        _
    $region6: #{conv_transpose_silu.1} parent=1 // loop_footer
      %s15 = sadd.s32 1, %s11
    $region7: #{conv_transpose_silu.1} parent=1 // loop_footer_branch
      %10 = sbr.rel target = $region3
    $region8: #{conv_transpose_silu.1} parent=1 // loop_exit
      _
    %8571 = vsyncpa [#allocation4], 1
    %s8572 = scalar_lea.sflag [#allocation4], 1
    %8573 = vsyncpa %s8572, 1
    %8574 = vsyncpa [#allocation6], 1

</llo_original>
